<compile_context>
chip_gen: v5e
topology: v5e:2x2
jax: 0.10.0
libtpu: 0.0.40
codegen_flags: <defaults>
</compile_context>

<pallas_src>
import functools

import jax
import jax.numpy as jnp
from jax.experimental import pallas as pl
from jax.experimental.pallas import tpu as pltpu


# ------------------------ generation-aware knobs ----------------------------

def _device_kind() -> str:
    try:
        return jax.devices()[0].device_kind.lower()
    except Exception:
        return ""


_KIND = _device_kind()

# VMEM budget: v5e/v6e have 128 MiB physical -> ~100 MiB scoped budget;
# v7x has 64 MiB physical -> ~48 MiB; unknown generation -> conservative 64 MiB.
if "v7" in _KIND:
    VMEM_LIMIT = 48 * 1024 * 1024
elif "v5" in _KIND or "v6" in _KIND:
    VMEM_LIMIT = 100 * 1024 * 1024
else:
    VMEM_LIMIT = 64 * 1024 * 1024

# MXU-matched reduction tile: 256 on v6e/v7x (2x256x256 MXU), 128 on v5e.
_PREFERRED_K = 256 if ("v6" in _KIND or "v7" in _KIND) else 128


def _k_tile(dim: int) -> int:
    for t in (_PREFERRED_K, 256, 128):
        if dim % t == 0:
            return t
    return dim


# ----------------------------- Pallas kernels -------------------------------

def conv3x3_bn_relu_pool_kernel(x_ref, w_ref, shift_ref, o_ref, pad_ref, *rest,
                                pool):
    """Fused 3x3 conv (stride 1, pad 1) + folded-BN bias + ReLU (+ 2x2 maxpool).

    One batch sample per grid step (grid axis "parallel" -> megacore on v7x).

    x_ref:     (1, H, W, Cin)        bf16 NHWC activation
    w_ref:     (9*Cin, Cout)         bf16, BN scale folded, rows ordered (dh,dw,ci)
    shift_ref: (1, Cout)             f32 folded bias
    o_ref:     (1, H, W, Cout) or (1, H//2, W//2, Cout) when pool=True
    pad_ref:   VMEM (H+2, W+2, Cin)  bf16 halo scratch
    rest:      (pool_ref,) VMEM (H//2, W, Cout) f32 scratch, iff pool=True
    """
    _, H, W, Cin = x_ref.shape
    Cout = o_ref.shape[-1]

    # Zero only the 1-pixel halo border (not the whole scratch), then store the
    # interior once.
    # TODO(synk): with H-row tiling, DMA the row tile (+halo) straight from HBM
    # (memory_space=pl.ANY) into pad_ref instead of the vld/vst copy below.
    zrow = jnp.zeros((1, W + 2, Cin), pad_ref.dtype)
    zcol = jnp.zeros((H, 1, Cin), pad_ref.dtype)
    pad_ref[0:1, :, :] = zrow
    pad_ref[H + 1:H + 2, :, :] = zrow
    pad_ref[1:H + 1, 0:1, :] = zcol
    pad_ref[1:H + 1, W + 1:W + 2, :] = zcol
    pad_ref[1:H + 1, 1:W + 1, :] = x_ref[0]

    # 3x3 conv as 9 accumulated MXU matmuls (K = Cin each); no im2col buffer.
    acc = None
    for dh in range(3):
        for dw in range(3):
            slab = pad_ref[dh:dh + H, dw:dw + W, :].reshape(H * W, Cin)
            wk = w_ref[(dh * 3 + dw) * Cin:(dh * 3 + dw + 1) * Cin, :]
            t = jnp.dot(slab, wk, preferred_element_type=jnp.float32)
            acc = t if acc is None else acc + t

    y = jnp.maximum(acc + shift_ref[...], 0.0)          # folded BN + ReLU (f32)

    if pool:
        # 2x2/stride-2 maxpool: row pairs in-register (cheap leading-dim
        # reshape), column pairs via a half-size f32 scratch + stride-2 reads.
        pool_ref = rest[0]
        Ho, Wo = H // 2, W // 2
        y4 = y.reshape(Ho, 2, W, Cout)
        pool_ref[...] = jnp.maximum(y4[:, 0, :, :], y4[:, 1, :, :])
        v0 = pool_ref[:, pl.ds(0, Wo, stride=2), :]
        v1 = pool_ref[:, pl.ds(1, Wo, stride=2), :]
        out = jnp.maximum(v0, v1)                        # (Ho, Wo, Cout)
    else:
        out = y.reshape(H, W, Cout)

    # TODO(synk): toy Cout (8/16) is lane-sparse; real VGG widths (>=64) give
    # lane-dense stores automatically.
    o_ref[0] = out.astype(o_ref.dtype)


def fc0_kernel(x_ref, w_ref, b_ref, o_ref, acc_ref):
    """Linear + ReLU with a K-tiled reduction ("arbitrary") + f32 accumulator."""
    k = pl.program_id(0)

    @pl.when(k == 0)
    def _():
        acc_ref[...] = jnp.zeros_like(acc_ref)

    acc_ref[...] += jnp.dot(x_ref[...], w_ref[...],
                            preferred_element_type=jnp.float32)

    @pl.when(k == pl.num_programs(0) - 1)
    def _():
        o_ref[...] = jnp.maximum(acc_ref[...] + b_ref[...], 0.0).astype(o_ref.dtype)


def fc12_kernel(h_ref, w1_ref, b1_ref, w2_ref, b2_ref, o_ref, acc_ref):
    """(Linear + ReLU) -> Linear; FC1's reduction is K-tiled. Dropout = identity."""
    k = pl.program_id(0)

    @pl.when(k == 0)
    def _():
        acc_ref[...] = jnp.zeros_like(acc_ref)

    acc_ref[...] += jnp.dot(h_ref[...], w1_ref[...],
                            preferred_element_type=jnp.float32)

    @pl.when(k == pl.num_programs(0) - 1)
    def _():
        h1 = jnp.maximum(acc_ref[...] + b1_ref[...], 0.0)          # FC1 + ReLU
        y = jnp.dot(h1.astype(w2_ref.dtype), w2_ref[...],
                    preferred_element_type=jnp.float32)
        o_ref[...] = y + b2_ref[...]                               # FC2


# ------------------------------ call helpers --------------------------------

def conv_bn_relu_pool(x_nhwc, w, shift, *, pool):
    N, H, W, Cin = x_nhwc.shape
    Cout = w.shape[-1]
    Ho, Wo = (H // 2, W // 2) if pool else (H, W)
    scratch = [pltpu.VMEM((H + 2, W + 2, Cin), x_nhwc.dtype)]
    if pool:
        scratch.append(pltpu.VMEM((Ho, W, Cout), jnp.float32))
    return pl.pallas_call(
        functools.partial(conv3x3_bn_relu_pool_kernel, pool=pool),
        out_shape=jax.ShapeDtypeStruct((N, Ho, Wo, Cout), x_nhwc.dtype),
        grid=(N,),
        in_specs=[
            pl.BlockSpec((1, H, W, Cin), lambda n: (n, 0, 0, 0)),
            # grid-invariant operands: single-buffer to save VMEM
            pl.BlockSpec((9 * Cin, Cout), lambda n: (0, 0),
                         pipeline_mode=pl.Buffered(1)),
            pl.BlockSpec((1, Cout), lambda n: (0, 0),
                         pipeline_mode=pl.Buffered(1)),
        ],
        out_specs=pl.BlockSpec((1, Ho, Wo, Cout), lambda n: (n, 0, 0, 0)),
        scratch_shapes=scratch,
        compiler_params=pltpu.CompilerParams(
            dimension_semantics=("parallel",),
            vmem_limit_bytes=VMEM_LIMIT),
    )(x_nhwc, w, shift)


def fc_head(x, p0, p1, p2):
    """FC0 in its own K-tiled call (FC1/FC2 weights not resident during the big
    reduction), then a small fused FC1+FC2 call.
    TODO(synk): add a "parallel" N-tile over FC0's 4096-wide output at real VGG
    sizes so v7x's second TensorCore shares the FC0 work."""
    B, Fin = x.shape
    H0 = p0["w"].shape[1]
    H1 = p1["w"].shape[1]
    C = p2["w"].shape[1]

    tk0 = _k_tile(Fin)
    h = pl.pallas_call(
        fc0_kernel,
        out_shape=jax.ShapeDtypeStruct((B, H0), jnp.bfloat16),
        grid=(Fin // tk0,),
        in_specs=[
            pl.BlockSpec((B, tk0), lambda k: (0, k)),
            pl.BlockSpec((tk0, H0), lambda k: (k, 0)),
            pl.BlockSpec((1, H0), lambda k: (0, 0),
                         pipeline_mode=pl.Buffered(1)),
        ],
        out_specs=pl.BlockSpec((B, H0), lambda k: (0, 0)),
        scratch_shapes=[pltpu.VMEM((B, H0), jnp.float32)],
        compiler_params=pltpu.CompilerParams(
            dimension_semantics=("arbitrary",),
            vmem_limit_bytes=VMEM_LIMIT),
    )(x, p0["w"], p0["b"])

    tk1 = _k_tile(H0)
    return pl.pallas_call(
        fc12_kernel,
        out_shape=jax.ShapeDtypeStruct((B, C), jnp.float32),
        grid=(H0 // tk1,),
        in_specs=[
            pl.BlockSpec((B, tk1), lambda k: (0, k)),
            pl.BlockSpec((tk1, H1), lambda k: (k, 0)),
            pl.BlockSpec((1, H1), lambda k: (0, 0),
                         pipeline_mode=pl.Buffered(1)),
            pl.BlockSpec((H1, C), lambda k: (0, 0),
                         pipeline_mode=pl.Buffered(1)),
            pl.BlockSpec((1, C), lambda k: (0, 0),
                         pipeline_mode=pl.Buffered(1)),
        ],
        out_specs=pl.BlockSpec((B, C), lambda k: (0, 0)),
        scratch_shapes=[pltpu.VMEM((B, H1), jnp.float32)],
        compiler_params=pltpu.CompilerParams(
            dimension_semantics=("arbitrary",),
            vmem_limit_bytes=VMEM_LIMIT),
    )(h, p1["w"], p1["b"], p2["w"], p2["b"])


# ------------------------------- VGG model ----------------------------------

ARCH = [8, 8, "M", 16, "M"]   # small VGG-style architecture
IN_CHANNELS = 4
NUM_CLASSES = 10
HIDDEN = 64                   # scaled-down stand-in for 4096
BN_EPS = 1e-5


def init_params(key, spatial):
    params = {"convs": [], "fcs": []}
    in_c = IN_CHANNELS
    s = spatial
    for a in ARCH:
        if a == "M":
            s //= 2
            continue
        out_c = a
        key, k1, k2, k3, k4, k5, k6 = jax.random.split(key, 7)
        fan_in = 3 * 3 * in_c
        w = jax.random.normal(k1, (3, 3, in_c, out_c), jnp.float32) / jnp.sqrt(fan_in)
        b = 0.05 * jax.random.normal(k2, (out_c,), jnp.float32)
        gamma = 1.0 + 0.1 * jax.random.normal(k3, (out_c,), jnp.float32)
        beta = 0.1 * jax.random.normal(k4, (out_c,), jnp.float32)
        rmean = 0.1 * jax.random.normal(k5, (out_c,), jnp.float32)
        rvar = jnp.abs(jax.random.normal(k6, (out_c,), jnp.float32)) + 0.5
        # Fold eval-mode BatchNorm into conv weights + bias (one-time, host side).
        scale = gamma / jnp.sqrt(rvar + BN_EPS)
        w_folded = (w * scale).reshape(9 * in_c, out_c).astype(jnp.bfloat16)
        shift = ((b - rmean) * scale + beta).reshape(1, out_c)     # f32
        params["convs"].append({"w": w_folded, "shift": shift})
        in_c = out_c

    fc_in = in_c * s * s
    dims = [(fc_in, HIDDEN), (HIDDEN, HIDDEN), (HIDDEN, NUM_CLASSES)]
    for li, (fi, fo) in enumerate(dims):
        key, k1, k2 = jax.random.split(key, 3)
        w_t = jax.random.normal(k1, (fi, fo), jnp.float32) / jnp.sqrt(fi)
        b = 0.05 * jax.random.normal(k2, (fo,), jnp.float32)
        if li == 0:
            # PyTorch flattens NCHW as (C, H, W); permute FC0 rows once so the
            # kernel consumes the NHWC flatten directly (no runtime transpose).
            w_t = (w_t.reshape(in_c, s, s, fo)
                      .transpose(1, 2, 0, 3)
                      .reshape(fi, fo))
        params["fcs"].append({"w": w_t.astype(jnp.bfloat16),
                              "b": b.reshape(1, fo)})             # bias stays f32
    return params


def vgg_forward(params, x_nchw):
    # NCHW -> NHWC (lane = channels) + bf16 at the boundary.
    x = jnp.transpose(x_nchw, (0, 2, 3, 1)).astype(jnp.bfloat16)
    ci = 0
    i = 0
    while i < len(ARCH):
        a = ARCH[i]
        # NOTE: standard VGG configs never start with 'M' or repeat it; a
        # standalone (un-fused) pool layer is intentionally not implemented.
        assert a != "M", "standalone MaxPool without preceding conv unsupported"
        pool = (i + 1 < len(ARCH) and ARCH[i + 1] == "M")
        p = params["convs"][ci]
        x = conv_bn_relu_pool(x, p["w"], p["shift"], pool=pool)
        ci += 1
        i += 2 if pool else 1
    # Flatten NHWC; FC0 weight rows were permuted at init so PyTorch's NCHW
    # flatten semantics are preserved without an activation transpose.
    x = x.reshape(x.shape[0], -1)
    # FC head: Linear+ReLU, Dropout(identity), Linear+ReLU, Dropout(identity), Linear
    # TODO(synk): training-mode Dropout(p=0.5) not implemented (identity in eval).
    return fc_head(x, *params["fcs"])


# ---------------------------------- main -------------------------------------

if __name__ == "__main__":
    key = jax.random.PRNGKey(0)
    kx, kp = jax.random.split(key)
    x = jax.random.normal(kx, (2, IN_CHANNELS, 16, 16), jnp.float32)  # NCHW
    params = init_params(kp, spatial=16)

    out = jax.jit(vgg_forward)(params, x)
    out = jax.block_until_ready(out)
    assert out.shape == (2, NUM_CLASSES), out.shape
    assert bool(jnp.all(jnp.isfinite(out)))
    print("KERNEL_OK")
</pallas_src>

<mosaic_0001>
module attributes {stable_mosaic.version = 11 : i64} {
  func.func @conv3x3_bn_relu_pool_kernel(%arg0: i32, %arg1: memref<1x16x16x4xbf16, #tpu.memory_space<vmem>>, %arg2: memref<36x8xbf16, #tpu.memory_space<vmem>>, %arg3: memref<1x8xf32, #tpu.memory_space<vmem>>, %arg4: memref<1x16x16x8xbf16, #tpu.memory_space<vmem>>, %arg5: memref<18x18x4xbf16, #tpu.memory_space<vmem>>) attributes {dimension_semantics = [#tpu.dimension_semantics<parallel>], iteration_bounds = array<i64: 2>, scalar_prefetch = 0 : i64, scratch_operands = 1 : i64, tpu.core_type = #tpu.core_type<tc>, window_params = [{transform_indices = @transform_0, window_bounds = array<i64: 1, 16, 16, 4>}, {pipeline_mode = #tpu.pipeline_mode<synchronous>, transform_indices = @transform_1, window_bounds = array<i64: 36, 8>}, {pipeline_mode = #tpu.pipeline_mode<synchronous>, transform_indices = @transform_2, window_bounds = array<i64: 1, 8>}, {transform_indices = @transform_3, window_bounds = array<i64: 1, 16, 16, 8>}]} {
    %cst = arith.constant 0.000000e+00 : bf16
    %0 = vector.broadcast %cst : bf16 to vector<1x18x4xbf16>
    %cst_0 = arith.constant 0.000000e+00 : bf16
    %1 = vector.broadcast %cst_0 : bf16 to vector<16x1x4xbf16>
    %c0 = arith.constant 0 : index
    %c0_1 = arith.constant 0 : index
    %c0_2 = arith.constant 0 : index
    %2 = vector.load %arg5[%c0, %c0_1, %c0_2] : memref<18x18x4xbf16, #tpu.memory_space<vmem>>, vector<1x18x4xbf16>
    tpu.vector_store %arg5[%c0, %c0_1, %c0_2], %0 {strides = array<i32>} : memref<18x18x4xbf16, #tpu.memory_space<vmem>>, vector<1x18x4xbf16>,
    %c17 = arith.constant 17 : index
    %c0_3 = arith.constant 0 : index
    %c0_4 = arith.constant 0 : index
    %3 = vector.load %arg5[%c17, %c0_3, %c0_4] : memref<18x18x4xbf16, #tpu.memory_space<vmem>>, vector<1x18x4xbf16>
    tpu.vector_store %arg5[%c17, %c0_3, %c0_4], %0 {strides = array<i32>} : memref<18x18x4xbf16, #tpu.memory_space<vmem>>, vector<1x18x4xbf16>,
    %c1 = arith.constant 1 : index
    %c0_5 = arith.constant 0 : index
    %c0_6 = arith.constant 0 : index
    %4 = vector.load %arg5[%c1, %c0_5, %c0_6] : memref<18x18x4xbf16, #tpu.memory_space<vmem>>, vector<16x1x4xbf16>
    tpu.vector_store %arg5[%c1, %c0_5, %c0_6], %1 {strides = array<i32>} : memref<18x18x4xbf16, #tpu.memory_space<vmem>>, vector<16x1x4xbf16>,
    %c1_7 = arith.constant 1 : index
    %c17_8 = arith.constant 17 : index
    %c0_9 = arith.constant 0 : index
    %5 = vector.load %arg5[%c1_7, %c17_8, %c0_9] : memref<18x18x4xbf16, #tpu.memory_space<vmem>>, vector<16x1x4xbf16>
    tpu.vector_store %arg5[%c1_7, %c17_8, %c0_9], %1 {strides = array<i32>} : memref<18x18x4xbf16, #tpu.memory_space<vmem>>, vector<16x1x4xbf16>,
    %c0_10 = arith.constant 0 : index
    %c0_11 = arith.constant 0 : index
    %c0_12 = arith.constant 0 : index
    %c0_13 = arith.constant 0 : index
    %6 = vector.load %arg1[%c0_10, %c0_11, %c0_12, %c0_13] : memref<1x16x16x4xbf16, #tpu.memory_space<vmem>>, vector<1x16x16x4xbf16>
    %7 = vector.shape_cast %6 : vector<1x16x16x4xbf16> to vector<16x16x4xbf16>
    %c1_14 = arith.constant 1 : index
    %c1_15 = arith.constant 1 : index
    %c0_16 = arith.constant 0 : index
    %8 = vector.load %arg5[%c1_14, %c1_15, %c0_16] : memref<18x18x4xbf16, #tpu.memory_space<vmem>>, vector<16x16x4xbf16>
    tpu.vector_store %arg5[%c1_14, %c1_15, %c0_16], %7 {strides = array<i32>} : memref<18x18x4xbf16, #tpu.memory_space<vmem>>, vector<16x16x4xbf16>,
    %c0_17 = arith.constant 0 : index
    %c0_18 = arith.constant 0 : index
    %c0_19 = arith.constant 0 : index
    %9 = vector.load %arg5[%c0_17, %c0_18, %c0_19] : memref<18x18x4xbf16, #tpu.memory_space<vmem>>, vector<16x16x4xbf16>
    %10 = vector.shape_cast %9 : vector<16x16x4xbf16> to vector<256x4xbf16>
    %c0_20 = arith.constant 0 : index
    %c0_21 = arith.constant 0 : index
    %11 = vector.load %arg2[%c0_20, %c0_21] : memref<36x8xbf16, #tpu.memory_space<vmem>>, vector<4x8xbf16>
    %cst_22 = arith.constant dense<0.000000e+00> : vector<256x8xf32>
    %12 = tpu.matmul %10, %11, %cst_22 {dimension_numbers = #tpu.dot_dimension_numbers<[1], [0], [0], [1], [0, 0, 1, 1], [], []>} : vector<256x4xbf16>, vector<4x8xbf16>, vector<256x8xf32> -> vector<256x8xf32>
    %c0_23 = arith.constant 0 : index
    %c1_24 = arith.constant 1 : index
    %c0_25 = arith.constant 0 : index
    %13 = vector.load %arg5[%c0_23, %c1_24, %c0_25] : memref<18x18x4xbf16, #tpu.memory_space<vmem>>, vector<16x16x4xbf16>
    %14 = vector.shape_cast %13 : vector<16x16x4xbf16> to vector<256x4xbf16>
    %c4 = arith.constant 4 : index
    %c0_26 = arith.constant 0 : index
    %15 = vector.load %arg2[%c4, %c0_26] : memref<36x8xbf16, #tpu.memory_space<vmem>>, vector<4x8xbf16>
    %cst_27 = arith.constant dense<0.000000e+00> : vector<256x8xf32>
    %16 = tpu.matmul %14, %15, %cst_27 {dimension_numbers = #tpu.dot_dimension_numbers<[1], [0], [0], [1], [0, 0, 1, 1], [], []>} : vector<256x4xbf16>, vector<4x8xbf16>, vector<256x8xf32> -> vector<256x8xf32>
    %17 = arith.addf %12, %16 : vector<256x8xf32>
    %c0_28 = arith.constant 0 : index
    %c2 = arith.constant 2 : index
    %c0_29 = arith.constant 0 : index
    %18 = vector.load %arg5[%c0_28, %c2, %c0_29] : memref<18x18x4xbf16, #tpu.memory_space<vmem>>, vector<16x16x4xbf16>
    %19 = vector.shape_cast %18 : vector<16x16x4xbf16> to vector<256x4xbf16>
    %c8 = arith.constant 8 : index
    %c0_30 = arith.constant 0 : index
    %20 = vector.load %arg2[%c8, %c0_30] : memref<36x8xbf16, #tpu.memory_space<vmem>>, vector<4x8xbf16>
    %cst_31 = arith.constant dense<0.000000e+00> : vector<256x8xf32>
    %21 = tpu.matmul %19, %20, %cst_31 {dimension_numbers = #tpu.dot_dimension_numbers<[1], [0], [0], [1], [0, 0, 1, 1], [], []>} : vector<256x4xbf16>, vector<4x8xbf16>, vector<256x8xf32> -> vector<256x8xf32>
    %22 = arith.addf %17, %21 : vector<256x8xf32>
    %c1_32 = arith.constant 1 : index
    %c0_33 = arith.constant 0 : index
    %c0_34 = arith.constant 0 : index
    %23 = vector.load %arg5[%c1_32, %c0_33, %c0_34] : memref<18x18x4xbf16, #tpu.memory_space<vmem>>, vector<16x16x4xbf16>
    %24 = vector.shape_cast %23 : vector<16x16x4xbf16> to vector<256x4xbf16>
    %c12 = arith.constant 12 : index
    %c0_35 = arith.constant 0 : index
    %25 = vector.load %arg2[%c12, %c0_35] : memref<36x8xbf16, #tpu.memory_space<vmem>>, vector<4x8xbf16>
    %cst_36 = arith.constant dense<0.000000e+00> : vector<256x8xf32>
    %26 = tpu.matmul %24, %25, %cst_36 {dimension_numbers = #tpu.dot_dimension_numbers<[1], [0], [0], [1], [0, 0, 1, 1], [], []>} : vector<256x4xbf16>, vector<4x8xbf16>, vector<256x8xf32> -> vector<256x8xf32>
    %27 = arith.addf %22, %26 : vector<256x8xf32>
    %c1_37 = arith.constant 1 : index
    %c1_38 = arith.constant 1 : index
    %c0_39 = arith.constant 0 : index
    %28 = vector.load %arg5[%c1_37, %c1_38, %c0_39] : memref<18x18x4xbf16, #tpu.memory_space<vmem>>, vector<16x16x4xbf16>
    %29 = vector.shape_cast %28 : vector<16x16x4xbf16> to vector<256x4xbf16>
    %c16 = arith.constant 16 : index
    %c0_40 = arith.constant 0 : index
    %30 = vector.load %arg2[%c16, %c0_40] : memref<36x8xbf16, #tpu.memory_space<vmem>>, vector<4x8xbf16>
    %cst_41 = arith.constant dense<0.000000e+00> : vector<256x8xf32>
    %31 = tpu.matmul %29, %30, %cst_41 {dimension_numbers = #tpu.dot_dimension_numbers<[1], [0], [0], [1], [0, 0, 1, 1], [], []>} : vector<256x4xbf16>, vector<4x8xbf16>, vector<256x8xf32> -> vector<256x8xf32>
    %32 = arith.addf %27, %31 : vector<256x8xf32>
    %c1_42 = arith.constant 1 : index
    %c2_43 = arith.constant 2 : index
    %c0_44 = arith.constant 0 : index
    %33 = vector.load %arg5[%c1_42, %c2_43, %c0_44] : memref<18x18x4xbf16, #tpu.memory_space<vmem>>, vector<16x16x4xbf16>
    %34 = vector.shape_cast %33 : vector<16x16x4xbf16> to vector<256x4xbf16>
    %c20 = arith.constant 20 : index
    %c0_45 = arith.constant 0 : index
    %35 = vector.load %arg2[%c20, %c0_45] : memref<36x8xbf16, #tpu.memory_space<vmem>>, vector<4x8xbf16>
    %cst_46 = arith.constant dense<0.000000e+00> : vector<256x8xf32>
    %36 = tpu.matmul %34, %35, %cst_46 {dimension_numbers = #tpu.dot_dimension_numbers<[1], [0], [0], [1], [0, 0, 1, 1], [], []>} : vector<256x4xbf16>, vector<4x8xbf16>, vector<256x8xf32> -> vector<256x8xf32>
    %37 = arith.addf %32, %36 : vector<256x8xf32>
    %c2_47 = arith.constant 2 : index
    %c0_48 = arith.constant 0 : index
    %c0_49 = arith.constant 0 : index
    %38 = vector.load %arg5[%c2_47, %c0_48, %c0_49] : memref<18x18x4xbf16, #tpu.memory_space<vmem>>, vector<16x16x4xbf16>
    %39 = vector.shape_cast %38 : vector<16x16x4xbf16> to vector<256x4xbf16>
    %c24 = arith.constant 24 : index
    %c0_50 = arith.constant 0 : index
    %40 = vector.load %arg2[%c24, %c0_50] : memref<36x8xbf16, #tpu.memory_space<vmem>>, vector<4x8xbf16>
    %cst_51 = arith.constant dense<0.000000e+00> : vector<256x8xf32>
    %41 = tpu.matmul %39, %40, %cst_51 {dimension_numbers = #tpu.dot_dimension_numbers<[1], [0], [0], [1], [0, 0, 1, 1], [], []>} : vector<256x4xbf16>, vector<4x8xbf16>, vector<256x8xf32> -> vector<256x8xf32>
    %42 = arith.addf %37, %41 : vector<256x8xf32>
    %c2_52 = arith.constant 2 : index
    %c1_53 = arith.constant 1 : index
    %c0_54 = arith.constant 0 : index
    %43 = vector.load %arg5[%c2_52, %c1_53, %c0_54] : memref<18x18x4xbf16, #tpu.memory_space<vmem>>, vector<16x16x4xbf16>
    %44 = vector.shape_cast %43 : vector<16x16x4xbf16> to vector<256x4xbf16>
    %c28 = arith.constant 28 : index
    %c0_55 = arith.constant 0 : index
    %45 = vector.load %arg2[%c28, %c0_55] : memref<36x8xbf16, #tpu.memory_space<vmem>>, vector<4x8xbf16>
    %cst_56 = arith.constant dense<0.000000e+00> : vector<256x8xf32>
    %46 = tpu.matmul %44, %45, %cst_56 {dimension_numbers = #tpu.dot_dimension_numbers<[1], [0], [0], [1], [0, 0, 1, 1], [], []>} : vector<256x4xbf16>, vector<4x8xbf16>, vector<256x8xf32> -> vector<256x8xf32>
    %47 = arith.addf %42, %46 : vector<256x8xf32>
    %c2_57 = arith.constant 2 : index
    %c2_58 = arith.constant 2 : index
    %c0_59 = arith.constant 0 : index
    %48 = vector.load %arg5[%c2_57, %c2_58, %c0_59] : memref<18x18x4xbf16, #tpu.memory_space<vmem>>, vector<16x16x4xbf16>
    %49 = vector.shape_cast %48 : vector<16x16x4xbf16> to vector<256x4xbf16>
    %c32 = arith.constant 32 : index
    %c0_60 = arith.constant 0 : index
    %50 = vector.load %arg2[%c32, %c0_60] : memref<36x8xbf16, #tpu.memory_space<vmem>>, vector<4x8xbf16>
    %cst_61 = arith.constant dense<0.000000e+00> : vector<256x8xf32>
    %51 = tpu.matmul %49, %50, %cst_61 {dimension_numbers = #tpu.dot_dimension_numbers<[1], [0], [0], [1], [0, 0, 1, 1], [], []>} : vector<256x4xbf16>, vector<4x8xbf16>, vector<256x8xf32> -> vector<256x8xf32>
    %52 = arith.addf %47, %51 : vector<256x8xf32>
    %c0_62 = arith.constant 0 : index
    %c0_63 = arith.constant 0 : index
    %53 = vector.load %arg3[%c0_62, %c0_63] : memref<1x8xf32, #tpu.memory_space<vmem>>, vector<1x8xf32>
    %54 = vector.broadcast %53 : vector<1x8xf32> to vector<256x8xf32>
    %55 = arith.addf %52, %54 : vector<256x8xf32>
    %cst_64 = arith.constant 0.000000e+00 : f32
    %56 = vector.broadcast %cst_64 : f32 to vector<256x8xf32>
    %57 = arith.maximumf %55, %56 : vector<256x8xf32>
    %58 = vector.shape_cast %57 : vector<256x8xf32> to vector<16x16x8xf32>
    %59 = arith.truncf %58 : vector<16x16x8xf32> to vector<16x16x8xbf16>
    %c0_65 = arith.constant 0 : index
    %c0_66 = arith.constant 0 : index
    %c0_67 = arith.constant 0 : index
    %c0_68 = arith.constant 0 : index
    %60 = vector.load %arg4[%c0_65, %c0_66, %c0_67, %c0_68] : memref<1x16x16x8xbf16, #tpu.memory_space<vmem>>, vector<1x16x16x8xbf16>
    %61 = vector.shape_cast %60 : vector<1x16x16x8xbf16> to vector<16x16x8xbf16>
    %62 = vector.shape_cast %59 : vector<16x16x8xbf16> to vector<1x16x16x8xbf16>
    tpu.vector_store %arg4[%c0_65, %c0_66, %c0_67, %c0_68], %62 {strides = array<i32>} : memref<1x16x16x8xbf16, #tpu.memory_space<vmem>>, vector<1x16x16x8xbf16>,
    return
  }
  func.func @transform_0(%arg0: i32) -> (i32, i32, i32, i32) {
    %c0_i32 = arith.constant 0 : i32
    %c0_i32_0 = arith.constant 0 : i32
    %c0_i32_1 = arith.constant 0 : i32
    %c0_i32_2 = arith.constant 0 : i32
    return %arg0, %c0_i32, %c0_i32_0, %c0_i32_1 : i32, i32, i32, i32
  }
  func.func @transform_1(%arg0: i32) -> (i32, i32) {
    %c0_i32 = arith.constant 0 : i32
    %c0_i32_0 = arith.constant 0 : i32
    %c0_i32_1 = arith.constant 0 : i32
    return %c0_i32, %c0_i32_0 : i32, i32
  }
  func.func @transform_2(%arg0: i32) -> (i32, i32) {
    %c0_i32 = arith.constant 0 : i32
    %c0_i32_0 = arith.constant 0 : i32
    %c0_i32_1 = arith.constant 0 : i32
    return %c0_i32, %c0_i32_0 : i32, i32
  }
  func.func @transform_3(%arg0: i32) -> (i32, i32, i32, i32) {
    %c0_i32 = arith.constant 0 : i32
    %c0_i32_0 = arith.constant 0 : i32
    %c0_i32_1 = arith.constant 0 : i32
    %c0_i32_2 = arith.constant 0 : i32
    return %arg0, %c0_i32, %c0_i32_0, %c0_i32_1 : i32, i32, i32, i32
  }
}

module attributes {stable_mosaic.version = 11 : i64} {
  func.func @conv3x3_bn_relu_pool_kernel(%arg0: i32, %arg1: memref<1x16x16x8xbf16, #tpu.memory_space<vmem>>, %arg2: memref<72x8xbf16, #tpu.memory_space<vmem>>, %arg3: memref<1x8xf32, #tpu.memory_space<vmem>>, %arg4: memref<1x8x8x8xbf16, #tpu.memory_space<vmem>>, %arg5: memref<18x18x8xbf16, #tpu.memory_space<vmem>>, %arg6: memref<8x16x8xf32, #tpu.memory_space<vmem>>) attributes {dimension_semantics = [#tpu.dimension_semantics<parallel>], iteration_bounds = array<i64: 2>, scalar_prefetch = 0 : i64, scratch_operands = 2 : i64, tpu.core_type = #tpu.core_type<tc>, window_params = [{transform_indices = @transform_0, window_bounds = array<i64: 1, 16, 16, 8>}, {pipeline_mode = #tpu.pipeline_mode<synchronous>, transform_indices = @transform_1, window_bounds = array<i64: 72, 8>}, {pipeline_mode = #tpu.pipeline_mode<synchronous>, transform_indices = @transform_2, window_bounds = array<i64: 1, 8>}, {transform_indices = @transform_3, window_bounds = array<i64: 1, 8, 8, 8>}]} {
    %cst = arith.constant 0.000000e+00 : bf16
    %0 = vector.broadcast %cst : bf16 to vector<1x18x8xbf16>
    %cst_0 = arith.constant 0.000000e+00 : bf16
    %1 = vector.broadcast %cst_0 : bf16 to vector<16x1x8xbf16>
    %c0 = arith.constant 0 : index
    %c0_1 = arith.constant 0 : index
    %c0_2 = arith.constant 0 : index
    %2 = vector.load %arg5[%c0, %c0_1, %c0_2] : memref<18x18x8xbf16, #tpu.memory_space<vmem>>, vector<1x18x8xbf16>
    tpu.vector_store %arg5[%c0, %c0_1, %c0_2], %0 {strides = array<i32>} : memref<18x18x8xbf16, #tpu.memory_space<vmem>>, vector<1x18x8xbf16>,
    %c17 = arith.constant 17 : index
    %c0_3 = arith.constant 0 : index
    %c0_4 = arith.constant 0 : index
    %3 = vector.load %arg5[%c17, %c0_3, %c0_4] : memref<18x18x8xbf16, #tpu.memory_space<vmem>>, vector<1x18x8xbf16>
    tpu.vector_store %arg5[%c17, %c0_3, %c0_4], %0 {strides = array<i32>} : memref<18x18x8xbf16, #tpu.memory_space<vmem>>, vector<1x18x8xbf16>,
    %c1 = arith.constant 1 : index
    %c0_5 = arith.constant 0 : index
    %c0_6 = arith.constant 0 : index
    %4 = vector.load %arg5[%c1, %c0_5, %c0_6] : memref<18x18x8xbf16, #tpu.memory_space<vmem>>, vector<16x1x8xbf16>
    tpu.vector_store %arg5[%c1, %c0_5, %c0_6], %1 {strides = array<i32>} : memref<18x18x8xbf16, #tpu.memory_space<vmem>>, vector<16x1x8xbf16>,
    %c1_7 = arith.constant 1 : index
    %c17_8 = arith.constant 17 : index
    %c0_9 = arith.constant 0 : index
    %5 = vector.load %arg5[%c1_7, %c17_8, %c0_9] : memref<18x18x8xbf16, #tpu.memory_space<vmem>>, vector<16x1x8xbf16>
    tpu.vector_store %arg5[%c1_7, %c17_8, %c0_9], %1 {strides = array<i32>} : memref<18x18x8xbf16, #tpu.memory_space<vmem>>, vector<16x1x8xbf16>,
    %c0_10 = arith.constant 0 : index
    %c0_11 = arith.constant 0 : index
    %c0_12 = arith.constant 0 : index
    %c0_13 = arith.constant 0 : index
    %6 = vector.load %arg1[%c0_10, %c0_11, %c0_12, %c0_13] : memref<1x16x16x8xbf16, #tpu.memory_space<vmem>>, vector<1x16x16x8xbf16>
    %7 = vector.shape_cast %6 : vector<1x16x16x8xbf16> to vector<16x16x8xbf16>
    %c1_14 = arith.constant 1 : index
    %c1_15 = arith.constant 1 : index
    %c0_16 = arith.constant 0 : index
    %8 = vector.load %arg5[%c1_14, %c1_15, %c0_16] : memref<18x18x8xbf16, #tpu.memory_space<vmem>>, vector<16x16x8xbf16>
    tpu.vector_store %arg5[%c1_14, %c1_15, %c0_16], %7 {strides = array<i32>} : memref<18x18x8xbf16, #tpu.memory_space<vmem>>, vector<16x16x8xbf16>,
    %c0_17 = arith.constant 0 : index
    %c0_18 = arith.constant 0 : index
    %c0_19 = arith.constant 0 : index
    %9 = vector.load %arg5[%c0_17, %c0_18, %c0_19] : memref<18x18x8xbf16, #tpu.memory_space<vmem>>, vector<16x16x8xbf16>
    %10 = vector.shape_cast %9 : vector<16x16x8xbf16> to vector<256x8xbf16>
    %c0_20 = arith.constant 0 : index
    %c0_21 = arith.constant 0 : index
    %11 = vector.load %arg2[%c0_20, %c0_21] : memref<72x8xbf16, #tpu.memory_space<vmem>>, vector<8x8xbf16>
    %cst_22 = arith.constant dense<0.000000e+00> : vector<256x8xf32>
    %12 = tpu.matmul %10, %11, %cst_22 {dimension_numbers = #tpu.dot_dimension_numbers<[1], [0], [0], [1], [0, 0, 1, 1], [], []>} : vector<256x8xbf16>, vector<8x8xbf16>, vector<256x8xf32> -> vector<256x8xf32>
    %c0_23 = arith.constant 0 : index
    %c1_24 = arith.constant 1 : index
    %c0_25 = arith.constant 0 : index
    %13 = vector.load %arg5[%c0_23, %c1_24, %c0_25] : memref<18x18x8xbf16, #tpu.memory_space<vmem>>, vector<16x16x8xbf16>
    %14 = vector.shape_cast %13 : vector<16x16x8xbf16> to vector<256x8xbf16>
    %c8 = arith.constant 8 : index
    %c0_26 = arith.constant 0 : index
    %15 = vector.load %arg2[%c8, %c0_26] : memref<72x8xbf16, #tpu.memory_space<vmem>>, vector<8x8xbf16>
    %cst_27 = arith.constant dense<0.000000e+00> : vector<256x8xf32>
    %16 = tpu.matmul %14, %15, %cst_27 {dimension_numbers = #tpu.dot_dimension_numbers<[1], [0], [0], [1], [0, 0, 1, 1], [], []>} : vector<256x8xbf16>, vector<8x8xbf16>, vector<256x8xf32> -> vector<256x8xf32>
    %17 = arith.addf %12, %16 : vector<256x8xf32>
    %c0_28 = arith.constant 0 : index
    %c2 = arith.constant 2 : index
    %c0_29 = arith.constant 0 : index
    %18 = vector.load %arg5[%c0_28, %c2, %c0_29] : memref<18x18x8xbf16, #tpu.memory_space<vmem>>, vector<16x16x8xbf16>
    %19 = vector.shape_cast %18 : vector<16x16x8xbf16> to vector<256x8xbf16>
    %c16 = arith.constant 16 : index
    %c0_30 = arith.constant 0 : index
    %20 = vector.load %arg2[%c16, %c0_30] : memref<72x8xbf16, #tpu.memory_space<vmem>>, vector<8x8xbf16>
    %cst_31 = arith.constant dense<0.000000e+00> : vector<256x8xf32>
    %21 = tpu.matmul %19, %20, %cst_31 {dimension_numbers = #tpu.dot_dimension_numbers<[1], [0], [0], [1], [0, 0, 1, 1], [], []>} : vector<256x8xbf16>, vector<8x8xbf16>, vector<256x8xf32> -> vector<256x8xf32>
    %22 = arith.addf %17, %21 : vector<256x8xf32>
    %c1_32 = arith.constant 1 : index
    %c0_33 = arith.constant 0 : index
    %c0_34 = arith.constant 0 : index
    %23 = vector.load %arg5[%c1_32, %c0_33, %c0_34] : memref<18x18x8xbf16, #tpu.memory_space<vmem>>, vector<16x16x8xbf16>
    %24 = vector.shape_cast %23 : vector<16x16x8xbf16> to vector<256x8xbf16>
    %c24 = arith.constant 24 : index
    %c0_35 = arith.constant 0 : index
    %25 = vector.load %arg2[%c24, %c0_35] : memref<72x8xbf16, #tpu.memory_space<vmem>>, vector<8x8xbf16>
    %cst_36 = arith.constant dense<0.000000e+00> : vector<256x8xf32>
    %26 = tpu.matmul %24, %25, %cst_36 {dimension_numbers = #tpu.dot_dimension_numbers<[1], [0], [0], [1], [0, 0, 1, 1], [], []>} : vector<256x8xbf16>, vector<8x8xbf16>, vector<256x8xf32> -> vector<256x8xf32>
    %27 = arith.addf %22, %26 : vector<256x8xf32>
    %c1_37 = arith.constant 1 : index
    %c1_38 = arith.constant 1 : index
    %c0_39 = arith.constant 0 : index
    %28 = vector.load %arg5[%c1_37, %c1_38, %c0_39] : memref<18x18x8xbf16, #tpu.memory_space<vmem>>, vector<16x16x8xbf16>
    %29 = vector.shape_cast %28 : vector<16x16x8xbf16> to vector<256x8xbf16>
    %c32 = arith.constant 32 : index
    %c0_40 = arith.constant 0 : index
    %30 = vector.load %arg2[%c32, %c0_40] : memref<72x8xbf16, #tpu.memory_space<vmem>>, vector<8x8xbf16>
    %cst_41 = arith.constant dense<0.000000e+00> : vector<256x8xf32>
    %31 = tpu.matmul %29, %30, %cst_41 {dimension_numbers = #tpu.dot_dimension_numbers<[1], [0], [0], [1], [0, 0, 1, 1], [], []>} : vector<256x8xbf16>, vector<8x8xbf16>, vector<256x8xf32> -> vector<256x8xf32>
    %32 = arith.addf %27, %31 : vector<256x8xf32>
    %c1_42 = arith.constant 1 : index
    %c2_43 = arith.constant 2 : index
    %c0_44 = arith.constant 0 : index
    %33 = vector.load %arg5[%c1_42, %c2_43, %c0_44] : memref<18x18x8xbf16, #tpu.memory_space<vmem>>, vector<16x16x8xbf16>
    %34 = vector.shape_cast %33 : vector<16x16x8xbf16> to vector<256x8xbf16>
    %c40 = arith.constant 40 : index
    %c0_45 = arith.constant 0 : index
    %35 = vector.load %arg2[%c40, %c0_45] : memref<72x8xbf16, #tpu.memory_space<vmem>>, vector<8x8xbf16>
    %cst_46 = arith.constant dense<0.000000e+00> : vector<256x8xf32>
    %36 = tpu.matmul %34, %35, %cst_46 {dimension_numbers = #tpu.dot_dimension_numbers<[1], [0], [0], [1], [0, 0, 1, 1], [], []>} : vector<256x8xbf16>, vector<8x8xbf16>, vector<256x8xf32> -> vector<256x8xf32>
    %37 = arith.addf %32, %36 : vector<256x8xf32>
    %c2_47 = arith.constant 2 : index
    %c0_48 = arith.constant 0 : index
    %c0_49 = arith.constant 0 : index
    %38 = vector.load %arg5[%c2_47, %c0_48, %c0_49] : memref<18x18x8xbf16, #tpu.memory_space<vmem>>, vector<16x16x8xbf16>
    %39 = vector.shape_cast %38 : vector<16x16x8xbf16> to vector<256x8xbf16>
    %c48 = arith.constant 48 : index
    %c0_50 = arith.constant 0 : index
    %40 = vector.load %arg2[%c48, %c0_50] : memref<72x8xbf16, #tpu.memory_space<vmem>>, vector<8x8xbf16>
    %cst_51 = arith.constant dense<0.000000e+00> : vector<256x8xf32>
    %41 = tpu.matmul %39, %40, %cst_51 {dimension_numbers = #tpu.dot_dimension_numbers<[1], [0], [0], [1], [0, 0, 1, 1], [], []>} : vector<256x8xbf16>, vector<8x8xbf16>, vector<256x8xf32> -> vector<256x8xf32>
    %42 = arith.addf %37, %41 : vector<256x8xf32>
    %c2_52 = arith.constant 2 : index
    %c1_53 = arith.constant 1 : index
    %c0_54 = arith.constant 0 : index
    %43 = vector.load %arg5[%c2_52, %c1_53, %c0_54] : memref<18x18x8xbf16, #tpu.memory_space<vmem>>, vector<16x16x8xbf16>
    %44 = vector.shape_cast %43 : vector<16x16x8xbf16> to vector<256x8xbf16>
    %c56 = arith.constant 56 : index
    %c0_55 = arith.constant 0 : index
    %45 = vector.load %arg2[%c56, %c0_55] : memref<72x8xbf16, #tpu.memory_space<vmem>>, vector<8x8xbf16>
    %cst_56 = arith.constant dense<0.000000e+00> : vector<256x8xf32>
    %46 = tpu.matmul %44, %45, %cst_56 {dimension_numbers = #tpu.dot_dimension_numbers<[1], [0], [0], [1], [0, 0, 1, 1], [], []>} : vector<256x8xbf16>, vector<8x8xbf16>, vector<256x8xf32> -> vector<256x8xf32>
    %47 = arith.addf %42, %46 : vector<256x8xf32>
    %c2_57 = arith.constant 2 : index
    %c2_58 = arith.constant 2 : index
    %c0_59 = arith.constant 0 : index
    %48 = vector.load %arg5[%c2_57, %c2_58, %c0_59] : memref<18x18x8xbf16, #tpu.memory_space<vmem>>, vector<16x16x8xbf16>
    %49 = vector.shape_cast %48 : vector<16x16x8xbf16> to vector<256x8xbf16>
    %c64 = arith.constant 64 : index
    %c0_60 = arith.constant 0 : index
    %50 = vector.load %arg2[%c64, %c0_60] : memref<72x8xbf16, #tpu.memory_space<vmem>>, vector<8x8xbf16>
    %cst_61 = arith.constant dense<0.000000e+00> : vector<256x8xf32>
    %51 = tpu.matmul %49, %50, %cst_61 {dimension_numbers = #tpu.dot_dimension_numbers<[1], [0], [0], [1], [0, 0, 1, 1], [], []>} : vector<256x8xbf16>, vector<8x8xbf16>, vector<256x8xf32> -> vector<256x8xf32>
    %52 = arith.addf %47, %51 : vector<256x8xf32>
    %c0_62 = arith.constant 0 : index
    %c0_63 = arith.constant 0 : index
    %53 = vector.load %arg3[%c0_62, %c0_63] : memref<1x8xf32, #tpu.memory_space<vmem>>, vector<1x8xf32>
    %54 = vector.broadcast %53 : vector<1x8xf32> to vector<256x8xf32>
    %55 = arith.addf %52, %54 : vector<256x8xf32>
    %cst_64 = arith.constant 0.000000e+00 : f32
    %56 = vector.broadcast %cst_64 : f32 to vector<256x8xf32>
    %57 = arith.maximumf %55, %56 : vector<256x8xf32>
    %58 = vector.shape_cast %57 : vector<256x8xf32> to vector<8x2x16x8xf32>
    %59 = vector.extract_strided_slice %58 {offsets = [0, 0, 0, 0], sizes = [8, 1, 16, 8], strides = [1, 1, 1, 1]} : vector<8x2x16x8xf32> to vector<8x1x16x8xf32>
    %60 = vector.shape_cast %59 : vector<8x1x16x8xf32> to vector<8x16x8xf32>
    %61 = vector.extract_strided_slice %58 {offsets = [0, 1, 0, 0], sizes = [8, 1, 16, 8], strides = [1, 1, 1, 1]} : vector<8x2x16x8xf32> to vector<8x1x16x8xf32>
    %62 = vector.shape_cast %61 : vector<8x1x16x8xf32> to vector<8x16x8xf32>
    %63 = arith.maximumf %60, %62 : vector<8x16x8xf32>
    %c0_65 = arith.constant 0 : index
    %c0_66 = arith.constant 0 : index
    %c0_67 = arith.constant 0 : index
    %64 = vector.load %arg6[%c0_65, %c0_66, %c0_67] : memref<8x16x8xf32, #tpu.memory_space<vmem>>, vector<8x16x8xf32>
    tpu.vector_store %arg6[%c0_65, %c0_66, %c0_67], %63 {strides = array<i32>} : memref<8x16x8xf32, #tpu.memory_space<vmem>>, vector<8x16x8xf32>,
    %c0_68 = arith.constant 0 : index
    %c0_69 = arith.constant 0 : index
    %c0_70 = arith.constant 0 : index
    %65 = tpu.strided_load %arg6[%c0_68, %c0_69, %c0_70] {strides = array<i32: 1, 2, 1>} : memref<8x16x8xf32, #tpu.memory_space<vmem>>, vector<8x8x8xf32>
    %c0_71 = arith.constant 0 : index
    %c1_72 = arith.constant 1 : index
    %c0_73 = arith.constant 0 : index
    %66 = tpu.strided_load %arg6[%c0_71, %c1_72, %c0_73] {strides = array<i32: 1, 2, 1>} : memref<8x16x8xf32, #tpu.memory_space<vmem>>, vector<8x8x8xf32>
    %67 = arith.maximumf %65, %66 : vector<8x8x8xf32>
    %68 = arith.truncf %67 : vector<8x8x8xf32> to vector<8x8x8xbf16>
    %c0_74 = arith.constant 0 : index
    %c0_75 = arith.constant 0 : index
    %c0_76 = arith.constant 0 : index
    %c0_77 = arith.constant 0 : index
    %69 = vector.load %arg4[%c0_74, %c0_75, %c0_76, %c0_77] : memref<1x8x8x8xbf16, #tpu.memory_space<vmem>>, vector<1x8x8x8xbf16>
    %70 = vector.shape_cast %69 : vector<1x8x8x8xbf16> to vector<8x8x8xbf16>
    %71 = vector.shape_cast %68 : vector<8x8x8xbf16> to vector<1x8x8x8xbf16>
    tpu.vector_store %arg4[%c0_74, %c0_75, %c0_76, %c0_77], %71 {strides = array<i32>} : memref<1x8x8x8xbf16, #tpu.memory_space<vmem>>, vector<1x8x8x8xbf16>,
    return
  }
  func.func @transform_0(%arg0: i32) -> (i32, i32, i32, i32) {
    %c0_i32 = arith.constant 0 : i32
    %c0_i32_0 = arith.constant 0 : i32
    %c0_i32_1 = arith.constant 0 : i32
    %c0_i32_2 = arith.constant 0 : i32
    return %arg0, %c0_i32, %c0_i32_0, %c0_i32_1 : i32, i32, i32, i32
  }
  func.func @transform_1(%arg0: i32) -> (i32, i32) {
    %c0_i32 = arith.constant 0 : i32
    %c0_i32_0 = arith.constant 0 : i32
    %c0_i32_1 = arith.constant 0 : i32
    return %c0_i32, %c0_i32_0 : i32, i32
  }
  func.func @transform_2(%arg0: i32) -> (i32, i32) {
    %c0_i32 = arith.constant 0 : i32
    %c0_i32_0 = arith.constant 0 : i32
    %c0_i32_1 = arith.constant 0 : i32
    return %c0_i32, %c0_i32_0 : i32, i32
  }
  func.func @transform_3(%arg0: i32) -> (i32, i32, i32, i32) {
    %c0_i32 = arith.constant 0 : i32
    %c0_i32_0 = arith.constant 0 : i32
    %c0_i32_1 = arith.constant 0 : i32
    %c0_i32_2 = arith.constant 0 : i32
    return %arg0, %c0_i32, %c0_i32_0, %c0_i32_1 : i32, i32, i32, i32
  }
}

module attributes {stable_mosaic.version = 11 : i64} {
  func.func @conv3x3_bn_relu_pool_kernel(%arg0: i32, %arg1: memref<1x8x8x8xbf16, #tpu.memory_space<vmem>>, %arg2: memref<72x16xbf16, #tpu.memory_space<vmem>>, %arg3: memref<1x16xf32, #tpu.memory_space<vmem>>, %arg4: memref<1x4x4x16xbf16, #tpu.memory_space<vmem>>, %arg5: memref<10x10x8xbf16, #tpu.memory_space<vmem>>, %arg6: memref<4x8x16xf32, #tpu.memory_space<vmem>>) attributes {dimension_semantics = [#tpu.dimension_semantics<parallel>], iteration_bounds = array<i64: 2>, scalar_prefetch = 0 : i64, scratch_operands = 2 : i64, tpu.core_type = #tpu.core_type<tc>, window_params = [{transform_indices = @transform_0, window_bounds = array<i64: 1, 8, 8, 8>}, {pipeline_mode = #tpu.pipeline_mode<synchronous>, transform_indices = @transform_1, window_bounds = array<i64: 72, 16>}, {pipeline_mode = #tpu.pipeline_mode<synchronous>, transform_indices = @transform_2, window_bounds = array<i64: 1, 16>}, {transform_indices = @transform_3, window_bounds = array<i64: 1, 4, 4, 16>}]} {
    %cst = arith.constant 0.000000e+00 : bf16
    %0 = vector.broadcast %cst : bf16 to vector<1x10x8xbf16>
    %cst_0 = arith.constant 0.000000e+00 : bf16
    %1 = vector.broadcast %cst_0 : bf16 to vector<8x1x8xbf16>
    %c0 = arith.constant 0 : index
    %c0_1 = arith.constant 0 : index
    %c0_2 = arith.constant 0 : index
    %2 = vector.load %arg5[%c0, %c0_1, %c0_2] : memref<10x10x8xbf16, #tpu.memory_space<vmem>>, vector<1x10x8xbf16>
    tpu.vector_store %arg5[%c0, %c0_1, %c0_2], %0 {strides = array<i32>} : memref<10x10x8xbf16, #tpu.memory_space<vmem>>, vector<1x10x8xbf16>,
    %c9 = arith.constant 9 : index
    %c0_3 = arith.constant 0 : index
    %c0_4 = arith.constant 0 : index
    %3 = vector.load %arg5[%c9, %c0_3, %c0_4] : memref<10x10x8xbf16, #tpu.memory_space<vmem>>, vector<1x10x8xbf16>
    tpu.vector_store %arg5[%c9, %c0_3, %c0_4], %0 {strides = array<i32>} : memref<10x10x8xbf16, #tpu.memory_space<vmem>>, vector<1x10x8xbf16>,
    %c1 = arith.constant 1 : index
    %c0_5 = arith.constant 0 : index
    %c0_6 = arith.constant 0 : index
    %4 = vector.load %arg5[%c1, %c0_5, %c0_6] : memref<10x10x8xbf16, #tpu.memory_space<vmem>>, vector<8x1x8xbf16>
    tpu.vector_store %arg5[%c1, %c0_5, %c0_6], %1 {strides = array<i32>} : memref<10x10x8xbf16, #tpu.memory_space<vmem>>, vector<8x1x8xbf16>,
    %c1_7 = arith.constant 1 : index
    %c9_8 = arith.constant 9 : index
    %c0_9 = arith.constant 0 : index
    %5 = vector.load %arg5[%c1_7, %c9_8, %c0_9] : memref<10x10x8xbf16, #tpu.memory_space<vmem>>, vector<8x1x8xbf16>
    tpu.vector_store %arg5[%c1_7, %c9_8, %c0_9], %1 {strides = array<i32>} : memref<10x10x8xbf16, #tpu.memory_space<vmem>>, vector<8x1x8xbf16>,
    %c0_10 = arith.constant 0 : index
    %c0_11 = arith.constant 0 : index
    %c0_12 = arith.constant 0 : index
    %c0_13 = arith.constant 0 : index
    %6 = vector.load %arg1[%c0_10, %c0_11, %c0_12, %c0_13] : memref<1x8x8x8xbf16, #tpu.memory_space<vmem>>, vector<1x8x8x8xbf16>
    %7 = vector.shape_cast %6 : vector<1x8x8x8xbf16> to vector<8x8x8xbf16>
    %c1_14 = arith.constant 1 : index
    %c1_15 = arith.constant 1 : index
    %c0_16 = arith.constant 0 : index
    %8 = vector.load %arg5[%c1_14, %c1_15, %c0_16] : memref<10x10x8xbf16, #tpu.memory_space<vmem>>, vector<8x8x8xbf16>
    tpu.vector_store %arg5[%c1_14, %c1_15, %c0_16], %7 {strides = array<i32>} : memref<10x10x8xbf16, #tpu.memory_space<vmem>>, vector<8x8x8xbf16>,
    %c0_17 = arith.constant 0 : index
    %c0_18 = arith.constant 0 : index
    %c0_19 = arith.constant 0 : index
    %9 = vector.load %arg5[%c0_17, %c0_18, %c0_19] : memref<10x10x8xbf16, #tpu.memory_space<vmem>>, vector<8x8x8xbf16>
    %10 = vector.shape_cast %9 : vector<8x8x8xbf16> to vector<64x8xbf16>
    %c0_20 = arith.constant 0 : index
    %c0_21 = arith.constant 0 : index
    %11 = vector.load %arg2[%c0_20, %c0_21] : memref<72x16xbf16, #tpu.memory_space<vmem>>, vector<8x16xbf16>
    %cst_22 = arith.constant dense<0.000000e+00> : vector<64x16xf32>
    %12 = tpu.matmul %10, %11, %cst_22 {dimension_numbers = #tpu.dot_dimension_numbers<[1], [0], [0], [1], [0, 0, 1, 1], [], []>} : vector<64x8xbf16>, vector<8x16xbf16>, vector<64x16xf32> -> vector<64x16xf32>
    %c0_23 = arith.constant 0 : index
    %c1_24 = arith.constant 1 : index
    %c0_25 = arith.constant 0 : index
    %13 = vector.load %arg5[%c0_23, %c1_24, %c0_25] : memref<10x10x8xbf16, #tpu.memory_space<vmem>>, vector<8x8x8xbf16>
    %14 = vector.shape_cast %13 : vector<8x8x8xbf16> to vector<64x8xbf16>
    %c8 = arith.constant 8 : index
    %c0_26 = arith.constant 0 : index
    %15 = vector.load %arg2[%c8, %c0_26] : memref<72x16xbf16, #tpu.memory_space<vmem>>, vector<8x16xbf16>
    %cst_27 = arith.constant dense<0.000000e+00> : vector<64x16xf32>
    %16 = tpu.matmul %14, %15, %cst_27 {dimension_numbers = #tpu.dot_dimension_numbers<[1], [0], [0], [1], [0, 0, 1, 1], [], []>} : vector<64x8xbf16>, vector<8x16xbf16>, vector<64x16xf32> -> vector<64x16xf32>
    %17 = arith.addf %12, %16 : vector<64x16xf32>
    %c0_28 = arith.constant 0 : index
    %c2 = arith.constant 2 : index
    %c0_29 = arith.constant 0 : index
    %18 = vector.load %arg5[%c0_28, %c2, %c0_29] : memref<10x10x8xbf16, #tpu.memory_space<vmem>>, vector<8x8x8xbf16>
    %19 = vector.shape_cast %18 : vector<8x8x8xbf16> to vector<64x8xbf16>
    %c16 = arith.constant 16 : index
    %c0_30 = arith.constant 0 : index
    %20 = vector.load %arg2[%c16, %c0_30] : memref<72x16xbf16, #tpu.memory_space<vmem>>, vector<8x16xbf16>
    %cst_31 = arith.constant dense<0.000000e+00> : vector<64x16xf32>
    %21 = tpu.matmul %19, %20, %cst_31 {dimension_numbers = #tpu.dot_dimension_numbers<[1], [0], [0], [1], [0, 0, 1, 1], [], []>} : vector<64x8xbf16>, vector<8x16xbf16>, vector<64x16xf32> -> vector<64x16xf32>
    %22 = arith.addf %17, %21 : vector<64x16xf32>
    %c1_32 = arith.constant 1 : index
    %c0_33 = arith.constant 0 : index
    %c0_34 = arith.constant 0 : index
    %23 = vector.load %arg5[%c1_32, %c0_33, %c0_34] : memref<10x10x8xbf16, #tpu.memory_space<vmem>>, vector<8x8x8xbf16>
    %24 = vector.shape_cast %23 : vector<8x8x8xbf16> to vector<64x8xbf16>
    %c24 = arith.constant 24 : index
    %c0_35 = arith.constant 0 : index
    %25 = vector.load %arg2[%c24, %c0_35] : memref<72x16xbf16, #tpu.memory_space<vmem>>, vector<8x16xbf16>
    %cst_36 = arith.constant dense<0.000000e+00> : vector<64x16xf32>
    %26 = tpu.matmul %24, %25, %cst_36 {dimension_numbers = #tpu.dot_dimension_numbers<[1], [0], [0], [1], [0, 0, 1, 1], [], []>} : vector<64x8xbf16>, vector<8x16xbf16>, vector<64x16xf32> -> vector<64x16xf32>
    %27 = arith.addf %22, %26 : vector<64x16xf32>
    %c1_37 = arith.constant 1 : index
    %c1_38 = arith.constant 1 : index
    %c0_39 = arith.constant 0 : index
    %28 = vector.load %arg5[%c1_37, %c1_38, %c0_39] : memref<10x10x8xbf16, #tpu.memory_space<vmem>>, vector<8x8x8xbf16>
    %29 = vector.shape_cast %28 : vector<8x8x8xbf16> to vector<64x8xbf16>
    %c32 = arith.constant 32 : index
    %c0_40 = arith.constant 0 : index
    %30 = vector.load %arg2[%c32, %c0_40] : memref<72x16xbf16, #tpu.memory_space<vmem>>, vector<8x16xbf16>
    %cst_41 = arith.constant dense<0.000000e+00> : vector<64x16xf32>
    %31 = tpu.matmul %29, %30, %cst_41 {dimension_numbers = #tpu.dot_dimension_numbers<[1], [0], [0], [1], [0, 0, 1, 1], [], []>} : vector<64x8xbf16>, vector<8x16xbf16>, vector<64x16xf32> -> vector<64x16xf32>
    %32 = arith.addf %27, %31 : vector<64x16xf32>
    %c1_42 = arith.constant 1 : index
    %c2_43 = arith.constant 2 : index
    %c0_44 = arith.constant 0 : index
    %33 = vector.load %arg5[%c1_42, %c2_43, %c0_44] : memref<10x10x8xbf16, #tpu.memory_space<vmem>>, vector<8x8x8xbf16>
    %34 = vector.shape_cast %33 : vector<8x8x8xbf16> to vector<64x8xbf16>
    %c40 = arith.constant 40 : index
    %c0_45 = arith.constant 0 : index
    %35 = vector.load %arg2[%c40, %c0_45] : memref<72x16xbf16, #tpu.memory_space<vmem>>, vector<8x16xbf16>
    %cst_46 = arith.constant dense<0.000000e+00> : vector<64x16xf32>
    %36 = tpu.matmul %34, %35, %cst_46 {dimension_numbers = #tpu.dot_dimension_numbers<[1], [0], [0], [1], [0, 0, 1, 1], [], []>} : vector<64x8xbf16>, vector<8x16xbf16>, vector<64x16xf32> -> vector<64x16xf32>
    %37 = arith.addf %32, %36 : vector<64x16xf32>
    %c2_47 = arith.constant 2 : index
    %c0_48 = arith.constant 0 : index
    %c0_49 = arith.constant 0 : index
    %38 = vector.load %arg5[%c2_47, %c0_48, %c0_49] : memref<10x10x8xbf16, #tpu.memory_space<vmem>>, vector<8x8x8xbf16>
    %39 = vector.shape_cast %38 : vector<8x8x8xbf16> to vector<64x8xbf16>
    %c48 = arith.constant 48 : index
    %c0_50 = arith.constant 0 : index
    %40 = vector.load %arg2[%c48, %c0_50] : memref<72x16xbf16, #tpu.memory_space<vmem>>, vector<8x16xbf16>
    %cst_51 = arith.constant dense<0.000000e+00> : vector<64x16xf32>
    %41 = tpu.matmul %39, %40, %cst_51 {dimension_numbers = #tpu.dot_dimension_numbers<[1], [0], [0], [1], [0, 0, 1, 1], [], []>} : vector<64x8xbf16>, vector<8x16xbf16>, vector<64x16xf32> -> vector<64x16xf32>
    %42 = arith.addf %37, %41 : vector<64x16xf32>
    %c2_52 = arith.constant 2 : index
    %c1_53 = arith.constant 1 : index
    %c0_54 = arith.constant 0 : index
    %43 = vector.load %arg5[%c2_52, %c1_53, %c0_54] : memref<10x10x8xbf16, #tpu.memory_space<vmem>>, vector<8x8x8xbf16>
    %44 = vector.shape_cast %43 : vector<8x8x8xbf16> to vector<64x8xbf16>
    %c56 = arith.constant 56 : index
    %c0_55 = arith.constant 0 : index
    %45 = vector.load %arg2[%c56, %c0_55] : memref<72x16xbf16, #tpu.memory_space<vmem>>, vector<8x16xbf16>
    %cst_56 = arith.constant dense<0.000000e+00> : vector<64x16xf32>
    %46 = tpu.matmul %44, %45, %cst_56 {dimension_numbers = #tpu.dot_dimension_numbers<[1], [0], [0], [1], [0, 0, 1, 1], [], []>} : vector<64x8xbf16>, vector<8x16xbf16>, vector<64x16xf32> -> vector<64x16xf32>
    %47 = arith.addf %42, %46 : vector<64x16xf32>
    %c2_57 = arith.constant 2 : index
    %c2_58 = arith.constant 2 : index
    %c0_59 = arith.constant 0 : index
    %48 = vector.load %arg5[%c2_57, %c2_58, %c0_59] : memref<10x10x8xbf16, #tpu.memory_space<vmem>>, vector<8x8x8xbf16>
    %49 = vector.shape_cast %48 : vector<8x8x8xbf16> to vector<64x8xbf16>
    %c64 = arith.constant 64 : index
    %c0_60 = arith.constant 0 : index
    %50 = vector.load %arg2[%c64, %c0_60] : memref<72x16xbf16, #tpu.memory_space<vmem>>, vector<8x16xbf16>
    %cst_61 = arith.constant dense<0.000000e+00> : vector<64x16xf32>
    %51 = tpu.matmul %49, %50, %cst_61 {dimension_numbers = #tpu.dot_dimension_numbers<[1], [0], [0], [1], [0, 0, 1, 1], [], []>} : vector<64x8xbf16>, vector<8x16xbf16>, vector<64x16xf32> -> vector<64x16xf32>
    %52 = arith.addf %47, %51 : vector<64x16xf32>
    %c0_62 = arith.constant 0 : index
    %c0_63 = arith.constant 0 : index
    %53 = vector.load %arg3[%c0_62, %c0_63] : memref<1x16xf32, #tpu.memory_space<vmem>>, vector<1x16xf32>
    %54 = vector.broadcast %53 : vector<1x16xf32> to vector<64x16xf32>
    %55 = arith.addf %52, %54 : vector<64x16xf32>
    %cst_64 = arith.constant 0.000000e+00 : f32
    %56 = vector.broadcast %cst_64 : f32 to vector<64x16xf32>
    %57 = arith.maximumf %55, %56 : vector<64x16xf32>
    %58 = vector.shape_cast %57 : vector<64x16xf32> to vector<4x2x8x16xf32>
    %59 = vector.extract_strided_slice %58 {offsets = [0, 0, 0, 0], sizes = [4, 1, 8, 16], strides = [1, 1, 1, 1]} : vector<4x2x8x16xf32> to vector<4x1x8x16xf32>
    %60 = vector.shape_cast %59 : vector<4x1x8x16xf32> to vector<4x8x16xf32>
    %61 = vector.extract_strided_slice %58 {offsets = [0, 1, 0, 0], sizes = [4, 1, 8, 16], strides = [1, 1, 1, 1]} : vector<4x2x8x16xf32> to vector<4x1x8x16xf32>
    %62 = vector.shape_cast %61 : vector<4x1x8x16xf32> to vector<4x8x16xf32>
    %63 = arith.maximumf %60, %62 : vector<4x8x16xf32>
    %c0_65 = arith.constant 0 : index
    %c0_66 = arith.constant 0 : index
    %c0_67 = arith.constant 0 : index
    %64 = vector.load %arg6[%c0_65, %c0_66, %c0_67] : memref<4x8x16xf32, #tpu.memory_space<vmem>>, vector<4x8x16xf32>
    tpu.vector_store %arg6[%c0_65, %c0_66, %c0_67], %63 {strides = array<i32>} : memref<4x8x16xf32, #tpu.memory_space<vmem>>, vector<4x8x16xf32>,
    %c0_68 = arith.constant 0 : index
    %c0_69 = arith.constant 0 : index
    %c0_70 = arith.constant 0 : index
    %65 = tpu.strided_load %arg6[%c0_68, %c0_69, %c0_70] {strides = array<i32: 1, 2, 1>} : memref<4x8x16xf32, #tpu.memory_space<vmem>>, vector<4x4x16xf32>
    %c0_71 = arith.constant 0 : index
    %c1_72 = arith.constant 1 : index
    %c0_73 = arith.constant 0 : index
    %66 = tpu.strided_load %arg6[%c0_71, %c1_72, %c0_73] {strides = array<i32: 1, 2, 1>} : memref<4x8x16xf32, #tpu.memory_space<vmem>>, vector<4x4x16xf32>
    %67 = arith.maximumf %65, %66 : vector<4x4x16xf32>
    %68 = arith.truncf %67 : vector<4x4x16xf32> to vector<4x4x16xbf16>
    %c0_74 = arith.constant 0 : index
    %c0_75 = arith.constant 0 : index
    %c0_76 = arith.constant 0 : index
    %c0_77 = arith.constant 0 : index
    %69 = vector.load %arg4[%c0_74, %c0_75, %c0_76, %c0_77] : memref<1x4x4x16xbf16, #tpu.memory_space<vmem>>, vector<1x4x4x16xbf16>
    %70 = vector.shape_cast %69 : vector<1x4x4x16xbf16> to vector<4x4x16xbf16>
    %71 = vector.shape_cast %68 : vector<4x4x16xbf16> to vector<1x4x4x16xbf16>
    tpu.vector_store %arg4[%c0_74, %c0_75, %c0_76, %c0_77], %71 {strides = array<i32>} : memref<1x4x4x16xbf16, #tpu.memory_space<vmem>>, vector<1x4x4x16xbf16>,
    return
  }
  func.func @transform_0(%arg0: i32) -> (i32, i32, i32, i32) {
    %c0_i32 = arith.constant 0 : i32
    %c0_i32_0 = arith.constant 0 : i32
    %c0_i32_1 = arith.constant 0 : i32
    %c0_i32_2 = arith.constant 0 : i32
    return %arg0, %c0_i32, %c0_i32_0, %c0_i32_1 : i32, i32, i32, i32
  }
  func.func @transform_1(%arg0: i32) -> (i32, i32) {
    %c0_i32 = arith.constant 0 : i32
    %c0_i32_0 = arith.constant 0 : i32
    %c0_i32_1 = arith.constant 0 : i32
    return %c0_i32, %c0_i32_0 : i32, i32
  }
  func.func @transform_2(%arg0: i32) -> (i32, i32) {
    %c0_i32 = arith.constant 0 : i32
    %c0_i32_0 = arith.constant 0 : i32
    %c0_i32_1 = arith.constant 0 : i32
    return %c0_i32, %c0_i32_0 : i32, i32
  }
  func.func @transform_3(%arg0: i32) -> (i32, i32, i32, i32) {
    %c0_i32 = arith.constant 0 : i32
    %c0_i32_0 = arith.constant 0 : i32
    %c0_i32_1 = arith.constant 0 : i32
    %c0_i32_2 = arith.constant 0 : i32
    return %arg0, %c0_i32, %c0_i32_0, %c0_i32_1 : i32, i32, i32, i32
  }
}

module attributes {stable_mosaic.version = 11 : i64} {
  func.func @fc0_kernel(%arg0: i32, %arg1: memref<2x128xbf16, #tpu.memory_space<vmem>>, %arg2: memref<128x64xbf16, #tpu.memory_space<vmem>>, %arg3: memref<1x64xf32, #tpu.memory_space<vmem>>, %arg4: memref<2x64xbf16, #tpu.memory_space<vmem>>, %arg5: memref<2x64xf32, #tpu.memory_space<vmem>>) attributes {dimension_semantics = [#tpu.dimension_semantics<arbitrary>], iteration_bounds = array<i64: 2>, scalar_prefetch = 0 : i64, scratch_operands = 1 : i64, tpu.core_type = #tpu.core_type<tc>, window_params = [{transform_indices = @transform_0, window_bounds = array<i64: 2, 128>}, {transform_indices = @transform_1, window_bounds = array<i64: 128, 64>}, {pipeline_mode = #tpu.pipeline_mode<synchronous>, transform_indices = @transform_2, window_bounds = array<i64: 1, 64>}, {pipeline_mode = #tpu.pipeline_mode<synchronous>, transform_indices = @transform_3, window_bounds = array<i64: 2, 64>}]} {
    %c0_i32 = arith.constant 0 : i32
    %0 = arith.cmpi eq, %arg0, %c0_i32 : i32
    %1 = arith.extui %0 : i1 to i32
    %c0_i32_0 = arith.constant 0 : i32
    %2 = arith.cmpi ne, %1, %c0_i32_0 : i32
    scf.if %2 {
      %cst_9 = arith.constant 0.000000e+00 : f32
      %12 = vector.broadcast %cst_9 : f32 to vector<2x64xf32>
      %c0_10 = arith.constant 0 : index
      %c0_11 = arith.constant 0 : index
      %13 = vector.load %arg5[%c0_10, %c0_11] : memref<2x64xf32, #tpu.memory_space<vmem>>, vector<2x64xf32>
      tpu.vector_store %arg5[%c0_10, %c0_11], %12 {strides = array<i32>} : memref<2x64xf32, #tpu.memory_space<vmem>>, vector<2x64xf32>,
    } else {
    }
    %c0 = arith.constant 0 : index
    %c0_1 = arith.constant 0 : index
    %3 = vector.load %arg5[%c0, %c0_1] : memref<2x64xf32, #tpu.memory_space<vmem>>, vector<2x64xf32>
    %c0_2 = arith.constant 0 : index
    %c0_3 = arith.constant 0 : index
    %4 = vector.load %arg1[%c0_2, %c0_3] : memref<2x128xbf16, #tpu.memory_space<vmem>>, vector<2x128xbf16>
    %c0_4 = arith.constant 0 : index
    %c0_5 = arith.constant 0 : index
    %5 = vector.load %arg2[%c0_4, %c0_5] : memref<128x64xbf16, #tpu.memory_space<vmem>>, vector<128x64xbf16>
    %cst = arith.constant dense<0.000000e+00> : vector<2x64xf32>
    %6 = tpu.matmul %4, %5, %cst {dimension_numbers = #tpu.dot_dimension_numbers<[1], [0], [0], [1], [0, 0, 1, 1], [], []>} : vector<2x128xbf16>, vector<128x64xbf16>, vector<2x64xf32> -> vector<2x64xf32>
    %7 = arith.addf %3, %6 : vector<2x64xf32>
    %c0_6 = arith.constant 0 : index
    %c0_7 = arith.constant 0 : index
    %8 = vector.load %arg5[%c0_6, %c0_7] : memref<2x64xf32, #tpu.memory_space<vmem>>, vector<2x64xf32>
    tpu.vector_store %arg5[%c0_6, %c0_7], %7 {strides = array<i32>} : memref<2x64xf32, #tpu.memory_space<vmem>>, vector<2x64xf32>,
    %c1_i32 = arith.constant 1 : i32
    %9 = arith.cmpi eq, %arg0, %c1_i32 : i32
    %10 = arith.extui %9 : i1 to i32
    %c0_i32_8 = arith.constant 0 : i32
    %11 = arith.cmpi ne, %10, %c0_i32_8 : i32
    scf.if %11 {
      %c0_9 = arith.constant 0 : index
      %c0_10 = arith.constant 0 : index
      %12 = vector.load %arg5[%c0_9, %c0_10] : memref<2x64xf32, #tpu.memory_space<vmem>>, vector<2x64xf32>
      %c0_11 = arith.constant 0 : index
      %c0_12 = arith.constant 0 : index
      %13 = vector.load %arg3[%c0_11, %c0_12] : memref<1x64xf32, #tpu.memory_space<vmem>>, vector<1x64xf32>
      %14 = vector.broadcast %13 : vector<1x64xf32> to vector<2x64xf32>
      %15 = arith.addf %12, %14 : vector<2x64xf32>
      %cst_13 = arith.constant 0.000000e+00 : f32
      %16 = vector.broadcast %cst_13 : f32 to vector<2x64xf32>
      %17 = arith.maximumf %15, %16 : vector<2x64xf32>
      %18 = arith.truncf %17 : vector<2x64xf32> to vector<2x64xbf16>
      %c0_14 = arith.constant 0 : index
      %c0_15 = arith.constant 0 : index
      %19 = vector.load %arg4[%c0_14, %c0_15] : memref<2x64xbf16, #tpu.memory_space<vmem>>, vector<2x64xbf16>
      tpu.vector_store %arg4[%c0_14, %c0_15], %18 {strides = array<i32>} : memref<2x64xbf16, #tpu.memory_space<vmem>>, vector<2x64xbf16>,
    } else {
    }
    return
  }
  func.func @transform_0(%arg0: i32) -> (i32, i32) {
    %c0_i32 = arith.constant 0 : i32
    %c0_i32_0 = arith.constant 0 : i32
    return %c0_i32, %arg0 : i32, i32
  }
  func.func @transform_1(%arg0: i32) -> (i32, i32) {
    %c0_i32 = arith.constant 0 : i32
    %c0_i32_0 = arith.constant 0 : i32
    return %arg0, %c0_i32 : i32, i32
  }
  func.func @transform_2(%arg0: i32) -> (i32, i32) {
    %c0_i32 = arith.constant 0 : i32
    %c0_i32_0 = arith.constant 0 : i32
    %c0_i32_1 = arith.constant 0 : i32
    return %c0_i32, %c0_i32_0 : i32, i32
  }
  func.func @transform_3(%arg0: i32) -> (i32, i32) {
    %c0_i32 = arith.constant 0 : i32
    %c0_i32_0 = arith.constant 0 : i32
    %c0_i32_1 = arith.constant 0 : i32
    return %c0_i32, %c0_i32_0 : i32, i32
  }
}

module attributes {stable_mosaic.version = 11 : i64} {
  func.func @fc12_kernel(%arg0: i32, %arg1: memref<2x64xbf16, #tpu.memory_space<vmem>>, %arg2: memref<64x64xbf16, #tpu.memory_space<vmem>>, %arg3: memref<1x64xf32, #tpu.memory_space<vmem>>, %arg4: memref<64x10xbf16, #tpu.memory_space<vmem>>, %arg5: memref<1x10xf32, #tpu.memory_space<vmem>>, %arg6: memref<2x10xf32, #tpu.memory_space<vmem>>, %arg7: memref<2x64xf32, #tpu.memory_space<vmem>>) attributes {dimension_semantics = [#tpu.dimension_semantics<arbitrary>], iteration_bounds = array<i64: 1>, scalar_prefetch = 0 : i64, scratch_operands = 1 : i64, tpu.core_type = #tpu.core_type<tc>, window_params = [{transform_indices = @transform_0, window_bounds = array<i64: 2, 64>}, {transform_indices = @transform_1, window_bounds = array<i64: 64, 64>}, {pipeline_mode = #tpu.pipeline_mode<synchronous>, transform_indices = @transform_2, window_bounds = array<i64: 1, 64>}, {pipeline_mode = #tpu.pipeline_mode<synchronous>, transform_indices = @transform_3, window_bounds = array<i64: 64, 10>}, {pipeline_mode = #tpu.pipeline_mode<synchronous>, transform_indices = @transform_4, window_bounds = array<i64: 1, 10>}, {pipeline_mode = #tpu.pipeline_mode<synchronous>, transform_indices = @transform_5, window_bounds = array<i64: 2, 10>}]} {
    %c0_i32 = arith.constant 0 : i32
    %0 = arith.cmpi eq, %arg0, %c0_i32 : i32
    %1 = arith.extui %0 : i1 to i32
    %c0_i32_0 = arith.constant 0 : i32
    %2 = arith.cmpi ne, %1, %c0_i32_0 : i32
    scf.if %2 {
      %cst_10 = arith.constant 0.000000e+00 : f32
      %12 = vector.broadcast %cst_10 : f32 to vector<2x64xf32>
      %c0_11 = arith.constant 0 : index
      %c0_12 = arith.constant 0 : index
      %13 = vector.load %arg7[%c0_11, %c0_12] : memref<2x64xf32, #tpu.memory_space<vmem>>, vector<2x64xf32>
      tpu.vector_store %arg7[%c0_11, %c0_12], %12 {strides = array<i32>} : memref<2x64xf32, #tpu.memory_space<vmem>>, vector<2x64xf32>,
    } else {
    }
    %c0 = arith.constant 0 : index
    %c0_1 = arith.constant 0 : index
    %3 = vector.load %arg7[%c0, %c0_1] : memref<2x64xf32, #tpu.memory_space<vmem>>, vector<2x64xf32>
    %c0_2 = arith.constant 0 : index
    %c0_3 = arith.constant 0 : index
    %4 = vector.load %arg1[%c0_2, %c0_3] : memref<2x64xbf16, #tpu.memory_space<vmem>>, vector<2x64xbf16>
    %c0_4 = arith.constant 0 : index
    %c0_5 = arith.constant 0 : index
    %5 = vector.load %arg2[%c0_4, %c0_5] : memref<64x64xbf16, #tpu.memory_space<vmem>>, vector<64x64xbf16>
    %cst = arith.constant dense<0.000000e+00> : vector<2x64xf32>
    %6 = tpu.matmul %4, %5, %cst {dimension_numbers = #tpu.dot_dimension_numbers<[1], [0], [0], [1], [0, 0, 1, 1], [], []>} : vector<2x64xbf16>, vector<64x64xbf16>, vector<2x64xf32> -> vector<2x64xf32>
    %7 = arith.addf %3, %6 : vector<2x64xf32>
    %c0_6 = arith.constant 0 : index
    %c0_7 = arith.constant 0 : index
    %8 = vector.load %arg7[%c0_6, %c0_7] : memref<2x64xf32, #tpu.memory_space<vmem>>, vector<2x64xf32>
    tpu.vector_store %arg7[%c0_6, %c0_7], %7 {strides = array<i32>} : memref<2x64xf32, #tpu.memory_space<vmem>>, vector<2x64xf32>,
    %c0_i32_8 = arith.constant 0 : i32
    %9 = arith.cmpi eq, %arg0, %c0_i32_8 : i32
    %10 = arith.extui %9 : i1 to i32
    %c0_i32_9 = arith.constant 0 : i32
    %11 = arith.cmpi ne, %10, %c0_i32_9 : i32
    scf.if %11 {
      %c0_10 = arith.constant 0 : index
      %c0_11 = arith.constant 0 : index
      %12 = vector.load %arg7[%c0_10, %c0_11] : memref<2x64xf32, #tpu.memory_space<vmem>>, vector<2x64xf32>
      %c0_12 = arith.constant 0 : index
      %c0_13 = arith.constant 0 : index
      %13 = vector.load %arg3[%c0_12, %c0_13] : memref<1x64xf32, #tpu.memory_space<vmem>>, vector<1x64xf32>
      %14 = vector.broadcast %13 : vector<1x64xf32> to vector<2x64xf32>
      %15 = arith.addf %12, %14 : vector<2x64xf32>
      %cst_14 = arith.constant 0.000000e+00 : f32
      %16 = vector.broadcast %cst_14 : f32 to vector<2x64xf32>
      %17 = arith.maximumf %15, %16 : vector<2x64xf32>
      %18 = arith.truncf %17 : vector<2x64xf32> to vector<2x64xbf16>
      %c0_15 = arith.constant 0 : index
      %c0_16 = arith.constant 0 : index
      %19 = vector.load %arg4[%c0_15, %c0_16] : memref<64x10xbf16, #tpu.memory_space<vmem>>, vector<64x10xbf16>
      %cst_17 = arith.constant dense<0.000000e+00> : vector<2x10xf32>
      %20 = tpu.matmul %18, %19, %cst_17 {dimension_numbers = #tpu.dot_dimension_numbers<[1], [0], [0], [1], [0, 0, 1, 1], [], []>} : vector<2x64xbf16>, vector<64x10xbf16>, vector<2x10xf32> -> vector<2x10xf32>
      %c0_18 = arith.constant 0 : index
      %c0_19 = arith.constant 0 : index
      %21 = vector.load %arg5[%c0_18, %c0_19] : memref<1x10xf32, #tpu.memory_space<vmem>>, vector<1x10xf32>
      %22 = vector.broadcast %21 : vector<1x10xf32> to vector<2x10xf32>
      %23 = arith.addf %20, %22 : vector<2x10xf32>
      %c0_20 = arith.constant 0 : index
      %c0_21 = arith.constant 0 : index
      %24 = vector.load %arg6[%c0_20, %c0_21] : memref<2x10xf32, #tpu.memory_space<vmem>>, vector<2x10xf32>
      tpu.vector_store %arg6[%c0_20, %c0_21], %23 {strides = array<i32>} : memref<2x10xf32, #tpu.memory_space<vmem>>, vector<2x10xf32>,
    } else {
    }
    return
  }
  func.func @transform_0(%arg0: i32) -> (i32, i32) {
    %c0_i32 = arith.constant 0 : i32
    %c0_i32_0 = arith.constant 0 : i32
    return %c0_i32, %arg0 : i32, i32
  }
  func.func @transform_1(%arg0: i32) -> (i32, i32) {
    %c0_i32 = arith.constant 0 : i32
    %c0_i32_0 = arith.constant 0 : i32
    return %arg0, %c0_i32 : i32, i32
  }
  func.func @transform_2(%arg0: i32) -> (i32, i32) {
    %c0_i32 = arith.constant 0 : i32
    %c0_i32_0 = arith.constant 0 : i32
    %c0_i32_1 = arith.constant 0 : i32
    return %c0_i32, %c0_i32_0 : i32, i32
  }
  func.func @transform_3(%arg0: i32) -> (i32, i32) {
    %c0_i32 = arith.constant 0 : i32
    %c0_i32_0 = arith.constant 0 : i32
    %c0_i32_1 = arith.constant 0 : i32
    return %c0_i32, %c0_i32_0 : i32, i32
  }
  func.func @transform_4(%arg0: i32) -> (i32, i32) {
    %c0_i32 = arith.constant 0 : i32
    %c0_i32_0 = arith.constant 0 : i32
    %c0_i32_1 = arith.constant 0 : i32
    return %c0_i32, %c0_i32_0 : i32, i32
  }
  func.func @transform_5(%arg0: i32) -> (i32, i32) {
    %c0_i32 = arith.constant 0 : i32
    %c0_i32_0 = arith.constant 0 : i32
    %c0_i32_1 = arith.constant 0 : i32
    return %c0_i32, %c0_i32_0 : i32, i32
  }
}

</mosaic_0001>

<llo_original>
// kernel: vgg_forward.8
$region0: #{vgg_forward.8}
  #allocation0 [shape = 'u32[]', space=smem, size = 0x4, offset = 0x4, fixed_abs, tag = 'smem constant byte address 0x4 - core index']
  #allocation1 [shape = 'u32[72,128]{1,0:T(1,128)}', space=vmem, size = 0x9000, scoped, tag = 'internal scratch']
  #allocation2 [shape = 'f32[2,64]{1,0:T(2,128)}', space=vmem, size = 0x400, scoped, tag = 'scratch operand']
  %s0 = inlined_call_operand.vmem [shape: bf16[2,256], index: 0, kind: input, shape index: {}]
  %s1 = inlined_call_operand.vmem [shape: bf16[256,64], index: 1, kind: input, shape index: {}]
  %s2 = inlined_call_operand.vmem [shape: f32[1,64], index: 2, kind: input, shape index: {}]
  %s3 = inlined_call_operand.vmem [shape: bf16[2,64], index: 3, kind: output, shape index: {}]
  %s4 = sld [smem:[#allocation0]]
  $region53: #{vgg_forward.8} parent=0
    _
  %s6 = ssub.s32 1, %s4
  %s7 = scalar_select 0, %s6, %s4
  loop: start=0, step=1, limit=4
  $region2: #{vgg_forward.8} parent=0 // loop_pre_header
    _
  $region3: #{vgg_forward.8} parent=0 // loop_header
    %s9 = sphi 0, %s13
    %p10 = scmp.ge.s32.totalorder %s9, 4
    %s19 = sphi 0, %s21
    %s22 = sphi 0, %s19
    %s23 = sphi 0, %s22
    %s39 = sphi 0, %s23
    %s45 = sphi 0, %s47
    %s48 = sphi 0, %s45
    %s49 = sphi 0, %s48
    %s65 = sphi 0, %s49
    %s69 = sphi 0, %s69
    %s71 = sphi 0, %s69
    %s72 = sphi 0, %s71
    %s86 = sphi 0, %s72
    %s90 = sphi 0, %s90
    %s92 = sphi 0, %s90
    %s93 = sphi 0, %s92
    %s107 = sphi 0, %s93
  $region4: #{vgg_forward.8} parent=0 // loop_header_branch
    %12 = sbr.rel (%p10) target = $region8
  $region5: #{vgg_forward.8} parent=0 // loop_body
    %s14 = ssub.s32 %s9, 1
    %s15 = ssub.s32 %s9, 2
    %s16 = sadd.s32 %s9, 1
    %s17 = ssub.s32 %s9, %s16
    %p18 = scmp.eq.s32.totalorder %s17, 0
    %s20 = sadd.s32 %s19, 1
    %s21 = scalar_select %p18, %s19, %s20
    %p24 = pneg %p18
    %p25 = scmp.eq.s32.totalorder %s9, 1
    %p26 = por %p24, %p25
    %p27 = scmp.ne.s32.totalorder %s19, %s22
    %p28 = scmp.eq.s32.totalorder %s9, 0
    %p29 = por %p27, %p28
    %p30 = scmp.ne.s32.totalorder %s19, %s22
    %p31 = scmp.eq.s32.totalorder %s14, 1
    %p32 = por %p30, %p31
    %p33 = scmp.ne.s32.totalorder %s22, %s23
    %p34 = scmp.eq.s32.totalorder %s14, 0
    %p35 = por %p33, %p34
    %p36 = scmp.ne.s32.totalorder %s22, %s23
    %p37 = scmp.eq.s32.totalorder %s15, 1
    %p38 = por %p36, %p37
    %p40 = scmp.ne.s32.totalorder %s23, %s39
    %p41 = scmp.eq.s32.totalorder %s15, 0
    %p42 = por %p40, %p41
    %s43 = ssub.s32 %s9, %s16
    %p44 = scmp.eq.s32.totalorder %s43, 0
    %s46 = sadd.s32 %s45, 1
    %s47 = scalar_select %p44, %s45, %s46
    %p50 = pneg %p44
    %p51 = scmp.eq.s32.totalorder %s9, 1
    %p52 = por %p50, %p51
    %p53 = scmp.ne.s32.totalorder %s45, %s48
    %p54 = scmp.eq.s32.totalorder %s9, 0
    %p55 = por %p53, %p54
    %p56 = scmp.ne.s32.totalorder %s45, %s48
    %p57 = scmp.eq.s32.totalorder %s14, 1
    %p58 = por %p56, %p57
    %p59 = scmp.ne.s32.totalorder %s48, %s49
    %p60 = scmp.eq.s32.totalorder %s14, 0
    %p61 = por %p59, %p60
    %p62 = scmp.ne.s32.totalorder %s48, %s49
    %p63 = scmp.eq.s32.totalorder %s15, 1
    %p64 = por %p62, %p63
    %p66 = scmp.ne.s32.totalorder %s49, %s65
    %p67 = scmp.eq.s32.totalorder %s15, 0
    %p68 = por %p66, %p67
    %s70 = sadd.s32 %s69, 1
    %p73 = scmp.eq.s32.totalorder %s9, 1
    %p74 = scmp.ne.s32.totalorder %s69, %s71
    %p75 = scmp.eq.s32.totalorder %s9, 0
    %p76 = por %p74, %p75
    %p77 = scmp.ne.s32.totalorder %s69, %s71
    %p78 = scmp.eq.s32.totalorder %s14, 1
    %p79 = por %p77, %p78
    %p80 = scmp.ne.s32.totalorder %s71, %s72
    %p81 = scmp.eq.s32.totalorder %s14, 0
    %p82 = por %p80, %p81
    %p83 = scmp.ne.s32.totalorder %s71, %s72
    %p84 = scmp.eq.s32.totalorder %s15, 1
    %p85 = por %p83, %p84
    %p87 = scmp.ne.s32.totalorder %s72, %s86
    %p88 = scmp.eq.s32.totalorder %s15, 0
    %p89 = por %p87, %p88
    %s91 = sadd.s32 %s90, 1
    %p94 = scmp.eq.s32.totalorder %s9, 1
    %p95 = scmp.ne.s32.totalorder %s90, %s92
    %p96 = scmp.eq.s32.totalorder %s9, 0
    %p97 = por %p95, %p96
    %p98 = scmp.ne.s32.totalorder %s90, %s92
    %p99 = scmp.eq.s32.totalorder %s14, 1
    %p100 = por %p98, %p99
    %p101 = scmp.ne.s32.totalorder %s92, %s93
    %p102 = scmp.eq.s32.totalorder %s14, 0
    %p103 = por %p101, %p102
    %p104 = scmp.ne.s32.totalorder %s92, %s93
    %p105 = scmp.eq.s32.totalorder %s15, 1
    %p106 = por %p104, %p105
    %p108 = scmp.ne.s32.totalorder %s93, %s107
    %p109 = scmp.eq.s32.totalorder %s15, 0
    %p110 = por %p108, %p109
    %p111 = scmp.le.s32.totalorder 1, %s9
    %p112 = scmp.lt.s32.totalorder %s9, 3
    %p113 = pnand %p111, %p112
    %p114 = pneg %p113
    // Predicated region
    $region9: #{vgg_forward.8} parent=5 // pred_check
      _
    $region10: #{vgg_forward.8} parent=5 // pred_check_branch
      %116 = sbr.rel (%p113) target = $region12
    $region11: #{vgg_forward.8} parent=5 // pred_region
      %s117 = ssub.s32 %s9, 1
      // Predicated region
      $region13: #{vgg_forward.8} parent=11 // pred_check
        %p118 = pneg %p82
      $region14: #{vgg_forward.8} parent=11 // pred_check_branch
        %120 = sbr.rel (%p118) target = $region16
      $region15: #{vgg_forward.8} parent=11 // pred_region
        _
      $region16: #{vgg_forward.8} parent=11 // pred_fallthru
        _
    $region12: #{vgg_forward.8} parent=5 // pred_fallthru
      _
    %p121 = scmp.lt.s32.totalorder %s9, 2
    // Predicated region
    $region17: #{vgg_forward.8} parent=5 // pred_check
      %p122 = pneg %p121
    $region18: #{vgg_forward.8} parent=5 // pred_check_branch
      %124 = sbr.rel (%p122) target = $region20
    $region19: #{vgg_forward.8} parent=5 // pred_region
      // Predicated region
      $region21: #{vgg_forward.8} parent=19 // pred_check
        %p125 = pneg %p29
      $region22: #{vgg_forward.8} parent=19 // pred_check_branch
        %127 = sbr.rel (%p125) target = $region24
      $region23: #{vgg_forward.8} parent=19 // pred_region
        %p128 = scmp.lt.s32.totalorder %s9, 1
        %s129 = scalar_select %p128, %s9, 1
        %s130 = scalar_lea.vmem %s0, %s129
      $region24: #{vgg_forward.8} parent=19 // pred_fallthru
        _
      // Predicated region
      $region25: #{vgg_forward.8} parent=19 // pred_check
        %p131 = pneg %p55
      $region26: #{vgg_forward.8} parent=19 // pred_check_branch
        %133 = sbr.rel (%p131) target = $region28
      $region27: #{vgg_forward.8} parent=19 // pred_region
        %s134 = smul.u32 16, %s9
        %p135 = scmp.lt.s32.totalorder %s134, 31
        %s136 = scalar_select %p135, %s134, 31
        %s137 = smul.addr %s136, 4
        %s138 = scalar_lea.vmem %s1, %s137
        %s139 = smul.u32 16, %s9
      $region28: #{vgg_forward.8} parent=19 // pred_fallthru
        _
    $region20: #{vgg_forward.8} parent=5 // pred_fallthru
      _
    %p140 = scmp.le.s32.totalorder 1, %s9
    %p141 = scmp.lt.s32.totalorder %s9, 3
    %p142 = pnand %p140, %p141
    %p143 = pneg %p142
    // Predicated region
    $region29: #{vgg_forward.8} parent=5 // pred_check
      _
    $region30: #{vgg_forward.8} parent=5 // pred_check_branch
      %145 = sbr.rel (%p142) target = $region32
    $region31: #{vgg_forward.8} parent=5 // pred_region
      %s146 = ssub.s32 %s9, 1
      %p147 = scmp.lt.s32.totalorder %s14, 1
      %s148 = scalar_select %p147, %s14, 1
      %s149 = scalar_lea.vmem %s0, %s148
      %p150 = pneg %p35
      %p151 = pneg %p32
      %s152 = smul.u32 16, %s14
      %p153 = scmp.lt.s32.totalorder %s152, 31
      %s154 = scalar_select %p153, %s152, 31
      %s155 = smul.addr %s154, 4
      %s156 = scalar_lea.vmem %s1, %s155
      %p157 = pneg %p61
      %p158 = pneg %p58
      %p159 = pneg %p82
      %p160 = pneg %p79
      %p161 = pneg %p103
      %p162 = pneg %p100
      %p163 = scmp.lt.s32.totalorder %s14, 1
      %s164 = scalar_select %p163, %s14, 1
      %s165 = scalar_lea.vmem %s0, %s164
      %s166 = smul.u32 16, %s14
      %p167 = scmp.lt.s32.totalorder %s166, 31
      %s168 = scalar_select %p167, %s166, 31
      %s169 = smul.addr %s168, 4
      %s170 = scalar_lea.vmem %s1, %s169
      %s171 = smul.u32 16, %s14
      %p172 = scmp.eq.s32.totalorder %s14, 0
      // Predicated region
      $region33: #{vgg_forward.8} parent=31 // pred_check
        %p173 = pneg %p172
      $region34: #{vgg_forward.8} parent=31 // pred_check_branch
        %175 = sbr.rel (%p173) target = $region36
      $region35: #{vgg_forward.8} parent=31 // pred_region
        %vm176 = vcmask 517120
        %177 = vst.msk [vmem:[#allocation2] sm:$0x3] %vm176, 0.0
      $region36: #{vgg_forward.8} parent=31 // pred_fallthru
        _
      %v178 = vld [vmem:[#allocation2] sm:$0x3]
      %v179 = vld [vmem:[%s165] sm:$0x1]
      %v180 = vld [vmem:[%s170] sm:$0xf]
      %v181 = vld [vmem:[%s170 + $0x4] sm:$0xf]
      %v182 = vld [vmem:[%s170 + $0x8] sm:$0xf]
      %v183 = vld [vmem:[%s170 + $0xc] sm:$0xf]
      %v184 = vld [vmem:[%s170 + $0x10] sm:$0xf]
      %v185 = vld [vmem:[%s170 + $0x14] sm:$0xf]
      %v186 = vld [vmem:[%s170 + $0x18] sm:$0xf]
      %v187 = vld [vmem:[%s170 + $0x1c] sm:$0xf]
      %v188 = vld [vmem:[%s170 + $0x20] sm:$0xf]
      %v189 = vld [vmem:[%s170 + $0x24] sm:$0xf]
      %v190 = vld [vmem:[%s170 + $0x28] sm:$0xf]
      %v191 = vld [vmem:[%s170 + $0x2c] sm:$0xf]
      %v192 = vld [vmem:[%s170 + $0x30] sm:$0xf]
      %v193 = vld [vmem:[%s170 + $0x34] sm:$0xf]
      %v194 = vld [vmem:[%s170 + $0x38] sm:$0xf]
      %v195 = vld [vmem:[%s170 + $0x3c] sm:$0xf]
      %v212 = vunpack.c.l.b16 %v180
      %v213 = vunpack.c.l.b16 %v181
      %v214 = vunpack.c.l.b16 %v182
      %v215 = vunpack.c.l.b16 %v183
      %v216 = vunpack.c.l.b16 %v184
      %v217 = vunpack.c.l.b16 %v185
      %v218 = vunpack.c.l.b16 %v186
      %v219 = vunpack.c.l.b16 %v187
      %v220 = vunpack.c.l.b16 %v188
      %v221 = vunpack.c.l.b16 %v189
      %v222 = vunpack.c.l.b16 %v190
      %v223 = vunpack.c.l.b16 %v191
      %v224 = vunpack.c.l.b16 %v192
      %v225 = vunpack.c.l.b16 %v193
      %v226 = vunpack.c.l.b16 %v194
      %v227 = vunpack.c.l.b16 %v195
      %v228 = vpack.c.b16 %v213, %v212
      %v229 = vpack.c.b16 %v215, %v214
      %v230 = vpack.c.b16 %v217, %v216
      %v231 = vpack.c.b16 %v219, %v218
      %v232 = vpack.c.b16 %v221, %v220
      %v233 = vpack.c.b16 %v223, %v222
      %v234 = vpack.c.b16 %v225, %v224
      %v235 = vpack.c.b16 %v227, %v226
      %244 = vmatpush.bf16.msra.mxu0 %v235
      %245 = vmatpush.bf16.msra.mxu0 %v234
      %246 = vmatpush.bf16.msra.mxu0 %v233
      %247 = vmatpush.bf16.msra.mxu0 %v232
      %248 = vmatpush.bf16.msra.mxu0 %v231
      %249 = vmatpush.bf16.msra.mxu0 %v230
      %250 = vmatpush.bf16.msra.mxu0 %v229
      %251 = vmatpush.bf16.msra.mxu0 %v228
      %252 = vmatmul.bf16.gmra.mxu0 %v179
      %v253 = vpop.f32.mrf.mxu0
      %v254 = vadd.f32 0.0, %v253
      %v255 = vpop.f32.mrf.mxu0
      %256 = vdwg.mxu0
      %v257 = vadd.f32 %v178, %v254
      %vm258 = vcmask 517120
      %259 = vst.msk [vmem:[#allocation2] sm:$0x3] %vm258, %v257
      %p260 = scmp.eq.s32.totalorder %s14, 1
      // Predicated region
      $region37: #{vgg_forward.8} parent=31 // pred_check
        %p261 = pneg %p260
      $region38: #{vgg_forward.8} parent=31 // pred_check_branch
        %263 = sbr.rel (%p261) target = $region40
      $region39: #{vgg_forward.8} parent=31 // pred_region
        %v264 = vld [vmem:[#allocation2] sm:$0x3]
        %v265 = vld [vmem:[%s2] sm:$0x1]
        %v267 = vperm.slane %v265, 0
        %v269 = vadd.f32 %v264, %v267
        %v270 = vmax.f32 %v269, 0.0
        %v271 = vpack.c.bf16 %v270, %v270
        %vm272 = vcmask 516096
        %273 = vst.msk [vmem:[%s3] sm:$0x1] %vm272, %v271
      $region40: #{vgg_forward.8} parent=31 // pred_fallthru
        _
      // Predicated region
      $region41: #{vgg_forward.8} parent=31 // pred_check
        %p274 = pneg %p100
      $region42: #{vgg_forward.8} parent=31 // pred_check_branch
        %276 = sbr.rel (%p274) target = $region44
      $region43: #{vgg_forward.8} parent=31 // pred_region
        _
      $region44: #{vgg_forward.8} parent=31 // pred_fallthru
        _
      // Predicated region
      $region45: #{vgg_forward.8} parent=31 // pred_check
        %p277 = pneg %p100
      $region46: #{vgg_forward.8} parent=31 // pred_check_branch
        %279 = sbr.rel (%p277) target = $region48
      $region47: #{vgg_forward.8} parent=31 // pred_region
        _
      $region48: #{vgg_forward.8} parent=31 // pred_fallthru
        _
    $region32: #{vgg_forward.8} parent=5 // pred_fallthru
      _
    %p280 = scmp.le.s32.totalorder 2, %s9
    // Predicated region
    $region49: #{vgg_forward.8} parent=5 // pred_check
      %p281 = pneg %p280
    $region50: #{vgg_forward.8} parent=5 // pred_check_branch
      %283 = sbr.rel (%p281) target = $region52
    $region51: #{vgg_forward.8} parent=5 // pred_region
      %s284 = ssub.s32 %s9, 2
    $region52: #{vgg_forward.8} parent=5 // pred_fallthru
      _
  $region6: #{vgg_forward.8} parent=0 // loop_footer
    %s13 = sadd.s32 1, %s9
  $region7: #{vgg_forward.8} parent=0 // loop_footer_branch
    %8 = sbr.rel target = $region3
  $region8: #{vgg_forward.8} parent=0 // loop_exit
    _

// kernel: vgg_forward.7
$region0: #{vgg_forward.7}
  #allocation0 [shape = 'u32[]', space=smem, size = 0x4, offset = 0x4, fixed_abs, tag = 'smem constant byte address 0x4 - core index']
  #allocation1 [shape = 'u32[72,128]{1,0:T(1,128)}', space=vmem, size = 0x9000, scoped, tag = 'internal scratch']
  #allocation2 [shape = 'bf16[10,10,8]{2,1,0:T(8,128)(2,1)}', space=vmem, size = 0xa000, scoped, tag = 'scratch operand']
  #allocation3 [shape = 'f32[4,8,16]{2,1,0:T(8,128)}', space=vmem, size = 0x4000, scoped, tag = 'scratch operand']
  %s0 = inlined_call_operand.vmem [shape: bf16[2,8,8,8], index: 0, kind: input, shape index: {}]
  %s1 = inlined_call_operand.vmem [shape: bf16[72,16], index: 1, kind: input, shape index: {}]
  %s2 = inlined_call_operand.vmem [shape: f32[1,16], index: 2, kind: input, shape index: {}]
  %s3 = inlined_call_operand.vmem [shape: bf16[2,4,4,16], index: 3, kind: output, shape index: {}]
  %s4 = sld [smem:[#allocation0]]
  $region45: #{vgg_forward.7} parent=0
    _
  %s6 = ssub.s32 1, %s4
  %s7 = scalar_select 0, %s6, %s4
  loop: start=0, step=1, limit=4
  $region2: #{vgg_forward.7} parent=0 // loop_pre_header
    _
  $region3: #{vgg_forward.7} parent=0 // loop_header
    %s9 = sphi 0, %s13
    %p10 = scmp.ge.s32.totalorder %s9, 4
    %s19 = sphi 0, %s21
    %s22 = sphi 0, %s19
    %s23 = sphi 0, %s22
    %s39 = sphi 0, %s23
    %s43 = sphi 0, %s43
    %s45 = sphi 0, %s43
    %s46 = sphi 0, %s45
    %s60 = sphi 0, %s46
    %s64 = sphi 0, %s64
    %s66 = sphi 0, %s64
    %s67 = sphi 0, %s66
    %s81 = sphi 0, %s67
    %s87 = sphi 0, %s89
    %s90 = sphi 0, %s87
    %s91 = sphi 0, %s90
    %s107 = sphi 0, %s91
  $region4: #{vgg_forward.7} parent=0 // loop_header_branch
    %12 = sbr.rel (%p10) target = $region8
  $region5: #{vgg_forward.7} parent=0 // loop_body
    %s14 = ssub.s32 %s9, 1
    %s15 = ssub.s32 %s9, 2
    %s16 = sadd.s32 %s9, 1
    %s17 = ssub.s32 %s9, %s16
    %p18 = scmp.eq.s32.totalorder %s17, 0
    %s20 = sadd.s32 %s19, 1
    %s21 = scalar_select %p18, %s19, %s20
    %p24 = pneg %p18
    %p25 = scmp.eq.s32.totalorder %s9, 1
    %p26 = por %p24, %p25
    %p27 = scmp.ne.s32.totalorder %s19, %s22
    %p28 = scmp.eq.s32.totalorder %s9, 0
    %p29 = por %p27, %p28
    %p30 = scmp.ne.s32.totalorder %s19, %s22
    %p31 = scmp.eq.s32.totalorder %s14, 1
    %p32 = por %p30, %p31
    %p33 = scmp.ne.s32.totalorder %s22, %s23
    %p34 = scmp.eq.s32.totalorder %s14, 0
    %p35 = por %p33, %p34
    %p36 = scmp.ne.s32.totalorder %s22, %s23
    %p37 = scmp.eq.s32.totalorder %s15, 1
    %p38 = por %p36, %p37
    %p40 = scmp.ne.s32.totalorder %s23, %s39
    %p41 = scmp.eq.s32.totalorder %s15, 0
    %p42 = por %p40, %p41
    %s44 = sadd.s32 %s43, 1
    %p47 = scmp.eq.s32.totalorder %s9, 1
    %p48 = scmp.ne.s32.totalorder %s43, %s45
    %p49 = scmp.eq.s32.totalorder %s9, 0
    %p50 = por %p48, %p49
    %p51 = scmp.ne.s32.totalorder %s43, %s45
    %p52 = scmp.eq.s32.totalorder %s14, 1
    %p53 = por %p51, %p52
    %p54 = scmp.ne.s32.totalorder %s45, %s46
    %p55 = scmp.eq.s32.totalorder %s14, 0
    %p56 = por %p54, %p55
    %p57 = scmp.ne.s32.totalorder %s45, %s46
    %p58 = scmp.eq.s32.totalorder %s15, 1
    %p59 = por %p57, %p58
    %p61 = scmp.ne.s32.totalorder %s46, %s60
    %p62 = scmp.eq.s32.totalorder %s15, 0
    %p63 = por %p61, %p62
    %s65 = sadd.s32 %s64, 1
    %p68 = scmp.eq.s32.totalorder %s9, 1
    %p69 = scmp.ne.s32.totalorder %s64, %s66
    %p70 = scmp.eq.s32.totalorder %s9, 0
    %p71 = por %p69, %p70
    %p72 = scmp.ne.s32.totalorder %s64, %s66
    %p73 = scmp.eq.s32.totalorder %s14, 1
    %p74 = por %p72, %p73
    %p75 = scmp.ne.s32.totalorder %s66, %s67
    %p76 = scmp.eq.s32.totalorder %s14, 0
    %p77 = por %p75, %p76
    %p78 = scmp.ne.s32.totalorder %s66, %s67
    %p79 = scmp.eq.s32.totalorder %s15, 1
    %p80 = por %p78, %p79
    %p82 = scmp.ne.s32.totalorder %s67, %s81
    %p83 = scmp.eq.s32.totalorder %s15, 0
    %p84 = por %p82, %p83
    %s85 = ssub.s32 %s9, %s16
    %p86 = scmp.eq.s32.totalorder %s85, 0
    %s88 = sadd.s32 %s87, 1
    %s89 = scalar_select %p86, %s87, %s88
    %p92 = pneg %p86
    %p93 = scmp.eq.s32.totalorder %s9, 1
    %p94 = por %p92, %p93
    %p95 = scmp.ne.s32.totalorder %s87, %s90
    %p96 = scmp.eq.s32.totalorder %s9, 0
    %p97 = por %p95, %p96
    %p98 = scmp.ne.s32.totalorder %s87, %s90
    %p99 = scmp.eq.s32.totalorder %s14, 1
    %p100 = por %p98, %p99
    %p101 = scmp.ne.s32.totalorder %s90, %s91
    %p102 = scmp.eq.s32.totalorder %s14, 0
    %p103 = por %p101, %p102
    %p104 = scmp.ne.s32.totalorder %s90, %s91
    %p105 = scmp.eq.s32.totalorder %s15, 1
    %p106 = por %p104, %p105
    %p108 = scmp.ne.s32.totalorder %s91, %s107
    %p109 = scmp.eq.s32.totalorder %s15, 0
    %p110 = por %p108, %p109
    %p111 = scmp.le.s32.totalorder 1, %s9
    %p112 = scmp.lt.s32.totalorder %s9, 3
    %p113 = pnand %p111, %p112
    %p114 = pneg %p113
    // Predicated region
    $region9: #{vgg_forward.7} parent=5 // pred_check
      _
    $region10: #{vgg_forward.7} parent=5 // pred_check_branch
      %116 = sbr.rel (%p113) target = $region12
    $region11: #{vgg_forward.7} parent=5 // pred_region
      %s117 = ssub.s32 %s9, 1
      // Predicated region
      $region13: #{vgg_forward.7} parent=11 // pred_check
        %p118 = pneg %p56
      $region14: #{vgg_forward.7} parent=11 // pred_check_branch
        %120 = sbr.rel (%p118) target = $region16
      $region15: #{vgg_forward.7} parent=11 // pred_region
        _
      $region16: #{vgg_forward.7} parent=11 // pred_fallthru
        _
      // Predicated region
      $region17: #{vgg_forward.7} parent=11 // pred_check
        %p121 = pneg %p77
      $region18: #{vgg_forward.7} parent=11 // pred_check_branch
        %123 = sbr.rel (%p121) target = $region20
      $region19: #{vgg_forward.7} parent=11 // pred_region
        _
      $region20: #{vgg_forward.7} parent=11 // pred_fallthru
        _
    $region12: #{vgg_forward.7} parent=5 // pred_fallthru
      _
    %p124 = scmp.lt.s32.totalorder %s9, 2
    // Predicated region
    $region21: #{vgg_forward.7} parent=5 // pred_check
      %p125 = pneg %p124
    $region22: #{vgg_forward.7} parent=5 // pred_check_branch
      %127 = sbr.rel (%p125) target = $region24
    $region23: #{vgg_forward.7} parent=5 // pred_region
      // Predicated region
      $region25: #{vgg_forward.7} parent=23 // pred_check
        %p128 = pneg %p29
      $region26: #{vgg_forward.7} parent=23 // pred_check_branch
        %130 = sbr.rel (%p128) target = $region28
      $region27: #{vgg_forward.7} parent=23 // pred_region
        %p131 = scmp.lt.s32.totalorder %s9, 1
        %s132 = scalar_select %p131, %s9, 1
        %s133 = smul.addr %s132, 8
        %s134 = smul.addr %s133, 4
        %s135 = scalar_lea.vmem %s0, %s134
      $region28: #{vgg_forward.7} parent=23 // pred_fallthru
        _
    $region24: #{vgg_forward.7} parent=5 // pred_fallthru
      _
    %p136 = scmp.le.s32.totalorder 1, %s9
    %p137 = scmp.lt.s32.totalorder %s9, 3
    %p138 = pnand %p136, %p137
    %p139 = pneg %p138
    // Predicated region
    $region29: #{vgg_forward.7} parent=5 // pred_check
      _
    $region30: #{vgg_forward.7} parent=5 // pred_check_branch
      %141 = sbr.rel (%p138) target = $region32
    $region31: #{vgg_forward.7} parent=5 // pred_region
      %s142 = ssub.s32 %s9, 1
      %p143 = scmp.lt.s32.totalorder %s14, 1
      %s144 = scalar_select %p143, %s14, 1
      %s145 = smul.addr %s144, 8
      %s146 = smul.addr %s145, 4
      %s147 = scalar_lea.vmem %s0, %s146
      %p148 = pneg %p35
      %p149 = pneg %p32
      %p150 = pneg %p56
      %p151 = pneg %p53
      %p152 = pneg %p77
      %p153 = pneg %p74
      %p154 = pneg %p103
      %p155 = pneg %p100
      %p156 = scmp.lt.s32.totalorder %s14, 1
      %s157 = scalar_select %p156, %s14, 1
      %s158 = smul.addr %s157, 4
      %s159 = smul.addr %s158, 2
      %s160 = scalar_lea.vmem %s3, %s159
      %p161 = scmp.lt.s32.totalorder %s14, 1
      %s162 = scalar_select %p161, %s14, 1
      %s163 = smul.addr %s162, 8
      %s164 = smul.addr %s163, 4
      %s165 = scalar_lea.vmem %s0, %s164
      %p166 = scmp.lt.s32.totalorder %s14, 1
      %s167 = scalar_select %p166, %s14, 1
      %s168 = smul.addr %s167, 4
      %s169 = smul.addr %s168, 2
      %s170 = scalar_lea.vmem %s3, %s169
      %vm172 = vcmask 60416
      %173 = vst.msk [vmem:[#allocation2] sm:$0xf] %vm172, 0
      %vm174 = vcmask 57344
      %175 = vst.msk [vmem:[#allocation2 + $0x4] sm:$0x1] %vm174, 0
      %s176 = scalar_lea.vmem [#allocation2], 72
      %177 = vst.msk [vmem:[%s176] sm:$0xf] %vm172, 0
      %178 = vst.msk [vmem:[%s176 + $0x4] sm:$0x1] %vm174, 0
      %s179 = scalar_lea.vmem [#allocation2], 8
      %vm180 = vcmask 57344
      %vm181 = vsmask.f32 256
      %vm182 = vmand %vm180, %vm181
      %v183 = vld [vmem:[%s179] sm:$0x1]
      %v184 = vsel %vm182, 0, %v183
      %185 = vst [vmem:[%s179] sm:$0x1] %v184
      %v186 = vld [vmem:[%s179 + $0x8] sm:$0x1]
      %v187 = vsel %vm182, 0, %v186
      %188 = vst [vmem:[%s179 + $0x8] sm:$0x1] %v187
      %v189 = vld [vmem:[%s179 + $0x10] sm:$0x1]
      %v190 = vsel %vm182, 0, %v189
      %191 = vst [vmem:[%s179 + $0x10] sm:$0x1] %v190
      %v192 = vld [vmem:[%s179 + $0x18] sm:$0x1]
      %v193 = vsel %vm182, 0, %v192
      %194 = vst [vmem:[%s179 + $0x18] sm:$0x1] %v193
      %v195 = vld [vmem:[%s179 + $0x20] sm:$0x1]
      %v196 = vsel %vm182, 0, %v195
      %197 = vst [vmem:[%s179 + $0x20] sm:$0x1] %v196
      %v198 = vld [vmem:[%s179 + $0x28] sm:$0x1]
      %v199 = vsel %vm182, 0, %v198
      %200 = vst [vmem:[%s179 + $0x28] sm:$0x1] %v199
      %v201 = vld [vmem:[%s179 + $0x30] sm:$0x1]
      %v202 = vsel %vm182, 0, %v201
      %203 = vst [vmem:[%s179 + $0x30] sm:$0x1] %v202
      %v204 = vld [vmem:[%s179 + $0x38] sm:$0x1]
      %v205 = vsel %vm182, 0, %v204
      %206 = vst [vmem:[%s179 + $0x38] sm:$0x1] %v205
      %vm207 = vsmask.f32 7938
      %vm208 = vmand %vm180, %vm207
      %v209 = vld [vmem:[%s179 + $0x4] sm:$0x1]
      %v210 = vsel %vm208, 0, %v209
      %211 = vst [vmem:[%s179 + $0x4] sm:$0x1] %v210
      %v212 = vld [vmem:[%s179 + $0xc] sm:$0x1]
      %v213 = vsel %vm208, 0, %v212
      %214 = vst [vmem:[%s179 + $0xc] sm:$0x1] %v213
      %v215 = vld [vmem:[%s179 + $0x14] sm:$0x1]
      %v216 = vsel %vm208, 0, %v215
      %217 = vst [vmem:[%s179 + $0x14] sm:$0x1] %v216
      %v218 = vld [vmem:[%s179 + $0x1c] sm:$0x1]
      %v219 = vsel %vm208, 0, %v218
      %220 = vst [vmem:[%s179 + $0x1c] sm:$0x1] %v219
      %v221 = vld [vmem:[%s179 + $0x24] sm:$0x1]
      %v222 = vsel %vm208, 0, %v221
      %223 = vst [vmem:[%s179 + $0x24] sm:$0x1] %v222
      %v224 = vld [vmem:[%s179 + $0x2c] sm:$0x1]
      %v225 = vsel %vm208, 0, %v224
      %226 = vst [vmem:[%s179 + $0x2c] sm:$0x1] %v225
      %v227 = vld [vmem:[%s179 + $0x34] sm:$0x1]
      %v228 = vsel %vm208, 0, %v227
      %229 = vst [vmem:[%s179 + $0x34] sm:$0x1] %v228
      %v230 = vld [vmem:[%s179 + $0x3c] sm:$0x1]
      %v231 = vsel %vm208, 0, %v230
      %232 = vst [vmem:[%s179 + $0x3c] sm:$0x1] %v231
      %v233 = vld [vmem:[%s165] sm:$0xf]
      %v234 = vld [vmem:[%s165 + $0x4] sm:$0xf]
      %v235 = vld [vmem:[%s165 + $0x8] sm:$0xf]
      %v236 = vld [vmem:[%s165 + $0xc] sm:$0xf]
      %v237 = vld [vmem:[%s165 + $0x10] sm:$0xf]
      %v238 = vld [vmem:[%s165 + $0x14] sm:$0xf]
      %v239 = vld [vmem:[%s165 + $0x18] sm:$0xf]
      %v240 = vld [vmem:[%s165 + $0x1c] sm:$0xf]
      %v242 = vshrl.u32 %v233, 16
      %v244 = vrot.slane %v242, 7
      %v245 = vshll.u32 %v233, 16
      %v247 = vor.u32 %v244, %v245
      %v248 = vrot.slane %v244, 4
      %v250 = vshrl.u32 %v234, 16
      %v252 = vrot.slane %v250, 7
      %v253 = vshll.u32 %v234, 16
      %v255 = vor.u32 %v252, %v253
      %v256 = vrot.slane %v252, 4
      %v258 = vshrl.u32 %v235, 16
      %v260 = vrot.slane %v258, 7
      %v261 = vshll.u32 %v235, 16
      %v263 = vor.u32 %v260, %v261
      %v264 = vrot.slane %v260, 4
      %v266 = vshrl.u32 %v236, 16
      %v268 = vrot.slane %v266, 7
      %v269 = vshll.u32 %v236, 16
      %v271 = vor.u32 %v268, %v269
      %v272 = vrot.slane %v268, 4
      %v274 = vshrl.u32 %v237, 16
      %v276 = vrot.slane %v274, 7
      %v277 = vshll.u32 %v237, 16
      %v279 = vor.u32 %v276, %v277
      %v280 = vrot.slane %v276, 4
      %v282 = vshrl.u32 %v238, 16
      %v284 = vrot.slane %v282, 7
      %v285 = vshll.u32 %v238, 16
      %v287 = vor.u32 %v284, %v285
      %v288 = vrot.slane %v284, 4
      %v290 = vshrl.u32 %v239, 16
      %v292 = vrot.slane %v290, 7
      %v293 = vshll.u32 %v239, 16
      %v295 = vor.u32 %v292, %v293
      %v296 = vrot.slane %v292, 4
      %v298 = vshrl.u32 %v240, 16
      %v300 = vrot.slane %v298, 7
      %v301 = vshll.u32 %v240, 16
      %v303 = vor.u32 %v300, %v301
      %v304 = vrot.slane %v300, 4
      %vm321 = vcmask 60416
      %vm322 = vmand %vm321, %vm207
      %v323 = vld [vmem:[%s179] sm:$0xf]
      %v324 = vsel %vm322, %v247, %v323
      %325 = vst [vmem:[%s179] sm:$0xf] %v324
      %v326 = vld [vmem:[%s179 + $0x4] sm:$0x1]
      %v327 = vsel %vm182, %v248, %v326
      %328 = vst [vmem:[%s179 + $0x4] sm:$0x1] %v327
      %v329 = vld [vmem:[%s179 + $0x8] sm:$0xf]
      %v330 = vsel %vm322, %v255, %v329
      %331 = vst [vmem:[%s179 + $0x8] sm:$0xf] %v330
      %v332 = vld [vmem:[%s179 + $0xc] sm:$0x1]
      %v333 = vsel %vm182, %v256, %v332
      %334 = vst [vmem:[%s179 + $0xc] sm:$0x1] %v333
      %v335 = vld [vmem:[%s179 + $0x10] sm:$0xf]
      %v336 = vsel %vm322, %v263, %v335
      %337 = vst [vmem:[%s179 + $0x10] sm:$0xf] %v336
      %v338 = vld [vmem:[%s179 + $0x14] sm:$0x1]
      %v339 = vsel %vm182, %v264, %v338
      %340 = vst [vmem:[%s179 + $0x14] sm:$0x1] %v339
      %v341 = vld [vmem:[%s179 + $0x18] sm:$0xf]
      %v342 = vsel %vm322, %v271, %v341
      %343 = vst [vmem:[%s179 + $0x18] sm:$0xf] %v342
      %v344 = vld [vmem:[%s179 + $0x1c] sm:$0x1]
      %v345 = vsel %vm182, %v272, %v344
      %346 = vst [vmem:[%s179 + $0x1c] sm:$0x1] %v345
      %v347 = vld [vmem:[%s179 + $0x20] sm:$0xf]
      %v348 = vsel %vm322, %v279, %v347
      %349 = vst [vmem:[%s179 + $0x20] sm:$0xf] %v348
      %v350 = vld [vmem:[%s179 + $0x24] sm:$0x1]
      %v351 = vsel %vm182, %v280, %v350
      %352 = vst [vmem:[%s179 + $0x24] sm:$0x1] %v351
      %v353 = vld [vmem:[%s179 + $0x28] sm:$0xf]
      %v354 = vsel %vm322, %v287, %v353
      %355 = vst [vmem:[%s179 + $0x28] sm:$0xf] %v354
      %v356 = vld [vmem:[%s179 + $0x2c] sm:$0x1]
      %v357 = vsel %vm182, %v288, %v356
      %358 = vst [vmem:[%s179 + $0x2c] sm:$0x1] %v357
      %v359 = vld [vmem:[%s179 + $0x30] sm:$0xf]
      %v360 = vsel %vm322, %v295, %v359
      %361 = vst [vmem:[%s179 + $0x30] sm:$0xf] %v360
      %v362 = vld [vmem:[%s179 + $0x34] sm:$0x1]
      %v363 = vsel %vm182, %v296, %v362
      %364 = vst [vmem:[%s179 + $0x34] sm:$0x1] %v363
      %v365 = vld [vmem:[%s179 + $0x38] sm:$0xf]
      %v366 = vsel %vm322, %v303, %v365
      %367 = vst [vmem:[%s179 + $0x38] sm:$0xf] %v366
      %v368 = vld [vmem:[%s179 + $0x3c] sm:$0x1]
      %v369 = vsel %vm182, %v304, %v368
      %370 = vst [vmem:[%s179 + $0x3c] sm:$0x1] %v369
      %v371 = vld [vmem:[#allocation2] sm:$0xf]
      %v372 = vld [vmem:[#allocation2 + $0x8] sm:$0xf]
      %v373 = vld [vmem:[#allocation2 + $0x10] sm:$0xf]
      %v374 = vld [vmem:[#allocation2 + $0x18] sm:$0xf]
      %v375 = vld [vmem:[#allocation2 + $0x20] sm:$0xf]
      %v376 = vld [vmem:[#allocation2 + $0x28] sm:$0xf]
      %v377 = vld [vmem:[#allocation2 + $0x30] sm:$0xf]
      %v378 = vld [vmem:[#allocation2 + $0x38] sm:$0xf]
      %v379 = vld [vmem:[%s1] sm:$0xf]
      %v380 = vld [vmem:[#allocation2 + $0x4] sm:$0x1]
      %v381 = vld [vmem:[#allocation2 + $0xc] sm:$0x1]
      %v382 = vld [vmem:[#allocation2 + $0x14] sm:$0x1]
      %v383 = vld [vmem:[#allocation2 + $0x1c] sm:$0x1]
      %v384 = vld [vmem:[#allocation2 + $0x24] sm:$0x1]
      %v385 = vld [vmem:[#allocation2 + $0x2c] sm:$0x1]
      %v386 = vld [vmem:[#allocation2 + $0x34] sm:$0x1]
      %v387 = vld [vmem:[#allocation2 + $0x3c] sm:$0x1]
      %vm388 = vsmask.f32 3328
      %vm389 = vsmask.f32 7440
      %vm390 = vmor %vm388, %vm389
      %v392 = vshrl.u32 %v371, 16
      %v394 = vrot.slane %v392, 4
      %v395 = vshll.u32 %v371, 16
      %v397 = vrot.slane %v395, 5
      %v398 = vor.u32 %v394, %v397
      %v399 = vrot.slane %v398, 4
      %v401 = vshll.u32 %v380, 16
      %v403 = vrot.slane %v401, 5
      %v404 = vsel %vm390, %v399, %v403
      %v406 = vshrl.u32 %v372, 16
      %v408 = vrot.slane %v406, 4
      %v409 = vshll.u32 %v372, 16
      %v411 = vrot.slane %v409, 5
      %v412 = vor.u32 %v408, %v411
      %v413 = vrot.slane %v412, 4
      %v415 = vshll.u32 %v381, 16
      %v417 = vrot.slane %v415, 5
      %v418 = vsel %vm390, %v413, %v417
      %v420 = vshrl.u32 %v373, 16
      %v422 = vrot.slane %v420, 4
      %v423 = vshll.u32 %v373, 16
      %v425 = vrot.slane %v423, 5
      %v426 = vor.u32 %v422, %v425
      %v427 = vrot.slane %v426, 4
      %v429 = vshll.u32 %v382, 16
      %v431 = vrot.slane %v429, 5
      %v432 = vsel %vm390, %v427, %v431
      %v434 = vshrl.u32 %v374, 16
      %v436 = vrot.slane %v434, 4
      %v437 = vshll.u32 %v374, 16
      %v439 = vrot.slane %v437, 5
      %v440 = vor.u32 %v436, %v439
      %v441 = vrot.slane %v440, 4
      %v443 = vshll.u32 %v383, 16
      %v445 = vrot.slane %v443, 5
      %v446 = vsel %vm390, %v441, %v445
      %v448 = vshrl.u32 %v375, 16
      %v450 = vrot.slane %v448, 4
      %v451 = vshll.u32 %v375, 16
      %v453 = vrot.slane %v451, 5
      %v454 = vor.u32 %v450, %v453
      %v455 = vrot.slane %v454, 4
      %v457 = vshll.u32 %v384, 16
      %v459 = vrot.slane %v457, 5
      %v460 = vsel %vm390, %v455, %v459
      %v462 = vshrl.u32 %v376, 16
      %v464 = vrot.slane %v462, 4
      %v465 = vshll.u32 %v376, 16
      %v467 = vrot.slane %v465, 5
      %v468 = vor.u32 %v464, %v467
      %v469 = vrot.slane %v468, 4
      %v471 = vshll.u32 %v385, 16
      %v473 = vrot.slane %v471, 5
      %v474 = vsel %vm390, %v469, %v473
      %v476 = vshrl.u32 %v377, 16
      %v478 = vrot.slane %v476, 4
      %v479 = vshll.u32 %v377, 16
      %v481 = vrot.slane %v479, 5
      %v482 = vor.u32 %v478, %v481
      %v483 = vrot.slane %v482, 4
      %v485 = vshll.u32 %v386, 16
      %v487 = vrot.slane %v485, 5
      %v488 = vsel %vm390, %v483, %v487
      %v490 = vshrl.u32 %v378, 16
      %v492 = vrot.slane %v490, 4
      %v493 = vshll.u32 %v378, 16
      %v495 = vrot.slane %v493, 5
      %v496 = vor.u32 %v492, %v495
      %v497 = vrot.slane %v496, 4
      %v499 = vshll.u32 %v387, 16
      %v501 = vrot.slane %v499, 5
      %v502 = vsel %vm390, %v497, %v501
      %v503 = vld [vmem:[%s1 + $0x4] sm:$0xf]
      %v504 = vunpack.c.l.b16 %v404
      %v505 = vunpack.c.l.b16 %v418
      %v506 = vunpack.c.l.b16 %v432
      %v507 = vunpack.c.l.b16 %v446
      %v508 = vunpack.c.l.b16 %v460
      %v509 = vunpack.c.l.b16 %v474
      %v510 = vunpack.c.l.b16 %v488
      %v511 = vunpack.c.l.b16 %v502
      %v512 = vpack.c.b16 %v505, %v504
      %v513 = vpack.c.b16 %v507, %v506
      %v514 = vpack.c.b16 %v509, %v508
      %v515 = vpack.c.b16 %v511, %v510
      %vm516 = vcmask 64512
      %v518 = vsel %vm516, %v512, 0
      %v521 = vsel %vm516, %v513, 0
      %v524 = vsel %vm516, %v514, 0
      %v527 = vsel %vm516, %v515, 0
      %vm529 = vcmask 1043456
      %v531 = vsel %vm529, %v503, 0
      %533 = vmatpush.bf16.msra.mxu0 0
      %534 = vmatpush.bf16.msra.mxu0 0
      %535 = vmatpush.bf16.msra.mxu0 0
      %536 = vmatpush.bf16.msra.mxu0 0
      %537 = vmatpush.bf16.msra.mxu0 0
      %538 = vmatpush.bf16.msra.mxu0 0
      %539 = vmatpush.bf16.msra.mxu0 0
      %540 = vmatpush.bf16.msra.mxu0 %v531
      %541 = vmatmul.bf16.gmra.mxu0 %v518
      %v542 = vpop.f32.mrf.mxu0
      %v543 = vadd.f32 0.0, %v542
      %v544 = vpop.f32.mrf.mxu0
      %v545 = vadd.f32 0.0, %v544
      %546 = vmatmul.bf16.gmra.mxu0 %v521
      %v547 = vpop.f32.mrf.mxu0
      %v548 = vadd.f32 0.0, %v547
      %v549 = vpop.f32.mrf.mxu0
      %v550 = vadd.f32 0.0, %v549
      %551 = vmatmul.bf16.gmra.mxu0 %v524
      %v552 = vpop.f32.mrf.mxu0
      %v553 = vadd.f32 0.0, %v552
      %v554 = vpop.f32.mrf.mxu0
      %v555 = vadd.f32 0.0, %v554
      %556 = vmatmul.bf16.gmra.mxu0 %v527
      %v557 = vpop.f32.mrf.mxu0
      %v558 = vadd.f32 0.0, %v557
      %v559 = vpop.f32.mrf.mxu0
      %v560 = vadd.f32 0.0, %v559
      %561 = vdwg.mxu0
      %v570 = vunpack.c.l.b16 %v371
      %v571 = vunpack.c.l.b16 %v372
      %v572 = vunpack.c.l.b16 %v373
      %v573 = vunpack.c.l.b16 %v374
      %v574 = vunpack.c.l.b16 %v375
      %v575 = vunpack.c.l.b16 %v376
      %v576 = vunpack.c.l.b16 %v377
      %v577 = vunpack.c.l.b16 %v378
      %v578 = vpack.c.b16 %v571, %v570
      %v579 = vpack.c.b16 %v573, %v572
      %v580 = vpack.c.b16 %v575, %v574
      %v581 = vpack.c.b16 %v577, %v576
      %v583 = vsel %vm516, %v578, 0
      %v586 = vsel %vm516, %v579, 0
      %v589 = vsel %vm516, %v580, 0
      %v592 = vsel %vm516, %v581, 0
      %v595 = vsel %vm529, %v379, 0
      %597 = vmatpush.bf16.msra.mxu0 0
      %598 = vmatpush.bf16.msra.mxu0 0
      %599 = vmatpush.bf16.msra.mxu0 0
      %600 = vmatpush.bf16.msra.mxu0 0
      %601 = vmatpush.bf16.msra.mxu0 0
      %602 = vmatpush.bf16.msra.mxu0 0
      %603 = vmatpush.bf16.msra.mxu0 0
      %604 = vmatpush.bf16.msra.mxu0 %v595
      %605 = vmatmul.bf16.gmra.mxu0 %v583
      %v606 = vpop.f32.mrf.mxu0
      %v607 = vadd.f32 %v543, %v606
      %v608 = vpop.f32.mrf.mxu0
      %v609 = vadd.f32 %v545, %v608
      %610 = vmatmul.bf16.gmra.mxu0 %v586
      %v611 = vpop.f32.mrf.mxu0
      %v612 = vadd.f32 %v548, %v611
      %v613 = vpop.f32.mrf.mxu0
      %v614 = vadd.f32 %v550, %v613
      %615 = vmatmul.bf16.gmra.mxu0 %v589
      %v616 = vpop.f32.mrf.mxu0
      %v617 = vadd.f32 %v553, %v616
      %v618 = vpop.f32.mrf.mxu0
      %v619 = vadd.f32 %v555, %v618
      %620 = vmatmul.bf16.gmra.mxu0 %v592
      %v621 = vpop.f32.mrf.mxu0
      %v622 = vadd.f32 %v558, %v621
      %v623 = vpop.f32.mrf.mxu0
      %v624 = vadd.f32 %v560, %v623
      %625 = vdwg.mxu0
      %v626 = vld [vmem:[#allocation2] sm:$0xe]
      %v627 = vld [vmem:[#allocation2 + $0x8] sm:$0xe]
      %v628 = vld [vmem:[#allocation2 + $0x10] sm:$0xe]
      %v629 = vld [vmem:[#allocation2 + $0x18] sm:$0xe]
      %v630 = vld [vmem:[#allocation2 + $0x20] sm:$0xe]
      %v631 = vld [vmem:[#allocation2 + $0x28] sm:$0xe]
      %v632 = vld [vmem:[#allocation2 + $0x30] sm:$0xe]
      %v633 = vld [vmem:[#allocation2 + $0x38] sm:$0xe]
      %vm650 = vcmask 1042432
      %vm651 = vcmask 1046532
      %vm652 = vmor %vm650, %vm651
      %v653 = vrot.slane %v626, 5
      %v654 = vrot.slane %v653, 4
      %v655 = vrot.slane %v380, 5
      %v656 = vsel %vm652, %v654, %v655
      %v657 = vrot.slane %v627, 5
      %v658 = vrot.slane %v657, 4
      %v659 = vrot.slane %v381, 5
      %v660 = vsel %vm652, %v658, %v659
      %v661 = vrot.slane %v628, 5
      %v662 = vrot.slane %v661, 4
      %v663 = vrot.slane %v382, 5
      %v664 = vsel %vm652, %v662, %v663
      %v665 = vrot.slane %v629, 5
      %v666 = vrot.slane %v665, 4
      %v667 = vrot.slane %v383, 5
      %v668 = vsel %vm652, %v666, %v667
      %v669 = vrot.slane %v630, 5
      %v670 = vrot.slane %v669, 4
      %v671 = vrot.slane %v384, 5
      %v672 = vsel %vm652, %v670, %v671
      %v673 = vrot.slane %v631, 5
      %v674 = vrot.slane %v673, 4
      %v675 = vrot.slane %v385, 5
      %v676 = vsel %vm652, %v674, %v675
      %v677 = vrot.slane %v632, 5
      %v678 = vrot.slane %v677, 4
      %v679 = vrot.slane %v386, 5
      %v680 = vsel %vm652, %v678, %v679
      %v681 = vrot.slane %v633, 5
      %v682 = vrot.slane %v681, 4
      %v683 = vrot.slane %v387, 5
      %v684 = vsel %vm652, %v682, %v683
      %v685 = vld [vmem:[%s1 + $0x8] sm:$0xf]
      %v686 = vunpack.c.l.b16 %v656
      %v687 = vunpack.c.l.b16 %v660
      %v688 = vunpack.c.l.b16 %v664
      %v689 = vunpack.c.l.b16 %v668
      %v690 = vunpack.c.l.b16 %v672
      %v691 = vunpack.c.l.b16 %v676
      %v692 = vunpack.c.l.b16 %v680
      %v693 = vunpack.c.l.b16 %v684
      %v694 = vpack.c.b16 %v687, %v686
      %v695 = vpack.c.b16 %v689, %v688
      %v696 = vpack.c.b16 %v691, %v690
      %v697 = vpack.c.b16 %v693, %v692
      %v699 = vsel %vm516, %v694, 0
      %v702 = vsel %vm516, %v695, 0
      %v705 = vsel %vm516, %v696, 0
      %v708 = vsel %vm516, %v697, 0
      %v711 = vsel %vm529, %v685, 0
      %713 = vmatpush.bf16.msra.mxu0 0
      %714 = vmatpush.bf16.msra.mxu0 0
      %715 = vmatpush.bf16.msra.mxu0 0
      %716 = vmatpush.bf16.msra.mxu0 0
      %717 = vmatpush.bf16.msra.mxu0 0
      %718 = vmatpush.bf16.msra.mxu0 0
      %719 = vmatpush.bf16.msra.mxu0 0
      %720 = vmatpush.bf16.msra.mxu0 %v711
      %721 = vmatmul.bf16.gmra.mxu0 %v699
      %v722 = vpop.f32.mrf.mxu0
      %v723 = vadd.f32 0.0, %v722
      %v724 = vpop.f32.mrf.mxu0
      %v725 = vadd.f32 0.0, %v724
      %726 = vmatmul.bf16.gmra.mxu0 %v702
      %v727 = vpop.f32.mrf.mxu0
      %v728 = vadd.f32 0.0, %v727
      %v729 = vpop.f32.mrf.mxu0
      %v730 = vadd.f32 0.0, %v729
      %731 = vmatmul.bf16.gmra.mxu0 %v705
      %v732 = vpop.f32.mrf.mxu0
      %v733 = vadd.f32 0.0, %v732
      %v734 = vpop.f32.mrf.mxu0
      %v735 = vadd.f32 0.0, %v734
      %736 = vmatmul.bf16.gmra.mxu0 %v708
      %v737 = vpop.f32.mrf.mxu0
      %v738 = vadd.f32 0.0, %v737
      %v739 = vpop.f32.mrf.mxu0
      %v740 = vadd.f32 0.0, %v739
      %741 = vdwg.mxu0
      %v742 = vadd.f32 %v607, %v723
      %v743 = vadd.f32 %v609, %v725
      %v744 = vadd.f32 %v612, %v728
      %v745 = vadd.f32 %v614, %v730
      %v746 = vadd.f32 %v617, %v733
      %v747 = vadd.f32 %v619, %v735
      %v748 = vadd.f32 %v622, %v738
      %v749 = vadd.f32 %v624, %v740
      %v750 = vld [vmem:[%s179] sm:$0xf]
      %v751 = vld [vmem:[%s179 + $0x8] sm:$0xf]
      %v752 = vld [vmem:[%s179 + $0x10] sm:$0xf]
      %v753 = vld [vmem:[%s179 + $0x18] sm:$0xf]
      %v754 = vld [vmem:[%s179 + $0x20] sm:$0xf]
      %v755 = vld [vmem:[%s179 + $0x28] sm:$0xf]
      %v756 = vld [vmem:[%s179 + $0x30] sm:$0xf]
      %v757 = vld [vmem:[%s179 + $0x38] sm:$0xf]
      %v758 = vld [vmem:[%s1 + $0xc] sm:$0xf]
      %v767 = vunpack.c.l.b16 %v750
      %v768 = vunpack.c.l.b16 %v751
      %v769 = vunpack.c.l.b16 %v752
      %v770 = vunpack.c.l.b16 %v753
      %v771 = vunpack.c.l.b16 %v754
      %v772 = vunpack.c.l.b16 %v755
      %v773 = vunpack.c.l.b16 %v756
      %v774 = vunpack.c.l.b16 %v757
      %v775 = vpack.c.b16 %v768, %v767
      %v776 = vpack.c.b16 %v770, %v769
      %v777 = vpack.c.b16 %v772, %v771
      %v778 = vpack.c.b16 %v774, %v773
      %v780 = vsel %vm516, %v775, 0
      %v783 = vsel %vm516, %v776, 0
      %v786 = vsel %vm516, %v777, 0
      %v789 = vsel %vm516, %v778, 0
      %v792 = vsel %vm529, %v758, 0
      %794 = vmatpush.bf16.msra.mxu0 0
      %795 = vmatpush.bf16.msra.mxu0 0
      %796 = vmatpush.bf16.msra.mxu0 0
      %797 = vmatpush.bf16.msra.mxu0 0
      %798 = vmatpush.bf16.msra.mxu0 0
      %799 = vmatpush.bf16.msra.mxu0 0
      %800 = vmatpush.bf16.msra.mxu0 0
      %801 = vmatpush.bf16.msra.mxu0 %v792
      %802 = vmatmul.bf16.gmra.mxu0 %v780
      %v803 = vpop.f32.mrf.mxu0
      %v804 = vadd.f32 0.0, %v803
      %v805 = vpop.f32.mrf.mxu0
      %v806 = vadd.f32 0.0, %v805
      %807 = vmatmul.bf16.gmra.mxu0 %v783
      %v808 = vpop.f32.mrf.mxu0
      %v809 = vadd.f32 0.0, %v808
      %v810 = vpop.f32.mrf.mxu0
      %v811 = vadd.f32 0.0, %v810
      %812 = vmatmul.bf16.gmra.mxu0 %v786
      %v813 = vpop.f32.mrf.mxu0
      %v814 = vadd.f32 0.0, %v813
      %v815 = vpop.f32.mrf.mxu0
      %v816 = vadd.f32 0.0, %v815
      %817 = vmatmul.bf16.gmra.mxu0 %v789
      %v818 = vpop.f32.mrf.mxu0
      %v819 = vadd.f32 0.0, %v818
      %v820 = vpop.f32.mrf.mxu0
      %v821 = vadd.f32 0.0, %v820
      %822 = vdwg.mxu0
      %v823 = vadd.f32 %v742, %v804
      %v824 = vadd.f32 %v743, %v806
      %v825 = vadd.f32 %v744, %v809
      %v826 = vadd.f32 %v745, %v811
      %v827 = vadd.f32 %v746, %v814
      %v828 = vadd.f32 %v747, %v816
      %v829 = vadd.f32 %v748, %v819
      %v830 = vadd.f32 %v749, %v821
      %v831 = vld [vmem:[%s179] sm:$0xf]
      %v832 = vld [vmem:[%s179 + $0x4] sm:$0x1]
      %v833 = vld [vmem:[%s179 + $0x8] sm:$0xf]
      %v834 = vld [vmem:[%s179 + $0xc] sm:$0x1]
      %v835 = vld [vmem:[%s179 + $0x10] sm:$0xf]
      %v836 = vld [vmem:[%s179 + $0x14] sm:$0x1]
      %v837 = vld [vmem:[%s179 + $0x18] sm:$0xf]
      %v838 = vld [vmem:[%s179 + $0x1c] sm:$0x1]
      %v839 = vld [vmem:[%s179 + $0x20] sm:$0xf]
      %v840 = vld [vmem:[%s179 + $0x24] sm:$0x1]
      %v841 = vld [vmem:[%s179 + $0x28] sm:$0xf]
      %v842 = vld [vmem:[%s179 + $0x2c] sm:$0x1]
      %v843 = vld [vmem:[%s179 + $0x30] sm:$0xf]
      %v844 = vld [vmem:[%s179 + $0x34] sm:$0x1]
      %v845 = vld [vmem:[%s179 + $0x38] sm:$0xf]
      %v846 = vld [vmem:[%s179 + $0x3c] sm:$0x1]
      %v848 = vshrl.u32 %v831, 16
      %v850 = vrot.slane %v848, 4
      %v851 = vshll.u32 %v831, 16
      %v853 = vrot.slane %v851, 5
      %v854 = vor.u32 %v850, %v853
      %v855 = vrot.slane %v854, 4
      %v857 = vshll.u32 %v832, 16
      %v859 = vrot.slane %v857, 5
      %v860 = vsel %vm390, %v855, %v859
      %v862 = vshrl.u32 %v833, 16
      %v864 = vrot.slane %v862, 4
      %v865 = vshll.u32 %v833, 16
      %v867 = vrot.slane %v865, 5
      %v868 = vor.u32 %v864, %v867
      %v869 = vrot.slane %v868, 4
      %v871 = vshll.u32 %v834, 16
      %v873 = vrot.slane %v871, 5
      %v874 = vsel %vm390, %v869, %v873
      %v876 = vshrl.u32 %v835, 16
      %v878 = vrot.slane %v876, 4
      %v879 = vshll.u32 %v835, 16
      %v881 = vrot.slane %v879, 5
      %v882 = vor.u32 %v878, %v881
      %v883 = vrot.slane %v882, 4
      %v885 = vshll.u32 %v836, 16
      %v887 = vrot.slane %v885, 5
      %v888 = vsel %vm390, %v883, %v887
      %v890 = vshrl.u32 %v837, 16
      %v892 = vrot.slane %v890, 4
      %v893 = vshll.u32 %v837, 16
      %v895 = vrot.slane %v893, 5
      %v896 = vor.u32 %v892, %v895
      %v897 = vrot.slane %v896, 4
      %v899 = vshll.u32 %v838, 16
      %v901 = vrot.slane %v899, 5
      %v902 = vsel %vm390, %v897, %v901
      %v904 = vshrl.u32 %v839, 16
      %v906 = vrot.slane %v904, 4
      %v907 = vshll.u32 %v839, 16
      %v909 = vrot.slane %v907, 5
      %v910 = vor.u32 %v906, %v909
      %v911 = vrot.slane %v910, 4
      %v913 = vshll.u32 %v840, 16
      %v915 = vrot.slane %v913, 5
      %v916 = vsel %vm390, %v911, %v915
      %v918 = vshrl.u32 %v841, 16
      %v920 = vrot.slane %v918, 4
      %v921 = vshll.u32 %v841, 16
      %v923 = vrot.slane %v921, 5
      %v924 = vor.u32 %v920, %v923
      %v925 = vrot.slane %v924, 4
      %v927 = vshll.u32 %v842, 16
      %v929 = vrot.slane %v927, 5
      %v930 = vsel %vm390, %v925, %v929
      %v932 = vshrl.u32 %v843, 16
      %v934 = vrot.slane %v932, 4
      %v935 = vshll.u32 %v843, 16
      %v937 = vrot.slane %v935, 5
      %v938 = vor.u32 %v934, %v937
      %v939 = vrot.slane %v938, 4
      %v941 = vshll.u32 %v844, 16
      %v943 = vrot.slane %v941, 5
      %v944 = vsel %vm390, %v939, %v943
      %v946 = vshrl.u32 %v845, 16
      %v948 = vrot.slane %v946, 4
      %v949 = vshll.u32 %v845, 16
      %v951 = vrot.slane %v949, 5
      %v952 = vor.u32 %v948, %v951
      %v953 = vrot.slane %v952, 4
      %v955 = vshll.u32 %v846, 16
      %v957 = vrot.slane %v955, 5
      %v958 = vsel %vm390, %v953, %v957
      %v959 = vld [vmem:[%s1 + $0x10] sm:$0xf]
      %v960 = vunpack.c.l.b16 %v860
      %v961 = vunpack.c.l.b16 %v874
      %v962 = vunpack.c.l.b16 %v888
      %v963 = vunpack.c.l.b16 %v902
      %v964 = vunpack.c.l.b16 %v916
      %v965 = vunpack.c.l.b16 %v930
      %v966 = vunpack.c.l.b16 %v944
      %v967 = vunpack.c.l.b16 %v958
      %v968 = vpack.c.b16 %v961, %v960
      %v969 = vpack.c.b16 %v963, %v962
      %v970 = vpack.c.b16 %v965, %v964
      %v971 = vpack.c.b16 %v967, %v966
      %v973 = vsel %vm516, %v968, 0
      %v976 = vsel %vm516, %v969, 0
      %v979 = vsel %vm516, %v970, 0
      %v982 = vsel %vm516, %v971, 0
      %v985 = vsel %vm529, %v959, 0
      %987 = vmatpush.bf16.msra.mxu0 0
      %988 = vmatpush.bf16.msra.mxu0 0
      %989 = vmatpush.bf16.msra.mxu0 0
      %990 = vmatpush.bf16.msra.mxu0 0
      %991 = vmatpush.bf16.msra.mxu0 0
      %992 = vmatpush.bf16.msra.mxu0 0
      %993 = vmatpush.bf16.msra.mxu0 0
      %994 = vmatpush.bf16.msra.mxu0 %v985
      %995 = vmatmul.bf16.gmra.mxu0 %v973
      %v996 = vpop.f32.mrf.mxu0
      %v997 = vadd.f32 0.0, %v996
      %v998 = vpop.f32.mrf.mxu0
      %v999 = vadd.f32 0.0, %v998
      %1000 = vmatmul.bf16.gmra.mxu0 %v976
      %v1001 = vpop.f32.mrf.mxu0
      %v1002 = vadd.f32 0.0, %v1001
      %v1003 = vpop.f32.mrf.mxu0
      %v1004 = vadd.f32 0.0, %v1003
      %1005 = vmatmul.bf16.gmra.mxu0 %v979
      %v1006 = vpop.f32.mrf.mxu0
      %v1007 = vadd.f32 0.0, %v1006
      %v1008 = vpop.f32.mrf.mxu0
      %v1009 = vadd.f32 0.0, %v1008
      %1010 = vmatmul.bf16.gmra.mxu0 %v982
      %v1011 = vpop.f32.mrf.mxu0
      %v1012 = vadd.f32 0.0, %v1011
      %v1013 = vpop.f32.mrf.mxu0
      %v1014 = vadd.f32 0.0, %v1013
      %1015 = vdwg.mxu0
      %v1016 = vadd.f32 %v823, %v997
      %v1017 = vadd.f32 %v824, %v999
      %v1018 = vadd.f32 %v825, %v1002
      %v1019 = vadd.f32 %v826, %v1004
      %v1020 = vadd.f32 %v827, %v1007
      %v1021 = vadd.f32 %v828, %v1009
      %v1022 = vadd.f32 %v829, %v1012
      %v1023 = vadd.f32 %v830, %v1014
      %v1024 = vld [vmem:[%s179] sm:$0xe]
      %v1025 = vld [vmem:[%s179 + $0x8] sm:$0xe]
      %v1026 = vld [vmem:[%s179 + $0x10] sm:$0xe]
      %v1027 = vld [vmem:[%s179 + $0x18] sm:$0xe]
      %v1028 = vld [vmem:[%s179 + $0x20] sm:$0xe]
      %v1029 = vld [vmem:[%s179 + $0x28] sm:$0xe]
      %v1030 = vld [vmem:[%s179 + $0x30] sm:$0xe]
      %v1031 = vld [vmem:[%s179 + $0x38] sm:$0xe]
      %v1048 = vrot.slane %v1024, 5
      %v1049 = vrot.slane %v1048, 4
      %v1050 = vrot.slane %v832, 5
      %v1051 = vsel %vm652, %v1049, %v1050
      %v1052 = vrot.slane %v1025, 5
      %v1053 = vrot.slane %v1052, 4
      %v1054 = vrot.slane %v834, 5
      %v1055 = vsel %vm652, %v1053, %v1054
      %v1056 = vrot.slane %v1026, 5
      %v1057 = vrot.slane %v1056, 4
      %v1058 = vrot.slane %v836, 5
      %v1059 = vsel %vm652, %v1057, %v1058
      %v1060 = vrot.slane %v1027, 5
      %v1061 = vrot.slane %v1060, 4
      %v1062 = vrot.slane %v838, 5
      %v1063 = vsel %vm652, %v1061, %v1062
      %v1064 = vrot.slane %v1028, 5
      %v1065 = vrot.slane %v1064, 4
      %v1066 = vrot.slane %v840, 5
      %v1067 = vsel %vm652, %v1065, %v1066
      %v1068 = vrot.slane %v1029, 5
      %v1069 = vrot.slane %v1068, 4
      %v1070 = vrot.slane %v842, 5
      %v1071 = vsel %vm652, %v1069, %v1070
      %v1072 = vrot.slane %v1030, 5
      %v1073 = vrot.slane %v1072, 4
      %v1074 = vrot.slane %v844, 5
      %v1075 = vsel %vm652, %v1073, %v1074
      %v1076 = vrot.slane %v1031, 5
      %v1077 = vrot.slane %v1076, 4
      %v1078 = vrot.slane %v846, 5
      %v1079 = vsel %vm652, %v1077, %v1078
      %v1080 = vld [vmem:[%s1 + $0x14] sm:$0xf]
      %v1081 = vunpack.c.l.b16 %v1051
      %v1082 = vunpack.c.l.b16 %v1055
      %v1083 = vunpack.c.l.b16 %v1059
      %v1084 = vunpack.c.l.b16 %v1063
      %v1085 = vunpack.c.l.b16 %v1067
      %v1086 = vunpack.c.l.b16 %v1071
      %v1087 = vunpack.c.l.b16 %v1075
      %v1088 = vunpack.c.l.b16 %v1079
      %v1089 = vpack.c.b16 %v1082, %v1081
      %v1090 = vpack.c.b16 %v1084, %v1083
      %v1091 = vpack.c.b16 %v1086, %v1085
      %v1092 = vpack.c.b16 %v1088, %v1087
      %v1094 = vsel %vm516, %v1089, 0
      %v1097 = vsel %vm516, %v1090, 0
      %v1100 = vsel %vm516, %v1091, 0
      %v1103 = vsel %vm516, %v1092, 0
      %v1106 = vsel %vm529, %v1080, 0
      %1108 = vmatpush.bf16.msra.mxu0 0
      %1109 = vmatpush.bf16.msra.mxu0 0
      %1110 = vmatpush.bf16.msra.mxu0 0
      %1111 = vmatpush.bf16.msra.mxu0 0
      %1112 = vmatpush.bf16.msra.mxu0 0
      %1113 = vmatpush.bf16.msra.mxu0 0
      %1114 = vmatpush.bf16.msra.mxu0 0
      %1115 = vmatpush.bf16.msra.mxu0 %v1106
      %1116 = vmatmul.bf16.gmra.mxu0 %v1094
      %v1117 = vpop.f32.mrf.mxu0
      %v1118 = vadd.f32 0.0, %v1117
      %v1119 = vpop.f32.mrf.mxu0
      %v1120 = vadd.f32 0.0, %v1119
      %1121 = vmatmul.bf16.gmra.mxu0 %v1097
      %v1122 = vpop.f32.mrf.mxu0
      %v1123 = vadd.f32 0.0, %v1122
      %v1124 = vpop.f32.mrf.mxu0
      %v1125 = vadd.f32 0.0, %v1124
      %1126 = vmatmul.bf16.gmra.mxu0 %v1100
      %v1127 = vpop.f32.mrf.mxu0
      %v1128 = vadd.f32 0.0, %v1127
      %v1129 = vpop.f32.mrf.mxu0
      %v1130 = vadd.f32 0.0, %v1129
      %1131 = vmatmul.bf16.gmra.mxu0 %v1103
      %v1132 = vpop.f32.mrf.mxu0
      %v1133 = vadd.f32 0.0, %v1132
      %v1134 = vpop.f32.mrf.mxu0
      %v1135 = vadd.f32 0.0, %v1134
      %1136 = vdwg.mxu0
      %v1137 = vadd.f32 %v1016, %v1118
      %v1138 = vadd.f32 %v1017, %v1120
      %v1139 = vadd.f32 %v1018, %v1123
      %v1140 = vadd.f32 %v1019, %v1125
      %v1141 = vadd.f32 %v1020, %v1128
      %v1142 = vadd.f32 %v1021, %v1130
      %v1143 = vadd.f32 %v1022, %v1133
      %v1144 = vadd.f32 %v1023, %v1135
      %s1145 = scalar_lea.vmem [#allocation2], 16
      %v1146 = vld [vmem:[%s1145] sm:$0xf]
      %v1147 = vld [vmem:[%s1145 + $0x8] sm:$0xf]
      %v1148 = vld [vmem:[%s1145 + $0x10] sm:$0xf]
      %v1149 = vld [vmem:[%s1145 + $0x18] sm:$0xf]
      %v1150 = vld [vmem:[%s1145 + $0x20] sm:$0xf]
      %v1151 = vld [vmem:[%s1145 + $0x28] sm:$0xf]
      %v1152 = vld [vmem:[%s1145 + $0x30] sm:$0xf]
      %v1153 = vld [vmem:[%s1145 + $0x38] sm:$0xf]
      %v1154 = vld [vmem:[%s1 + $0x18] sm:$0xf]
      %v1163 = vunpack.c.l.b16 %v1146
      %v1164 = vunpack.c.l.b16 %v1147
      %v1165 = vunpack.c.l.b16 %v1148
      %v1166 = vunpack.c.l.b16 %v1149
      %v1167 = vunpack.c.l.b16 %v1150
      %v1168 = vunpack.c.l.b16 %v1151
      %v1169 = vunpack.c.l.b16 %v1152
      %v1170 = vunpack.c.l.b16 %v1153
      %v1171 = vpack.c.b16 %v1164, %v1163
      %v1172 = vpack.c.b16 %v1166, %v1165
      %v1173 = vpack.c.b16 %v1168, %v1167
      %v1174 = vpack.c.b16 %v1170, %v1169
      %v1176 = vsel %vm516, %v1171, 0
      %v1179 = vsel %vm516, %v1172, 0
      %v1182 = vsel %vm516, %v1173, 0
      %v1185 = vsel %vm516, %v1174, 0
      %v1188 = vsel %vm529, %v1154, 0
      %1190 = vmatpush.bf16.msra.mxu0 0
      %1191 = vmatpush.bf16.msra.mxu0 0
      %1192 = vmatpush.bf16.msra.mxu0 0
      %1193 = vmatpush.bf16.msra.mxu0 0
      %1194 = vmatpush.bf16.msra.mxu0 0
      %1195 = vmatpush.bf16.msra.mxu0 0
      %1196 = vmatpush.bf16.msra.mxu0 0
      %1197 = vmatpush.bf16.msra.mxu0 %v1188
      %1198 = vmatmul.bf16.gmra.mxu0 %v1176
      %v1199 = vpop.f32.mrf.mxu0
      %v1200 = vadd.f32 0.0, %v1199
      %v1201 = vpop.f32.mrf.mxu0
      %v1202 = vadd.f32 0.0, %v1201
      %1203 = vmatmul.bf16.gmra.mxu0 %v1179
      %v1204 = vpop.f32.mrf.mxu0
      %v1205 = vadd.f32 0.0, %v1204
      %v1206 = vpop.f32.mrf.mxu0
      %v1207 = vadd.f32 0.0, %v1206
      %1208 = vmatmul.bf16.gmra.mxu0 %v1182
      %v1209 = vpop.f32.mrf.mxu0
      %v1210 = vadd.f32 0.0, %v1209
      %v1211 = vpop.f32.mrf.mxu0
      %v1212 = vadd.f32 0.0, %v1211
      %1213 = vmatmul.bf16.gmra.mxu0 %v1185
      %v1214 = vpop.f32.mrf.mxu0
      %v1215 = vadd.f32 0.0, %v1214
      %v1216 = vpop.f32.mrf.mxu0
      %v1217 = vadd.f32 0.0, %v1216
      %1218 = vdwg.mxu0
      %v1219 = vadd.f32 %v1137, %v1200
      %v1220 = vadd.f32 %v1138, %v1202
      %v1221 = vadd.f32 %v1139, %v1205
      %v1222 = vadd.f32 %v1140, %v1207
      %v1223 = vadd.f32 %v1141, %v1210
      %v1224 = vadd.f32 %v1142, %v1212
      %v1225 = vadd.f32 %v1143, %v1215
      %v1226 = vadd.f32 %v1144, %v1217
      %v1227 = vld [vmem:[%s1145] sm:$0xf]
      %v1228 = vld [vmem:[%s1145 + $0x4] sm:$0x1]
      %v1229 = vld [vmem:[%s1145 + $0x8] sm:$0xf]
      %v1230 = vld [vmem:[%s1145 + $0xc] sm:$0x1]
      %v1231 = vld [vmem:[%s1145 + $0x10] sm:$0xf]
      %v1232 = vld [vmem:[%s1145 + $0x14] sm:$0x1]
      %v1233 = vld [vmem:[%s1145 + $0x18] sm:$0xf]
      %v1234 = vld [vmem:[%s1145 + $0x1c] sm:$0x1]
      %v1235 = vld [vmem:[%s1145 + $0x20] sm:$0xf]
      %v1236 = vld [vmem:[%s1145 + $0x24] sm:$0x1]
      %v1237 = vld [vmem:[%s1145 + $0x28] sm:$0xf]
      %v1238 = vld [vmem:[%s1145 + $0x2c] sm:$0x1]
      %v1239 = vld [vmem:[%s1145 + $0x30] sm:$0xf]
      %v1240 = vld [vmem:[%s1145 + $0x34] sm:$0x1]
      %v1241 = vld [vmem:[%s1145 + $0x38] sm:$0xf]
      %v1242 = vld [vmem:[%s1145 + $0x3c] sm:$0x1]
      %v1244 = vshrl.u32 %v1227, 16
      %v1246 = vrot.slane %v1244, 4
      %v1247 = vshll.u32 %v1227, 16
      %v1249 = vrot.slane %v1247, 5
      %v1250 = vor.u32 %v1246, %v1249
      %v1251 = vrot.slane %v1250, 4
      %v1253 = vshll.u32 %v1228, 16
      %v1255 = vrot.slane %v1253, 5
      %v1256 = vsel %vm390, %v1251, %v1255
      %v1258 = vshrl.u32 %v1229, 16
      %v1260 = vrot.slane %v1258, 4
      %v1261 = vshll.u32 %v1229, 16
      %v1263 = vrot.slane %v1261, 5
      %v1264 = vor.u32 %v1260, %v1263
      %v1265 = vrot.slane %v1264, 4
      %v1267 = vshll.u32 %v1230, 16
      %v1269 = vrot.slane %v1267, 5
      %v1270 = vsel %vm390, %v1265, %v1269
      %v1272 = vshrl.u32 %v1231, 16
      %v1274 = vrot.slane %v1272, 4
      %v1275 = vshll.u32 %v1231, 16
      %v1277 = vrot.slane %v1275, 5
      %v1278 = vor.u32 %v1274, %v1277
      %v1279 = vrot.slane %v1278, 4
      %v1281 = vshll.u32 %v1232, 16
      %v1283 = vrot.slane %v1281, 5
      %v1284 = vsel %vm390, %v1279, %v1283
      %v1286 = vshrl.u32 %v1233, 16
      %v1288 = vrot.slane %v1286, 4
      %v1289 = vshll.u32 %v1233, 16
      %v1291 = vrot.slane %v1289, 5
      %v1292 = vor.u32 %v1288, %v1291
      %v1293 = vrot.slane %v1292, 4
      %v1295 = vshll.u32 %v1234, 16
      %v1297 = vrot.slane %v1295, 5
      %v1298 = vsel %vm390, %v1293, %v1297
      %v1300 = vshrl.u32 %v1235, 16
      %v1302 = vrot.slane %v1300, 4
      %v1303 = vshll.u32 %v1235, 16
      %v1305 = vrot.slane %v1303, 5
      %v1306 = vor.u32 %v1302, %v1305
      %v1307 = vrot.slane %v1306, 4
      %v1309 = vshll.u32 %v1236, 16
      %v1311 = vrot.slane %v1309, 5
      %v1312 = vsel %vm390, %v1307, %v1311
      %v1314 = vshrl.u32 %v1237, 16
      %v1316 = vrot.slane %v1314, 4
      %v1317 = vshll.u32 %v1237, 16
      %v1319 = vrot.slane %v1317, 5
      %v1320 = vor.u32 %v1316, %v1319
      %v1321 = vrot.slane %v1320, 4
      %v1323 = vshll.u32 %v1238, 16
      %v1325 = vrot.slane %v1323, 5
      %v1326 = vsel %vm390, %v1321, %v1325
      %v1328 = vshrl.u32 %v1239, 16
      %v1330 = vrot.slane %v1328, 4
      %v1331 = vshll.u32 %v1239, 16
      %v1333 = vrot.slane %v1331, 5
      %v1334 = vor.u32 %v1330, %v1333
      %v1335 = vrot.slane %v1334, 4
      %v1337 = vshll.u32 %v1240, 16
      %v1339 = vrot.slane %v1337, 5
      %v1340 = vsel %vm390, %v1335, %v1339
      %v1342 = vshrl.u32 %v1241, 16
      %v1344 = vrot.slane %v1342, 4
      %v1345 = vshll.u32 %v1241, 16
      %v1347 = vrot.slane %v1345, 5
      %v1348 = vor.u32 %v1344, %v1347
      %v1349 = vrot.slane %v1348, 4
      %v1351 = vshll.u32 %v1242, 16
      %v1353 = vrot.slane %v1351, 5
      %v1354 = vsel %vm390, %v1349, %v1353
      %v1355 = vld [vmem:[%s1 + $0x1c] sm:$0xf]
      %v1356 = vunpack.c.l.b16 %v1256
      %v1357 = vunpack.c.l.b16 %v1270
      %v1358 = vunpack.c.l.b16 %v1284
      %v1359 = vunpack.c.l.b16 %v1298
      %v1360 = vunpack.c.l.b16 %v1312
      %v1361 = vunpack.c.l.b16 %v1326
      %v1362 = vunpack.c.l.b16 %v1340
      %v1363 = vunpack.c.l.b16 %v1354
      %v1364 = vpack.c.b16 %v1357, %v1356
      %v1365 = vpack.c.b16 %v1359, %v1358
      %v1366 = vpack.c.b16 %v1361, %v1360
      %v1367 = vpack.c.b16 %v1363, %v1362
      %v1369 = vsel %vm516, %v1364, 0
      %v1372 = vsel %vm516, %v1365, 0
      %v1375 = vsel %vm516, %v1366, 0
      %v1378 = vsel %vm516, %v1367, 0
      %v1381 = vsel %vm529, %v1355, 0
      %1383 = vmatpush.bf16.msra.mxu0 0
      %1384 = vmatpush.bf16.msra.mxu0 0
      %1385 = vmatpush.bf16.msra.mxu0 0
      %1386 = vmatpush.bf16.msra.mxu0 0
      %1387 = vmatpush.bf16.msra.mxu0 0
      %1388 = vmatpush.bf16.msra.mxu0 0
      %1389 = vmatpush.bf16.msra.mxu0 0
      %1390 = vmatpush.bf16.msra.mxu0 %v1381
      %1391 = vmatmul.bf16.gmra.mxu0 %v1369
      %v1392 = vpop.f32.mrf.mxu0
      %v1393 = vadd.f32 0.0, %v1392
      %v1394 = vpop.f32.mrf.mxu0
      %v1395 = vadd.f32 0.0, %v1394
      %1396 = vmatmul.bf16.gmra.mxu0 %v1372
      %v1397 = vpop.f32.mrf.mxu0
      %v1398 = vadd.f32 0.0, %v1397
      %v1399 = vpop.f32.mrf.mxu0
      %v1400 = vadd.f32 0.0, %v1399
      %1401 = vmatmul.bf16.gmra.mxu0 %v1375
      %v1402 = vpop.f32.mrf.mxu0
      %v1403 = vadd.f32 0.0, %v1402
      %v1404 = vpop.f32.mrf.mxu0
      %v1405 = vadd.f32 0.0, %v1404
      %1406 = vmatmul.bf16.gmra.mxu0 %v1378
      %v1407 = vpop.f32.mrf.mxu0
      %v1408 = vadd.f32 0.0, %v1407
      %v1409 = vpop.f32.mrf.mxu0
      %v1410 = vadd.f32 0.0, %v1409
      %1411 = vdwg.mxu0
      %v1412 = vadd.f32 %v1219, %v1393
      %v1413 = vadd.f32 %v1220, %v1395
      %v1414 = vadd.f32 %v1221, %v1398
      %v1415 = vadd.f32 %v1222, %v1400
      %v1416 = vadd.f32 %v1223, %v1403
      %v1417 = vadd.f32 %v1224, %v1405
      %v1418 = vadd.f32 %v1225, %v1408
      %v1419 = vadd.f32 %v1226, %v1410
      %v1420 = vld [vmem:[%s1145] sm:$0xe]
      %v1421 = vld [vmem:[%s1145 + $0x8] sm:$0xe]
      %v1422 = vld [vmem:[%s1145 + $0x10] sm:$0xe]
      %v1423 = vld [vmem:[%s1145 + $0x18] sm:$0xe]
      %v1424 = vld [vmem:[%s1145 + $0x20] sm:$0xe]
      %v1425 = vld [vmem:[%s1145 + $0x28] sm:$0xe]
      %v1426 = vld [vmem:[%s1145 + $0x30] sm:$0xe]
      %v1427 = vld [vmem:[%s1145 + $0x38] sm:$0xe]
      %v1444 = vrot.slane %v1420, 5
      %v1445 = vrot.slane %v1444, 4
      %v1446 = vrot.slane %v1228, 5
      %v1447 = vsel %vm652, %v1445, %v1446
      %v1448 = vrot.slane %v1421, 5
      %v1449 = vrot.slane %v1448, 4
      %v1450 = vrot.slane %v1230, 5
      %v1451 = vsel %vm652, %v1449, %v1450
      %v1452 = vrot.slane %v1422, 5
      %v1453 = vrot.slane %v1452, 4
      %v1454 = vrot.slane %v1232, 5
      %v1455 = vsel %vm652, %v1453, %v1454
      %v1456 = vrot.slane %v1423, 5
      %v1457 = vrot.slane %v1456, 4
      %v1458 = vrot.slane %v1234, 5
      %v1459 = vsel %vm652, %v1457, %v1458
      %v1460 = vrot.slane %v1424, 5
      %v1461 = vrot.slane %v1460, 4
      %v1462 = vrot.slane %v1236, 5
      %v1463 = vsel %vm652, %v1461, %v1462
      %v1464 = vrot.slane %v1425, 5
      %v1465 = vrot.slane %v1464, 4
      %v1466 = vrot.slane %v1238, 5
      %v1467 = vsel %vm652, %v1465, %v1466
      %v1468 = vrot.slane %v1426, 5
      %v1469 = vrot.slane %v1468, 4
      %v1470 = vrot.slane %v1240, 5
      %v1471 = vsel %vm652, %v1469, %v1470
      %v1472 = vrot.slane %v1427, 5
      %v1473 = vrot.slane %v1472, 4
      %v1474 = vrot.slane %v1242, 5
      %v1475 = vsel %vm652, %v1473, %v1474
      %v1476 = vld [vmem:[%s1 + $0x20] sm:$0xf]
      %v1477 = vunpack.c.l.b16 %v1447
      %v1478 = vunpack.c.l.b16 %v1451
      %v1479 = vunpack.c.l.b16 %v1455
      %v1480 = vunpack.c.l.b16 %v1459
      %v1481 = vunpack.c.l.b16 %v1463
      %v1482 = vunpack.c.l.b16 %v1467
      %v1483 = vunpack.c.l.b16 %v1471
      %v1484 = vunpack.c.l.b16 %v1475
      %v1485 = vpack.c.b16 %v1478, %v1477
      %v1486 = vpack.c.b16 %v1480, %v1479
      %v1487 = vpack.c.b16 %v1482, %v1481
      %v1488 = vpack.c.b16 %v1484, %v1483
      %v1490 = vsel %vm516, %v1485, 0
      %v1493 = vsel %vm516, %v1486, 0
      %v1496 = vsel %vm516, %v1487, 0
      %v1499 = vsel %vm516, %v1488, 0
      %v1502 = vsel %vm529, %v1476, 0
      %1504 = vmatpush.bf16.msra.mxu0 0
      %1505 = vmatpush.bf16.msra.mxu0 0
      %1506 = vmatpush.bf16.msra.mxu0 0
      %1507 = vmatpush.bf16.msra.mxu0 0
      %1508 = vmatpush.bf16.msra.mxu0 0
      %1509 = vmatpush.bf16.msra.mxu0 0
      %1510 = vmatpush.bf16.msra.mxu0 0
      %1511 = vmatpush.bf16.msra.mxu0 %v1502
      %1512 = vmatmul.bf16.gmra.mxu0 %v1490
      %v1513 = vpop.f32.mrf.mxu0
      %v1514 = vadd.f32 0.0, %v1513
      %v1515 = vpop.f32.mrf.mxu0
      %v1516 = vadd.f32 0.0, %v1515
      %1517 = vmatmul.bf16.gmra.mxu0 %v1493
      %v1518 = vpop.f32.mrf.mxu0
      %v1519 = vadd.f32 0.0, %v1518
      %v1520 = vpop.f32.mrf.mxu0
      %v1521 = vadd.f32 0.0, %v1520
      %1522 = vmatmul.bf16.gmra.mxu0 %v1496
      %v1523 = vpop.f32.mrf.mxu0
      %v1524 = vadd.f32 0.0, %v1523
      %v1525 = vpop.f32.mrf.mxu0
      %v1526 = vadd.f32 0.0, %v1525
      %1527 = vmatmul.bf16.gmra.mxu0 %v1499
      %v1528 = vpop.f32.mrf.mxu0
      %v1529 = vadd.f32 0.0, %v1528
      %v1530 = vpop.f32.mrf.mxu0
      %v1531 = vadd.f32 0.0, %v1530
      %1532 = vdwg.mxu0
      %v1533 = vadd.f32 %v1412, %v1514
      %v1534 = vadd.f32 %v1413, %v1516
      %v1535 = vadd.f32 %v1414, %v1519
      %v1536 = vadd.f32 %v1415, %v1521
      %v1537 = vadd.f32 %v1416, %v1524
      %v1538 = vadd.f32 %v1417, %v1526
      %v1539 = vadd.f32 %v1418, %v1529
      %v1540 = vadd.f32 %v1419, %v1531
      %v1541 = vld [vmem:[%s2] sm:$0x1]
      %v1543 = vperm.slane %v1541, 0
      %v1545 = vadd.f32 %v1533, %v1543
      %v1546 = vadd.f32 %v1534, %v1543
      %v1547 = vadd.f32 %v1535, %v1543
      %v1548 = vadd.f32 %v1536, %v1543
      %v1549 = vadd.f32 %v1537, %v1543
      %v1550 = vadd.f32 %v1538, %v1543
      %v1551 = vadd.f32 %v1539, %v1543
      %v1552 = vadd.f32 %v1540, %v1543
      %v1553 = vmax.f32 %v1545, 0.0
      %v1554 = vmax.f32 %v1546, 0.0
      %v1555 = vmax.f32 %v1547, 0.0
      %v1556 = vmax.f32 %v1548, 0.0
      %v1557 = vmax.f32 %v1549, 0.0
      %v1558 = vmax.f32 %v1550, 0.0
      %v1559 = vmax.f32 %v1551, 0.0
      %v1560 = vmax.f32 %v1552, 0.0
      %v1561 = vmax.f32 %v1553, %v1554
      %v1562 = vmax.f32 %v1555, %v1556
      %v1563 = vmax.f32 %v1557, %v1558
      %v1564 = vmax.f32 %v1559, %v1560
      %vm1565 = vcmask 130048
      %1566 = vst.msk [vmem:[#allocation3] sm:$0xff] %vm1565, %v1561
      %1567 = vst.msk [vmem:[#allocation3 + $0x8] sm:$0xff] %vm1565, %v1562
      %1568 = vst.msk [vmem:[#allocation3 + $0x10] sm:$0xff] %vm1565, %v1563
      %1569 = vst.msk [vmem:[#allocation3 + $0x18] sm:$0xff] %vm1565, %v1564
      %v1570 = vld [vmem:[#allocation3] ss:$2 sm:$0xf]
      %s1571 = scalar_lea.vmem [#allocation3], 8
      %v1572 = vld [vmem:[%s1571] ss:$2 sm:$0xf]
      %s1573 = scalar_lea.vmem [#allocation3], 16
      %v1574 = vld [vmem:[%s1573] ss:$2 sm:$0xf]
      %s1575 = scalar_lea.vmem [#allocation3], 24
      %v1576 = vld [vmem:[%s1575] ss:$2 sm:$0xf]
      %s1577 = scalar_lea.vmem [#allocation3], 1
      %v1578 = vld [vmem:[%s1577] ss:$2 sm:$0xf]
      %s1579 = scalar_lea.vmem [#allocation3], 9
      %v1580 = vld [vmem:[%s1579] ss:$2 sm:$0xf]
      %s1581 = scalar_lea.vmem [#allocation3], 17
      %v1582 = vld [vmem:[%s1581] ss:$2 sm:$0xf]
      %s1583 = scalar_lea.vmem [#allocation3], 25
      %v1584 = vld [vmem:[%s1583] ss:$2 sm:$0xf]
      %v1585 = vmax.f32 %v1570, %v1578
      %v1586 = vmax.f32 %v1572, %v1580
      %v1587 = vmax.f32 %v1574, %v1582
      %v1588 = vmax.f32 %v1576, %v1584
      %v1589 = vpack.c.bf16 %v1585, %v1585
      %v1590 = vpack.c.bf16 %v1586, %v1586
      %v1591 = vpack.c.bf16 %v1587, %v1587
      %v1592 = vpack.c.bf16 %v1588, %v1588
      %vm1593 = vcmask 123904
      %1594 = vst.msk [vmem:[%s170] sm:$0x3] %vm1593, %v1589
      %1595 = vst.msk [vmem:[%s170 + $0x2] sm:$0x3] %vm1593, %v1590
      %1596 = vst.msk [vmem:[%s170 + $0x4] sm:$0x3] %vm1593, %v1591
      %1597 = vst.msk [vmem:[%s170 + $0x6] sm:$0x3] %vm1593, %v1592
      %p1598 = scmp.lt.s32.totalorder %s14, 1
      %s1599 = scalar_select %p1598, %s14, 1
      %s1600 = smul.addr %s1599, 4
      %s1601 = smul.addr %s1600, 2
      %s1602 = scalar_lea.vmem %s3, %s1601
      // Predicated region
      $region33: #{vgg_forward.7} parent=31 // pred_check
        %p1603 = pneg %p100
      $region34: #{vgg_forward.7} parent=31 // pred_check_branch
        %1605 = sbr.rel (%p1603) target = $region36
      $region35: #{vgg_forward.7} parent=31 // pred_region
        _
      $region36: #{vgg_forward.7} parent=31 // pred_fallthru
        _
    $region32: #{vgg_forward.7} parent=5 // pred_fallthru
      _
    %p1606 = scmp.le.s32.totalorder 2, %s9
    // Predicated region
    $region37: #{vgg_forward.7} parent=5 // pred_check
      %p1607 = pneg %p1606
    $region38: #{vgg_forward.7} parent=5 // pred_check_branch
      %1609 = sbr.rel (%p1607) target = $region40
    $region39: #{vgg_forward.7} parent=5 // pred_region
      %s1610 = ssub.s32 %s9, 2
      // Predicated region
      $region41: #{vgg_forward.7} parent=39 // pred_check
        %p1611 = pneg %p106
      $region42: #{vgg_forward.7} parent=39 // pred_check_branch
        %1613 = sbr.rel (%p1611) target = $region44
      $region43: #{vgg_forward.7} parent=39 // pred_region
        %p1614 = scmp.lt.s32.totalorder %s15, 1
        %s1615 = scalar_select %p1614, %s15, 1
        %s1616 = smul.addr %s1615, 4
        %s1617 = smul.addr %s1616, 2
        %s1618 = scalar_lea.vmem %s3, %s1617
      $region44: #{vgg_forward.7} parent=39 // pred_fallthru
        _
    $region40: #{vgg_forward.7} parent=5 // pred_fallthru
      _
  $region6: #{vgg_forward.7} parent=0 // loop_footer
    %s13 = sadd.s32 1, %s9
  $region7: #{vgg_forward.7} parent=0 // loop_footer_branch
    %8 = sbr.rel target = $region3
  $region8: #{vgg_forward.7} parent=0 // loop_exit
    _

// kernel: vgg_forward.9
$region0: #{vgg_forward.9}
  #allocation0 [shape = 'u32[]', space=smem, size = 0x4, offset = 0x4, fixed_abs, tag = 'smem constant byte address 0x4 - core index']
  #allocation1 [shape = 'u32[72,128]{1,0:T(1,128)}', space=vmem, size = 0x9000, scoped, tag = 'internal scratch']
  #allocation2 [shape = 'f32[2,64]{1,0:T(2,128)}', space=vmem, size = 0x400, scoped, tag = 'scratch operand']
  %s0 = inlined_call_operand.vmem [shape: bf16[2,64], index: 0, kind: input, shape index: {}]
  %s1 = inlined_call_operand.vmem [shape: bf16[64,64], index: 1, kind: input, shape index: {}]
  %s2 = inlined_call_operand.vmem [shape: f32[1,64], index: 2, kind: input, shape index: {}]
  %s3 = inlined_call_operand.vmem [shape: bf16[64,10], index: 3, kind: input, shape index: {}]
  %s4 = inlined_call_operand.vmem [shape: f32[1,10], index: 4, kind: input, shape index: {}]
  %s5 = inlined_call_operand.hbm [shape: f32[2,10], index: 5, kind: output, shape index: {}]
  %s6 = sld [smem:[#allocation0]]
  $region38: #{vgg_forward.9} parent=0
    _
  %s8 = ssub.s32 1, %s6
  %s9 = scalar_select 0, %s8, %s6
  $region1: #{vgg_forward.9} parent=0
    #allocation3 [shape = 'u8[1024]{0}', space=vmem, size = 0x400, scoped, tag = 'output window, operand 0, single buffered']
    #allocation4 [shape = 's32[1]{0}', space=sflag, size = 0x4, scoped, tag = 'scoped memory for vgg_forward.9']
    %10 = vsyncpa [#allocation4], 0
    // Predicated region
    $region2: #{vgg_forward.9} parent=1 // pred_check
      _
    $region3: #{vgg_forward.9} parent=1 // pred_check_branch
      %12 = sbr.rel (0) target = $region5
    $region4: #{vgg_forward.9} parent=1 // pred_region
      _
    $region5: #{vgg_forward.9} parent=1 // pred_fallthru
      _
    // Predicated region
    $region6: #{vgg_forward.9} parent=1 // pred_check
      _
    $region7: #{vgg_forward.9} parent=1 // pred_check_branch
      %14 = sbr.rel (0) target = $region9
    $region8: #{vgg_forward.9} parent=1 // pred_region
      _
    $region9: #{vgg_forward.9} parent=1 // pred_fallthru
      _
    // Predicated region
    $region10: #{vgg_forward.9} parent=1 // pred_check
      _
    $region11: #{vgg_forward.9} parent=1 // pred_check_branch
      %16 = sbr.rel (0) target = $region13
    $region12: #{vgg_forward.9} parent=1 // pred_region
      _
    $region13: #{vgg_forward.9} parent=1 // pred_fallthru
      _
    // Predicated region
    $region14: #{vgg_forward.9} parent=1 // pred_check
      _
    $region15: #{vgg_forward.9} parent=1 // pred_check_branch
      %18 = sbr.rel (0) target = $region17
    $region16: #{vgg_forward.9} parent=1 // pred_region
      _
    $region17: #{vgg_forward.9} parent=1 // pred_fallthru
      _
    // Predicated region
    $region18: #{vgg_forward.9} parent=1 // pred_check
      _
    $region19: #{vgg_forward.9} parent=1 // pred_check_branch
      %20 = sbr.rel (0) target = $region21
    $region20: #{vgg_forward.9} parent=1 // pred_region
      _
    $region21: #{vgg_forward.9} parent=1 // pred_fallthru
      _
    %p22 = scmp.eq.s32.totalorder 0, 0
    // Predicated region
    $region22: #{vgg_forward.9} parent=1 // pred_check
      %p23 = pneg %p22
    $region23: #{vgg_forward.9} parent=1 // pred_check_branch
      %25 = sbr.rel (%p23) target = $region25
    $region24: #{vgg_forward.9} parent=1 // pred_region
      %vm26 = vcmask 517120
      %27 = vst.msk [vmem:[#allocation2] sm:$0x3] %vm26, 0.0
    $region25: #{vgg_forward.9} parent=1 // pred_fallthru
      _
    %v28 = vld [vmem:[#allocation2] sm:$0x3]
    %v29 = vld [vmem:[%s0] sm:$0x1]
    %v30 = vld [vmem:[%s1] sm:$0xf]
    %v31 = vld [vmem:[%s1 + $0x4] sm:$0xf]
    %v32 = vld [vmem:[%s1 + $0x8] sm:$0xf]
    %v33 = vld [vmem:[%s1 + $0xc] sm:$0xf]
    %v34 = vld [vmem:[%s1 + $0x10] sm:$0xf]
    %v35 = vld [vmem:[%s1 + $0x14] sm:$0xf]
    %v36 = vld [vmem:[%s1 + $0x18] sm:$0xf]
    %v37 = vld [vmem:[%s1 + $0x1c] sm:$0xf]
    %v46 = vunpack.c.l.b16 %v30
    %v47 = vunpack.c.l.b16 %v31
    %v48 = vunpack.c.l.b16 %v32
    %v49 = vunpack.c.l.b16 %v33
    %v50 = vunpack.c.l.b16 %v34
    %v51 = vunpack.c.l.b16 %v35
    %v52 = vunpack.c.l.b16 %v36
    %v53 = vunpack.c.l.b16 %v37
    %v54 = vpack.c.b16 %v47, %v46
    %v55 = vpack.c.b16 %v49, %v48
    %v56 = vpack.c.b16 %v51, %v50
    %v57 = vpack.c.b16 %v53, %v52
    %vm62 = vcmask 523264
    %v64 = vsel %vm62, %v29, 0
    %66 = vmatpush.bf16.msra.mxu0 0
    %67 = vmatpush.bf16.msra.mxu0 0
    %68 = vmatpush.bf16.msra.mxu0 0
    %69 = vmatpush.bf16.msra.mxu0 0
    %70 = vmatpush.bf16.msra.mxu0 %v57
    %71 = vmatpush.bf16.msra.mxu0 %v56
    %72 = vmatpush.bf16.msra.mxu0 %v55
    %73 = vmatpush.bf16.msra.mxu0 %v54
    %74 = vmatmul.bf16.gmra.mxu0 %v64
    %v75 = vpop.f32.mrf.mxu0
    %v76 = vadd.f32 0.0, %v75
    %v77 = vpop.f32.mrf.mxu0
    %78 = vdwg.mxu0
    %v79 = vadd.f32 %v28, %v76
    %vm80 = vcmask 517120
    %81 = vst.msk [vmem:[#allocation2] sm:$0x3] %vm80, %v79
    // Predicated region
    $region26: #{vgg_forward.9} parent=1 // pred_check
      %p82 = pneg %p22
    $region27: #{vgg_forward.9} parent=1 // pred_check_branch
      %84 = sbr.rel (%p82) target = $region29
    $region28: #{vgg_forward.9} parent=1 // pred_region
      %v85 = vld [vmem:[#allocation2] sm:$0x3]
      %v86 = vld [vmem:[%s2] sm:$0x1]
      %v88 = vperm.slane %v86, 0
      %v90 = vadd.f32 %v85, %v88
      %v91 = vmax.f32 %v90, 0.0
      %v92 = vpack.c.bf16 %v91, %v91
      %v93 = vld [vmem:[%s3] sm:$0xf]
      %v94 = vld [vmem:[%s3 + $0x4] sm:$0xf]
      %v95 = vld [vmem:[%s3 + $0x8] sm:$0xf]
      %v96 = vld [vmem:[%s3 + $0xc] sm:$0xf]
      %v97 = vld [vmem:[%s3 + $0x10] sm:$0xf]
      %v98 = vld [vmem:[%s3 + $0x14] sm:$0xf]
      %v99 = vld [vmem:[%s3 + $0x18] sm:$0xf]
      %v100 = vld [vmem:[%s3 + $0x1c] sm:$0xf]
      %v101 = vld [vmem:[%s4] sm:$0x1]
      %v103 = vperm.slane %v101, 0
      %v113 = vunpack.c.l.b16 %v93
      %v114 = vunpack.c.l.b16 %v94
      %v115 = vunpack.c.l.b16 %v95
      %v116 = vunpack.c.l.b16 %v96
      %v117 = vunpack.c.l.b16 %v97
      %v118 = vunpack.c.l.b16 %v98
      %v119 = vunpack.c.l.b16 %v99
      %v120 = vunpack.c.l.b16 %v100
      %v121 = vpack.c.b16 %v114, %v113
      %v122 = vpack.c.b16 %v116, %v115
      %v123 = vpack.c.b16 %v118, %v117
      %v124 = vpack.c.b16 %v120, %v119
      %v130 = vsel %vm62, %v92, 0
      %132 = vmatpush.bf16.msra.mxu0 0
      %133 = vmatpush.bf16.msra.mxu0 0
      %134 = vmatpush.bf16.msra.mxu0 0
      %135 = vmatpush.bf16.msra.mxu0 0
      %136 = vmatpush.bf16.msra.mxu0 %v124
      %137 = vmatpush.bf16.msra.mxu0 %v123
      %138 = vmatpush.bf16.msra.mxu0 %v122
      %139 = vmatpush.bf16.msra.mxu0 %v121
      %140 = vmatmul.bf16.gmra.mxu0 %v130
      %v141 = vpop.f32.mrf.mxu0
      %v142 = vadd.f32 %v103, %v141
      %v143 = vpop.f32.mrf.mxu0
      %144 = vdwg.mxu0
      %vm145 = vcmask 74752
      %146 = vst.msk [vmem:[#allocation3] sm:$0x3] %vm145, %v142
    $region29: #{vgg_forward.9} parent=1 // pred_fallthru
      _
    // Predicated region
    $region30: #{vgg_forward.9} parent=1 // pred_check
      _
    $region31: #{vgg_forward.9} parent=1 // pred_check_branch
      %148 = sbr.rel (0) target = $region33
    $region32: #{vgg_forward.9} parent=1 // pred_region
      %150 = vsyncadd [#allocation4], 0
      %s152 = sshll.u32 [#allocation3], 4
      %s153 = int_to_ptr.vmem [resolvable:$true] %s152
      %s154 = sshll.u32 %s5, 4
      %s155 = int_to_ptr.hbm [resolvable:$true] %s154
      %157 = dma.vmem_to_hbm [thread:$0]  %s153, 32, %s155, [#allocation4]
    $region33: #{vgg_forward.9} parent=1 // pred_fallthru
      _
    // Predicated region
    $region34: #{vgg_forward.9} parent=1 // pred_check
      _
    $region35: #{vgg_forward.9} parent=1 // pred_check_branch
      %159 = sbr.rel (0) target = $region37
    $region36: #{vgg_forward.9} parent=1 // pred_region
      %161 = dma.done [#allocation4], 32
    $region37: #{vgg_forward.9} parent=1 // pred_fallthru
      _
    %162 = vsyncpa [#allocation4], 1

// kernel: vgg_forward.6
$region0: #{vgg_forward.6}
  #allocation0 [shape = 'u32[]', space=smem, size = 0x4, offset = 0x4, fixed_abs, tag = 'smem constant byte address 0x4 - core index']
  #allocation1 [shape = 'u32[72,128]{1,0:T(1,128)}', space=vmem, size = 0x9000, scoped, tag = 'internal scratch']
  #allocation2 [shape = 'bf16[18,18,8]{2,1,0:T(8,128)(2,1)}', space=vmem, size = 0x1b000, scoped, tag = 'scratch operand']
  #allocation3 [shape = 'f32[8,16,8]{2,1,0:T(8,128)}', space=vmem, size = 0x10000, scoped, tag = 'scratch operand']
  %s0 = inlined_call_operand.vmem [shape: bf16[2,16,16,8], index: 0, kind: input, shape index: {}]
  %s1 = inlined_call_operand.vmem [shape: bf16[72,8], index: 1, kind: input, shape index: {}]
  %s2 = inlined_call_operand.vmem [shape: f32[1,8], index: 2, kind: input, shape index: {}]
  %s3 = inlined_call_operand.vmem [shape: bf16[2,8,8,8], index: 3, kind: output, shape index: {}]
  %s4 = sld [smem:[#allocation0]]
  $region45: #{vgg_forward.6} parent=0
    _
  %s6 = ssub.s32 1, %s4
  %s7 = scalar_select 0, %s6, %s4
  loop: start=0, step=1, limit=4
  $region2: #{vgg_forward.6} parent=0 // loop_pre_header
    _
  $region3: #{vgg_forward.6} parent=0 // loop_header
    %s9 = sphi 0, %s13
    %p10 = scmp.ge.s32.totalorder %s9, 4
    %s19 = sphi 0, %s21
    %s22 = sphi 0, %s19
    %s23 = sphi 0, %s22
    %s39 = sphi 0, %s23
    %s43 = sphi 0, %s43
    %s45 = sphi 0, %s43
    %s46 = sphi 0, %s45
    %s60 = sphi 0, %s46
    %s64 = sphi 0, %s64
    %s66 = sphi 0, %s64
    %s67 = sphi 0, %s66
    %s81 = sphi 0, %s67
    %s87 = sphi 0, %s89
    %s90 = sphi 0, %s87
    %s91 = sphi 0, %s90
    %s107 = sphi 0, %s91
  $region4: #{vgg_forward.6} parent=0 // loop_header_branch
    %12 = sbr.rel (%p10) target = $region8
  $region5: #{vgg_forward.6} parent=0 // loop_body
    %s14 = ssub.s32 %s9, 1
    %s15 = ssub.s32 %s9, 2
    %s16 = sadd.s32 %s9, 1
    %s17 = ssub.s32 %s9, %s16
    %p18 = scmp.eq.s32.totalorder %s17, 0
    %s20 = sadd.s32 %s19, 1
    %s21 = scalar_select %p18, %s19, %s20
    %p24 = pneg %p18
    %p25 = scmp.eq.s32.totalorder %s9, 1
    %p26 = por %p24, %p25
    %p27 = scmp.ne.s32.totalorder %s19, %s22
    %p28 = scmp.eq.s32.totalorder %s9, 0
    %p29 = por %p27, %p28
    %p30 = scmp.ne.s32.totalorder %s19, %s22
    %p31 = scmp.eq.s32.totalorder %s14, 1
    %p32 = por %p30, %p31
    %p33 = scmp.ne.s32.totalorder %s22, %s23
    %p34 = scmp.eq.s32.totalorder %s14, 0
    %p35 = por %p33, %p34
    %p36 = scmp.ne.s32.totalorder %s22, %s23
    %p37 = scmp.eq.s32.totalorder %s15, 1
    %p38 = por %p36, %p37
    %p40 = scmp.ne.s32.totalorder %s23, %s39
    %p41 = scmp.eq.s32.totalorder %s15, 0
    %p42 = por %p40, %p41
    %s44 = sadd.s32 %s43, 1
    %p47 = scmp.eq.s32.totalorder %s9, 1
    %p48 = scmp.ne.s32.totalorder %s43, %s45
    %p49 = scmp.eq.s32.totalorder %s9, 0
    %p50 = por %p48, %p49
    %p51 = scmp.ne.s32.totalorder %s43, %s45
    %p52 = scmp.eq.s32.totalorder %s14, 1
    %p53 = por %p51, %p52
    %p54 = scmp.ne.s32.totalorder %s45, %s46
    %p55 = scmp.eq.s32.totalorder %s14, 0
    %p56 = por %p54, %p55
    %p57 = scmp.ne.s32.totalorder %s45, %s46
    %p58 = scmp.eq.s32.totalorder %s15, 1
    %p59 = por %p57, %p58
    %p61 = scmp.ne.s32.totalorder %s46, %s60
    %p62 = scmp.eq.s32.totalorder %s15, 0
    %p63 = por %p61, %p62
    %s65 = sadd.s32 %s64, 1
    %p68 = scmp.eq.s32.totalorder %s9, 1
    %p69 = scmp.ne.s32.totalorder %s64, %s66
    %p70 = scmp.eq.s32.totalorder %s9, 0
    %p71 = por %p69, %p70
    %p72 = scmp.ne.s32.totalorder %s64, %s66
    %p73 = scmp.eq.s32.totalorder %s14, 1
    %p74 = por %p72, %p73
    %p75 = scmp.ne.s32.totalorder %s66, %s67
    %p76 = scmp.eq.s32.totalorder %s14, 0
    %p77 = por %p75, %p76
    %p78 = scmp.ne.s32.totalorder %s66, %s67
    %p79 = scmp.eq.s32.totalorder %s15, 1
    %p80 = por %p78, %p79
    %p82 = scmp.ne.s32.totalorder %s67, %s81
    %p83 = scmp.eq.s32.totalorder %s15, 0
    %p84 = por %p82, %p83
    %s85 = ssub.s32 %s9, %s16
    %p86 = scmp.eq.s32.totalorder %s85, 0
    %s88 = sadd.s32 %s87, 1
    %s89 = scalar_select %p86, %s87, %s88
    %p92 = pneg %p86
    %p93 = scmp.eq.s32.totalorder %s9, 1
    %p94 = por %p92, %p93
    %p95 = scmp.ne.s32.totalorder %s87, %s90
    %p96 = scmp.eq.s32.totalorder %s9, 0
    %p97 = por %p95, %p96
    %p98 = scmp.ne.s32.totalorder %s87, %s90
    %p99 = scmp.eq.s32.totalorder %s14, 1
    %p100 = por %p98, %p99
    %p101 = scmp.ne.s32.totalorder %s90, %s91
    %p102 = scmp.eq.s32.totalorder %s14, 0
    %p103 = por %p101, %p102
    %p104 = scmp.ne.s32.totalorder %s90, %s91
    %p105 = scmp.eq.s32.totalorder %s15, 1
    %p106 = por %p104, %p105
    %p108 = scmp.ne.s32.totalorder %s91, %s107
    %p109 = scmp.eq.s32.totalorder %s15, 0
    %p110 = por %p108, %p109
    %p111 = scmp.le.s32.totalorder 1, %s9
    %p112 = scmp.lt.s32.totalorder %s9, 3
    %p113 = pnand %p111, %p112
    %p114 = pneg %p113
    // Predicated region
    $region9: #{vgg_forward.6} parent=5 // pred_check
      _
    $region10: #{vgg_forward.6} parent=5 // pred_check_branch
      %116 = sbr.rel (%p113) target = $region12
    $region11: #{vgg_forward.6} parent=5 // pred_region
      %s117 = ssub.s32 %s9, 1
      // Predicated region
      $region13: #{vgg_forward.6} parent=11 // pred_check
        %p118 = pneg %p56
      $region14: #{vgg_forward.6} parent=11 // pred_check_branch
        %120 = sbr.rel (%p118) target = $region16
      $region15: #{vgg_forward.6} parent=11 // pred_region
        _
      $region16: #{vgg_forward.6} parent=11 // pred_fallthru
        _
      // Predicated region
      $region17: #{vgg_forward.6} parent=11 // pred_check
        %p121 = pneg %p77
      $region18: #{vgg_forward.6} parent=11 // pred_check_branch
        %123 = sbr.rel (%p121) target = $region20
      $region19: #{vgg_forward.6} parent=11 // pred_region
        _
      $region20: #{vgg_forward.6} parent=11 // pred_fallthru
        _
    $region12: #{vgg_forward.6} parent=5 // pred_fallthru
      _
    %p124 = scmp.lt.s32.totalorder %s9, 2
    // Predicated region
    $region21: #{vgg_forward.6} parent=5 // pred_check
      %p125 = pneg %p124
    $region22: #{vgg_forward.6} parent=5 // pred_check_branch
      %127 = sbr.rel (%p125) target = $region24
    $region23: #{vgg_forward.6} parent=5 // pred_region
      // Predicated region
      $region25: #{vgg_forward.6} parent=23 // pred_check
        %p128 = pneg %p29
      $region26: #{vgg_forward.6} parent=23 // pred_check_branch
        %130 = sbr.rel (%p128) target = $region28
      $region27: #{vgg_forward.6} parent=23 // pred_region
        %p131 = scmp.lt.s32.totalorder %s9, 1
        %s132 = scalar_select %p131, %s9, 1
        %s133 = smul.addr %s132, 32
        %s134 = smul.addr %s133, 4
        %s135 = scalar_lea.vmem %s0, %s134
      $region28: #{vgg_forward.6} parent=23 // pred_fallthru
        _
    $region24: #{vgg_forward.6} parent=5 // pred_fallthru
      _
    %p136 = scmp.le.s32.totalorder 1, %s9
    %p137 = scmp.lt.s32.totalorder %s9, 3
    %p138 = pnand %p136, %p137
    %p139 = pneg %p138
    // Predicated region
    $region29: #{vgg_forward.6} parent=5 // pred_check
      _
    $region30: #{vgg_forward.6} parent=5 // pred_check_branch
      %141 = sbr.rel (%p138) target = $region32
    $region31: #{vgg_forward.6} parent=5 // pred_region
      %s142 = ssub.s32 %s9, 1
      %p143 = scmp.lt.s32.totalorder %s14, 1
      %s144 = scalar_select %p143, %s14, 1
      %s145 = smul.addr %s144, 32
      %s146 = smul.addr %s145, 4
      %s147 = scalar_lea.vmem %s0, %s146
      %p148 = pneg %p35
      %p149 = pneg %p32
      %p150 = pneg %p56
      %p151 = pneg %p53
      %p152 = pneg %p77
      %p153 = pneg %p74
      %p154 = pneg %p103
      %p155 = pneg %p100
      %p156 = scmp.lt.s32.totalorder %s14, 1
      %s157 = scalar_select %p156, %s14, 1
      %s158 = smul.addr %s157, 8
      %s159 = smul.addr %s158, 4
      %s160 = scalar_lea.vmem %s3, %s159
      %p161 = scmp.lt.s32.totalorder %s14, 1
      %s162 = scalar_select %p161, %s14, 1
      %s163 = smul.addr %s162, 32
      %s164 = smul.addr %s163, 4
      %s165 = scalar_lea.vmem %s0, %s164
      %p166 = scmp.lt.s32.totalorder %s14, 1
      %s167 = scalar_select %p166, %s14, 1
      %s168 = smul.addr %s167, 8
      %s169 = smul.addr %s168, 4
      %s170 = scalar_lea.vmem %s3, %s169
      %vm172 = vcmask 60416
      %173 = vst.msk [vmem:[#allocation2] sm:$0xf] %vm172, 0
      %174 = vst.msk [vmem:[#allocation2 + $0x4] sm:$0xf] %vm172, 0
      %vm175 = vcmask 57344
      %176 = vst.msk [vmem:[#allocation2 + $0x8] sm:$0x1] %vm175, 0
      %s177 = scalar_lea.vmem [#allocation2], 204
      %178 = vst.msk [vmem:[%s177] sm:$0xf] %vm172, 0
      %179 = vst.msk [vmem:[%s177 + $0x4] sm:$0xf] %vm172, 0
      %180 = vst.msk [vmem:[%s177 + $0x8] sm:$0x1] %vm175, 0
      %s181 = scalar_lea.vmem [#allocation2], 12
      %vm182 = vcmask 57344
      %vm183 = vsmask.f32 256
      %vm184 = vmand %vm182, %vm183
      %v185 = vld [vmem:[%s181] sm:$0x1]
      %v186 = vsel %vm184, 0, %v185
      %187 = vst [vmem:[%s181] sm:$0x1] %v186
      %v188 = vld [vmem:[%s181 + $0xc] sm:$0x1]
      %v189 = vsel %vm184, 0, %v188
      %190 = vst [vmem:[%s181 + $0xc] sm:$0x1] %v189
      %v191 = vld [vmem:[%s181 + $0x18] sm:$0x1]
      %v192 = vsel %vm184, 0, %v191
      %193 = vst [vmem:[%s181 + $0x18] sm:$0x1] %v192
      %v194 = vld [vmem:[%s181 + $0x24] sm:$0x1]
      %v195 = vsel %vm184, 0, %v194
      %196 = vst [vmem:[%s181 + $0x24] sm:$0x1] %v195
      %v197 = vld [vmem:[%s181 + $0x30] sm:$0x1]
      %v198 = vsel %vm184, 0, %v197
      %199 = vst [vmem:[%s181 + $0x30] sm:$0x1] %v198
      %v200 = vld [vmem:[%s181 + $0x3c] sm:$0x1]
      %v201 = vsel %vm184, 0, %v200
      %202 = vst [vmem:[%s181 + $0x3c] sm:$0x1] %v201
      %v203 = vld [vmem:[%s181 + $0x48] sm:$0x1]
      %v204 = vsel %vm184, 0, %v203
      %205 = vst [vmem:[%s181 + $0x48] sm:$0x1] %v204
      %v206 = vld [vmem:[%s181 + $0x54] sm:$0x1]
      %v207 = vsel %vm184, 0, %v206
      %208 = vst [vmem:[%s181 + $0x54] sm:$0x1] %v207
      %v209 = vld [vmem:[%s181 + $0x60] sm:$0x1]
      %v210 = vsel %vm184, 0, %v209
      %211 = vst [vmem:[%s181 + $0x60] sm:$0x1] %v210
      %v212 = vld [vmem:[%s181 + $0x6c] sm:$0x1]
      %v213 = vsel %vm184, 0, %v212
      %214 = vst [vmem:[%s181 + $0x6c] sm:$0x1] %v213
      %v215 = vld [vmem:[%s181 + $0x78] sm:$0x1]
      %v216 = vsel %vm184, 0, %v215
      %217 = vst [vmem:[%s181 + $0x78] sm:$0x1] %v216
      %v218 = vld [vmem:[%s181 + $0x84] sm:$0x1]
      %v219 = vsel %vm184, 0, %v218
      %220 = vst [vmem:[%s181 + $0x84] sm:$0x1] %v219
      %v221 = vld [vmem:[%s181 + $0x90] sm:$0x1]
      %v222 = vsel %vm184, 0, %v221
      %223 = vst [vmem:[%s181 + $0x90] sm:$0x1] %v222
      %v224 = vld [vmem:[%s181 + $0x9c] sm:$0x1]
      %v225 = vsel %vm184, 0, %v224
      %226 = vst [vmem:[%s181 + $0x9c] sm:$0x1] %v225
      %v227 = vld [vmem:[%s181 + $0xa8] sm:$0x1]
      %v228 = vsel %vm184, 0, %v227
      %229 = vst [vmem:[%s181 + $0xa8] sm:$0x1] %v228
      %v230 = vld [vmem:[%s181 + $0xb4] sm:$0x1]
      %v231 = vsel %vm184, 0, %v230
      %232 = vst [vmem:[%s181 + $0xb4] sm:$0x1] %v231
      %vm233 = vsmask.f32 7938
      %vm234 = vmand %vm182, %vm233
      %v235 = vld [vmem:[%s181 + $0x8] sm:$0x1]
      %v236 = vsel %vm234, 0, %v235
      %237 = vst [vmem:[%s181 + $0x8] sm:$0x1] %v236
      %v238 = vld [vmem:[%s181 + $0x14] sm:$0x1]
      %v239 = vsel %vm234, 0, %v238
      %240 = vst [vmem:[%s181 + $0x14] sm:$0x1] %v239
      %v241 = vld [vmem:[%s181 + $0x20] sm:$0x1]
      %v242 = vsel %vm234, 0, %v241
      %243 = vst [vmem:[%s181 + $0x20] sm:$0x1] %v242
      %v244 = vld [vmem:[%s181 + $0x2c] sm:$0x1]
      %v245 = vsel %vm234, 0, %v244
      %246 = vst [vmem:[%s181 + $0x2c] sm:$0x1] %v245
      %v247 = vld [vmem:[%s181 + $0x38] sm:$0x1]
      %v248 = vsel %vm234, 0, %v247
      %249 = vst [vmem:[%s181 + $0x38] sm:$0x1] %v248
      %v250 = vld [vmem:[%s181 + $0x44] sm:$0x1]
      %v251 = vsel %vm234, 0, %v250
      %252 = vst [vmem:[%s181 + $0x44] sm:$0x1] %v251
      %v253 = vld [vmem:[%s181 + $0x50] sm:$0x1]
      %v254 = vsel %vm234, 0, %v253
      %255 = vst [vmem:[%s181 + $0x50] sm:$0x1] %v254
      %v256 = vld [vmem:[%s181 + $0x5c] sm:$0x1]
      %v257 = vsel %vm234, 0, %v256
      %258 = vst [vmem:[%s181 + $0x5c] sm:$0x1] %v257
      %v259 = vld [vmem:[%s181 + $0x68] sm:$0x1]
      %v260 = vsel %vm234, 0, %v259
      %261 = vst [vmem:[%s181 + $0x68] sm:$0x1] %v260
      %v262 = vld [vmem:[%s181 + $0x74] sm:$0x1]
      %v263 = vsel %vm234, 0, %v262
      %264 = vst [vmem:[%s181 + $0x74] sm:$0x1] %v263
      %v265 = vld [vmem:[%s181 + $0x80] sm:$0x1]
      %v266 = vsel %vm234, 0, %v265
      %267 = vst [vmem:[%s181 + $0x80] sm:$0x1] %v266
      %v268 = vld [vmem:[%s181 + $0x8c] sm:$0x1]
      %v269 = vsel %vm234, 0, %v268
      %270 = vst [vmem:[%s181 + $0x8c] sm:$0x1] %v269
      %v271 = vld [vmem:[%s181 + $0x98] sm:$0x1]
      %v272 = vsel %vm234, 0, %v271
      %273 = vst [vmem:[%s181 + $0x98] sm:$0x1] %v272
      %v274 = vld [vmem:[%s181 + $0xa4] sm:$0x1]
      %v275 = vsel %vm234, 0, %v274
      %276 = vst [vmem:[%s181 + $0xa4] sm:$0x1] %v275
      %v277 = vld [vmem:[%s181 + $0xb0] sm:$0x1]
      %v278 = vsel %vm234, 0, %v277
      %279 = vst [vmem:[%s181 + $0xb0] sm:$0x1] %v278
      %v280 = vld [vmem:[%s181 + $0xbc] sm:$0x1]
      %v281 = vsel %vm234, 0, %v280
      %282 = vst [vmem:[%s181 + $0xbc] sm:$0x1] %v281
      %v283 = vld [vmem:[%s165] sm:$0xf]
      %v284 = vld [vmem:[%s165 + $0x4] sm:$0xf]
      %v285 = vld [vmem:[%s165 + $0x8] sm:$0xf]
      %v286 = vld [vmem:[%s165 + $0xc] sm:$0xf]
      %v287 = vld [vmem:[%s165 + $0x10] sm:$0xf]
      %v288 = vld [vmem:[%s165 + $0x14] sm:$0xf]
      %v289 = vld [vmem:[%s165 + $0x18] sm:$0xf]
      %v290 = vld [vmem:[%s165 + $0x1c] sm:$0xf]
      %v291 = vld [vmem:[%s165 + $0x20] sm:$0xf]
      %v292 = vld [vmem:[%s165 + $0x24] sm:$0xf]
      %v293 = vld [vmem:[%s165 + $0x28] sm:$0xf]
      %v294 = vld [vmem:[%s165 + $0x2c] sm:$0xf]
      %v295 = vld [vmem:[%s165 + $0x30] sm:$0xf]
      %v296 = vld [vmem:[%s165 + $0x34] sm:$0xf]
      %v297 = vld [vmem:[%s165 + $0x38] sm:$0xf]
      %v298 = vld [vmem:[%s165 + $0x3c] sm:$0xf]
      %v299 = vld [vmem:[%s165 + $0x40] sm:$0xf]
      %v300 = vld [vmem:[%s165 + $0x44] sm:$0xf]
      %v301 = vld [vmem:[%s165 + $0x48] sm:$0xf]
      %v302 = vld [vmem:[%s165 + $0x4c] sm:$0xf]
      %v303 = vld [vmem:[%s165 + $0x50] sm:$0xf]
      %v304 = vld [vmem:[%s165 + $0x54] sm:$0xf]
      %v305 = vld [vmem:[%s165 + $0x58] sm:$0xf]
      %v306 = vld [vmem:[%s165 + $0x5c] sm:$0xf]
      %v307 = vld [vmem:[%s165 + $0x60] sm:$0xf]
      %v308 = vld [vmem:[%s165 + $0x64] sm:$0xf]
      %v309 = vld [vmem:[%s165 + $0x68] sm:$0xf]
      %v310 = vld [vmem:[%s165 + $0x6c] sm:$0xf]
      %v311 = vld [vmem:[%s165 + $0x70] sm:$0xf]
      %v312 = vld [vmem:[%s165 + $0x74] sm:$0xf]
      %v313 = vld [vmem:[%s165 + $0x78] sm:$0xf]
      %v314 = vld [vmem:[%s165 + $0x7c] sm:$0xf]
      %vm315 = vsmask.f32 4368
      %vm316 = vmor %vm183, %vm315
      %v318 = vshrl.u32 %v283, 16
      %v320 = vrot.slane %v318, 7
      %v321 = vshll.u32 %v283, 16
      %v323 = vor.u32 %v320, %v321
      %v324 = vrot.slane %v320, 4
      %v326 = vshrl.u32 %v284, 16
      %v328 = vrot.slane %v326, 7
      %v329 = vshll.u32 %v284, 16
      %v331 = vor.u32 %v328, %v329
      %v332 = vsel %vm316, %v324, %v331
      %v333 = vrot.slane %v328, 4
      %v335 = vshrl.u32 %v285, 16
      %v337 = vrot.slane %v335, 7
      %v338 = vshll.u32 %v285, 16
      %v340 = vor.u32 %v337, %v338
      %v341 = vrot.slane %v337, 4
      %v343 = vshrl.u32 %v286, 16
      %v345 = vrot.slane %v343, 7
      %v346 = vshll.u32 %v286, 16
      %v348 = vor.u32 %v345, %v346
      %v349 = vsel %vm316, %v341, %v348
      %v350 = vrot.slane %v345, 4
      %v352 = vshrl.u32 %v287, 16
      %v354 = vrot.slane %v352, 7
      %v355 = vshll.u32 %v287, 16
      %v357 = vor.u32 %v354, %v355
      %v358 = vrot.slane %v354, 4
      %v360 = vshrl.u32 %v288, 16
      %v362 = vrot.slane %v360, 7
      %v363 = vshll.u32 %v288, 16
      %v365 = vor.u32 %v362, %v363
      %v366 = vsel %vm316, %v358, %v365
      %v367 = vrot.slane %v362, 4
      %v369 = vshrl.u32 %v289, 16
      %v371 = vrot.slane %v369, 7
      %v372 = vshll.u32 %v289, 16
      %v374 = vor.u32 %v371, %v372
      %v375 = vrot.slane %v371, 4
      %v377 = vshrl.u32 %v290, 16
      %v379 = vrot.slane %v377, 7
      %v380 = vshll.u32 %v290, 16
      %v382 = vor.u32 %v379, %v380
      %v383 = vsel %vm316, %v375, %v382
      %v384 = vrot.slane %v379, 4
      %v386 = vshrl.u32 %v291, 16
      %v388 = vrot.slane %v386, 7
      %v389 = vshll.u32 %v291, 16
      %v391 = vor.u32 %v388, %v389
      %v392 = vrot.slane %v388, 4
      %v394 = vshrl.u32 %v292, 16
      %v396 = vrot.slane %v394, 7
      %v397 = vshll.u32 %v292, 16
      %v399 = vor.u32 %v396, %v397
      %v400 = vsel %vm316, %v392, %v399
      %v401 = vrot.slane %v396, 4
      %v403 = vshrl.u32 %v293, 16
      %v405 = vrot.slane %v403, 7
      %v406 = vshll.u32 %v293, 16
      %v408 = vor.u32 %v405, %v406
      %v409 = vrot.slane %v405, 4
      %v411 = vshrl.u32 %v294, 16
      %v413 = vrot.slane %v411, 7
      %v414 = vshll.u32 %v294, 16
      %v416 = vor.u32 %v413, %v414
      %v417 = vsel %vm316, %v409, %v416
      %v418 = vrot.slane %v413, 4
      %v420 = vshrl.u32 %v295, 16
      %v422 = vrot.slane %v420, 7
      %v423 = vshll.u32 %v295, 16
      %v425 = vor.u32 %v422, %v423
      %v426 = vrot.slane %v422, 4
      %v428 = vshrl.u32 %v296, 16
      %v430 = vrot.slane %v428, 7
      %v431 = vshll.u32 %v296, 16
      %v433 = vor.u32 %v430, %v431
      %v434 = vsel %vm316, %v426, %v433
      %v435 = vrot.slane %v430, 4
      %v437 = vshrl.u32 %v297, 16
      %v439 = vrot.slane %v437, 7
      %v440 = vshll.u32 %v297, 16
      %v442 = vor.u32 %v439, %v440
      %v443 = vrot.slane %v439, 4
      %v445 = vshrl.u32 %v298, 16
      %v447 = vrot.slane %v445, 7
      %v448 = vshll.u32 %v298, 16
      %v450 = vor.u32 %v447, %v448
      %v451 = vsel %vm316, %v443, %v450
      %v452 = vrot.slane %v447, 4
      %v454 = vshrl.u32 %v299, 16
      %v456 = vrot.slane %v454, 7
      %v457 = vshll.u32 %v299, 16
      %v459 = vor.u32 %v456, %v457
      %v460 = vrot.slane %v456, 4
      %v462 = vshrl.u32 %v300, 16
      %v464 = vrot.slane %v462, 7
      %v465 = vshll.u32 %v300, 16
      %v467 = vor.u32 %v464, %v465
      %v468 = vsel %vm316, %v460, %v467
      %v469 = vrot.slane %v464, 4
      %v471 = vshrl.u32 %v301, 16
      %v473 = vrot.slane %v471, 7
      %v474 = vshll.u32 %v301, 16
      %v476 = vor.u32 %v473, %v474
      %v477 = vrot.slane %v473, 4
      %v479 = vshrl.u32 %v302, 16
      %v481 = vrot.slane %v479, 7
      %v482 = vshll.u32 %v302, 16
      %v484 = vor.u32 %v481, %v482
      %v485 = vsel %vm316, %v477, %v484
      %v486 = vrot.slane %v481, 4
      %v488 = vshrl.u32 %v303, 16
      %v490 = vrot.slane %v488, 7
      %v491 = vshll.u32 %v303, 16
      %v493 = vor.u32 %v490, %v491
      %v494 = vrot.slane %v490, 4
      %v496 = vshrl.u32 %v304, 16
      %v498 = vrot.slane %v496, 7
      %v499 = vshll.u32 %v304, 16
      %v501 = vor.u32 %v498, %v499
      %v502 = vsel %vm316, %v494, %v501
      %v503 = vrot.slane %v498, 4
      %v505 = vshrl.u32 %v305, 16
      %v507 = vrot.slane %v505, 7
      %v508 = vshll.u32 %v305, 16
      %v510 = vor.u32 %v507, %v508
      %v511 = vrot.slane %v507, 4
      %v513 = vshrl.u32 %v306, 16
      %v515 = vrot.slane %v513, 7
      %v516 = vshll.u32 %v306, 16
      %v518 = vor.u32 %v515, %v516
      %v519 = vsel %vm316, %v511, %v518
      %v520 = vrot.slane %v515, 4
      %v522 = vshrl.u32 %v307, 16
      %v524 = vrot.slane %v522, 7
      %v525 = vshll.u32 %v307, 16
      %v527 = vor.u32 %v524, %v525
      %v528 = vrot.slane %v524, 4
      %v530 = vshrl.u32 %v308, 16
      %v532 = vrot.slane %v530, 7
      %v533 = vshll.u32 %v308, 16
      %v535 = vor.u32 %v532, %v533
      %v536 = vsel %vm316, %v528, %v535
      %v537 = vrot.slane %v532, 4
      %v539 = vshrl.u32 %v309, 16
      %v541 = vrot.slane %v539, 7
      %v542 = vshll.u32 %v309, 16
      %v544 = vor.u32 %v541, %v542
      %v545 = vrot.slane %v541, 4
      %v547 = vshrl.u32 %v310, 16
      %v549 = vrot.slane %v547, 7
      %v550 = vshll.u32 %v310, 16
      %v552 = vor.u32 %v549, %v550
      %v553 = vsel %vm316, %v545, %v552
      %v554 = vrot.slane %v549, 4
      %v556 = vshrl.u32 %v311, 16
      %v558 = vrot.slane %v556, 7
      %v559 = vshll.u32 %v311, 16
      %v561 = vor.u32 %v558, %v559
      %v562 = vrot.slane %v558, 4
      %v564 = vshrl.u32 %v312, 16
      %v566 = vrot.slane %v564, 7
      %v567 = vshll.u32 %v312, 16
      %v569 = vor.u32 %v566, %v567
      %v570 = vsel %vm316, %v562, %v569
      %v571 = vrot.slane %v566, 4
      %v573 = vshrl.u32 %v313, 16
      %v575 = vrot.slane %v573, 7
      %v576 = vshll.u32 %v313, 16
      %v578 = vor.u32 %v575, %v576
      %v579 = vrot.slane %v575, 4
      %v581 = vshrl.u32 %v314, 16
      %v583 = vrot.slane %v581, 7
      %v584 = vshll.u32 %v314, 16
      %v586 = vor.u32 %v583, %v584
      %v587 = vsel %vm316, %v579, %v586
      %v588 = vrot.slane %v583, 4
      %vm637 = vcmask 60416
      %vm638 = vmand %vm637, %vm233
      %v639 = vld [vmem:[%s181] sm:$0xf]
      %v640 = vsel %vm638, %v323, %v639
      %641 = vst [vmem:[%s181] sm:$0xf] %v640
      %642 = vst.msk [vmem:[%s181 + $0x4] sm:$0xf] %vm172, %v332
      %v643 = vld [vmem:[%s181 + $0x8] sm:$0x1]
      %v644 = vsel %vm184, %v333, %v643
      %645 = vst [vmem:[%s181 + $0x8] sm:$0x1] %v644
      %v646 = vld [vmem:[%s181 + $0xc] sm:$0xf]
      %v647 = vsel %vm638, %v340, %v646
      %648 = vst [vmem:[%s181 + $0xc] sm:$0xf] %v647
      %649 = vst.msk [vmem:[%s181 + $0x10] sm:$0xf] %vm172, %v349
      %v650 = vld [vmem:[%s181 + $0x14] sm:$0x1]
      %v651 = vsel %vm184, %v350, %v650
      %652 = vst [vmem:[%s181 + $0x14] sm:$0x1] %v651
      %v653 = vld [vmem:[%s181 + $0x18] sm:$0xf]
      %v654 = vsel %vm638, %v357, %v653
      %655 = vst [vmem:[%s181 + $0x18] sm:$0xf] %v654
      %656 = vst.msk [vmem:[%s181 + $0x1c] sm:$0xf] %vm172, %v366
      %v657 = vld [vmem:[%s181 + $0x20] sm:$0x1]
      %v658 = vsel %vm184, %v367, %v657
      %659 = vst [vmem:[%s181 + $0x20] sm:$0x1] %v658
      %v660 = vld [vmem:[%s181 + $0x24] sm:$0xf]
      %v661 = vsel %vm638, %v374, %v660
      %662 = vst [vmem:[%s181 + $0x24] sm:$0xf] %v661
      %663 = vst.msk [vmem:[%s181 + $0x28] sm:$0xf] %vm172, %v383
      %v664 = vld [vmem:[%s181 + $0x2c] sm:$0x1]
      %v665 = vsel %vm184, %v384, %v664
      %666 = vst [vmem:[%s181 + $0x2c] sm:$0x1] %v665
      %v667 = vld [vmem:[%s181 + $0x30] sm:$0xf]
      %v668 = vsel %vm638, %v391, %v667
      %669 = vst [vmem:[%s181 + $0x30] sm:$0xf] %v668
      %670 = vst.msk [vmem:[%s181 + $0x34] sm:$0xf] %vm172, %v400
      %v671 = vld [vmem:[%s181 + $0x38] sm:$0x1]
      %v672 = vsel %vm184, %v401, %v671
      %673 = vst [vmem:[%s181 + $0x38] sm:$0x1] %v672
      %v674 = vld [vmem:[%s181 + $0x3c] sm:$0xf]
      %v675 = vsel %vm638, %v408, %v674
      %676 = vst [vmem:[%s181 + $0x3c] sm:$0xf] %v675
      %677 = vst.msk [vmem:[%s181 + $0x40] sm:$0xf] %vm172, %v417
      %v678 = vld [vmem:[%s181 + $0x44] sm:$0x1]
      %v679 = vsel %vm184, %v418, %v678
      %680 = vst [vmem:[%s181 + $0x44] sm:$0x1] %v679
      %v681 = vld [vmem:[%s181 + $0x48] sm:$0xf]
      %v682 = vsel %vm638, %v425, %v681
      %683 = vst [vmem:[%s181 + $0x48] sm:$0xf] %v682
      %684 = vst.msk [vmem:[%s181 + $0x4c] sm:$0xf] %vm172, %v434
      %v685 = vld [vmem:[%s181 + $0x50] sm:$0x1]
      %v686 = vsel %vm184, %v435, %v685
      %687 = vst [vmem:[%s181 + $0x50] sm:$0x1] %v686
      %v688 = vld [vmem:[%s181 + $0x54] sm:$0xf]
      %v689 = vsel %vm638, %v442, %v688
      %690 = vst [vmem:[%s181 + $0x54] sm:$0xf] %v689
      %691 = vst.msk [vmem:[%s181 + $0x58] sm:$0xf] %vm172, %v451
      %v692 = vld [vmem:[%s181 + $0x5c] sm:$0x1]
      %v693 = vsel %vm184, %v452, %v692
      %694 = vst [vmem:[%s181 + $0x5c] sm:$0x1] %v693
      %v695 = vld [vmem:[%s181 + $0x60] sm:$0xf]
      %v696 = vsel %vm638, %v459, %v695
      %697 = vst [vmem:[%s181 + $0x60] sm:$0xf] %v696
      %698 = vst.msk [vmem:[%s181 + $0x64] sm:$0xf] %vm172, %v468
      %v699 = vld [vmem:[%s181 + $0x68] sm:$0x1]
      %v700 = vsel %vm184, %v469, %v699
      %701 = vst [vmem:[%s181 + $0x68] sm:$0x1] %v700
      %v702 = vld [vmem:[%s181 + $0x6c] sm:$0xf]
      %v703 = vsel %vm638, %v476, %v702
      %704 = vst [vmem:[%s181 + $0x6c] sm:$0xf] %v703
      %705 = vst.msk [vmem:[%s181 + $0x70] sm:$0xf] %vm172, %v485
      %v706 = vld [vmem:[%s181 + $0x74] sm:$0x1]
      %v707 = vsel %vm184, %v486, %v706
      %708 = vst [vmem:[%s181 + $0x74] sm:$0x1] %v707
      %v709 = vld [vmem:[%s181 + $0x78] sm:$0xf]
      %v710 = vsel %vm638, %v493, %v709
      %711 = vst [vmem:[%s181 + $0x78] sm:$0xf] %v710
      %712 = vst.msk [vmem:[%s181 + $0x7c] sm:$0xf] %vm172, %v502
      %v713 = vld [vmem:[%s181 + $0x80] sm:$0x1]
      %v714 = vsel %vm184, %v503, %v713
      %715 = vst [vmem:[%s181 + $0x80] sm:$0x1] %v714
      %v716 = vld [vmem:[%s181 + $0x84] sm:$0xf]
      %v717 = vsel %vm638, %v510, %v716
      %718 = vst [vmem:[%s181 + $0x84] sm:$0xf] %v717
      %719 = vst.msk [vmem:[%s181 + $0x88] sm:$0xf] %vm172, %v519
      %v720 = vld [vmem:[%s181 + $0x8c] sm:$0x1]
      %v721 = vsel %vm184, %v520, %v720
      %722 = vst [vmem:[%s181 + $0x8c] sm:$0x1] %v721
      %v723 = vld [vmem:[%s181 + $0x90] sm:$0xf]
      %v724 = vsel %vm638, %v527, %v723
      %725 = vst [vmem:[%s181 + $0x90] sm:$0xf] %v724
      %726 = vst.msk [vmem:[%s181 + $0x94] sm:$0xf] %vm172, %v536
      %v727 = vld [vmem:[%s181 + $0x98] sm:$0x1]
      %v728 = vsel %vm184, %v537, %v727
      %729 = vst [vmem:[%s181 + $0x98] sm:$0x1] %v728
      %v730 = vld [vmem:[%s181 + $0x9c] sm:$0xf]
      %v731 = vsel %vm638, %v544, %v730
      %732 = vst [vmem:[%s181 + $0x9c] sm:$0xf] %v731
      %733 = vst.msk [vmem:[%s181 + $0xa0] sm:$0xf] %vm172, %v553
      %v734 = vld [vmem:[%s181 + $0xa4] sm:$0x1]
      %v735 = vsel %vm184, %v554, %v734
      %736 = vst [vmem:[%s181 + $0xa4] sm:$0x1] %v735
      %v737 = vld [vmem:[%s181 + $0xa8] sm:$0xf]
      %v738 = vsel %vm638, %v561, %v737
      %739 = vst [vmem:[%s181 + $0xa8] sm:$0xf] %v738
      %740 = vst.msk [vmem:[%s181 + $0xac] sm:$0xf] %vm172, %v570
      %v741 = vld [vmem:[%s181 + $0xb0] sm:$0x1]
      %v742 = vsel %vm184, %v571, %v741
      %743 = vst [vmem:[%s181 + $0xb0] sm:$0x1] %v742
      %v744 = vld [vmem:[%s181 + $0xb4] sm:$0xf]
      %v745 = vsel %vm638, %v578, %v744
      %746 = vst [vmem:[%s181 + $0xb4] sm:$0xf] %v745
      %747 = vst.msk [vmem:[%s181 + $0xb8] sm:$0xf] %vm172, %v587
      %v748 = vld [vmem:[%s181 + $0xbc] sm:$0x1]
      %v749 = vsel %vm184, %v588, %v748
      %750 = vst [vmem:[%s181 + $0xbc] sm:$0x1] %v749
      %v751 = vld [vmem:[#allocation2] sm:$0xf]
      %v752 = vld [vmem:[#allocation2 + $0x4] sm:$0xf]
      %v753 = vld [vmem:[#allocation2 + $0xc] sm:$0xf]
      %v754 = vld [vmem:[#allocation2 + $0x10] sm:$0xf]
      %v755 = vld [vmem:[#allocation2 + $0x18] sm:$0xf]
      %v756 = vld [vmem:[#allocation2 + $0x1c] sm:$0xf]
      %v757 = vld [vmem:[#allocation2 + $0x24] sm:$0xf]
      %v758 = vld [vmem:[#allocation2 + $0x28] sm:$0xf]
      %v759 = vld [vmem:[#allocation2 + $0x30] sm:$0xf]
      %v760 = vld [vmem:[#allocation2 + $0x34] sm:$0xf]
      %v761 = vld [vmem:[#allocation2 + $0x3c] sm:$0xf]
      %v762 = vld [vmem:[#allocation2 + $0x40] sm:$0xf]
      %v763 = vld [vmem:[#allocation2 + $0x48] sm:$0xf]
      %v764 = vld [vmem:[#allocation2 + $0x4c] sm:$0xf]
      %v765 = vld [vmem:[#allocation2 + $0x54] sm:$0xf]
      %v766 = vld [vmem:[#allocation2 + $0x58] sm:$0xf]
      %v767 = vld [vmem:[#allocation2 + $0x60] sm:$0xf]
      %v768 = vld [vmem:[#allocation2 + $0x64] sm:$0xf]
      %v769 = vld [vmem:[#allocation2 + $0x6c] sm:$0xf]
      %v770 = vld [vmem:[#allocation2 + $0x70] sm:$0xf]
      %v771 = vld [vmem:[#allocation2 + $0x78] sm:$0xf]
      %v772 = vld [vmem:[#allocation2 + $0x7c] sm:$0xf]
      %v773 = vld [vmem:[#allocation2 + $0x84] sm:$0xf]
      %v774 = vld [vmem:[#allocation2 + $0x88] sm:$0xf]
      %v775 = vld [vmem:[#allocation2 + $0x90] sm:$0xf]
      %v776 = vld [vmem:[#allocation2 + $0x94] sm:$0xf]
      %v777 = vld [vmem:[#allocation2 + $0x9c] sm:$0xf]
      %v778 = vld [vmem:[#allocation2 + $0xa0] sm:$0xf]
      %v779 = vld [vmem:[#allocation2 + $0xa8] sm:$0xf]
      %v780 = vld [vmem:[#allocation2 + $0xac] sm:$0xf]
      %v781 = vld [vmem:[#allocation2 + $0xb4] sm:$0xf]
      %v782 = vld [vmem:[#allocation2 + $0xb8] sm:$0xf]
      %v783 = vld [vmem:[%s1] sm:$0xf]
      %v784 = vld [vmem:[#allocation2 + $0x8] sm:$0x1]
      %v785 = vld [vmem:[#allocation2 + $0x14] sm:$0x1]
      %v786 = vld [vmem:[#allocation2 + $0x20] sm:$0x1]
      %v787 = vld [vmem:[#allocation2 + $0x2c] sm:$0x1]
      %v788 = vld [vmem:[#allocation2 + $0x38] sm:$0x1]
      %v789 = vld [vmem:[#allocation2 + $0x44] sm:$0x1]
      %v790 = vld [vmem:[#allocation2 + $0x50] sm:$0x1]
      %v791 = vld [vmem:[#allocation2 + $0x5c] sm:$0x1]
      %v792 = vld [vmem:[#allocation2 + $0x68] sm:$0x1]
      %v793 = vld [vmem:[#allocation2 + $0x74] sm:$0x1]
      %v794 = vld [vmem:[#allocation2 + $0x80] sm:$0x1]
      %v795 = vld [vmem:[#allocation2 + $0x8c] sm:$0x1]
      %v796 = vld [vmem:[#allocation2 + $0x98] sm:$0x1]
      %v797 = vld [vmem:[#allocation2 + $0xa4] sm:$0x1]
      %v798 = vld [vmem:[#allocation2 + $0xb0] sm:$0x1]
      %v799 = vld [vmem:[#allocation2 + $0xbc] sm:$0x1]
      %vm800 = vsmask.f32 3328
      %vm801 = vsmask.f32 7440
      %vm802 = vmor %vm800, %vm801
      %v804 = vshrl.u32 %v751, 16
      %v806 = vrot.slane %v804, 4
      %v807 = vshll.u32 %v751, 16
      %v809 = vrot.slane %v807, 5
      %v810 = vor.u32 %v806, %v809
      %v811 = vrot.slane %v810, 4
      %v813 = vshll.u32 %v752, 16
      %v815 = vrot.slane %v813, 5
      %v816 = vsel %vm802, %v811, %v815
      %v817 = vshrl.u32 %v752, 16
      %v819 = vrot.slane %v817, 4
      %v820 = vor.u32 %v819, %v815
      %v821 = vrot.slane %v820, 4
      %v823 = vshll.u32 %v784, 16
      %v825 = vrot.slane %v823, 5
      %v826 = vsel %vm802, %v821, %v825
      %v828 = vshrl.u32 %v753, 16
      %v830 = vrot.slane %v828, 4
      %v831 = vshll.u32 %v753, 16
      %v833 = vrot.slane %v831, 5
      %v834 = vor.u32 %v830, %v833
      %v835 = vrot.slane %v834, 4
      %v837 = vshll.u32 %v754, 16
      %v839 = vrot.slane %v837, 5
      %v840 = vsel %vm802, %v835, %v839
      %v841 = vshrl.u32 %v754, 16
      %v843 = vrot.slane %v841, 4
      %v844 = vor.u32 %v843, %v839
      %v845 = vrot.slane %v844, 4
      %v847 = vshll.u32 %v785, 16
      %v849 = vrot.slane %v847, 5
      %v850 = vsel %vm802, %v845, %v849
      %v852 = vshrl.u32 %v755, 16
      %v854 = vrot.slane %v852, 4
      %v855 = vshll.u32 %v755, 16
      %v857 = vrot.slane %v855, 5
      %v858 = vor.u32 %v854, %v857
      %v859 = vrot.slane %v858, 4
      %v861 = vshll.u32 %v756, 16
      %v863 = vrot.slane %v861, 5
      %v864 = vsel %vm802, %v859, %v863
      %v865 = vshrl.u32 %v756, 16
      %v867 = vrot.slane %v865, 4
      %v868 = vor.u32 %v867, %v863
      %v869 = vrot.slane %v868, 4
      %v871 = vshll.u32 %v786, 16
      %v873 = vrot.slane %v871, 5
      %v874 = vsel %vm802, %v869, %v873
      %v876 = vshrl.u32 %v757, 16
      %v878 = vrot.slane %v876, 4
      %v879 = vshll.u32 %v757, 16
      %v881 = vrot.slane %v879, 5
      %v882 = vor.u32 %v878, %v881
      %v883 = vrot.slane %v882, 4
      %v885 = vshll.u32 %v758, 16
      %v887 = vrot.slane %v885, 5
      %v888 = vsel %vm802, %v883, %v887
      %v889 = vshrl.u32 %v758, 16
      %v891 = vrot.slane %v889, 4
      %v892 = vor.u32 %v891, %v887
      %v893 = vrot.slane %v892, 4
      %v895 = vshll.u32 %v787, 16
      %v897 = vrot.slane %v895, 5
      %v898 = vsel %vm802, %v893, %v897
      %v900 = vshrl.u32 %v759, 16
      %v902 = vrot.slane %v900, 4
      %v903 = vshll.u32 %v759, 16
      %v905 = vrot.slane %v903, 5
      %v906 = vor.u32 %v902, %v905
      %v907 = vrot.slane %v906, 4
      %v909 = vshll.u32 %v760, 16
      %v911 = vrot.slane %v909, 5
      %v912 = vsel %vm802, %v907, %v911
      %v913 = vshrl.u32 %v760, 16
      %v915 = vrot.slane %v913, 4
      %v916 = vor.u32 %v915, %v911
      %v917 = vrot.slane %v916, 4
      %v919 = vshll.u32 %v788, 16
      %v921 = vrot.slane %v919, 5
      %v922 = vsel %vm802, %v917, %v921
      %v924 = vshrl.u32 %v761, 16
      %v926 = vrot.slane %v924, 4
      %v927 = vshll.u32 %v761, 16
      %v929 = vrot.slane %v927, 5
      %v930 = vor.u32 %v926, %v929
      %v931 = vrot.slane %v930, 4
      %v933 = vshll.u32 %v762, 16
      %v935 = vrot.slane %v933, 5
      %v936 = vsel %vm802, %v931, %v935
      %v937 = vshrl.u32 %v762, 16
      %v939 = vrot.slane %v937, 4
      %v940 = vor.u32 %v939, %v935
      %v941 = vrot.slane %v940, 4
      %v943 = vshll.u32 %v789, 16
      %v945 = vrot.slane %v943, 5
      %v946 = vsel %vm802, %v941, %v945
      %v948 = vshrl.u32 %v763, 16
      %v950 = vrot.slane %v948, 4
      %v951 = vshll.u32 %v763, 16
      %v953 = vrot.slane %v951, 5
      %v954 = vor.u32 %v950, %v953
      %v955 = vrot.slane %v954, 4
      %v957 = vshll.u32 %v764, 16
      %v959 = vrot.slane %v957, 5
      %v960 = vsel %vm802, %v955, %v959
      %v961 = vshrl.u32 %v764, 16
      %v963 = vrot.slane %v961, 4
      %v964 = vor.u32 %v963, %v959
      %v965 = vrot.slane %v964, 4
      %v967 = vshll.u32 %v790, 16
      %v969 = vrot.slane %v967, 5
      %v970 = vsel %vm802, %v965, %v969
      %v972 = vshrl.u32 %v765, 16
      %v974 = vrot.slane %v972, 4
      %v975 = vshll.u32 %v765, 16
      %v977 = vrot.slane %v975, 5
      %v978 = vor.u32 %v974, %v977
      %v979 = vrot.slane %v978, 4
      %v981 = vshll.u32 %v766, 16
      %v983 = vrot.slane %v981, 5
      %v984 = vsel %vm802, %v979, %v983
      %v985 = vshrl.u32 %v766, 16
      %v987 = vrot.slane %v985, 4
      %v988 = vor.u32 %v987, %v983
      %v989 = vrot.slane %v988, 4
      %v991 = vshll.u32 %v791, 16
      %v993 = vrot.slane %v991, 5
      %v994 = vsel %vm802, %v989, %v993
      %v996 = vshrl.u32 %v767, 16
      %v998 = vrot.slane %v996, 4
      %v999 = vshll.u32 %v767, 16
      %v1001 = vrot.slane %v999, 5
      %v1002 = vor.u32 %v998, %v1001
      %v1003 = vrot.slane %v1002, 4
      %v1005 = vshll.u32 %v768, 16
      %v1007 = vrot.slane %v1005, 5
      %v1008 = vsel %vm802, %v1003, %v1007
      %v1009 = vshrl.u32 %v768, 16
      %v1011 = vrot.slane %v1009, 4
      %v1012 = vor.u32 %v1011, %v1007
      %v1013 = vrot.slane %v1012, 4
      %v1015 = vshll.u32 %v792, 16
      %v1017 = vrot.slane %v1015, 5
      %v1018 = vsel %vm802, %v1013, %v1017
      %v1020 = vshrl.u32 %v769, 16
      %v1022 = vrot.slane %v1020, 4
      %v1023 = vshll.u32 %v769, 16
      %v1025 = vrot.slane %v1023, 5
      %v1026 = vor.u32 %v1022, %v1025
      %v1027 = vrot.slane %v1026, 4
      %v1029 = vshll.u32 %v770, 16
      %v1031 = vrot.slane %v1029, 5
      %v1032 = vsel %vm802, %v1027, %v1031
      %v1033 = vshrl.u32 %v770, 16
      %v1035 = vrot.slane %v1033, 4
      %v1036 = vor.u32 %v1035, %v1031
      %v1037 = vrot.slane %v1036, 4
      %v1039 = vshll.u32 %v793, 16
      %v1041 = vrot.slane %v1039, 5
      %v1042 = vsel %vm802, %v1037, %v1041
      %v1044 = vshrl.u32 %v771, 16
      %v1046 = vrot.slane %v1044, 4
      %v1047 = vshll.u32 %v771, 16
      %v1049 = vrot.slane %v1047, 5
      %v1050 = vor.u32 %v1046, %v1049
      %v1051 = vrot.slane %v1050, 4
      %v1053 = vshll.u32 %v772, 16
      %v1055 = vrot.slane %v1053, 5
      %v1056 = vsel %vm802, %v1051, %v1055
      %v1057 = vshrl.u32 %v772, 16
      %v1059 = vrot.slane %v1057, 4
      %v1060 = vor.u32 %v1059, %v1055
      %v1061 = vrot.slane %v1060, 4
      %v1063 = vshll.u32 %v794, 16
      %v1065 = vrot.slane %v1063, 5
      %v1066 = vsel %vm802, %v1061, %v1065
      %v1068 = vshrl.u32 %v773, 16
      %v1070 = vrot.slane %v1068, 4
      %v1071 = vshll.u32 %v773, 16
      %v1073 = vrot.slane %v1071, 5
      %v1074 = vor.u32 %v1070, %v1073
      %v1075 = vrot.slane %v1074, 4
      %v1077 = vshll.u32 %v774, 16
      %v1079 = vrot.slane %v1077, 5
      %v1080 = vsel %vm802, %v1075, %v1079
      %v1081 = vshrl.u32 %v774, 16
      %v1083 = vrot.slane %v1081, 4
      %v1084 = vor.u32 %v1083, %v1079
      %v1085 = vrot.slane %v1084, 4
      %v1087 = vshll.u32 %v795, 16
      %v1089 = vrot.slane %v1087, 5
      %v1090 = vsel %vm802, %v1085, %v1089
      %v1092 = vshrl.u32 %v775, 16
      %v1094 = vrot.slane %v1092, 4
      %v1095 = vshll.u32 %v775, 16
      %v1097 = vrot.slane %v1095, 5
      %v1098 = vor.u32 %v1094, %v1097
      %v1099 = vrot.slane %v1098, 4
      %v1101 = vshll.u32 %v776, 16
      %v1103 = vrot.slane %v1101, 5
      %v1104 = vsel %vm802, %v1099, %v1103
      %v1105 = vshrl.u32 %v776, 16
      %v1107 = vrot.slane %v1105, 4
      %v1108 = vor.u32 %v1107, %v1103
      %v1109 = vrot.slane %v1108, 4
      %v1111 = vshll.u32 %v796, 16
      %v1113 = vrot.slane %v1111, 5
      %v1114 = vsel %vm802, %v1109, %v1113
      %v1116 = vshrl.u32 %v777, 16
      %v1118 = vrot.slane %v1116, 4
      %v1119 = vshll.u32 %v777, 16
      %v1121 = vrot.slane %v1119, 5
      %v1122 = vor.u32 %v1118, %v1121
      %v1123 = vrot.slane %v1122, 4
      %v1125 = vshll.u32 %v778, 16
      %v1127 = vrot.slane %v1125, 5
      %v1128 = vsel %vm802, %v1123, %v1127
      %v1129 = vshrl.u32 %v778, 16
      %v1131 = vrot.slane %v1129, 4
      %v1132 = vor.u32 %v1131, %v1127
      %v1133 = vrot.slane %v1132, 4
      %v1135 = vshll.u32 %v797, 16
      %v1137 = vrot.slane %v1135, 5
      %v1138 = vsel %vm802, %v1133, %v1137
      %v1140 = vshrl.u32 %v779, 16
      %v1142 = vrot.slane %v1140, 4
      %v1143 = vshll.u32 %v779, 16
      %v1145 = vrot.slane %v1143, 5
      %v1146 = vor.u32 %v1142, %v1145
      %v1147 = vrot.slane %v1146, 4
      %v1149 = vshll.u32 %v780, 16
      %v1151 = vrot.slane %v1149, 5
      %v1152 = vsel %vm802, %v1147, %v1151
      %v1153 = vshrl.u32 %v780, 16
      %v1155 = vrot.slane %v1153, 4
      %v1156 = vor.u32 %v1155, %v1151
      %v1157 = vrot.slane %v1156, 4
      %v1159 = vshll.u32 %v798, 16
      %v1161 = vrot.slane %v1159, 5
      %v1162 = vsel %vm802, %v1157, %v1161
      %v1164 = vshrl.u32 %v781, 16
      %v1166 = vrot.slane %v1164, 4
      %v1167 = vshll.u32 %v781, 16
      %v1169 = vrot.slane %v1167, 5
      %v1170 = vor.u32 %v1166, %v1169
      %v1171 = vrot.slane %v1170, 4
      %v1173 = vshll.u32 %v782, 16
      %v1175 = vrot.slane %v1173, 5
      %v1176 = vsel %vm802, %v1171, %v1175
      %v1177 = vshrl.u32 %v782, 16
      %v1179 = vrot.slane %v1177, 4
      %v1180 = vor.u32 %v1179, %v1175
      %v1181 = vrot.slane %v1180, 4
      %v1183 = vshll.u32 %v799, 16
      %v1185 = vrot.slane %v1183, 5
      %v1186 = vsel %vm802, %v1181, %v1185
      %v1187 = vld [vmem:[%s1 + $0x4] sm:$0xf]
      %v1188 = vunpack.c.l.b16 %v816
      %v1189 = vunpack.c.l.b16 %v826
      %v1190 = vunpack.c.l.b16 %v840
      %v1191 = vunpack.c.l.b16 %v850
      %v1192 = vunpack.c.l.b16 %v864
      %v1193 = vunpack.c.l.b16 %v874
      %v1194 = vunpack.c.l.b16 %v888
      %v1195 = vunpack.c.l.b16 %v898
      %v1196 = vunpack.c.l.b16 %v912
      %v1197 = vunpack.c.l.b16 %v922
      %v1198 = vunpack.c.l.b16 %v936
      %v1199 = vunpack.c.l.b16 %v946
      %v1200 = vunpack.c.l.b16 %v960
      %v1201 = vunpack.c.l.b16 %v970
      %v1202 = vunpack.c.l.b16 %v984
      %v1203 = vunpack.c.l.b16 %v994
      %v1204 = vunpack.c.l.b16 %v1008
      %v1205 = vunpack.c.l.b16 %v1018
      %v1206 = vunpack.c.l.b16 %v1032
      %v1207 = vunpack.c.l.b16 %v1042
      %v1208 = vunpack.c.l.b16 %v1056
      %v1209 = vunpack.c.l.b16 %v1066
      %v1210 = vunpack.c.l.b16 %v1080
      %v1211 = vunpack.c.l.b16 %v1090
      %v1212 = vunpack.c.l.b16 %v1104
      %v1213 = vunpack.c.l.b16 %v1114
      %v1214 = vunpack.c.l.b16 %v1128
      %v1215 = vunpack.c.l.b16 %v1138
      %v1216 = vunpack.c.l.b16 %v1152
      %v1217 = vunpack.c.l.b16 %v1162
      %v1218 = vunpack.c.l.b16 %v1176
      %v1219 = vunpack.c.l.b16 %v1186
      %v1220 = vpack.c.b16 %v1189, %v1188
      %v1221 = vpack.c.b16 %v1191, %v1190
      %v1222 = vpack.c.b16 %v1193, %v1192
      %v1223 = vpack.c.b16 %v1195, %v1194
      %v1224 = vpack.c.b16 %v1197, %v1196
      %v1225 = vpack.c.b16 %v1199, %v1198
      %v1226 = vpack.c.b16 %v1201, %v1200
      %v1227 = vpack.c.b16 %v1203, %v1202
      %v1228 = vpack.c.b16 %v1205, %v1204
      %v1229 = vpack.c.b16 %v1207, %v1206
      %v1230 = vpack.c.b16 %v1209, %v1208
      %v1231 = vpack.c.b16 %v1211, %v1210
      %v1232 = vpack.c.b16 %v1213, %v1212
      %v1233 = vpack.c.b16 %v1215, %v1214
      %v1234 = vpack.c.b16 %v1217, %v1216
      %v1235 = vpack.c.b16 %v1219, %v1218
      %vm1236 = vcmask 64512
      %v1238 = vsel %vm1236, %v1220, 0
      %v1241 = vsel %vm1236, %v1221, 0
      %v1244 = vsel %vm1236, %v1222, 0
      %v1247 = vsel %vm1236, %v1223, 0
      %v1250 = vsel %vm1236, %v1224, 0
      %v1253 = vsel %vm1236, %v1225, 0
      %v1256 = vsel %vm1236, %v1226, 0
      %v1259 = vsel %vm1236, %v1227, 0
      %v1262 = vsel %vm1236, %v1228, 0
      %v1265 = vsel %vm1236, %v1229, 0
      %v1268 = vsel %vm1236, %v1230, 0
      %v1271 = vsel %vm1236, %v1231, 0
      %v1274 = vsel %vm1236, %v1232, 0
      %v1277 = vsel %vm1236, %v1233, 0
      %v1280 = vsel %vm1236, %v1234, 0
      %v1283 = vsel %vm1236, %v1235, 0
      %vm1285 = vcmask 1043456
      %v1287 = vsel %vm1285, %v1187, 0
      %1289 = vmatpush.bf16.msra.mxu0 0
      %1290 = vmatpush.bf16.msra.mxu0 0
      %1291 = vmatpush.bf16.msra.mxu0 0
      %1292 = vmatpush.bf16.msra.mxu0 0
      %1293 = vmatpush.bf16.msra.mxu0 0
      %1294 = vmatpush.bf16.msra.mxu0 0
      %1295 = vmatpush.bf16.msra.mxu0 0
      %1296 = vmatpush.bf16.msra.mxu0 %v1287
      %1297 = vmatmul.bf16.gmra.mxu0 %v1238
      %v1298 = vpop.f32.mrf.mxu0
      %v1299 = vadd.f32 0.0, %v1298
      %v1300 = vpop.f32.mrf.mxu0
      %v1301 = vadd.f32 0.0, %v1300
      %1302 = vmatmul.bf16.gmra.mxu0 %v1241
      %v1303 = vpop.f32.mrf.mxu0
      %v1304 = vadd.f32 0.0, %v1303
      %v1305 = vpop.f32.mrf.mxu0
      %v1306 = vadd.f32 0.0, %v1305
      %1307 = vmatmul.bf16.gmra.mxu0 %v1244
      %v1308 = vpop.f32.mrf.mxu0
      %v1309 = vadd.f32 0.0, %v1308
      %v1310 = vpop.f32.mrf.mxu0
      %v1311 = vadd.f32 0.0, %v1310
      %1312 = vmatmul.bf16.gmra.mxu0 %v1247
      %v1313 = vpop.f32.mrf.mxu0
      %v1314 = vadd.f32 0.0, %v1313
      %v1315 = vpop.f32.mrf.mxu0
      %v1316 = vadd.f32 0.0, %v1315
      %1317 = vmatmul.bf16.gmra.mxu0 %v1250
      %v1318 = vpop.f32.mrf.mxu0
      %v1319 = vadd.f32 0.0, %v1318
      %v1320 = vpop.f32.mrf.mxu0
      %v1321 = vadd.f32 0.0, %v1320
      %1322 = vmatmul.bf16.gmra.mxu0 %v1253
      %v1323 = vpop.f32.mrf.mxu0
      %v1324 = vadd.f32 0.0, %v1323
      %v1325 = vpop.f32.mrf.mxu0
      %v1326 = vadd.f32 0.0, %v1325
      %1327 = vmatmul.bf16.gmra.mxu0 %v1256
      %v1328 = vpop.f32.mrf.mxu0
      %v1329 = vadd.f32 0.0, %v1328
      %v1330 = vpop.f32.mrf.mxu0
      %v1331 = vadd.f32 0.0, %v1330
      %1332 = vmatmul.bf16.gmra.mxu0 %v1259
      %v1333 = vpop.f32.mrf.mxu0
      %v1334 = vadd.f32 0.0, %v1333
      %v1335 = vpop.f32.mrf.mxu0
      %v1336 = vadd.f32 0.0, %v1335
      %1337 = vmatmul.bf16.gmra.mxu0 %v1262
      %v1338 = vpop.f32.mrf.mxu0
      %v1339 = vadd.f32 0.0, %v1338
      %v1340 = vpop.f32.mrf.mxu0
      %v1341 = vadd.f32 0.0, %v1340
      %1342 = vmatmul.bf16.gmra.mxu0 %v1265
      %v1343 = vpop.f32.mrf.mxu0
      %v1344 = vadd.f32 0.0, %v1343
      %v1345 = vpop.f32.mrf.mxu0
      %v1346 = vadd.f32 0.0, %v1345
      %1347 = vmatmul.bf16.gmra.mxu0 %v1268
      %v1348 = vpop.f32.mrf.mxu0
      %v1349 = vadd.f32 0.0, %v1348
      %v1350 = vpop.f32.mrf.mxu0
      %v1351 = vadd.f32 0.0, %v1350
      %1352 = vmatmul.bf16.gmra.mxu0 %v1271
      %v1353 = vpop.f32.mrf.mxu0
      %v1354 = vadd.f32 0.0, %v1353
      %v1355 = vpop.f32.mrf.mxu0
      %v1356 = vadd.f32 0.0, %v1355
      %1357 = vmatmul.bf16.gmra.mxu0 %v1274
      %v1358 = vpop.f32.mrf.mxu0
      %v1359 = vadd.f32 0.0, %v1358
      %v1360 = vpop.f32.mrf.mxu0
      %v1361 = vadd.f32 0.0, %v1360
      %1362 = vmatmul.bf16.gmra.mxu0 %v1277
      %v1363 = vpop.f32.mrf.mxu0
      %v1364 = vadd.f32 0.0, %v1363
      %v1365 = vpop.f32.mrf.mxu0
      %v1366 = vadd.f32 0.0, %v1365
      %1367 = vmatmul.bf16.gmra.mxu0 %v1280
      %v1368 = vpop.f32.mrf.mxu0
      %v1369 = vadd.f32 0.0, %v1368
      %v1370 = vpop.f32.mrf.mxu0
      %v1371 = vadd.f32 0.0, %v1370
      %1372 = vmatmul.bf16.gmra.mxu0 %v1283
      %v1373 = vpop.f32.mrf.mxu0
      %v1374 = vadd.f32 0.0, %v1373
      %v1375 = vpop.f32.mrf.mxu0
      %v1376 = vadd.f32 0.0, %v1375
      %1377 = vdwg.mxu0
      %v1410 = vunpack.c.l.b16 %v751
      %v1411 = vunpack.c.l.b16 %v752
      %v1412 = vunpack.c.l.b16 %v753
      %v1413 = vunpack.c.l.b16 %v754
      %v1414 = vunpack.c.l.b16 %v755
      %v1415 = vunpack.c.l.b16 %v756
      %v1416 = vunpack.c.l.b16 %v757
      %v1417 = vunpack.c.l.b16 %v758
      %v1418 = vunpack.c.l.b16 %v759
      %v1419 = vunpack.c.l.b16 %v760
      %v1420 = vunpack.c.l.b16 %v761
      %v1421 = vunpack.c.l.b16 %v762
      %v1422 = vunpack.c.l.b16 %v763
      %v1423 = vunpack.c.l.b16 %v764
      %v1424 = vunpack.c.l.b16 %v765
      %v1425 = vunpack.c.l.b16 %v766
      %v1426 = vunpack.c.l.b16 %v767
      %v1427 = vunpack.c.l.b16 %v768
      %v1428 = vunpack.c.l.b16 %v769
      %v1429 = vunpack.c.l.b16 %v770
      %v1430 = vunpack.c.l.b16 %v771
      %v1431 = vunpack.c.l.b16 %v772
      %v1432 = vunpack.c.l.b16 %v773
      %v1433 = vunpack.c.l.b16 %v774
      %v1434 = vunpack.c.l.b16 %v775
      %v1435 = vunpack.c.l.b16 %v776
      %v1436 = vunpack.c.l.b16 %v777
      %v1437 = vunpack.c.l.b16 %v778
      %v1438 = vunpack.c.l.b16 %v779
      %v1439 = vunpack.c.l.b16 %v780
      %v1440 = vunpack.c.l.b16 %v781
      %v1441 = vunpack.c.l.b16 %v782
      %v1442 = vpack.c.b16 %v1411, %v1410
      %v1443 = vpack.c.b16 %v1413, %v1412
      %v1444 = vpack.c.b16 %v1415, %v1414
      %v1445 = vpack.c.b16 %v1417, %v1416
      %v1446 = vpack.c.b16 %v1419, %v1418
      %v1447 = vpack.c.b16 %v1421, %v1420
      %v1448 = vpack.c.b16 %v1423, %v1422
      %v1449 = vpack.c.b16 %v1425, %v1424
      %v1450 = vpack.c.b16 %v1427, %v1426
      %v1451 = vpack.c.b16 %v1429, %v1428
      %v1452 = vpack.c.b16 %v1431, %v1430
      %v1453 = vpack.c.b16 %v1433, %v1432
      %v1454 = vpack.c.b16 %v1435, %v1434
      %v1455 = vpack.c.b16 %v1437, %v1436
      %v1456 = vpack.c.b16 %v1439, %v1438
      %v1457 = vpack.c.b16 %v1441, %v1440
      %v1459 = vsel %vm1236, %v1442, 0
      %v1462 = vsel %vm1236, %v1443, 0
      %v1465 = vsel %vm1236, %v1444, 0
      %v1468 = vsel %vm1236, %v1445, 0
      %v1471 = vsel %vm1236, %v1446, 0
      %v1474 = vsel %vm1236, %v1447, 0
      %v1477 = vsel %vm1236, %v1448, 0
      %v1480 = vsel %vm1236, %v1449, 0
      %v1483 = vsel %vm1236, %v1450, 0
      %v1486 = vsel %vm1236, %v1451, 0
      %v1489 = vsel %vm1236, %v1452, 0
      %v1492 = vsel %vm1236, %v1453, 0
      %v1495 = vsel %vm1236, %v1454, 0
      %v1498 = vsel %vm1236, %v1455, 0
      %v1501 = vsel %vm1236, %v1456, 0
      %v1504 = vsel %vm1236, %v1457, 0
      %v1507 = vsel %vm1285, %v783, 0
      %1509 = vmatpush.bf16.msra.mxu0 0
      %1510 = vmatpush.bf16.msra.mxu0 0
      %1511 = vmatpush.bf16.msra.mxu0 0
      %1512 = vmatpush.bf16.msra.mxu0 0
      %1513 = vmatpush.bf16.msra.mxu0 0
      %1514 = vmatpush.bf16.msra.mxu0 0
      %1515 = vmatpush.bf16.msra.mxu0 0
      %1516 = vmatpush.bf16.msra.mxu0 %v1507
      %1517 = vmatmul.bf16.gmra.mxu0 %v1459
      %v1518 = vpop.f32.mrf.mxu0
      %v1519 = vadd.f32 %v1299, %v1518
      %v1520 = vpop.f32.mrf.mxu0
      %v1521 = vadd.f32 %v1301, %v1520
      %1522 = vmatmul.bf16.gmra.mxu0 %v1462
      %v1523 = vpop.f32.mrf.mxu0
      %v1524 = vadd.f32 %v1304, %v1523
      %v1525 = vpop.f32.mrf.mxu0
      %v1526 = vadd.f32 %v1306, %v1525
      %1527 = vmatmul.bf16.gmra.mxu0 %v1465
      %v1528 = vpop.f32.mrf.mxu0
      %v1529 = vadd.f32 %v1309, %v1528
      %v1530 = vpop.f32.mrf.mxu0
      %v1531 = vadd.f32 %v1311, %v1530
      %1532 = vmatmul.bf16.gmra.mxu0 %v1468
      %v1533 = vpop.f32.mrf.mxu0
      %v1534 = vadd.f32 %v1314, %v1533
      %v1535 = vpop.f32.mrf.mxu0
      %v1536 = vadd.f32 %v1316, %v1535
      %1537 = vmatmul.bf16.gmra.mxu0 %v1471
      %v1538 = vpop.f32.mrf.mxu0
      %v1539 = vadd.f32 %v1319, %v1538
      %v1540 = vpop.f32.mrf.mxu0
      %v1541 = vadd.f32 %v1321, %v1540
      %1542 = vmatmul.bf16.gmra.mxu0 %v1474
      %v1543 = vpop.f32.mrf.mxu0
      %v1544 = vadd.f32 %v1324, %v1543
      %v1545 = vpop.f32.mrf.mxu0
      %v1546 = vadd.f32 %v1326, %v1545
      %1547 = vmatmul.bf16.gmra.mxu0 %v1477
      %v1548 = vpop.f32.mrf.mxu0
      %v1549 = vadd.f32 %v1329, %v1548
      %v1550 = vpop.f32.mrf.mxu0
      %v1551 = vadd.f32 %v1331, %v1550
      %1552 = vmatmul.bf16.gmra.mxu0 %v1480
      %v1553 = vpop.f32.mrf.mxu0
      %v1554 = vadd.f32 %v1334, %v1553
      %v1555 = vpop.f32.mrf.mxu0
      %v1556 = vadd.f32 %v1336, %v1555
      %1557 = vmatmul.bf16.gmra.mxu0 %v1483
      %v1558 = vpop.f32.mrf.mxu0
      %v1559 = vadd.f32 %v1339, %v1558
      %v1560 = vpop.f32.mrf.mxu0
      %v1561 = vadd.f32 %v1341, %v1560
      %1562 = vmatmul.bf16.gmra.mxu0 %v1486
      %v1563 = vpop.f32.mrf.mxu0
      %v1564 = vadd.f32 %v1344, %v1563
      %v1565 = vpop.f32.mrf.mxu0
      %v1566 = vadd.f32 %v1346, %v1565
      %1567 = vmatmul.bf16.gmra.mxu0 %v1489
      %v1568 = vpop.f32.mrf.mxu0
      %v1569 = vadd.f32 %v1349, %v1568
      %v1570 = vpop.f32.mrf.mxu0
      %v1571 = vadd.f32 %v1351, %v1570
      %1572 = vmatmul.bf16.gmra.mxu0 %v1492
      %v1573 = vpop.f32.mrf.mxu0
      %v1574 = vadd.f32 %v1354, %v1573
      %v1575 = vpop.f32.mrf.mxu0
      %v1576 = vadd.f32 %v1356, %v1575
      %1577 = vmatmul.bf16.gmra.mxu0 %v1495
      %v1578 = vpop.f32.mrf.mxu0
      %v1579 = vadd.f32 %v1359, %v1578
      %v1580 = vpop.f32.mrf.mxu0
      %v1581 = vadd.f32 %v1361, %v1580
      %1582 = vmatmul.bf16.gmra.mxu0 %v1498
      %v1583 = vpop.f32.mrf.mxu0
      %v1584 = vadd.f32 %v1364, %v1583
      %v1585 = vpop.f32.mrf.mxu0
      %v1586 = vadd.f32 %v1366, %v1585
      %1587 = vmatmul.bf16.gmra.mxu0 %v1501
      %v1588 = vpop.f32.mrf.mxu0
      %v1589 = vadd.f32 %v1369, %v1588
      %v1590 = vpop.f32.mrf.mxu0
      %v1591 = vadd.f32 %v1371, %v1590
      %1592 = vmatmul.bf16.gmra.mxu0 %v1504
      %v1593 = vpop.f32.mrf.mxu0
      %v1594 = vadd.f32 %v1374, %v1593
      %v1595 = vpop.f32.mrf.mxu0
      %v1596 = vadd.f32 %v1376, %v1595
      %1597 = vdwg.mxu0
      %v1598 = vld [vmem:[#allocation2] sm:$0xe]
      %v1599 = vld [vmem:[#allocation2 + $0xc] sm:$0xe]
      %v1600 = vld [vmem:[#allocation2 + $0x18] sm:$0xe]
      %v1601 = vld [vmem:[#allocation2 + $0x24] sm:$0xe]
      %v1602 = vld [vmem:[#allocation2 + $0x30] sm:$0xe]
      %v1603 = vld [vmem:[#allocation2 + $0x3c] sm:$0xe]
      %v1604 = vld [vmem:[#allocation2 + $0x48] sm:$0xe]
      %v1605 = vld [vmem:[#allocation2 + $0x54] sm:$0xe]
      %v1606 = vld [vmem:[#allocation2 + $0x60] sm:$0xe]
      %v1607 = vld [vmem:[#allocation2 + $0x6c] sm:$0xe]
      %v1608 = vld [vmem:[#allocation2 + $0x78] sm:$0xe]
      %v1609 = vld [vmem:[#allocation2 + $0x84] sm:$0xe]
      %v1610 = vld [vmem:[#allocation2 + $0x90] sm:$0xe]
      %v1611 = vld [vmem:[#allocation2 + $0x9c] sm:$0xe]
      %v1612 = vld [vmem:[#allocation2 + $0xa8] sm:$0xe]
      %v1613 = vld [vmem:[#allocation2 + $0xb4] sm:$0xe]
      %vm1646 = vcmask 1042432
      %vm1647 = vcmask 1046532
      %vm1648 = vmor %vm1646, %vm1647
      %v1649 = vrot.slane %v1598, 5
      %v1650 = vrot.slane %v1649, 4
      %v1651 = vrot.slane %v752, 5
      %v1652 = vsel %vm1648, %v1650, %v1651
      %v1653 = vrot.slane %v1651, 4
      %v1654 = vrot.slane %v784, 5
      %v1655 = vsel %vm1648, %v1653, %v1654
      %v1656 = vrot.slane %v1599, 5
      %v1657 = vrot.slane %v1656, 4
      %v1658 = vrot.slane %v754, 5
      %v1659 = vsel %vm1648, %v1657, %v1658
      %v1660 = vrot.slane %v1658, 4
      %v1661 = vrot.slane %v785, 5
      %v1662 = vsel %vm1648, %v1660, %v1661
      %v1663 = vrot.slane %v1600, 5
      %v1664 = vrot.slane %v1663, 4
      %v1665 = vrot.slane %v756, 5
      %v1666 = vsel %vm1648, %v1664, %v1665
      %v1667 = vrot.slane %v1665, 4
      %v1668 = vrot.slane %v786, 5
      %v1669 = vsel %vm1648, %v1667, %v1668
      %v1670 = vrot.slane %v1601, 5
      %v1671 = vrot.slane %v1670, 4
      %v1672 = vrot.slane %v758, 5
      %v1673 = vsel %vm1648, %v1671, %v1672
      %v1674 = vrot.slane %v1672, 4
      %v1675 = vrot.slane %v787, 5
      %v1676 = vsel %vm1648, %v1674, %v1675
      %v1677 = vrot.slane %v1602, 5
      %v1678 = vrot.slane %v1677, 4
      %v1679 = vrot.slane %v760, 5
      %v1680 = vsel %vm1648, %v1678, %v1679
      %v1681 = vrot.slane %v1679, 4
      %v1682 = vrot.slane %v788, 5
      %v1683 = vsel %vm1648, %v1681, %v1682
      %v1684 = vrot.slane %v1603, 5
      %v1685 = vrot.slane %v1684, 4
      %v1686 = vrot.slane %v762, 5
      %v1687 = vsel %vm1648, %v1685, %v1686
      %v1688 = vrot.slane %v1686, 4
      %v1689 = vrot.slane %v789, 5
      %v1690 = vsel %vm1648, %v1688, %v1689
      %v1691 = vrot.slane %v1604, 5
      %v1692 = vrot.slane %v1691, 4
      %v1693 = vrot.slane %v764, 5
      %v1694 = vsel %vm1648, %v1692, %v1693
      %v1695 = vrot.slane %v1693, 4
      %v1696 = vrot.slane %v790, 5
      %v1697 = vsel %vm1648, %v1695, %v1696
      %v1698 = vrot.slane %v1605, 5
      %v1699 = vrot.slane %v1698, 4
      %v1700 = vrot.slane %v766, 5
      %v1701 = vsel %vm1648, %v1699, %v1700
      %v1702 = vrot.slane %v1700, 4
      %v1703 = vrot.slane %v791, 5
      %v1704 = vsel %vm1648, %v1702, %v1703
      %v1705 = vrot.slane %v1606, 5
      %v1706 = vrot.slane %v1705, 4
      %v1707 = vrot.slane %v768, 5
      %v1708 = vsel %vm1648, %v1706, %v1707
      %v1709 = vrot.slane %v1707, 4
      %v1710 = vrot.slane %v792, 5
      %v1711 = vsel %vm1648, %v1709, %v1710
      %v1712 = vrot.slane %v1607, 5
      %v1713 = vrot.slane %v1712, 4
      %v1714 = vrot.slane %v770, 5
      %v1715 = vsel %vm1648, %v1713, %v1714
      %v1716 = vrot.slane %v1714, 4
      %v1717 = vrot.slane %v793, 5
      %v1718 = vsel %vm1648, %v1716, %v1717
      %v1719 = vrot.slane %v1608, 5
      %v1720 = vrot.slane %v1719, 4
      %v1721 = vrot.slane %v772, 5
      %v1722 = vsel %vm1648, %v1720, %v1721
      %v1723 = vrot.slane %v1721, 4
      %v1724 = vrot.slane %v794, 5
      %v1725 = vsel %vm1648, %v1723, %v1724
      %v1726 = vrot.slane %v1609, 5
      %v1727 = vrot.slane %v1726, 4
      %v1728 = vrot.slane %v774, 5
      %v1729 = vsel %vm1648, %v1727, %v1728
      %v1730 = vrot.slane %v1728, 4
      %v1731 = vrot.slane %v795, 5
      %v1732 = vsel %vm1648, %v1730, %v1731
      %v1733 = vrot.slane %v1610, 5
      %v1734 = vrot.slane %v1733, 4
      %v1735 = vrot.slane %v776, 5
      %v1736 = vsel %vm1648, %v1734, %v1735
      %v1737 = vrot.slane %v1735, 4
      %v1738 = vrot.slane %v796, 5
      %v1739 = vsel %vm1648, %v1737, %v1738
      %v1740 = vrot.slane %v1611, 5
      %v1741 = vrot.slane %v1740, 4
      %v1742 = vrot.slane %v778, 5
      %v1743 = vsel %vm1648, %v1741, %v1742
      %v1744 = vrot.slane %v1742, 4
      %v1745 = vrot.slane %v797, 5
      %v1746 = vsel %vm1648, %v1744, %v1745
      %v1747 = vrot.slane %v1612, 5
      %v1748 = vrot.slane %v1747, 4
      %v1749 = vrot.slane %v780, 5
      %v1750 = vsel %vm1648, %v1748, %v1749
      %v1751 = vrot.slane %v1749, 4
      %v1752 = vrot.slane %v798, 5
      %v1753 = vsel %vm1648, %v1751, %v1752
      %v1754 = vrot.slane %v1613, 5
      %v1755 = vrot.slane %v1754, 4
      %v1756 = vrot.slane %v782, 5
      %v1757 = vsel %vm1648, %v1755, %v1756
      %v1758 = vrot.slane %v1756, 4
      %v1759 = vrot.slane %v799, 5
      %v1760 = vsel %vm1648, %v1758, %v1759
      %v1761 = vld [vmem:[%s1 + $0x8] sm:$0xf]
      %v1762 = vunpack.c.l.b16 %v1652
      %v1763 = vunpack.c.l.b16 %v1655
      %v1764 = vunpack.c.l.b16 %v1659
      %v1765 = vunpack.c.l.b16 %v1662
      %v1766 = vunpack.c.l.b16 %v1666
      %v1767 = vunpack.c.l.b16 %v1669
      %v1768 = vunpack.c.l.b16 %v1673
      %v1769 = vunpack.c.l.b16 %v1676
      %v1770 = vunpack.c.l.b16 %v1680
      %v1771 = vunpack.c.l.b16 %v1683
      %v1772 = vunpack.c.l.b16 %v1687
      %v1773 = vunpack.c.l.b16 %v1690
      %v1774 = vunpack.c.l.b16 %v1694
      %v1775 = vunpack.c.l.b16 %v1697
      %v1776 = vunpack.c.l.b16 %v1701
      %v1777 = vunpack.c.l.b16 %v1704
      %v1778 = vunpack.c.l.b16 %v1708
      %v1779 = vunpack.c.l.b16 %v1711
      %v1780 = vunpack.c.l.b16 %v1715
      %v1781 = vunpack.c.l.b16 %v1718
      %v1782 = vunpack.c.l.b16 %v1722
      %v1783 = vunpack.c.l.b16 %v1725
      %v1784 = vunpack.c.l.b16 %v1729
      %v1785 = vunpack.c.l.b16 %v1732
      %v1786 = vunpack.c.l.b16 %v1736
      %v1787 = vunpack.c.l.b16 %v1739
      %v1788 = vunpack.c.l.b16 %v1743
      %v1789 = vunpack.c.l.b16 %v1746
      %v1790 = vunpack.c.l.b16 %v1750
      %v1791 = vunpack.c.l.b16 %v1753
      %v1792 = vunpack.c.l.b16 %v1757
      %v1793 = vunpack.c.l.b16 %v1760
      %v1794 = vpack.c.b16 %v1763, %v1762
      %v1795 = vpack.c.b16 %v1765, %v1764
      %v1796 = vpack.c.b16 %v1767, %v1766
      %v1797 = vpack.c.b16 %v1769, %v1768
      %v1798 = vpack.c.b16 %v1771, %v1770
      %v1799 = vpack.c.b16 %v1773, %v1772
      %v1800 = vpack.c.b16 %v1775, %v1774
      %v1801 = vpack.c.b16 %v1777, %v1776
      %v1802 = vpack.c.b16 %v1779, %v1778
      %v1803 = vpack.c.b16 %v1781, %v1780
      %v1804 = vpack.c.b16 %v1783, %v1782
      %v1805 = vpack.c.b16 %v1785, %v1784
      %v1806 = vpack.c.b16 %v1787, %v1786
      %v1807 = vpack.c.b16 %v1789, %v1788
      %v1808 = vpack.c.b16 %v1791, %v1790
      %v1809 = vpack.c.b16 %v1793, %v1792
      %v1811 = vsel %vm1236, %v1794, 0
      %v1814 = vsel %vm1236, %v1795, 0
      %v1817 = vsel %vm1236, %v1796, 0
      %v1820 = vsel %vm1236, %v1797, 0
      %v1823 = vsel %vm1236, %v1798, 0
      %v1826 = vsel %vm1236, %v1799, 0
      %v1829 = vsel %vm1236, %v1800, 0
      %v1832 = vsel %vm1236, %v1801, 0
      %v1835 = vsel %vm1236, %v1802, 0
      %v1838 = vsel %vm1236, %v1803, 0
      %v1841 = vsel %vm1236, %v1804, 0
      %v1844 = vsel %vm1236, %v1805, 0
      %v1847 = vsel %vm1236, %v1806, 0
      %v1850 = vsel %vm1236, %v1807, 0
      %v1853 = vsel %vm1236, %v1808, 0
      %v1856 = vsel %vm1236, %v1809, 0
      %v1859 = vsel %vm1285, %v1761, 0
      %1861 = vmatpush.bf16.msra.mxu0 0
      %1862 = vmatpush.bf16.msra.mxu0 0
      %1863 = vmatpush.bf16.msra.mxu0 0
      %1864 = vmatpush.bf16.msra.mxu0 0
      %1865 = vmatpush.bf16.msra.mxu0 0
      %1866 = vmatpush.bf16.msra.mxu0 0
      %1867 = vmatpush.bf16.msra.mxu0 0
      %1868 = vmatpush.bf16.msra.mxu0 %v1859
      %1869 = vmatmul.bf16.gmra.mxu0 %v1811
      %v1870 = vpop.f32.mrf.mxu0
      %v1871 = vadd.f32 0.0, %v1870
      %v1872 = vpop.f32.mrf.mxu0
      %v1873 = vadd.f32 0.0, %v1872
      %1874 = vmatmul.bf16.gmra.mxu0 %v1814
      %v1875 = vpop.f32.mrf.mxu0
      %v1876 = vadd.f32 0.0, %v1875
      %v1877 = vpop.f32.mrf.mxu0
      %v1878 = vadd.f32 0.0, %v1877
      %1879 = vmatmul.bf16.gmra.mxu0 %v1817
      %v1880 = vpop.f32.mrf.mxu0
      %v1881 = vadd.f32 0.0, %v1880
      %v1882 = vpop.f32.mrf.mxu0
      %v1883 = vadd.f32 0.0, %v1882
      %1884 = vmatmul.bf16.gmra.mxu0 %v1820
      %v1885 = vpop.f32.mrf.mxu0
      %v1886 = vadd.f32 0.0, %v1885
      %v1887 = vpop.f32.mrf.mxu0
      %v1888 = vadd.f32 0.0, %v1887
      %1889 = vmatmul.bf16.gmra.mxu0 %v1823
      %v1890 = vpop.f32.mrf.mxu0
      %v1891 = vadd.f32 0.0, %v1890
      %v1892 = vpop.f32.mrf.mxu0
      %v1893 = vadd.f32 0.0, %v1892
      %1894 = vmatmul.bf16.gmra.mxu0 %v1826
      %v1895 = vpop.f32.mrf.mxu0
      %v1896 = vadd.f32 0.0, %v1895
      %v1897 = vpop.f32.mrf.mxu0
      %v1898 = vadd.f32 0.0, %v1897
      %1899 = vmatmul.bf16.gmra.mxu0 %v1829
      %v1900 = vpop.f32.mrf.mxu0
      %v1901 = vadd.f32 0.0, %v1900
      %v1902 = vpop.f32.mrf.mxu0
      %v1903 = vadd.f32 0.0, %v1902
      %1904 = vmatmul.bf16.gmra.mxu0 %v1832
      %v1905 = vpop.f32.mrf.mxu0
      %v1906 = vadd.f32 0.0, %v1905
      %v1907 = vpop.f32.mrf.mxu0
      %v1908 = vadd.f32 0.0, %v1907
      %1909 = vmatmul.bf16.gmra.mxu0 %v1835
      %v1910 = vpop.f32.mrf.mxu0
      %v1911 = vadd.f32 0.0, %v1910
      %v1912 = vpop.f32.mrf.mxu0
      %v1913 = vadd.f32 0.0, %v1912
      %1914 = vmatmul.bf16.gmra.mxu0 %v1838
      %v1915 = vpop.f32.mrf.mxu0
      %v1916 = vadd.f32 0.0, %v1915
      %v1917 = vpop.f32.mrf.mxu0
      %v1918 = vadd.f32 0.0, %v1917
      %1919 = vmatmul.bf16.gmra.mxu0 %v1841
      %v1920 = vpop.f32.mrf.mxu0
      %v1921 = vadd.f32 0.0, %v1920
      %v1922 = vpop.f32.mrf.mxu0
      %v1923 = vadd.f32 0.0, %v1922
      %1924 = vmatmul.bf16.gmra.mxu0 %v1844
      %v1925 = vpop.f32.mrf.mxu0
      %v1926 = vadd.f32 0.0, %v1925
      %v1927 = vpop.f32.mrf.mxu0
      %v1928 = vadd.f32 0.0, %v1927
      %1929 = vmatmul.bf16.gmra.mxu0 %v1847
      %v1930 = vpop.f32.mrf.mxu0
      %v1931 = vadd.f32 0.0, %v1930
      %v1932 = vpop.f32.mrf.mxu0
      %v1933 = vadd.f32 0.0, %v1932
      %1934 = vmatmul.bf16.gmra.mxu0 %v1850
      %v1935 = vpop.f32.mrf.mxu0
      %v1936 = vadd.f32 0.0, %v1935
      %v1937 = vpop.f32.mrf.mxu0
      %v1938 = vadd.f32 0.0, %v1937
      %1939 = vmatmul.bf16.gmra.mxu0 %v1853
      %v1940 = vpop.f32.mrf.mxu0
      %v1941 = vadd.f32 0.0, %v1940
      %v1942 = vpop.f32.mrf.mxu0
      %v1943 = vadd.f32 0.0, %v1942
      %1944 = vmatmul.bf16.gmra.mxu0 %v1856
      %v1945 = vpop.f32.mrf.mxu0
      %v1946 = vadd.f32 0.0, %v1945
      %v1947 = vpop.f32.mrf.mxu0
      %v1948 = vadd.f32 0.0, %v1947
      %1949 = vdwg.mxu0
      %v1950 = vadd.f32 %v1519, %v1871
      %v1951 = vadd.f32 %v1521, %v1873
      %v1952 = vadd.f32 %v1524, %v1876
      %v1953 = vadd.f32 %v1526, %v1878
      %v1954 = vadd.f32 %v1529, %v1881
      %v1955 = vadd.f32 %v1531, %v1883
      %v1956 = vadd.f32 %v1534, %v1886
      %v1957 = vadd.f32 %v1536, %v1888
      %v1958 = vadd.f32 %v1539, %v1891
      %v1959 = vadd.f32 %v1541, %v1893
      %v1960 = vadd.f32 %v1544, %v1896
      %v1961 = vadd.f32 %v1546, %v1898
      %v1962 = vadd.f32 %v1549, %v1901
      %v1963 = vadd.f32 %v1551, %v1903
      %v1964 = vadd.f32 %v1554, %v1906
      %v1965 = vadd.f32 %v1556, %v1908
      %v1966 = vadd.f32 %v1559, %v1911
      %v1967 = vadd.f32 %v1561, %v1913
      %v1968 = vadd.f32 %v1564, %v1916
      %v1969 = vadd.f32 %v1566, %v1918
      %v1970 = vadd.f32 %v1569, %v1921
      %v1971 = vadd.f32 %v1571, %v1923
      %v1972 = vadd.f32 %v1574, %v1926
      %v1973 = vadd.f32 %v1576, %v1928
      %v1974 = vadd.f32 %v1579, %v1931
      %v1975 = vadd.f32 %v1581, %v1933
      %v1976 = vadd.f32 %v1584, %v1936
      %v1977 = vadd.f32 %v1586, %v1938
      %v1978 = vadd.f32 %v1589, %v1941
      %v1979 = vadd.f32 %v1591, %v1943
      %v1980 = vadd.f32 %v1594, %v1946
      %v1981 = vadd.f32 %v1596, %v1948
      %v1982 = vld [vmem:[%s181] sm:$0xf]
      %v1983 = vld [vmem:[%s181 + $0x4] sm:$0xf]
      %v1984 = vld [vmem:[%s181 + $0xc] sm:$0xf]
      %v1985 = vld [vmem:[%s181 + $0x10] sm:$0xf]
      %v1986 = vld [vmem:[%s181 + $0x18] sm:$0xf]
      %v1987 = vld [vmem:[%s181 + $0x1c] sm:$0xf]
      %v1988 = vld [vmem:[%s181 + $0x24] sm:$0xf]
      %v1989 = vld [vmem:[%s181 + $0x28] sm:$0xf]
      %v1990 = vld [vmem:[%s181 + $0x30] sm:$0xf]
      %v1991 = vld [vmem:[%s181 + $0x34] sm:$0xf]
      %v1992 = vld [vmem:[%s181 + $0x3c] sm:$0xf]
      %v1993 = vld [vmem:[%s181 + $0x40] sm:$0xf]
      %v1994 = vld [vmem:[%s181 + $0x48] sm:$0xf]
      %v1995 = vld [vmem:[%s181 + $0x4c] sm:$0xf]
      %v1996 = vld [vmem:[%s181 + $0x54] sm:$0xf]
      %v1997 = vld [vmem:[%s181 + $0x58] sm:$0xf]
      %v1998 = vld [vmem:[%s181 + $0x60] sm:$0xf]
      %v1999 = vld [vmem:[%s181 + $0x64] sm:$0xf]
      %v2000 = vld [vmem:[%s181 + $0x6c] sm:$0xf]
      %v2001 = vld [vmem:[%s181 + $0x70] sm:$0xf]
      %v2002 = vld [vmem:[%s181 + $0x78] sm:$0xf]
      %v2003 = vld [vmem:[%s181 + $0x7c] sm:$0xf]
      %v2004 = vld [vmem:[%s181 + $0x84] sm:$0xf]
      %v2005 = vld [vmem:[%s181 + $0x88] sm:$0xf]
      %v2006 = vld [vmem:[%s181 + $0x90] sm:$0xf]
      %v2007 = vld [vmem:[%s181 + $0x94] sm:$0xf]
      %v2008 = vld [vmem:[%s181 + $0x9c] sm:$0xf]
      %v2009 = vld [vmem:[%s181 + $0xa0] sm:$0xf]
      %v2010 = vld [vmem:[%s181 + $0xa8] sm:$0xf]
      %v2011 = vld [vmem:[%s181 + $0xac] sm:$0xf]
      %v2012 = vld [vmem:[%s181 + $0xb4] sm:$0xf]
      %v2013 = vld [vmem:[%s181 + $0xb8] sm:$0xf]
      %v2014 = vld [vmem:[%s1 + $0xc] sm:$0xf]
      %v2047 = vunpack.c.l.b16 %v1982
      %v2048 = vunpack.c.l.b16 %v1983
      %v2049 = vunpack.c.l.b16 %v1984
      %v2050 = vunpack.c.l.b16 %v1985
      %v2051 = vunpack.c.l.b16 %v1986
      %v2052 = vunpack.c.l.b16 %v1987
      %v2053 = vunpack.c.l.b16 %v1988
      %v2054 = vunpack.c.l.b16 %v1989
      %v2055 = vunpack.c.l.b16 %v1990
      %v2056 = vunpack.c.l.b16 %v1991
      %v2057 = vunpack.c.l.b16 %v1992
      %v2058 = vunpack.c.l.b16 %v1993
      %v2059 = vunpack.c.l.b16 %v1994
      %v2060 = vunpack.c.l.b16 %v1995
      %v2061 = vunpack.c.l.b16 %v1996
      %v2062 = vunpack.c.l.b16 %v1997
      %v2063 = vunpack.c.l.b16 %v1998
      %v2064 = vunpack.c.l.b16 %v1999
      %v2065 = vunpack.c.l.b16 %v2000
      %v2066 = vunpack.c.l.b16 %v2001
      %v2067 = vunpack.c.l.b16 %v2002
      %v2068 = vunpack.c.l.b16 %v2003
      %v2069 = vunpack.c.l.b16 %v2004
      %v2070 = vunpack.c.l.b16 %v2005
      %v2071 = vunpack.c.l.b16 %v2006
      %v2072 = vunpack.c.l.b16 %v2007
      %v2073 = vunpack.c.l.b16 %v2008
      %v2074 = vunpack.c.l.b16 %v2009
      %v2075 = vunpack.c.l.b16 %v2010
      %v2076 = vunpack.c.l.b16 %v2011
      %v2077 = vunpack.c.l.b16 %v2012
      %v2078 = vunpack.c.l.b16 %v2013
      %v2079 = vpack.c.b16 %v2048, %v2047
      %v2080 = vpack.c.b16 %v2050, %v2049
      %v2081 = vpack.c.b16 %v2052, %v2051
      %v2082 = vpack.c.b16 %v2054, %v2053
      %v2083 = vpack.c.b16 %v2056, %v2055
      %v2084 = vpack.c.b16 %v2058, %v2057
      %v2085 = vpack.c.b16 %v2060, %v2059
      %v2086 = vpack.c.b16 %v2062, %v2061
      %v2087 = vpack.c.b16 %v2064, %v2063
      %v2088 = vpack.c.b16 %v2066, %v2065
      %v2089 = vpack.c.b16 %v2068, %v2067
      %v2090 = vpack.c.b16 %v2070, %v2069
      %v2091 = vpack.c.b16 %v2072, %v2071
      %v2092 = vpack.c.b16 %v2074, %v2073
      %v2093 = vpack.c.b16 %v2076, %v2075
      %v2094 = vpack.c.b16 %v2078, %v2077
      %v2096 = vsel %vm1236, %v2079, 0
      %v2099 = vsel %vm1236, %v2080, 0
      %v2102 = vsel %vm1236, %v2081, 0
      %v2105 = vsel %vm1236, %v2082, 0
      %v2108 = vsel %vm1236, %v2083, 0
      %v2111 = vsel %vm1236, %v2084, 0
      %v2114 = vsel %vm1236, %v2085, 0
      %v2117 = vsel %vm1236, %v2086, 0
      %v2120 = vsel %vm1236, %v2087, 0
      %v2123 = vsel %vm1236, %v2088, 0
      %v2126 = vsel %vm1236, %v2089, 0
      %v2129 = vsel %vm1236, %v2090, 0
      %v2132 = vsel %vm1236, %v2091, 0
      %v2135 = vsel %vm1236, %v2092, 0
      %v2138 = vsel %vm1236, %v2093, 0
      %v2141 = vsel %vm1236, %v2094, 0
      %v2144 = vsel %vm1285, %v2014, 0
      %2146 = vmatpush.bf16.msra.mxu0 0
      %2147 = vmatpush.bf16.msra.mxu0 0
      %2148 = vmatpush.bf16.msra.mxu0 0
      %2149 = vmatpush.bf16.msra.mxu0 0
      %2150 = vmatpush.bf16.msra.mxu0 0
      %2151 = vmatpush.bf16.msra.mxu0 0
      %2152 = vmatpush.bf16.msra.mxu0 0
      %2153 = vmatpush.bf16.msra.mxu0 %v2144
      %2154 = vmatmul.bf16.gmra.mxu0 %v2096
      %v2155 = vpop.f32.mrf.mxu0
      %v2156 = vadd.f32 0.0, %v2155
      %v2157 = vpop.f32.mrf.mxu0
      %v2158 = vadd.f32 0.0, %v2157
      %2159 = vmatmul.bf16.gmra.mxu0 %v2099
      %v2160 = vpop.f32.mrf.mxu0
      %v2161 = vadd.f32 0.0, %v2160
      %v2162 = vpop.f32.mrf.mxu0
      %v2163 = vadd.f32 0.0, %v2162
      %2164 = vmatmul.bf16.gmra.mxu0 %v2102
      %v2165 = vpop.f32.mrf.mxu0
      %v2166 = vadd.f32 0.0, %v2165
      %v2167 = vpop.f32.mrf.mxu0
      %v2168 = vadd.f32 0.0, %v2167
      %2169 = vmatmul.bf16.gmra.mxu0 %v2105
      %v2170 = vpop.f32.mrf.mxu0
      %v2171 = vadd.f32 0.0, %v2170
      %v2172 = vpop.f32.mrf.mxu0
      %v2173 = vadd.f32 0.0, %v2172
      %2174 = vmatmul.bf16.gmra.mxu0 %v2108
      %v2175 = vpop.f32.mrf.mxu0
      %v2176 = vadd.f32 0.0, %v2175
      %v2177 = vpop.f32.mrf.mxu0
      %v2178 = vadd.f32 0.0, %v2177
      %2179 = vmatmul.bf16.gmra.mxu0 %v2111
      %v2180 = vpop.f32.mrf.mxu0
      %v2181 = vadd.f32 0.0, %v2180
      %v2182 = vpop.f32.mrf.mxu0
      %v2183 = vadd.f32 0.0, %v2182
      %2184 = vmatmul.bf16.gmra.mxu0 %v2114
      %v2185 = vpop.f32.mrf.mxu0
      %v2186 = vadd.f32 0.0, %v2185
      %v2187 = vpop.f32.mrf.mxu0
      %v2188 = vadd.f32 0.0, %v2187
      %2189 = vmatmul.bf16.gmra.mxu0 %v2117
      %v2190 = vpop.f32.mrf.mxu0
      %v2191 = vadd.f32 0.0, %v2190
      %v2192 = vpop.f32.mrf.mxu0
      %v2193 = vadd.f32 0.0, %v2192
      %2194 = vmatmul.bf16.gmra.mxu0 %v2120
      %v2195 = vpop.f32.mrf.mxu0
      %v2196 = vadd.f32 0.0, %v2195
      %v2197 = vpop.f32.mrf.mxu0
      %v2198 = vadd.f32 0.0, %v2197
      %2199 = vmatmul.bf16.gmra.mxu0 %v2123
      %v2200 = vpop.f32.mrf.mxu0
      %v2201 = vadd.f32 0.0, %v2200
      %v2202 = vpop.f32.mrf.mxu0
      %v2203 = vadd.f32 0.0, %v2202
      %2204 = vmatmul.bf16.gmra.mxu0 %v2126
      %v2205 = vpop.f32.mrf.mxu0
      %v2206 = vadd.f32 0.0, %v2205
      %v2207 = vpop.f32.mrf.mxu0
      %v2208 = vadd.f32 0.0, %v2207
      %2209 = vmatmul.bf16.gmra.mxu0 %v2129
      %v2210 = vpop.f32.mrf.mxu0
      %v2211 = vadd.f32 0.0, %v2210
      %v2212 = vpop.f32.mrf.mxu0
      %v2213 = vadd.f32 0.0, %v2212
      %2214 = vmatmul.bf16.gmra.mxu0 %v2132
      %v2215 = vpop.f32.mrf.mxu0
      %v2216 = vadd.f32 0.0, %v2215
      %v2217 = vpop.f32.mrf.mxu0
      %v2218 = vadd.f32 0.0, %v2217
      %2219 = vmatmul.bf16.gmra.mxu0 %v2135
      %v2220 = vpop.f32.mrf.mxu0
      %v2221 = vadd.f32 0.0, %v2220
      %v2222 = vpop.f32.mrf.mxu0
      %v2223 = vadd.f32 0.0, %v2222
      %2224 = vmatmul.bf16.gmra.mxu0 %v2138
      %v2225 = vpop.f32.mrf.mxu0
      %v2226 = vadd.f32 0.0, %v2225
      %v2227 = vpop.f32.mrf.mxu0
      %v2228 = vadd.f32 0.0, %v2227
      %2229 = vmatmul.bf16.gmra.mxu0 %v2141
      %v2230 = vpop.f32.mrf.mxu0
      %v2231 = vadd.f32 0.0, %v2230
      %v2232 = vpop.f32.mrf.mxu0
      %v2233 = vadd.f32 0.0, %v2232
      %2234 = vdwg.mxu0
      %v2235 = vadd.f32 %v1950, %v2156
      %v2236 = vadd.f32 %v1951, %v2158
      %v2237 = vadd.f32 %v1952, %v2161
      %v2238 = vadd.f32 %v1953, %v2163
      %v2239 = vadd.f32 %v1954, %v2166
      %v2240 = vadd.f32 %v1955, %v2168
      %v2241 = vadd.f32 %v1956, %v2171
      %v2242 = vadd.f32 %v1957, %v2173
      %v2243 = vadd.f32 %v1958, %v2176
      %v2244 = vadd.f32 %v1959, %v2178
      %v2245 = vadd.f32 %v1960, %v2181
      %v2246 = vadd.f32 %v1961, %v2183
      %v2247 = vadd.f32 %v1962, %v2186
      %v2248 = vadd.f32 %v1963, %v2188
      %v2249 = vadd.f32 %v1964, %v2191
      %v2250 = vadd.f32 %v1965, %v2193
      %v2251 = vadd.f32 %v1966, %v2196
      %v2252 = vadd.f32 %v1967, %v2198
      %v2253 = vadd.f32 %v1968, %v2201
      %v2254 = vadd.f32 %v1969, %v2203
      %v2255 = vadd.f32 %v1970, %v2206
      %v2256 = vadd.f32 %v1971, %v2208
      %v2257 = vadd.f32 %v1972, %v2211
      %v2258 = vadd.f32 %v1973, %v2213
      %v2259 = vadd.f32 %v1974, %v2216
      %v2260 = vadd.f32 %v1975, %v2218
      %v2261 = vadd.f32 %v1976, %v2221
      %v2262 = vadd.f32 %v1977, %v2223
      %v2263 = vadd.f32 %v1978, %v2226
      %v2264 = vadd.f32 %v1979, %v2228
      %v2265 = vadd.f32 %v1980, %v2231
      %v2266 = vadd.f32 %v1981, %v2233
      %v2267 = vld [vmem:[%s181] sm:$0xf]
      %v2268 = vld [vmem:[%s181 + $0x4] sm:$0xf]
      %v2269 = vld [vmem:[%s181 + $0x8] sm:$0x1]
      %v2270 = vld [vmem:[%s181 + $0xc] sm:$0xf]
      %v2271 = vld [vmem:[%s181 + $0x10] sm:$0xf]
      %v2272 = vld [vmem:[%s181 + $0x14] sm:$0x1]
      %v2273 = vld [vmem:[%s181 + $0x18] sm:$0xf]
      %v2274 = vld [vmem:[%s181 + $0x1c] sm:$0xf]
      %v2275 = vld [vmem:[%s181 + $0x20] sm:$0x1]
      %v2276 = vld [vmem:[%s181 + $0x24] sm:$0xf]
      %v2277 = vld [vmem:[%s181 + $0x28] sm:$0xf]
      %v2278 = vld [vmem:[%s181 + $0x2c] sm:$0x1]
      %v2279 = vld [vmem:[%s181 + $0x30] sm:$0xf]
      %v2280 = vld [vmem:[%s181 + $0x34] sm:$0xf]
      %v2281 = vld [vmem:[%s181 + $0x38] sm:$0x1]
      %v2282 = vld [vmem:[%s181 + $0x3c] sm:$0xf]
      %v2283 = vld [vmem:[%s181 + $0x40] sm:$0xf]
      %v2284 = vld [vmem:[%s181 + $0x44] sm:$0x1]
      %v2285 = vld [vmem:[%s181 + $0x48] sm:$0xf]
      %v2286 = vld [vmem:[%s181 + $0x4c] sm:$0xf]
      %v2287 = vld [vmem:[%s181 + $0x50] sm:$0x1]
      %v2288 = vld [vmem:[%s181 + $0x54] sm:$0xf]
      %v2289 = vld [vmem:[%s181 + $0x58] sm:$0xf]
      %v2290 = vld [vmem:[%s181 + $0x5c] sm:$0x1]
      %v2291 = vld [vmem:[%s181 + $0x60] sm:$0xf]
      %v2292 = vld [vmem:[%s181 + $0x64] sm:$0xf]
      %v2293 = vld [vmem:[%s181 + $0x68] sm:$0x1]
      %v2294 = vld [vmem:[%s181 + $0x6c] sm:$0xf]
      %v2295 = vld [vmem:[%s181 + $0x70] sm:$0xf]
      %v2296 = vld [vmem:[%s181 + $0x74] sm:$0x1]
      %v2297 = vld [vmem:[%s181 + $0x78] sm:$0xf]
      %v2298 = vld [vmem:[%s181 + $0x7c] sm:$0xf]
      %v2299 = vld [vmem:[%s181 + $0x80] sm:$0x1]
      %v2300 = vld [vmem:[%s181 + $0x84] sm:$0xf]
      %v2301 = vld [vmem:[%s181 + $0x88] sm:$0xf]
      %v2302 = vld [vmem:[%s181 + $0x8c] sm:$0x1]
      %v2303 = vld [vmem:[%s181 + $0x90] sm:$0xf]
      %v2304 = vld [vmem:[%s181 + $0x94] sm:$0xf]
      %v2305 = vld [vmem:[%s181 + $0x98] sm:$0x1]
      %v2306 = vld [vmem:[%s181 + $0x9c] sm:$0xf]
      %v2307 = vld [vmem:[%s181 + $0xa0] sm:$0xf]
      %v2308 = vld [vmem:[%s181 + $0xa4] sm:$0x1]
      %v2309 = vld [vmem:[%s181 + $0xa8] sm:$0xf]
      %v2310 = vld [vmem:[%s181 + $0xac] sm:$0xf]
      %v2311 = vld [vmem:[%s181 + $0xb0] sm:$0x1]
      %v2312 = vld [vmem:[%s181 + $0xb4] sm:$0xf]
      %v2313 = vld [vmem:[%s181 + $0xb8] sm:$0xf]
      %v2314 = vld [vmem:[%s181 + $0xbc] sm:$0x1]
      %v2316 = vshrl.u32 %v2267, 16
      %v2318 = vrot.slane %v2316, 4
      %v2319 = vshll.u32 %v2267, 16
      %v2321 = vrot.slane %v2319, 5
      %v2322 = vor.u32 %v2318, %v2321
      %v2323 = vrot.slane %v2322, 4
      %v2325 = vshll.u32 %v2268, 16
      %v2327 = vrot.slane %v2325, 5
      %v2328 = vsel %vm802, %v2323, %v2327
      %v2329 = vshrl.u32 %v2268, 16
      %v2331 = vrot.slane %v2329, 4
      %v2332 = vor.u32 %v2331, %v2327
      %v2333 = vrot.slane %v2332, 4
      %v2335 = vshll.u32 %v2269, 16
      %v2337 = vrot.slane %v2335, 5
      %v2338 = vsel %vm802, %v2333, %v2337
      %v2340 = vshrl.u32 %v2270, 16
      %v2342 = vrot.slane %v2340, 4
      %v2343 = vshll.u32 %v2270, 16
      %v2345 = vrot.slane %v2343, 5
      %v2346 = vor.u32 %v2342, %v2345
      %v2347 = vrot.slane %v2346, 4
      %v2349 = vshll.u32 %v2271, 16
      %v2351 = vrot.slane %v2349, 5
      %v2352 = vsel %vm802, %v2347, %v2351
      %v2353 = vshrl.u32 %v2271, 16
      %v2355 = vrot.slane %v2353, 4
      %v2356 = vor.u32 %v2355, %v2351
      %v2357 = vrot.slane %v2356, 4
      %v2359 = vshll.u32 %v2272, 16
      %v2361 = vrot.slane %v2359, 5
      %v2362 = vsel %vm802, %v2357, %v2361
      %v2364 = vshrl.u32 %v2273, 16
      %v2366 = vrot.slane %v2364, 4
      %v2367 = vshll.u32 %v2273, 16
      %v2369 = vrot.slane %v2367, 5
      %v2370 = vor.u32 %v2366, %v2369
      %v2371 = vrot.slane %v2370, 4
      %v2373 = vshll.u32 %v2274, 16
      %v2375 = vrot.slane %v2373, 5
      %v2376 = vsel %vm802, %v2371, %v2375
      %v2377 = vshrl.u32 %v2274, 16
      %v2379 = vrot.slane %v2377, 4
      %v2380 = vor.u32 %v2379, %v2375
      %v2381 = vrot.slane %v2380, 4
      %v2383 = vshll.u32 %v2275, 16
      %v2385 = vrot.slane %v2383, 5
      %v2386 = vsel %vm802, %v2381, %v2385
      %v2388 = vshrl.u32 %v2276, 16
      %v2390 = vrot.slane %v2388, 4
      %v2391 = vshll.u32 %v2276, 16
      %v2393 = vrot.slane %v2391, 5
      %v2394 = vor.u32 %v2390, %v2393
      %v2395 = vrot.slane %v2394, 4
      %v2397 = vshll.u32 %v2277, 16
      %v2399 = vrot.slane %v2397, 5
      %v2400 = vsel %vm802, %v2395, %v2399
      %v2401 = vshrl.u32 %v2277, 16
      %v2403 = vrot.slane %v2401, 4
      %v2404 = vor.u32 %v2403, %v2399
      %v2405 = vrot.slane %v2404, 4
      %v2407 = vshll.u32 %v2278, 16
      %v2409 = vrot.slane %v2407, 5
      %v2410 = vsel %vm802, %v2405, %v2409
      %v2412 = vshrl.u32 %v2279, 16
      %v2414 = vrot.slane %v2412, 4
      %v2415 = vshll.u32 %v2279, 16
      %v2417 = vrot.slane %v2415, 5
      %v2418 = vor.u32 %v2414, %v2417
      %v2419 = vrot.slane %v2418, 4
      %v2421 = vshll.u32 %v2280, 16
      %v2423 = vrot.slane %v2421, 5
      %v2424 = vsel %vm802, %v2419, %v2423
      %v2425 = vshrl.u32 %v2280, 16
      %v2427 = vrot.slane %v2425, 4
      %v2428 = vor.u32 %v2427, %v2423
      %v2429 = vrot.slane %v2428, 4
      %v2431 = vshll.u32 %v2281, 16
      %v2433 = vrot.slane %v2431, 5
      %v2434 = vsel %vm802, %v2429, %v2433
      %v2436 = vshrl.u32 %v2282, 16
      %v2438 = vrot.slane %v2436, 4
      %v2439 = vshll.u32 %v2282, 16
      %v2441 = vrot.slane %v2439, 5
      %v2442 = vor.u32 %v2438, %v2441
      %v2443 = vrot.slane %v2442, 4
      %v2445 = vshll.u32 %v2283, 16
      %v2447 = vrot.slane %v2445, 5
      %v2448 = vsel %vm802, %v2443, %v2447
      %v2449 = vshrl.u32 %v2283, 16
      %v2451 = vrot.slane %v2449, 4
      %v2452 = vor.u32 %v2451, %v2447
      %v2453 = vrot.slane %v2452, 4
      %v2455 = vshll.u32 %v2284, 16
      %v2457 = vrot.slane %v2455, 5
      %v2458 = vsel %vm802, %v2453, %v2457
      %v2460 = vshrl.u32 %v2285, 16
      %v2462 = vrot.slane %v2460, 4
      %v2463 = vshll.u32 %v2285, 16
      %v2465 = vrot.slane %v2463, 5
      %v2466 = vor.u32 %v2462, %v2465
      %v2467 = vrot.slane %v2466, 4
      %v2469 = vshll.u32 %v2286, 16
      %v2471 = vrot.slane %v2469, 5
      %v2472 = vsel %vm802, %v2467, %v2471
      %v2473 = vshrl.u32 %v2286, 16
      %v2475 = vrot.slane %v2473, 4
      %v2476 = vor.u32 %v2475, %v2471
      %v2477 = vrot.slane %v2476, 4
      %v2479 = vshll.u32 %v2287, 16
      %v2481 = vrot.slane %v2479, 5
      %v2482 = vsel %vm802, %v2477, %v2481
      %v2484 = vshrl.u32 %v2288, 16
      %v2486 = vrot.slane %v2484, 4
      %v2487 = vshll.u32 %v2288, 16
      %v2489 = vrot.slane %v2487, 5
      %v2490 = vor.u32 %v2486, %v2489
      %v2491 = vrot.slane %v2490, 4
      %v2493 = vshll.u32 %v2289, 16
      %v2495 = vrot.slane %v2493, 5
      %v2496 = vsel %vm802, %v2491, %v2495
      %v2497 = vshrl.u32 %v2289, 16
      %v2499 = vrot.slane %v2497, 4
      %v2500 = vor.u32 %v2499, %v2495
      %v2501 = vrot.slane %v2500, 4
      %v2503 = vshll.u32 %v2290, 16
      %v2505 = vrot.slane %v2503, 5
      %v2506 = vsel %vm802, %v2501, %v2505
      %v2508 = vshrl.u32 %v2291, 16
      %v2510 = vrot.slane %v2508, 4
      %v2511 = vshll.u32 %v2291, 16
      %v2513 = vrot.slane %v2511, 5
      %v2514 = vor.u32 %v2510, %v2513
      %v2515 = vrot.slane %v2514, 4
      %v2517 = vshll.u32 %v2292, 16
      %v2519 = vrot.slane %v2517, 5
      %v2520 = vsel %vm802, %v2515, %v2519
      %v2521 = vshrl.u32 %v2292, 16
      %v2523 = vrot.slane %v2521, 4
      %v2524 = vor.u32 %v2523, %v2519
      %v2525 = vrot.slane %v2524, 4
      %v2527 = vshll.u32 %v2293, 16
      %v2529 = vrot.slane %v2527, 5
      %v2530 = vsel %vm802, %v2525, %v2529
      %v2532 = vshrl.u32 %v2294, 16
      %v2534 = vrot.slane %v2532, 4
      %v2535 = vshll.u32 %v2294, 16
      %v2537 = vrot.slane %v2535, 5
      %v2538 = vor.u32 %v2534, %v2537
      %v2539 = vrot.slane %v2538, 4
      %v2541 = vshll.u32 %v2295, 16
      %v2543 = vrot.slane %v2541, 5
      %v2544 = vsel %vm802, %v2539, %v2543
      %v2545 = vshrl.u32 %v2295, 16
      %v2547 = vrot.slane %v2545, 4
      %v2548 = vor.u32 %v2547, %v2543
      %v2549 = vrot.slane %v2548, 4
      %v2551 = vshll.u32 %v2296, 16
      %v2553 = vrot.slane %v2551, 5
      %v2554 = vsel %vm802, %v2549, %v2553
      %v2556 = vshrl.u32 %v2297, 16
      %v2558 = vrot.slane %v2556, 4
      %v2559 = vshll.u32 %v2297, 16
      %v2561 = vrot.slane %v2559, 5
      %v2562 = vor.u32 %v2558, %v2561
      %v2563 = vrot.slane %v2562, 4
      %v2565 = vshll.u32 %v2298, 16
      %v2567 = vrot.slane %v2565, 5
      %v2568 = vsel %vm802, %v2563, %v2567
      %v2569 = vshrl.u32 %v2298, 16
      %v2571 = vrot.slane %v2569, 4
      %v2572 = vor.u32 %v2571, %v2567
      %v2573 = vrot.slane %v2572, 4
      %v2575 = vshll.u32 %v2299, 16
      %v2577 = vrot.slane %v2575, 5
      %v2578 = vsel %vm802, %v2573, %v2577
      %v2580 = vshrl.u32 %v2300, 16
      %v2582 = vrot.slane %v2580, 4
      %v2583 = vshll.u32 %v2300, 16
      %v2585 = vrot.slane %v2583, 5
      %v2586 = vor.u32 %v2582, %v2585
      %v2587 = vrot.slane %v2586, 4
      %v2589 = vshll.u32 %v2301, 16
      %v2591 = vrot.slane %v2589, 5
      %v2592 = vsel %vm802, %v2587, %v2591
      %v2593 = vshrl.u32 %v2301, 16
      %v2595 = vrot.slane %v2593, 4
      %v2596 = vor.u32 %v2595, %v2591
      %v2597 = vrot.slane %v2596, 4
      %v2599 = vshll.u32 %v2302, 16
      %v2601 = vrot.slane %v2599, 5
      %v2602 = vsel %vm802, %v2597, %v2601
      %v2604 = vshrl.u32 %v2303, 16
      %v2606 = vrot.slane %v2604, 4
      %v2607 = vshll.u32 %v2303, 16
      %v2609 = vrot.slane %v2607, 5
      %v2610 = vor.u32 %v2606, %v2609
      %v2611 = vrot.slane %v2610, 4
      %v2613 = vshll.u32 %v2304, 16
      %v2615 = vrot.slane %v2613, 5
      %v2616 = vsel %vm802, %v2611, %v2615
      %v2617 = vshrl.u32 %v2304, 16
      %v2619 = vrot.slane %v2617, 4
      %v2620 = vor.u32 %v2619, %v2615
      %v2621 = vrot.slane %v2620, 4
      %v2623 = vshll.u32 %v2305, 16
      %v2625 = vrot.slane %v2623, 5
      %v2626 = vsel %vm802, %v2621, %v2625
      %v2628 = vshrl.u32 %v2306, 16
      %v2630 = vrot.slane %v2628, 4
      %v2631 = vshll.u32 %v2306, 16
      %v2633 = vrot.slane %v2631, 5
      %v2634 = vor.u32 %v2630, %v2633
      %v2635 = vrot.slane %v2634, 4
      %v2637 = vshll.u32 %v2307, 16
      %v2639 = vrot.slane %v2637, 5
      %v2640 = vsel %vm802, %v2635, %v2639
      %v2641 = vshrl.u32 %v2307, 16
      %v2643 = vrot.slane %v2641, 4
      %v2644 = vor.u32 %v2643, %v2639
      %v2645 = vrot.slane %v2644, 4
      %v2647 = vshll.u32 %v2308, 16
      %v2649 = vrot.slane %v2647, 5
      %v2650 = vsel %vm802, %v2645, %v2649
      %v2652 = vshrl.u32 %v2309, 16
      %v2654 = vrot.slane %v2652, 4
      %v2655 = vshll.u32 %v2309, 16
      %v2657 = vrot.slane %v2655, 5
      %v2658 = vor.u32 %v2654, %v2657
      %v2659 = vrot.slane %v2658, 4
      %v2661 = vshll.u32 %v2310, 16
      %v2663 = vrot.slane %v2661, 5
      %v2664 = vsel %vm802, %v2659, %v2663
      %v2665 = vshrl.u32 %v2310, 16
      %v2667 = vrot.slane %v2665, 4
      %v2668 = vor.u32 %v2667, %v2663
      %v2669 = vrot.slane %v2668, 4
      %v2671 = vshll.u32 %v2311, 16
      %v2673 = vrot.slane %v2671, 5
      %v2674 = vsel %vm802, %v2669, %v2673
      %v2676 = vshrl.u32 %v2312, 16
      %v2678 = vrot.slane %v2676, 4
      %v2679 = vshll.u32 %v2312, 16
      %v2681 = vrot.slane %v2679, 5
      %v2682 = vor.u32 %v2678, %v2681
      %v2683 = vrot.slane %v2682, 4
      %v2685 = vshll.u32 %v2313, 16
      %v2687 = vrot.slane %v2685, 5
      %v2688 = vsel %vm802, %v2683, %v2687
      %v2689 = vshrl.u32 %v2313, 16
      %v2691 = vrot.slane %v2689, 4
      %v2692 = vor.u32 %v2691, %v2687
      %v2693 = vrot.slane %v2692, 4
      %v2695 = vshll.u32 %v2314, 16
      %v2697 = vrot.slane %v2695, 5
      %v2698 = vsel %vm802, %v2693, %v2697
      %v2699 = vld [vmem:[%s1 + $0x10] sm:$0xf]
      %v2700 = vunpack.c.l.b16 %v2328
      %v2701 = vunpack.c.l.b16 %v2338
      %v2702 = vunpack.c.l.b16 %v2352
      %v2703 = vunpack.c.l.b16 %v2362
      %v2704 = vunpack.c.l.b16 %v2376
      %v2705 = vunpack.c.l.b16 %v2386
      %v2706 = vunpack.c.l.b16 %v2400
      %v2707 = vunpack.c.l.b16 %v2410
      %v2708 = vunpack.c.l.b16 %v2424
      %v2709 = vunpack.c.l.b16 %v2434
      %v2710 = vunpack.c.l.b16 %v2448
      %v2711 = vunpack.c.l.b16 %v2458
      %v2712 = vunpack.c.l.b16 %v2472
      %v2713 = vunpack.c.l.b16 %v2482
      %v2714 = vunpack.c.l.b16 %v2496
      %v2715 = vunpack.c.l.b16 %v2506
      %v2716 = vunpack.c.l.b16 %v2520
      %v2717 = vunpack.c.l.b16 %v2530
      %v2718 = vunpack.c.l.b16 %v2544
      %v2719 = vunpack.c.l.b16 %v2554
      %v2720 = vunpack.c.l.b16 %v2568
      %v2721 = vunpack.c.l.b16 %v2578
      %v2722 = vunpack.c.l.b16 %v2592
      %v2723 = vunpack.c.l.b16 %v2602
      %v2724 = vunpack.c.l.b16 %v2616
      %v2725 = vunpack.c.l.b16 %v2626
      %v2726 = vunpack.c.l.b16 %v2640
      %v2727 = vunpack.c.l.b16 %v2650
      %v2728 = vunpack.c.l.b16 %v2664
      %v2729 = vunpack.c.l.b16 %v2674
      %v2730 = vunpack.c.l.b16 %v2688
      %v2731 = vunpack.c.l.b16 %v2698
      %v2732 = vpack.c.b16 %v2701, %v2700
      %v2733 = vpack.c.b16 %v2703, %v2702
      %v2734 = vpack.c.b16 %v2705, %v2704
      %v2735 = vpack.c.b16 %v2707, %v2706
      %v2736 = vpack.c.b16 %v2709, %v2708
      %v2737 = vpack.c.b16 %v2711, %v2710
      %v2738 = vpack.c.b16 %v2713, %v2712
      %v2739 = vpack.c.b16 %v2715, %v2714
      %v2740 = vpack.c.b16 %v2717, %v2716
      %v2741 = vpack.c.b16 %v2719, %v2718
      %v2742 = vpack.c.b16 %v2721, %v2720
      %v2743 = vpack.c.b16 %v2723, %v2722
      %v2744 = vpack.c.b16 %v2725, %v2724
      %v2745 = vpack.c.b16 %v2727, %v2726
      %v2746 = vpack.c.b16 %v2729, %v2728
      %v2747 = vpack.c.b16 %v2731, %v2730
      %v2749 = vsel %vm1236, %v2732, 0
      %v2752 = vsel %vm1236, %v2733, 0
      %v2755 = vsel %vm1236, %v2734, 0
      %v2758 = vsel %vm1236, %v2735, 0
      %v2761 = vsel %vm1236, %v2736, 0
      %v2764 = vsel %vm1236, %v2737, 0
      %v2767 = vsel %vm1236, %v2738, 0
      %v2770 = vsel %vm1236, %v2739, 0
      %v2773 = vsel %vm1236, %v2740, 0
      %v2776 = vsel %vm1236, %v2741, 0
      %v2779 = vsel %vm1236, %v2742, 0
      %v2782 = vsel %vm1236, %v2743, 0
      %v2785 = vsel %vm1236, %v2744, 0
      %v2788 = vsel %vm1236, %v2745, 0
      %v2791 = vsel %vm1236, %v2746, 0
      %v2794 = vsel %vm1236, %v2747, 0
      %v2797 = vsel %vm1285, %v2699, 0
      %2799 = vmatpush.bf16.msra.mxu0 0
      %2800 = vmatpush.bf16.msra.mxu0 0
      %2801 = vmatpush.bf16.msra.mxu0 0
      %2802 = vmatpush.bf16.msra.mxu0 0
      %2803 = vmatpush.bf16.msra.mxu0 0
      %2804 = vmatpush.bf16.msra.mxu0 0
      %2805 = vmatpush.bf16.msra.mxu0 0
      %2806 = vmatpush.bf16.msra.mxu0 %v2797
      %2807 = vmatmul.bf16.gmra.mxu0 %v2749
      %v2808 = vpop.f32.mrf.mxu0
      %v2809 = vadd.f32 0.0, %v2808
      %v2810 = vpop.f32.mrf.mxu0
      %v2811 = vadd.f32 0.0, %v2810
      %2812 = vmatmul.bf16.gmra.mxu0 %v2752
      %v2813 = vpop.f32.mrf.mxu0
      %v2814 = vadd.f32 0.0, %v2813
      %v2815 = vpop.f32.mrf.mxu0
      %v2816 = vadd.f32 0.0, %v2815
      %2817 = vmatmul.bf16.gmra.mxu0 %v2755
      %v2818 = vpop.f32.mrf.mxu0
      %v2819 = vadd.f32 0.0, %v2818
      %v2820 = vpop.f32.mrf.mxu0
      %v2821 = vadd.f32 0.0, %v2820
      %2822 = vmatmul.bf16.gmra.mxu0 %v2758
      %v2823 = vpop.f32.mrf.mxu0
      %v2824 = vadd.f32 0.0, %v2823
      %v2825 = vpop.f32.mrf.mxu0
      %v2826 = vadd.f32 0.0, %v2825
      %2827 = vmatmul.bf16.gmra.mxu0 %v2761
      %v2828 = vpop.f32.mrf.mxu0
      %v2829 = vadd.f32 0.0, %v2828
      %v2830 = vpop.f32.mrf.mxu0
      %v2831 = vadd.f32 0.0, %v2830
      %2832 = vmatmul.bf16.gmra.mxu0 %v2764
      %v2833 = vpop.f32.mrf.mxu0
      %v2834 = vadd.f32 0.0, %v2833
      %v2835 = vpop.f32.mrf.mxu0
      %v2836 = vadd.f32 0.0, %v2835
      %2837 = vmatmul.bf16.gmra.mxu0 %v2767
      %v2838 = vpop.f32.mrf.mxu0
      %v2839 = vadd.f32 0.0, %v2838
      %v2840 = vpop.f32.mrf.mxu0
      %v2841 = vadd.f32 0.0, %v2840
      %2842 = vmatmul.bf16.gmra.mxu0 %v2770
      %v2843 = vpop.f32.mrf.mxu0
      %v2844 = vadd.f32 0.0, %v2843
      %v2845 = vpop.f32.mrf.mxu0
      %v2846 = vadd.f32 0.0, %v2845
      %2847 = vmatmul.bf16.gmra.mxu0 %v2773
      %v2848 = vpop.f32.mrf.mxu0
      %v2849 = vadd.f32 0.0, %v2848
      %v2850 = vpop.f32.mrf.mxu0
      %v2851 = vadd.f32 0.0, %v2850
      %2852 = vmatmul.bf16.gmra.mxu0 %v2776
      %v2853 = vpop.f32.mrf.mxu0
      %v2854 = vadd.f32 0.0, %v2853
      %v2855 = vpop.f32.mrf.mxu0
      %v2856 = vadd.f32 0.0, %v2855
      %2857 = vmatmul.bf16.gmra.mxu0 %v2779
      %v2858 = vpop.f32.mrf.mxu0
      %v2859 = vadd.f32 0.0, %v2858
      %v2860 = vpop.f32.mrf.mxu0
      %v2861 = vadd.f32 0.0, %v2860
      %2862 = vmatmul.bf16.gmra.mxu0 %v2782
      %v2863 = vpop.f32.mrf.mxu0
      %v2864 = vadd.f32 0.0, %v2863
      %v2865 = vpop.f32.mrf.mxu0
      %v2866 = vadd.f32 0.0, %v2865
      %2867 = vmatmul.bf16.gmra.mxu0 %v2785
      %v2868 = vpop.f32.mrf.mxu0
      %v2869 = vadd.f32 0.0, %v2868
      %v2870 = vpop.f32.mrf.mxu0
      %v2871 = vadd.f32 0.0, %v2870
      %2872 = vmatmul.bf16.gmra.mxu0 %v2788
      %v2873 = vpop.f32.mrf.mxu0
      %v2874 = vadd.f32 0.0, %v2873
      %v2875 = vpop.f32.mrf.mxu0
      %v2876 = vadd.f32 0.0, %v2875
      %2877 = vmatmul.bf16.gmra.mxu0 %v2791
      %v2878 = vpop.f32.mrf.mxu0
      %v2879 = vadd.f32 0.0, %v2878
      %v2880 = vpop.f32.mrf.mxu0
      %v2881 = vadd.f32 0.0, %v2880
      %2882 = vmatmul.bf16.gmra.mxu0 %v2794
      %v2883 = vpop.f32.mrf.mxu0
      %v2884 = vadd.f32 0.0, %v2883
      %v2885 = vpop.f32.mrf.mxu0
      %v2886 = vadd.f32 0.0, %v2885
      %2887 = vdwg.mxu0
      %v2888 = vadd.f32 %v2235, %v2809
      %v2889 = vadd.f32 %v2236, %v2811
      %v2890 = vadd.f32 %v2237, %v2814
      %v2891 = vadd.f32 %v2238, %v2816
      %v2892 = vadd.f32 %v2239, %v2819
      %v2893 = vadd.f32 %v2240, %v2821
      %v2894 = vadd.f32 %v2241, %v2824
      %v2895 = vadd.f32 %v2242, %v2826
      %v2896 = vadd.f32 %v2243, %v2829
      %v2897 = vadd.f32 %v2244, %v2831
      %v2898 = vadd.f32 %v2245, %v2834
      %v2899 = vadd.f32 %v2246, %v2836
      %v2900 = vadd.f32 %v2247, %v2839
      %v2901 = vadd.f32 %v2248, %v2841
      %v2902 = vadd.f32 %v2249, %v2844
      %v2903 = vadd.f32 %v2250, %v2846
      %v2904 = vadd.f32 %v2251, %v2849
      %v2905 = vadd.f32 %v2252, %v2851
      %v2906 = vadd.f32 %v2253, %v2854
      %v2907 = vadd.f32 %v2254, %v2856
      %v2908 = vadd.f32 %v2255, %v2859
      %v2909 = vadd.f32 %v2256, %v2861
      %v2910 = vadd.f32 %v2257, %v2864
      %v2911 = vadd.f32 %v2258, %v2866
      %v2912 = vadd.f32 %v2259, %v2869
      %v2913 = vadd.f32 %v2260, %v2871
      %v2914 = vadd.f32 %v2261, %v2874
      %v2915 = vadd.f32 %v2262, %v2876
      %v2916 = vadd.f32 %v2263, %v2879
      %v2917 = vadd.f32 %v2264, %v2881
      %v2918 = vadd.f32 %v2265, %v2884
      %v2919 = vadd.f32 %v2266, %v2886
      %v2920 = vld [vmem:[%s181] sm:$0xe]
      %v2921 = vld [vmem:[%s181 + $0xc] sm:$0xe]
      %v2922 = vld [vmem:[%s181 + $0x18] sm:$0xe]
      %v2923 = vld [vmem:[%s181 + $0x24] sm:$0xe]
      %v2924 = vld [vmem:[%s181 + $0x30] sm:$0xe]
      %v2925 = vld [vmem:[%s181 + $0x3c] sm:$0xe]
      %v2926 = vld [vmem:[%s181 + $0x48] sm:$0xe]
      %v2927 = vld [vmem:[%s181 + $0x54] sm:$0xe]
      %v2928 = vld [vmem:[%s181 + $0x60] sm:$0xe]
      %v2929 = vld [vmem:[%s181 + $0x6c] sm:$0xe]
      %v2930 = vld [vmem:[%s181 + $0x78] sm:$0xe]
      %v2931 = vld [vmem:[%s181 + $0x84] sm:$0xe]
      %v2932 = vld [vmem:[%s181 + $0x90] sm:$0xe]
      %v2933 = vld [vmem:[%s181 + $0x9c] sm:$0xe]
      %v2934 = vld [vmem:[%s181 + $0xa8] sm:$0xe]
      %v2935 = vld [vmem:[%s181 + $0xb4] sm:$0xe]
      %v2984 = vrot.slane %v2920, 5
      %v2985 = vrot.slane %v2984, 4
      %v2986 = vrot.slane %v2268, 5
      %v2987 = vsel %vm1648, %v2985, %v2986
      %v2988 = vrot.slane %v2986, 4
      %v2989 = vrot.slane %v2269, 5
      %v2990 = vsel %vm1648, %v2988, %v2989
      %v2991 = vrot.slane %v2921, 5
      %v2992 = vrot.slane %v2991, 4
      %v2993 = vrot.slane %v2271, 5
      %v2994 = vsel %vm1648, %v2992, %v2993
      %v2995 = vrot.slane %v2993, 4
      %v2996 = vrot.slane %v2272, 5
      %v2997 = vsel %vm1648, %v2995, %v2996
      %v2998 = vrot.slane %v2922, 5
      %v2999 = vrot.slane %v2998, 4
      %v3000 = vrot.slane %v2274, 5
      %v3001 = vsel %vm1648, %v2999, %v3000
      %v3002 = vrot.slane %v3000, 4
      %v3003 = vrot.slane %v2275, 5
      %v3004 = vsel %vm1648, %v3002, %v3003
      %v3005 = vrot.slane %v2923, 5
      %v3006 = vrot.slane %v3005, 4
      %v3007 = vrot.slane %v2277, 5
      %v3008 = vsel %vm1648, %v3006, %v3007
      %v3009 = vrot.slane %v3007, 4
      %v3010 = vrot.slane %v2278, 5
      %v3011 = vsel %vm1648, %v3009, %v3010
      %v3012 = vrot.slane %v2924, 5
      %v3013 = vrot.slane %v3012, 4
      %v3014 = vrot.slane %v2280, 5
      %v3015 = vsel %vm1648, %v3013, %v3014
      %v3016 = vrot.slane %v3014, 4
      %v3017 = vrot.slane %v2281, 5
      %v3018 = vsel %vm1648, %v3016, %v3017
      %v3019 = vrot.slane %v2925, 5
      %v3020 = vrot.slane %v3019, 4
      %v3021 = vrot.slane %v2283, 5
      %v3022 = vsel %vm1648, %v3020, %v3021
      %v3023 = vrot.slane %v3021, 4
      %v3024 = vrot.slane %v2284, 5
      %v3025 = vsel %vm1648, %v3023, %v3024
      %v3026 = vrot.slane %v2926, 5
      %v3027 = vrot.slane %v3026, 4
      %v3028 = vrot.slane %v2286, 5
      %v3029 = vsel %vm1648, %v3027, %v3028
      %v3030 = vrot.slane %v3028, 4
      %v3031 = vrot.slane %v2287, 5
      %v3032 = vsel %vm1648, %v3030, %v3031
      %v3033 = vrot.slane %v2927, 5
      %v3034 = vrot.slane %v3033, 4
      %v3035 = vrot.slane %v2289, 5
      %v3036 = vsel %vm1648, %v3034, %v3035
      %v3037 = vrot.slane %v3035, 4
      %v3038 = vrot.slane %v2290, 5
      %v3039 = vsel %vm1648, %v3037, %v3038
      %v3040 = vrot.slane %v2928, 5
      %v3041 = vrot.slane %v3040, 4
      %v3042 = vrot.slane %v2292, 5
      %v3043 = vsel %vm1648, %v3041, %v3042
      %v3044 = vrot.slane %v3042, 4
      %v3045 = vrot.slane %v2293, 5
      %v3046 = vsel %vm1648, %v3044, %v3045
      %v3047 = vrot.slane %v2929, 5
      %v3048 = vrot.slane %v3047, 4
      %v3049 = vrot.slane %v2295, 5
      %v3050 = vsel %vm1648, %v3048, %v3049
      %v3051 = vrot.slane %v3049, 4
      %v3052 = vrot.slane %v2296, 5
      %v3053 = vsel %vm1648, %v3051, %v3052
      %v3054 = vrot.slane %v2930, 5
      %v3055 = vrot.slane %v3054, 4
      %v3056 = vrot.slane %v2298, 5
      %v3057 = vsel %vm1648, %v3055, %v3056
      %v3058 = vrot.slane %v3056, 4
      %v3059 = vrot.slane %v2299, 5
      %v3060 = vsel %vm1648, %v3058, %v3059
      %v3061 = vrot.slane %v2931, 5
      %v3062 = vrot.slane %v3061, 4
      %v3063 = vrot.slane %v2301, 5
      %v3064 = vsel %vm1648, %v3062, %v3063
      %v3065 = vrot.slane %v3063, 4
      %v3066 = vrot.slane %v2302, 5
      %v3067 = vsel %vm1648, %v3065, %v3066
      %v3068 = vrot.slane %v2932, 5
      %v3069 = vrot.slane %v3068, 4
      %v3070 = vrot.slane %v2304, 5
      %v3071 = vsel %vm1648, %v3069, %v3070
      %v3072 = vrot.slane %v3070, 4
      %v3073 = vrot.slane %v2305, 5
      %v3074 = vsel %vm1648, %v3072, %v3073
      %v3075 = vrot.slane %v2933, 5
      %v3076 = vrot.slane %v3075, 4
      %v3077 = vrot.slane %v2307, 5
      %v3078 = vsel %vm1648, %v3076, %v3077
      %v3079 = vrot.slane %v3077, 4
      %v3080 = vrot.slane %v2308, 5
      %v3081 = vsel %vm1648, %v3079, %v3080
      %v3082 = vrot.slane %v2934, 5
      %v3083 = vrot.slane %v3082, 4
      %v3084 = vrot.slane %v2310, 5
      %v3085 = vsel %vm1648, %v3083, %v3084
      %v3086 = vrot.slane %v3084, 4
      %v3087 = vrot.slane %v2311, 5
      %v3088 = vsel %vm1648, %v3086, %v3087
      %v3089 = vrot.slane %v2935, 5
      %v3090 = vrot.slane %v3089, 4
      %v3091 = vrot.slane %v2313, 5
      %v3092 = vsel %vm1648, %v3090, %v3091
      %v3093 = vrot.slane %v3091, 4
      %v3094 = vrot.slane %v2314, 5
      %v3095 = vsel %vm1648, %v3093, %v3094
      %v3096 = vld [vmem:[%s1 + $0x14] sm:$0xf]
      %v3097 = vunpack.c.l.b16 %v2987
      %v3098 = vunpack.c.l.b16 %v2990
      %v3099 = vunpack.c.l.b16 %v2994
      %v3100 = vunpack.c.l.b16 %v2997
      %v3101 = vunpack.c.l.b16 %v3001
      %v3102 = vunpack.c.l.b16 %v3004
      %v3103 = vunpack.c.l.b16 %v3008
      %v3104 = vunpack.c.l.b16 %v3011
      %v3105 = vunpack.c.l.b16 %v3015
      %v3106 = vunpack.c.l.b16 %v3018
      %v3107 = vunpack.c.l.b16 %v3022
      %v3108 = vunpack.c.l.b16 %v3025
      %v3109 = vunpack.c.l.b16 %v3029
      %v3110 = vunpack.c.l.b16 %v3032
      %v3111 = vunpack.c.l.b16 %v3036
      %v3112 = vunpack.c.l.b16 %v3039
      %v3113 = vunpack.c.l.b16 %v3043
      %v3114 = vunpack.c.l.b16 %v3046
      %v3115 = vunpack.c.l.b16 %v3050
      %v3116 = vunpack.c.l.b16 %v3053
      %v3117 = vunpack.c.l.b16 %v3057
      %v3118 = vunpack.c.l.b16 %v3060
      %v3119 = vunpack.c.l.b16 %v3064
      %v3120 = vunpack.c.l.b16 %v3067
      %v3121 = vunpack.c.l.b16 %v3071
      %v3122 = vunpack.c.l.b16 %v3074
      %v3123 = vunpack.c.l.b16 %v3078
      %v3124 = vunpack.c.l.b16 %v3081
      %v3125 = vunpack.c.l.b16 %v3085
      %v3126 = vunpack.c.l.b16 %v3088
      %v3127 = vunpack.c.l.b16 %v3092
      %v3128 = vunpack.c.l.b16 %v3095
      %v3129 = vpack.c.b16 %v3098, %v3097
      %v3130 = vpack.c.b16 %v3100, %v3099
      %v3131 = vpack.c.b16 %v3102, %v3101
      %v3132 = vpack.c.b16 %v3104, %v3103
      %v3133 = vpack.c.b16 %v3106, %v3105
      %v3134 = vpack.c.b16 %v3108, %v3107
      %v3135 = vpack.c.b16 %v3110, %v3109
      %v3136 = vpack.c.b16 %v3112, %v3111
      %v3137 = vpack.c.b16 %v3114, %v3113
      %v3138 = vpack.c.b16 %v3116, %v3115
      %v3139 = vpack.c.b16 %v3118, %v3117
      %v3140 = vpack.c.b16 %v3120, %v3119
      %v3141 = vpack.c.b16 %v3122, %v3121
      %v3142 = vpack.c.b16 %v3124, %v3123
      %v3143 = vpack.c.b16 %v3126, %v3125
      %v3144 = vpack.c.b16 %v3128, %v3127
      %v3146 = vsel %vm1236, %v3129, 0
      %v3149 = vsel %vm1236, %v3130, 0
      %v3152 = vsel %vm1236, %v3131, 0
      %v3155 = vsel %vm1236, %v3132, 0
      %v3158 = vsel %vm1236, %v3133, 0
      %v3161 = vsel %vm1236, %v3134, 0
      %v3164 = vsel %vm1236, %v3135, 0
      %v3167 = vsel %vm1236, %v3136, 0
      %v3170 = vsel %vm1236, %v3137, 0
      %v3173 = vsel %vm1236, %v3138, 0
      %v3176 = vsel %vm1236, %v3139, 0
      %v3179 = vsel %vm1236, %v3140, 0
      %v3182 = vsel %vm1236, %v3141, 0
      %v3185 = vsel %vm1236, %v3142, 0
      %v3188 = vsel %vm1236, %v3143, 0
      %v3191 = vsel %vm1236, %v3144, 0
      %v3194 = vsel %vm1285, %v3096, 0
      %3196 = vmatpush.bf16.msra.mxu0 0
      %3197 = vmatpush.bf16.msra.mxu0 0
      %3198 = vmatpush.bf16.msra.mxu0 0
      %3199 = vmatpush.bf16.msra.mxu0 0
      %3200 = vmatpush.bf16.msra.mxu0 0
      %3201 = vmatpush.bf16.msra.mxu0 0
      %3202 = vmatpush.bf16.msra.mxu0 0
      %3203 = vmatpush.bf16.msra.mxu0 %v3194
      %3204 = vmatmul.bf16.gmra.mxu0 %v3146
      %v3205 = vpop.f32.mrf.mxu0
      %v3206 = vadd.f32 0.0, %v3205
      %v3207 = vpop.f32.mrf.mxu0
      %v3208 = vadd.f32 0.0, %v3207
      %3209 = vmatmul.bf16.gmra.mxu0 %v3149
      %v3210 = vpop.f32.mrf.mxu0
      %v3211 = vadd.f32 0.0, %v3210
      %v3212 = vpop.f32.mrf.mxu0
      %v3213 = vadd.f32 0.0, %v3212
      %3214 = vmatmul.bf16.gmra.mxu0 %v3152
      %v3215 = vpop.f32.mrf.mxu0
      %v3216 = vadd.f32 0.0, %v3215
      %v3217 = vpop.f32.mrf.mxu0
      %v3218 = vadd.f32 0.0, %v3217
      %3219 = vmatmul.bf16.gmra.mxu0 %v3155
      %v3220 = vpop.f32.mrf.mxu0
      %v3221 = vadd.f32 0.0, %v3220
      %v3222 = vpop.f32.mrf.mxu0
      %v3223 = vadd.f32 0.0, %v3222
      %3224 = vmatmul.bf16.gmra.mxu0 %v3158
      %v3225 = vpop.f32.mrf.mxu0
      %v3226 = vadd.f32 0.0, %v3225
      %v3227 = vpop.f32.mrf.mxu0
      %v3228 = vadd.f32 0.0, %v3227
      %3229 = vmatmul.bf16.gmra.mxu0 %v3161
      %v3230 = vpop.f32.mrf.mxu0
      %v3231 = vadd.f32 0.0, %v3230
      %v3232 = vpop.f32.mrf.mxu0
      %v3233 = vadd.f32 0.0, %v3232
      %3234 = vmatmul.bf16.gmra.mxu0 %v3164
      %v3235 = vpop.f32.mrf.mxu0
      %v3236 = vadd.f32 0.0, %v3235
      %v3237 = vpop.f32.mrf.mxu0
      %v3238 = vadd.f32 0.0, %v3237
      %3239 = vmatmul.bf16.gmra.mxu0 %v3167
      %v3240 = vpop.f32.mrf.mxu0
      %v3241 = vadd.f32 0.0, %v3240
      %v3242 = vpop.f32.mrf.mxu0
      %v3243 = vadd.f32 0.0, %v3242
      %3244 = vmatmul.bf16.gmra.mxu0 %v3170
      %v3245 = vpop.f32.mrf.mxu0
      %v3246 = vadd.f32 0.0, %v3245
      %v3247 = vpop.f32.mrf.mxu0
      %v3248 = vadd.f32 0.0, %v3247
      %3249 = vmatmul.bf16.gmra.mxu0 %v3173
      %v3250 = vpop.f32.mrf.mxu0
      %v3251 = vadd.f32 0.0, %v3250
      %v3252 = vpop.f32.mrf.mxu0
      %v3253 = vadd.f32 0.0, %v3252
      %3254 = vmatmul.bf16.gmra.mxu0 %v3176
      %v3255 = vpop.f32.mrf.mxu0
      %v3256 = vadd.f32 0.0, %v3255
      %v3257 = vpop.f32.mrf.mxu0
      %v3258 = vadd.f32 0.0, %v3257
      %3259 = vmatmul.bf16.gmra.mxu0 %v3179
      %v3260 = vpop.f32.mrf.mxu0
      %v3261 = vadd.f32 0.0, %v3260
      %v3262 = vpop.f32.mrf.mxu0
      %v3263 = vadd.f32 0.0, %v3262
      %3264 = vmatmul.bf16.gmra.mxu0 %v3182
      %v3265 = vpop.f32.mrf.mxu0
      %v3266 = vadd.f32 0.0, %v3265
      %v3267 = vpop.f32.mrf.mxu0
      %v3268 = vadd.f32 0.0, %v3267
      %3269 = vmatmul.bf16.gmra.mxu0 %v3185
      %v3270 = vpop.f32.mrf.mxu0
      %v3271 = vadd.f32 0.0, %v3270
      %v3272 = vpop.f32.mrf.mxu0
      %v3273 = vadd.f32 0.0, %v3272
      %3274 = vmatmul.bf16.gmra.mxu0 %v3188
      %v3275 = vpop.f32.mrf.mxu0
      %v3276 = vadd.f32 0.0, %v3275
      %v3277 = vpop.f32.mrf.mxu0
      %v3278 = vadd.f32 0.0, %v3277
      %3279 = vmatmul.bf16.gmra.mxu0 %v3191
      %v3280 = vpop.f32.mrf.mxu0
      %v3281 = vadd.f32 0.0, %v3280
      %v3282 = vpop.f32.mrf.mxu0
      %v3283 = vadd.f32 0.0, %v3282
      %3284 = vdwg.mxu0
      %v3285 = vadd.f32 %v2888, %v3206
      %v3286 = vadd.f32 %v2889, %v3208
      %v3287 = vadd.f32 %v2890, %v3211
      %v3288 = vadd.f32 %v2891, %v3213
      %v3289 = vadd.f32 %v2892, %v3216
      %v3290 = vadd.f32 %v2893, %v3218
      %v3291 = vadd.f32 %v2894, %v3221
      %v3292 = vadd.f32 %v2895, %v3223
      %v3293 = vadd.f32 %v2896, %v3226
      %v3294 = vadd.f32 %v2897, %v3228
      %v3295 = vadd.f32 %v2898, %v3231
      %v3296 = vadd.f32 %v2899, %v3233
      %v3297 = vadd.f32 %v2900, %v3236
      %v3298 = vadd.f32 %v2901, %v3238
      %v3299 = vadd.f32 %v2902, %v3241
      %v3300 = vadd.f32 %v2903, %v3243
      %v3301 = vadd.f32 %v2904, %v3246
      %v3302 = vadd.f32 %v2905, %v3248
      %v3303 = vadd.f32 %v2906, %v3251
      %v3304 = vadd.f32 %v2907, %v3253
      %v3305 = vadd.f32 %v2908, %v3256
      %v3306 = vadd.f32 %v2909, %v3258
      %v3307 = vadd.f32 %v2910, %v3261
      %v3308 = vadd.f32 %v2911, %v3263
      %v3309 = vadd.f32 %v2912, %v3266
      %v3310 = vadd.f32 %v2913, %v3268
      %v3311 = vadd.f32 %v2914, %v3271
      %v3312 = vadd.f32 %v2915, %v3273
      %v3313 = vadd.f32 %v2916, %v3276
      %v3314 = vadd.f32 %v2917, %v3278
      %v3315 = vadd.f32 %v2918, %v3281
      %v3316 = vadd.f32 %v2919, %v3283
      %s3317 = scalar_lea.vmem [#allocation2], 24
      %v3318 = vld [vmem:[%s3317] sm:$0xf]
      %v3319 = vld [vmem:[%s3317 + $0x4] sm:$0xf]
      %v3320 = vld [vmem:[%s3317 + $0xc] sm:$0xf]
      %v3321 = vld [vmem:[%s3317 + $0x10] sm:$0xf]
      %v3322 = vld [vmem:[%s3317 + $0x18] sm:$0xf]
      %v3323 = vld [vmem:[%s3317 + $0x1c] sm:$0xf]
      %v3324 = vld [vmem:[%s3317 + $0x24] sm:$0xf]
      %v3325 = vld [vmem:[%s3317 + $0x28] sm:$0xf]
      %v3326 = vld [vmem:[%s3317 + $0x30] sm:$0xf]
      %v3327 = vld [vmem:[%s3317 + $0x34] sm:$0xf]
      %v3328 = vld [vmem:[%s3317 + $0x3c] sm:$0xf]
      %v3329 = vld [vmem:[%s3317 + $0x40] sm:$0xf]
      %v3330 = vld [vmem:[%s3317 + $0x48] sm:$0xf]
      %v3331 = vld [vmem:[%s3317 + $0x4c] sm:$0xf]
      %v3332 = vld [vmem:[%s3317 + $0x54] sm:$0xf]
      %v3333 = vld [vmem:[%s3317 + $0x58] sm:$0xf]
      %v3334 = vld [vmem:[%s3317 + $0x60] sm:$0xf]
      %v3335 = vld [vmem:[%s3317 + $0x64] sm:$0xf]
      %v3336 = vld [vmem:[%s3317 + $0x6c] sm:$0xf]
      %v3337 = vld [vmem:[%s3317 + $0x70] sm:$0xf]
      %v3338 = vld [vmem:[%s3317 + $0x78] sm:$0xf]
      %v3339 = vld [vmem:[%s3317 + $0x7c] sm:$0xf]
      %v3340 = vld [vmem:[%s3317 + $0x84] sm:$0xf]
      %v3341 = vld [vmem:[%s3317 + $0x88] sm:$0xf]
      %v3342 = vld [vmem:[%s3317 + $0x90] sm:$0xf]
      %v3343 = vld [vmem:[%s3317 + $0x94] sm:$0xf]
      %v3344 = vld [vmem:[%s3317 + $0x9c] sm:$0xf]
      %v3345 = vld [vmem:[%s3317 + $0xa0] sm:$0xf]
      %v3346 = vld [vmem:[%s3317 + $0xa8] sm:$0xf]
      %v3347 = vld [vmem:[%s3317 + $0xac] sm:$0xf]
      %v3348 = vld [vmem:[%s3317 + $0xb4] sm:$0xf]
      %v3349 = vld [vmem:[%s3317 + $0xb8] sm:$0xf]
      %v3350 = vld [vmem:[%s1 + $0x18] sm:$0xf]
      %v3383 = vunpack.c.l.b16 %v3318
      %v3384 = vunpack.c.l.b16 %v3319
      %v3385 = vunpack.c.l.b16 %v3320
      %v3386 = vunpack.c.l.b16 %v3321
      %v3387 = vunpack.c.l.b16 %v3322
      %v3388 = vunpack.c.l.b16 %v3323
      %v3389 = vunpack.c.l.b16 %v3324
      %v3390 = vunpack.c.l.b16 %v3325
      %v3391 = vunpack.c.l.b16 %v3326
      %v3392 = vunpack.c.l.b16 %v3327
      %v3393 = vunpack.c.l.b16 %v3328
      %v3394 = vunpack.c.l.b16 %v3329
      %v3395 = vunpack.c.l.b16 %v3330
      %v3396 = vunpack.c.l.b16 %v3331
      %v3397 = vunpack.c.l.b16 %v3332
      %v3398 = vunpack.c.l.b16 %v3333
      %v3399 = vunpack.c.l.b16 %v3334
      %v3400 = vunpack.c.l.b16 %v3335
      %v3401 = vunpack.c.l.b16 %v3336
      %v3402 = vunpack.c.l.b16 %v3337
      %v3403 = vunpack.c.l.b16 %v3338
      %v3404 = vunpack.c.l.b16 %v3339
      %v3405 = vunpack.c.l.b16 %v3340
      %v3406 = vunpack.c.l.b16 %v3341
      %v3407 = vunpack.c.l.b16 %v3342
      %v3408 = vunpack.c.l.b16 %v3343
      %v3409 = vunpack.c.l.b16 %v3344
      %v3410 = vunpack.c.l.b16 %v3345
      %v3411 = vunpack.c.l.b16 %v3346
      %v3412 = vunpack.c.l.b16 %v3347
      %v3413 = vunpack.c.l.b16 %v3348
      %v3414 = vunpack.c.l.b16 %v3349
      %v3415 = vpack.c.b16 %v3384, %v3383
      %v3416 = vpack.c.b16 %v3386, %v3385
      %v3417 = vpack.c.b16 %v3388, %v3387
      %v3418 = vpack.c.b16 %v3390, %v3389
      %v3419 = vpack.c.b16 %v3392, %v3391
      %v3420 = vpack.c.b16 %v3394, %v3393
      %v3421 = vpack.c.b16 %v3396, %v3395
      %v3422 = vpack.c.b16 %v3398, %v3397
      %v3423 = vpack.c.b16 %v3400, %v3399
      %v3424 = vpack.c.b16 %v3402, %v3401
      %v3425 = vpack.c.b16 %v3404, %v3403
      %v3426 = vpack.c.b16 %v3406, %v3405
      %v3427 = vpack.c.b16 %v3408, %v3407
      %v3428 = vpack.c.b16 %v3410, %v3409
      %v3429 = vpack.c.b16 %v3412, %v3411
      %v3430 = vpack.c.b16 %v3414, %v3413
      %v3432 = vsel %vm1236, %v3415, 0
      %v3435 = vsel %vm1236, %v3416, 0
      %v3438 = vsel %vm1236, %v3417, 0
      %v3441 = vsel %vm1236, %v3418, 0
      %v3444 = vsel %vm1236, %v3419, 0
      %v3447 = vsel %vm1236, %v3420, 0
      %v3450 = vsel %vm1236, %v3421, 0
      %v3453 = vsel %vm1236, %v3422, 0
      %v3456 = vsel %vm1236, %v3423, 0
      %v3459 = vsel %vm1236, %v3424, 0
      %v3462 = vsel %vm1236, %v3425, 0
      %v3465 = vsel %vm1236, %v3426, 0
      %v3468 = vsel %vm1236, %v3427, 0
      %v3471 = vsel %vm1236, %v3428, 0
      %v3474 = vsel %vm1236, %v3429, 0
      %v3477 = vsel %vm1236, %v3430, 0
      %v3480 = vsel %vm1285, %v3350, 0
      %3482 = vmatpush.bf16.msra.mxu0 0
      %3483 = vmatpush.bf16.msra.mxu0 0
      %3484 = vmatpush.bf16.msra.mxu0 0
      %3485 = vmatpush.bf16.msra.mxu0 0
      %3486 = vmatpush.bf16.msra.mxu0 0
      %3487 = vmatpush.bf16.msra.mxu0 0
      %3488 = vmatpush.bf16.msra.mxu0 0
      %3489 = vmatpush.bf16.msra.mxu0 %v3480
      %3490 = vmatmul.bf16.gmra.mxu0 %v3432
      %v3491 = vpop.f32.mrf.mxu0
      %v3492 = vadd.f32 0.0, %v3491
      %v3493 = vpop.f32.mrf.mxu0
      %v3494 = vadd.f32 0.0, %v3493
      %3495 = vmatmul.bf16.gmra.mxu0 %v3435
      %v3496 = vpop.f32.mrf.mxu0
      %v3497 = vadd.f32 0.0, %v3496
      %v3498 = vpop.f32.mrf.mxu0
      %v3499 = vadd.f32 0.0, %v3498
      %3500 = vmatmul.bf16.gmra.mxu0 %v3438
      %v3501 = vpop.f32.mrf.mxu0
      %v3502 = vadd.f32 0.0, %v3501
      %v3503 = vpop.f32.mrf.mxu0
      %v3504 = vadd.f32 0.0, %v3503
      %3505 = vmatmul.bf16.gmra.mxu0 %v3441
      %v3506 = vpop.f32.mrf.mxu0
      %v3507 = vadd.f32 0.0, %v3506
      %v3508 = vpop.f32.mrf.mxu0
      %v3509 = vadd.f32 0.0, %v3508
      %3510 = vmatmul.bf16.gmra.mxu0 %v3444
      %v3511 = vpop.f32.mrf.mxu0
      %v3512 = vadd.f32 0.0, %v3511
      %v3513 = vpop.f32.mrf.mxu0
      %v3514 = vadd.f32 0.0, %v3513
      %3515 = vmatmul.bf16.gmra.mxu0 %v3447
      %v3516 = vpop.f32.mrf.mxu0
      %v3517 = vadd.f32 0.0, %v3516
      %v3518 = vpop.f32.mrf.mxu0
      %v3519 = vadd.f32 0.0, %v3518
      %3520 = vmatmul.bf16.gmra.mxu0 %v3450
      %v3521 = vpop.f32.mrf.mxu0
      %v3522 = vadd.f32 0.0, %v3521
      %v3523 = vpop.f32.mrf.mxu0
      %v3524 = vadd.f32 0.0, %v3523
      %3525 = vmatmul.bf16.gmra.mxu0 %v3453
      %v3526 = vpop.f32.mrf.mxu0
      %v3527 = vadd.f32 0.0, %v3526
      %v3528 = vpop.f32.mrf.mxu0
      %v3529 = vadd.f32 0.0, %v3528
      %3530 = vmatmul.bf16.gmra.mxu0 %v3456
      %v3531 = vpop.f32.mrf.mxu0
      %v3532 = vadd.f32 0.0, %v3531
      %v3533 = vpop.f32.mrf.mxu0
      %v3534 = vadd.f32 0.0, %v3533
      %3535 = vmatmul.bf16.gmra.mxu0 %v3459
      %v3536 = vpop.f32.mrf.mxu0
      %v3537 = vadd.f32 0.0, %v3536
      %v3538 = vpop.f32.mrf.mxu0
      %v3539 = vadd.f32 0.0, %v3538
      %3540 = vmatmul.bf16.gmra.mxu0 %v3462
      %v3541 = vpop.f32.mrf.mxu0
      %v3542 = vadd.f32 0.0, %v3541
      %v3543 = vpop.f32.mrf.mxu0
      %v3544 = vadd.f32 0.0, %v3543
      %3545 = vmatmul.bf16.gmra.mxu0 %v3465
      %v3546 = vpop.f32.mrf.mxu0
      %v3547 = vadd.f32 0.0, %v3546
      %v3548 = vpop.f32.mrf.mxu0
      %v3549 = vadd.f32 0.0, %v3548
      %3550 = vmatmul.bf16.gmra.mxu0 %v3468
      %v3551 = vpop.f32.mrf.mxu0
      %v3552 = vadd.f32 0.0, %v3551
      %v3553 = vpop.f32.mrf.mxu0
      %v3554 = vadd.f32 0.0, %v3553
      %3555 = vmatmul.bf16.gmra.mxu0 %v3471
      %v3556 = vpop.f32.mrf.mxu0
      %v3557 = vadd.f32 0.0, %v3556
      %v3558 = vpop.f32.mrf.mxu0
      %v3559 = vadd.f32 0.0, %v3558
      %3560 = vmatmul.bf16.gmra.mxu0 %v3474
      %v3561 = vpop.f32.mrf.mxu0
      %v3562 = vadd.f32 0.0, %v3561
      %v3563 = vpop.f32.mrf.mxu0
      %v3564 = vadd.f32 0.0, %v3563
      %3565 = vmatmul.bf16.gmra.mxu0 %v3477
      %v3566 = vpop.f32.mrf.mxu0
      %v3567 = vadd.f32 0.0, %v3566
      %v3568 = vpop.f32.mrf.mxu0
      %v3569 = vadd.f32 0.0, %v3568
      %3570 = vdwg.mxu0
      %v3571 = vadd.f32 %v3285, %v3492
      %v3572 = vadd.f32 %v3286, %v3494
      %v3573 = vadd.f32 %v3287, %v3497
      %v3574 = vadd.f32 %v3288, %v3499
      %v3575 = vadd.f32 %v3289, %v3502
      %v3576 = vadd.f32 %v3290, %v3504
      %v3577 = vadd.f32 %v3291, %v3507
      %v3578 = vadd.f32 %v3292, %v3509
      %v3579 = vadd.f32 %v3293, %v3512
      %v3580 = vadd.f32 %v3294, %v3514
      %v3581 = vadd.f32 %v3295, %v3517
      %v3582 = vadd.f32 %v3296, %v3519
      %v3583 = vadd.f32 %v3297, %v3522
      %v3584 = vadd.f32 %v3298, %v3524
      %v3585 = vadd.f32 %v3299, %v3527
      %v3586 = vadd.f32 %v3300, %v3529
      %v3587 = vadd.f32 %v3301, %v3532
      %v3588 = vadd.f32 %v3302, %v3534
      %v3589 = vadd.f32 %v3303, %v3537
      %v3590 = vadd.f32 %v3304, %v3539
      %v3591 = vadd.f32 %v3305, %v3542
      %v3592 = vadd.f32 %v3306, %v3544
      %v3593 = vadd.f32 %v3307, %v3547
      %v3594 = vadd.f32 %v3308, %v3549
      %v3595 = vadd.f32 %v3309, %v3552
      %v3596 = vadd.f32 %v3310, %v3554
      %v3597 = vadd.f32 %v3311, %v3557
      %v3598 = vadd.f32 %v3312, %v3559
      %v3599 = vadd.f32 %v3313, %v3562
      %v3600 = vadd.f32 %v3314, %v3564
      %v3601 = vadd.f32 %v3315, %v3567
      %v3602 = vadd.f32 %v3316, %v3569
      %v3603 = vld [vmem:[%s3317] sm:$0xf]
      %v3604 = vld [vmem:[%s3317 + $0x4] sm:$0xf]
      %v3605 = vld [vmem:[%s3317 + $0x8] sm:$0x1]
      %v3606 = vld [vmem:[%s3317 + $0xc] sm:$0xf]
      %v3607 = vld [vmem:[%s3317 + $0x10] sm:$0xf]
      %v3608 = vld [vmem:[%s3317 + $0x14] sm:$0x1]
      %v3609 = vld [vmem:[%s3317 + $0x18] sm:$0xf]
      %v3610 = vld [vmem:[%s3317 + $0x1c] sm:$0xf]
      %v3611 = vld [vmem:[%s3317 + $0x20] sm:$0x1]
      %v3612 = vld [vmem:[%s3317 + $0x24] sm:$0xf]
      %v3613 = vld [vmem:[%s3317 + $0x28] sm:$0xf]
      %v3614 = vld [vmem:[%s3317 + $0x2c] sm:$0x1]
      %v3615 = vld [vmem:[%s3317 + $0x30] sm:$0xf]
      %v3616 = vld [vmem:[%s3317 + $0x34] sm:$0xf]
      %v3617 = vld [vmem:[%s3317 + $0x38] sm:$0x1]
      %v3618 = vld [vmem:[%s3317 + $0x3c] sm:$0xf]
      %v3619 = vld [vmem:[%s3317 + $0x40] sm:$0xf]
      %v3620 = vld [vmem:[%s3317 + $0x44] sm:$0x1]
      %v3621 = vld [vmem:[%s3317 + $0x48] sm:$0xf]
      %v3622 = vld [vmem:[%s3317 + $0x4c] sm:$0xf]
      %v3623 = vld [vmem:[%s3317 + $0x50] sm:$0x1]
      %v3624 = vld [vmem:[%s3317 + $0x54] sm:$0xf]
      %v3625 = vld [vmem:[%s3317 + $0x58] sm:$0xf]
      %v3626 = vld [vmem:[%s3317 + $0x5c] sm:$0x1]
      %v3627 = vld [vmem:[%s3317 + $0x60] sm:$0xf]
      %v3628 = vld [vmem:[%s3317 + $0x64] sm:$0xf]
      %v3629 = vld [vmem:[%s3317 + $0x68] sm:$0x1]
      %v3630 = vld [vmem:[%s3317 + $0x6c] sm:$0xf]
      %v3631 = vld [vmem:[%s3317 + $0x70] sm:$0xf]
      %v3632 = vld [vmem:[%s3317 + $0x74] sm:$0x1]
      %v3633 = vld [vmem:[%s3317 + $0x78] sm:$0xf]
      %v3634 = vld [vmem:[%s3317 + $0x7c] sm:$0xf]
      %v3635 = vld [vmem:[%s3317 + $0x80] sm:$0x1]
      %v3636 = vld [vmem:[%s3317 + $0x84] sm:$0xf]
      %v3637 = vld [vmem:[%s3317 + $0x88] sm:$0xf]
      %v3638 = vld [vmem:[%s3317 + $0x8c] sm:$0x1]
      %v3639 = vld [vmem:[%s3317 + $0x90] sm:$0xf]
      %v3640 = vld [vmem:[%s3317 + $0x94] sm:$0xf]
      %v3641 = vld [vmem:[%s3317 + $0x98] sm:$0x1]
      %v3642 = vld [vmem:[%s3317 + $0x9c] sm:$0xf]
      %v3643 = vld [vmem:[%s3317 + $0xa0] sm:$0xf]
      %v3644 = vld [vmem:[%s3317 + $0xa4] sm:$0x1]
      %v3645 = vld [vmem:[%s3317 + $0xa8] sm:$0xf]
      %v3646 = vld [vmem:[%s3317 + $0xac] sm:$0xf]
      %v3647 = vld [vmem:[%s3317 + $0xb0] sm:$0x1]
      %v3648 = vld [vmem:[%s3317 + $0xb4] sm:$0xf]
      %v3649 = vld [vmem:[%s3317 + $0xb8] sm:$0xf]
      %v3650 = vld [vmem:[%s3317 + $0xbc] sm:$0x1]
      %v3652 = vshrl.u32 %v3603, 16
      %v3654 = vrot.slane %v3652, 4
      %v3655 = vshll.u32 %v3603, 16
      %v3657 = vrot.slane %v3655, 5
      %v3658 = vor.u32 %v3654, %v3657
      %v3659 = vrot.slane %v3658, 4
      %v3661 = vshll.u32 %v3604, 16
      %v3663 = vrot.slane %v3661, 5
      %v3664 = vsel %vm802, %v3659, %v3663
      %v3665 = vshrl.u32 %v3604, 16
      %v3667 = vrot.slane %v3665, 4
      %v3668 = vor.u32 %v3667, %v3663
      %v3669 = vrot.slane %v3668, 4
      %v3671 = vshll.u32 %v3605, 16
      %v3673 = vrot.slane %v3671, 5
      %v3674 = vsel %vm802, %v3669, %v3673
      %v3676 = vshrl.u32 %v3606, 16
      %v3678 = vrot.slane %v3676, 4
      %v3679 = vshll.u32 %v3606, 16
      %v3681 = vrot.slane %v3679, 5
      %v3682 = vor.u32 %v3678, %v3681
      %v3683 = vrot.slane %v3682, 4
      %v3685 = vshll.u32 %v3607, 16
      %v3687 = vrot.slane %v3685, 5
      %v3688 = vsel %vm802, %v3683, %v3687
      %v3689 = vshrl.u32 %v3607, 16
      %v3691 = vrot.slane %v3689, 4
      %v3692 = vor.u32 %v3691, %v3687
      %v3693 = vrot.slane %v3692, 4
      %v3695 = vshll.u32 %v3608, 16
      %v3697 = vrot.slane %v3695, 5
      %v3698 = vsel %vm802, %v3693, %v3697
      %v3700 = vshrl.u32 %v3609, 16
      %v3702 = vrot.slane %v3700, 4
      %v3703 = vshll.u32 %v3609, 16
      %v3705 = vrot.slane %v3703, 5
      %v3706 = vor.u32 %v3702, %v3705
      %v3707 = vrot.slane %v3706, 4
      %v3709 = vshll.u32 %v3610, 16
      %v3711 = vrot.slane %v3709, 5
      %v3712 = vsel %vm802, %v3707, %v3711
      %v3713 = vshrl.u32 %v3610, 16
      %v3715 = vrot.slane %v3713, 4
      %v3716 = vor.u32 %v3715, %v3711
      %v3717 = vrot.slane %v3716, 4
      %v3719 = vshll.u32 %v3611, 16
      %v3721 = vrot.slane %v3719, 5
      %v3722 = vsel %vm802, %v3717, %v3721
      %v3724 = vshrl.u32 %v3612, 16
      %v3726 = vrot.slane %v3724, 4
      %v3727 = vshll.u32 %v3612, 16
      %v3729 = vrot.slane %v3727, 5
      %v3730 = vor.u32 %v3726, %v3729
      %v3731 = vrot.slane %v3730, 4
      %v3733 = vshll.u32 %v3613, 16
      %v3735 = vrot.slane %v3733, 5
      %v3736 = vsel %vm802, %v3731, %v3735
      %v3737 = vshrl.u32 %v3613, 16
      %v3739 = vrot.slane %v3737, 4
      %v3740 = vor.u32 %v3739, %v3735
      %v3741 = vrot.slane %v3740, 4
      %v3743 = vshll.u32 %v3614, 16
      %v3745 = vrot.slane %v3743, 5
      %v3746 = vsel %vm802, %v3741, %v3745
      %v3748 = vshrl.u32 %v3615, 16
      %v3750 = vrot.slane %v3748, 4
      %v3751 = vshll.u32 %v3615, 16
      %v3753 = vrot.slane %v3751, 5
      %v3754 = vor.u32 %v3750, %v3753
      %v3755 = vrot.slane %v3754, 4
      %v3757 = vshll.u32 %v3616, 16
      %v3759 = vrot.slane %v3757, 5
      %v3760 = vsel %vm802, %v3755, %v3759
      %v3761 = vshrl.u32 %v3616, 16
      %v3763 = vrot.slane %v3761, 4
      %v3764 = vor.u32 %v3763, %v3759
      %v3765 = vrot.slane %v3764, 4
      %v3767 = vshll.u32 %v3617, 16
      %v3769 = vrot.slane %v3767, 5
      %v3770 = vsel %vm802, %v3765, %v3769
      %v3772 = vshrl.u32 %v3618, 16
      %v3774 = vrot.slane %v3772, 4
      %v3775 = vshll.u32 %v3618, 16
      %v3777 = vrot.slane %v3775, 5
      %v3778 = vor.u32 %v3774, %v3777
      %v3779 = vrot.slane %v3778, 4
      %v3781 = vshll.u32 %v3619, 16
      %v3783 = vrot.slane %v3781, 5
      %v3784 = vsel %vm802, %v3779, %v3783
      %v3785 = vshrl.u32 %v3619, 16
      %v3787 = vrot.slane %v3785, 4
      %v3788 = vor.u32 %v3787, %v3783
      %v3789 = vrot.slane %v3788, 4
      %v3791 = vshll.u32 %v3620, 16
      %v3793 = vrot.slane %v3791, 5
      %v3794 = vsel %vm802, %v3789, %v3793
      %v3796 = vshrl.u32 %v3621, 16
      %v3798 = vrot.slane %v3796, 4
      %v3799 = vshll.u32 %v3621, 16
      %v3801 = vrot.slane %v3799, 5
      %v3802 = vor.u32 %v3798, %v3801
      %v3803 = vrot.slane %v3802, 4
      %v3805 = vshll.u32 %v3622, 16
      %v3807 = vrot.slane %v3805, 5
      %v3808 = vsel %vm802, %v3803, %v3807
      %v3809 = vshrl.u32 %v3622, 16
      %v3811 = vrot.slane %v3809, 4
      %v3812 = vor.u32 %v3811, %v3807
      %v3813 = vrot.slane %v3812, 4
      %v3815 = vshll.u32 %v3623, 16
      %v3817 = vrot.slane %v3815, 5
      %v3818 = vsel %vm802, %v3813, %v3817
      %v3820 = vshrl.u32 %v3624, 16
      %v3822 = vrot.slane %v3820, 4
      %v3823 = vshll.u32 %v3624, 16
      %v3825 = vrot.slane %v3823, 5
      %v3826 = vor.u32 %v3822, %v3825
      %v3827 = vrot.slane %v3826, 4
      %v3829 = vshll.u32 %v3625, 16
      %v3831 = vrot.slane %v3829, 5
      %v3832 = vsel %vm802, %v3827, %v3831
      %v3833 = vshrl.u32 %v3625, 16
      %v3835 = vrot.slane %v3833, 4
      %v3836 = vor.u32 %v3835, %v3831
      %v3837 = vrot.slane %v3836, 4
      %v3839 = vshll.u32 %v3626, 16
      %v3841 = vrot.slane %v3839, 5
      %v3842 = vsel %vm802, %v3837, %v3841
      %v3844 = vshrl.u32 %v3627, 16
      %v3846 = vrot.slane %v3844, 4
      %v3847 = vshll.u32 %v3627, 16
      %v3849 = vrot.slane %v3847, 5
      %v3850 = vor.u32 %v3846, %v3849
      %v3851 = vrot.slane %v3850, 4
      %v3853 = vshll.u32 %v3628, 16
      %v3855 = vrot.slane %v3853, 5
      %v3856 = vsel %vm802, %v3851, %v3855
      %v3857 = vshrl.u32 %v3628, 16
      %v3859 = vrot.slane %v3857, 4
      %v3860 = vor.u32 %v3859, %v3855
      %v3861 = vrot.slane %v3860, 4
      %v3863 = vshll.u32 %v3629, 16
      %v3865 = vrot.slane %v3863, 5
      %v3866 = vsel %vm802, %v3861, %v3865
      %v3868 = vshrl.u32 %v3630, 16
      %v3870 = vrot.slane %v3868, 4
      %v3871 = vshll.u32 %v3630, 16
      %v3873 = vrot.slane %v3871, 5
      %v3874 = vor.u32 %v3870, %v3873
      %v3875 = vrot.slane %v3874, 4
      %v3877 = vshll.u32 %v3631, 16
      %v3879 = vrot.slane %v3877, 5
      %v3880 = vsel %vm802, %v3875, %v3879
      %v3881 = vshrl.u32 %v3631, 16
      %v3883 = vrot.slane %v3881, 4
      %v3884 = vor.u32 %v3883, %v3879
      %v3885 = vrot.slane %v3884, 4
      %v3887 = vshll.u32 %v3632, 16
      %v3889 = vrot.slane %v3887, 5
      %v3890 = vsel %vm802, %v3885, %v3889
      %v3892 = vshrl.u32 %v3633, 16
      %v3894 = vrot.slane %v3892, 4
      %v3895 = vshll.u32 %v3633, 16
      %v3897 = vrot.slane %v3895, 5
      %v3898 = vor.u32 %v3894, %v3897
      %v3899 = vrot.slane %v3898, 4
      %v3901 = vshll.u32 %v3634, 16
      %v3903 = vrot.slane %v3901, 5
      %v3904 = vsel %vm802, %v3899, %v3903
      %v3905 = vshrl.u32 %v3634, 16
      %v3907 = vrot.slane %v3905, 4
      %v3908 = vor.u32 %v3907, %v3903
      %v3909 = vrot.slane %v3908, 4
      %v3911 = vshll.u32 %v3635, 16
      %v3913 = vrot.slane %v3911, 5
      %v3914 = vsel %vm802, %v3909, %v3913
      %v3916 = vshrl.u32 %v3636, 16
      %v3918 = vrot.slane %v3916, 4
      %v3919 = vshll.u32 %v3636, 16
      %v3921 = vrot.slane %v3919, 5
      %v3922 = vor.u32 %v3918, %v3921
      %v3923 = vrot.slane %v3922, 4
      %v3925 = vshll.u32 %v3637, 16
      %v3927 = vrot.slane %v3925, 5
      %v3928 = vsel %vm802, %v3923, %v3927
      %v3929 = vshrl.u32 %v3637, 16
      %v3931 = vrot.slane %v3929, 4
      %v3932 = vor.u32 %v3931, %v3927
      %v3933 = vrot.slane %v3932, 4
      %v3935 = vshll.u32 %v3638, 16
      %v3937 = vrot.slane %v3935, 5
      %v3938 = vsel %vm802, %v3933, %v3937
      %v3940 = vshrl.u32 %v3639, 16
      %v3942 = vrot.slane %v3940, 4
      %v3943 = vshll.u32 %v3639, 16
      %v3945 = vrot.slane %v3943, 5
      %v3946 = vor.u32 %v3942, %v3945
      %v3947 = vrot.slane %v3946, 4
      %v3949 = vshll.u32 %v3640, 16
      %v3951 = vrot.slane %v3949, 5
      %v3952 = vsel %vm802, %v3947, %v3951
      %v3953 = vshrl.u32 %v3640, 16
      %v3955 = vrot.slane %v3953, 4
      %v3956 = vor.u32 %v3955, %v3951
      %v3957 = vrot.slane %v3956, 4
      %v3959 = vshll.u32 %v3641, 16
      %v3961 = vrot.slane %v3959, 5
      %v3962 = vsel %vm802, %v3957, %v3961
      %v3964 = vshrl.u32 %v3642, 16
      %v3966 = vrot.slane %v3964, 4
      %v3967 = vshll.u32 %v3642, 16
      %v3969 = vrot.slane %v3967, 5
      %v3970 = vor.u32 %v3966, %v3969
      %v3971 = vrot.slane %v3970, 4
      %v3973 = vshll.u32 %v3643, 16
      %v3975 = vrot.slane %v3973, 5
      %v3976 = vsel %vm802, %v3971, %v3975
      %v3977 = vshrl.u32 %v3643, 16
      %v3979 = vrot.slane %v3977, 4
      %v3980 = vor.u32 %v3979, %v3975
      %v3981 = vrot.slane %v3980, 4
      %v3983 = vshll.u32 %v3644, 16
      %v3985 = vrot.slane %v3983, 5
      %v3986 = vsel %vm802, %v3981, %v3985
      %v3988 = vshrl.u32 %v3645, 16
      %v3990 = vrot.slane %v3988, 4
      %v3991 = vshll.u32 %v3645, 16
      %v3993 = vrot.slane %v3991, 5
      %v3994 = vor.u32 %v3990, %v3993
      %v3995 = vrot.slane %v3994, 4
      %v3997 = vshll.u32 %v3646, 16
      %v3999 = vrot.slane %v3997, 5
      %v4000 = vsel %vm802, %v3995, %v3999
      %v4001 = vshrl.u32 %v3646, 16
      %v4003 = vrot.slane %v4001, 4
      %v4004 = vor.u32 %v4003, %v3999
      %v4005 = vrot.slane %v4004, 4
      %v4007 = vshll.u32 %v3647, 16
      %v4009 = vrot.slane %v4007, 5
      %v4010 = vsel %vm802, %v4005, %v4009
      %v4012 = vshrl.u32 %v3648, 16
      %v4014 = vrot.slane %v4012, 4
      %v4015 = vshll.u32 %v3648, 16
      %v4017 = vrot.slane %v4015, 5
      %v4018 = vor.u32 %v4014, %v4017
      %v4019 = vrot.slane %v4018, 4
      %v4021 = vshll.u32 %v3649, 16
      %v4023 = vrot.slane %v4021, 5
      %v4024 = vsel %vm802, %v4019, %v4023
      %v4025 = vshrl.u32 %v3649, 16
      %v4027 = vrot.slane %v4025, 4
      %v4028 = vor.u32 %v4027, %v4023
      %v4029 = vrot.slane %v4028, 4
      %v4031 = vshll.u32 %v3650, 16
      %v4033 = vrot.slane %v4031, 5
      %v4034 = vsel %vm802, %v4029, %v4033
      %v4035 = vld [vmem:[%s1 + $0x1c] sm:$0xf]
      %v4036 = vunpack.c.l.b16 %v3664
      %v4037 = vunpack.c.l.b16 %v3674
      %v4038 = vunpack.c.l.b16 %v3688
      %v4039 = vunpack.c.l.b16 %v3698
      %v4040 = vunpack.c.l.b16 %v3712
      %v4041 = vunpack.c.l.b16 %v3722
      %v4042 = vunpack.c.l.b16 %v3736
      %v4043 = vunpack.c.l.b16 %v3746
      %v4044 = vunpack.c.l.b16 %v3760
      %v4045 = vunpack.c.l.b16 %v3770
      %v4046 = vunpack.c.l.b16 %v3784
      %v4047 = vunpack.c.l.b16 %v3794
      %v4048 = vunpack.c.l.b16 %v3808
      %v4049 = vunpack.c.l.b16 %v3818
      %v4050 = vunpack.c.l.b16 %v3832
      %v4051 = vunpack.c.l.b16 %v3842
      %v4052 = vunpack.c.l.b16 %v3856
      %v4053 = vunpack.c.l.b16 %v3866
      %v4054 = vunpack.c.l.b16 %v3880
      %v4055 = vunpack.c.l.b16 %v3890
      %v4056 = vunpack.c.l.b16 %v3904
      %v4057 = vunpack.c.l.b16 %v3914
      %v4058 = vunpack.c.l.b16 %v3928
      %v4059 = vunpack.c.l.b16 %v3938
      %v4060 = vunpack.c.l.b16 %v3952
      %v4061 = vunpack.c.l.b16 %v3962
      %v4062 = vunpack.c.l.b16 %v3976
      %v4063 = vunpack.c.l.b16 %v3986
      %v4064 = vunpack.c.l.b16 %v4000
      %v4065 = vunpack.c.l.b16 %v4010
      %v4066 = vunpack.c.l.b16 %v4024
      %v4067 = vunpack.c.l.b16 %v4034
      %v4068 = vpack.c.b16 %v4037, %v4036
      %v4069 = vpack.c.b16 %v4039, %v4038
      %v4070 = vpack.c.b16 %v4041, %v4040
      %v4071 = vpack.c.b16 %v4043, %v4042
      %v4072 = vpack.c.b16 %v4045, %v4044
      %v4073 = vpack.c.b16 %v4047, %v4046
      %v4074 = vpack.c.b16 %v4049, %v4048
      %v4075 = vpack.c.b16 %v4051, %v4050
      %v4076 = vpack.c.b16 %v4053, %v4052
      %v4077 = vpack.c.b16 %v4055, %v4054
      %v4078 = vpack.c.b16 %v4057, %v4056
      %v4079 = vpack.c.b16 %v4059, %v4058
      %v4080 = vpack.c.b16 %v4061, %v4060
      %v4081 = vpack.c.b16 %v4063, %v4062
      %v4082 = vpack.c.b16 %v4065, %v4064
      %v4083 = vpack.c.b16 %v4067, %v4066
      %v4085 = vsel %vm1236, %v4068, 0
      %v4088 = vsel %vm1236, %v4069, 0
      %v4091 = vsel %vm1236, %v4070, 0
      %v4094 = vsel %vm1236, %v4071, 0
      %v4097 = vsel %vm1236, %v4072, 0
      %v4100 = vsel %vm1236, %v4073, 0
      %v4103 = vsel %vm1236, %v4074, 0
      %v4106 = vsel %vm1236, %v4075, 0
      %v4109 = vsel %vm1236, %v4076, 0
      %v4112 = vsel %vm1236, %v4077, 0
      %v4115 = vsel %vm1236, %v4078, 0
      %v4118 = vsel %vm1236, %v4079, 0
      %v4121 = vsel %vm1236, %v4080, 0
      %v4124 = vsel %vm1236, %v4081, 0
      %v4127 = vsel %vm1236, %v4082, 0
      %v4130 = vsel %vm1236, %v4083, 0
      %v4133 = vsel %vm1285, %v4035, 0
      %4135 = vmatpush.bf16.msra.mxu0 0
      %4136 = vmatpush.bf16.msra.mxu0 0
      %4137 = vmatpush.bf16.msra.mxu0 0
      %4138 = vmatpush.bf16.msra.mxu0 0
      %4139 = vmatpush.bf16.msra.mxu0 0
      %4140 = vmatpush.bf16.msra.mxu0 0
      %4141 = vmatpush.bf16.msra.mxu0 0
      %4142 = vmatpush.bf16.msra.mxu0 %v4133
      %4143 = vmatmul.bf16.gmra.mxu0 %v4085
      %v4144 = vpop.f32.mrf.mxu0
      %v4145 = vadd.f32 0.0, %v4144
      %v4146 = vpop.f32.mrf.mxu0
      %v4147 = vadd.f32 0.0, %v4146
      %4148 = vmatmul.bf16.gmra.mxu0 %v4088
      %v4149 = vpop.f32.mrf.mxu0
      %v4150 = vadd.f32 0.0, %v4149
      %v4151 = vpop.f32.mrf.mxu0
      %v4152 = vadd.f32 0.0, %v4151
      %4153 = vmatmul.bf16.gmra.mxu0 %v4091
      %v4154 = vpop.f32.mrf.mxu0
      %v4155 = vadd.f32 0.0, %v4154
      %v4156 = vpop.f32.mrf.mxu0
      %v4157 = vadd.f32 0.0, %v4156
      %4158 = vmatmul.bf16.gmra.mxu0 %v4094
      %v4159 = vpop.f32.mrf.mxu0
      %v4160 = vadd.f32 0.0, %v4159
      %v4161 = vpop.f32.mrf.mxu0
      %v4162 = vadd.f32 0.0, %v4161
      %4163 = vmatmul.bf16.gmra.mxu0 %v4097
      %v4164 = vpop.f32.mrf.mxu0
      %v4165 = vadd.f32 0.0, %v4164
      %v4166 = vpop.f32.mrf.mxu0
      %v4167 = vadd.f32 0.0, %v4166
      %4168 = vmatmul.bf16.gmra.mxu0 %v4100
      %v4169 = vpop.f32.mrf.mxu0
      %v4170 = vadd.f32 0.0, %v4169
      %v4171 = vpop.f32.mrf.mxu0
      %v4172 = vadd.f32 0.0, %v4171
      %4173 = vmatmul.bf16.gmra.mxu0 %v4103
      %v4174 = vpop.f32.mrf.mxu0
      %v4175 = vadd.f32 0.0, %v4174
      %v4176 = vpop.f32.mrf.mxu0
      %v4177 = vadd.f32 0.0, %v4176
      %4178 = vmatmul.bf16.gmra.mxu0 %v4106
      %v4179 = vpop.f32.mrf.mxu0
      %v4180 = vadd.f32 0.0, %v4179
      %v4181 = vpop.f32.mrf.mxu0
      %v4182 = vadd.f32 0.0, %v4181
      %4183 = vmatmul.bf16.gmra.mxu0 %v4109
      %v4184 = vpop.f32.mrf.mxu0
      %v4185 = vadd.f32 0.0, %v4184
      %v4186 = vpop.f32.mrf.mxu0
      %v4187 = vadd.f32 0.0, %v4186
      %4188 = vmatmul.bf16.gmra.mxu0 %v4112
      %v4189 = vpop.f32.mrf.mxu0
      %v4190 = vadd.f32 0.0, %v4189
      %v4191 = vpop.f32.mrf.mxu0
      %v4192 = vadd.f32 0.0, %v4191
      %4193 = vmatmul.bf16.gmra.mxu0 %v4115
      %v4194 = vpop.f32.mrf.mxu0
      %v4195 = vadd.f32 0.0, %v4194
      %v4196 = vpop.f32.mrf.mxu0
      %v4197 = vadd.f32 0.0, %v4196
      %4198 = vmatmul.bf16.gmra.mxu0 %v4118
      %v4199 = vpop.f32.mrf.mxu0
      %v4200 = vadd.f32 0.0, %v4199
      %v4201 = vpop.f32.mrf.mxu0
      %v4202 = vadd.f32 0.0, %v4201
      %4203 = vmatmul.bf16.gmra.mxu0 %v4121
      %v4204 = vpop.f32.mrf.mxu0
      %v4205 = vadd.f32 0.0, %v4204
      %v4206 = vpop.f32.mrf.mxu0
      %v4207 = vadd.f32 0.0, %v4206
      %4208 = vmatmul.bf16.gmra.mxu0 %v4124
      %v4209 = vpop.f32.mrf.mxu0
      %v4210 = vadd.f32 0.0, %v4209
      %v4211 = vpop.f32.mrf.mxu0
      %v4212 = vadd.f32 0.0, %v4211
      %4213 = vmatmul.bf16.gmra.mxu0 %v4127
      %v4214 = vpop.f32.mrf.mxu0
      %v4215 = vadd.f32 0.0, %v4214
      %v4216 = vpop.f32.mrf.mxu0
      %v4217 = vadd.f32 0.0, %v4216
      %4218 = vmatmul.bf16.gmra.mxu0 %v4130
      %v4219 = vpop.f32.mrf.mxu0
      %v4220 = vadd.f32 0.0, %v4219
      %v4221 = vpop.f32.mrf.mxu0
      %v4222 = vadd.f32 0.0, %v4221
      %4223 = vdwg.mxu0
      %v4224 = vadd.f32 %v3571, %v4145
      %v4225 = vadd.f32 %v3572, %v4147
      %v4226 = vadd.f32 %v3573, %v4150
      %v4227 = vadd.f32 %v3574, %v4152
      %v4228 = vadd.f32 %v3575, %v4155
      %v4229 = vadd.f32 %v3576, %v4157
      %v4230 = vadd.f32 %v3577, %v4160
      %v4231 = vadd.f32 %v3578, %v4162
      %v4232 = vadd.f32 %v3579, %v4165
      %v4233 = vadd.f32 %v3580, %v4167
      %v4234 = vadd.f32 %v3581, %v4170
      %v4235 = vadd.f32 %v3582, %v4172
      %v4236 = vadd.f32 %v3583, %v4175
      %v4237 = vadd.f32 %v3584, %v4177
      %v4238 = vadd.f32 %v3585, %v4180
      %v4239 = vadd.f32 %v3586, %v4182
      %v4240 = vadd.f32 %v3587, %v4185
      %v4241 = vadd.f32 %v3588, %v4187
      %v4242 = vadd.f32 %v3589, %v4190
      %v4243 = vadd.f32 %v3590, %v4192
      %v4244 = vadd.f32 %v3591, %v4195
      %v4245 = vadd.f32 %v3592, %v4197
      %v4246 = vadd.f32 %v3593, %v4200
      %v4247 = vadd.f32 %v3594, %v4202
      %v4248 = vadd.f32 %v3595, %v4205
      %v4249 = vadd.f32 %v3596, %v4207
      %v4250 = vadd.f32 %v3597, %v4210
      %v4251 = vadd.f32 %v3598, %v4212
      %v4252 = vadd.f32 %v3599, %v4215
      %v4253 = vadd.f32 %v3600, %v4217
      %v4254 = vadd.f32 %v3601, %v4220
      %v4255 = vadd.f32 %v3602, %v4222
      %v4256 = vld [vmem:[%s3317] sm:$0xe]
      %v4257 = vld [vmem:[%s3317 + $0xc] sm:$0xe]
      %v4258 = vld [vmem:[%s3317 + $0x18] sm:$0xe]
      %v4259 = vld [vmem:[%s3317 + $0x24] sm:$0xe]
      %v4260 = vld [vmem:[%s3317 + $0x30] sm:$0xe]
      %v4261 = vld [vmem:[%s3317 + $0x3c] sm:$0xe]
      %v4262 = vld [vmem:[%s3317 + $0x48] sm:$0xe]
      %v4263 = vld [vmem:[%s3317 + $0x54] sm:$0xe]
      %v4264 = vld [vmem:[%s3317 + $0x60] sm:$0xe]
      %v4265 = vld [vmem:[%s3317 + $0x6c] sm:$0xe]
      %v4266 = vld [vmem:[%s3317 + $0x78] sm:$0xe]
      %v4267 = vld [vmem:[%s3317 + $0x84] sm:$0xe]
      %v4268 = vld [vmem:[%s3317 + $0x90] sm:$0xe]
      %v4269 = vld [vmem:[%s3317 + $0x9c] sm:$0xe]
      %v4270 = vld [vmem:[%s3317 + $0xa8] sm:$0xe]
      %v4271 = vld [vmem:[%s3317 + $0xb4] sm:$0xe]
      %v4320 = vrot.slane %v4256, 5
      %v4321 = vrot.slane %v4320, 4
      %v4322 = vrot.slane %v3604, 5
      %v4323 = vsel %vm1648, %v4321, %v4322
      %v4324 = vrot.slane %v4322, 4
      %v4325 = vrot.slane %v3605, 5
      %v4326 = vsel %vm1648, %v4324, %v4325
      %v4327 = vrot.slane %v4257, 5
      %v4328 = vrot.slane %v4327, 4
      %v4329 = vrot.slane %v3607, 5
      %v4330 = vsel %vm1648, %v4328, %v4329
      %v4331 = vrot.slane %v4329, 4
      %v4332 = vrot.slane %v3608, 5
      %v4333 = vsel %vm1648, %v4331, %v4332
      %v4334 = vrot.slane %v4258, 5
      %v4335 = vrot.slane %v4334, 4
      %v4336 = vrot.slane %v3610, 5
      %v4337 = vsel %vm1648, %v4335, %v4336
      %v4338 = vrot.slane %v4336, 4
      %v4339 = vrot.slane %v3611, 5
      %v4340 = vsel %vm1648, %v4338, %v4339
      %v4341 = vrot.slane %v4259, 5
      %v4342 = vrot.slane %v4341, 4
      %v4343 = vrot.slane %v3613, 5
      %v4344 = vsel %vm1648, %v4342, %v4343
      %v4345 = vrot.slane %v4343, 4
      %v4346 = vrot.slane %v3614, 5
      %v4347 = vsel %vm1648, %v4345, %v4346
      %v4348 = vrot.slane %v4260, 5
      %v4349 = vrot.slane %v4348, 4
      %v4350 = vrot.slane %v3616, 5
      %v4351 = vsel %vm1648, %v4349, %v4350
      %v4352 = vrot.slane %v4350, 4
      %v4353 = vrot.slane %v3617, 5
      %v4354 = vsel %vm1648, %v4352, %v4353
      %v4355 = vrot.slane %v4261, 5
      %v4356 = vrot.slane %v4355, 4
      %v4357 = vrot.slane %v3619, 5
      %v4358 = vsel %vm1648, %v4356, %v4357
      %v4359 = vrot.slane %v4357, 4
      %v4360 = vrot.slane %v3620, 5
      %v4361 = vsel %vm1648, %v4359, %v4360
      %v4362 = vrot.slane %v4262, 5
      %v4363 = vrot.slane %v4362, 4
      %v4364 = vrot.slane %v3622, 5
      %v4365 = vsel %vm1648, %v4363, %v4364
      %v4366 = vrot.slane %v4364, 4
      %v4367 = vrot.slane %v3623, 5
      %v4368 = vsel %vm1648, %v4366, %v4367
      %v4369 = vrot.slane %v4263, 5
      %v4370 = vrot.slane %v4369, 4
      %v4371 = vrot.slane %v3625, 5
      %v4372 = vsel %vm1648, %v4370, %v4371
      %v4373 = vrot.slane %v4371, 4
      %v4374 = vrot.slane %v3626, 5
      %v4375 = vsel %vm1648, %v4373, %v4374
      %v4376 = vrot.slane %v4264, 5
      %v4377 = vrot.slane %v4376, 4
      %v4378 = vrot.slane %v3628, 5
      %v4379 = vsel %vm1648, %v4377, %v4378
      %v4380 = vrot.slane %v4378, 4
      %v4381 = vrot.slane %v3629, 5
      %v4382 = vsel %vm1648, %v4380, %v4381
      %v4383 = vrot.slane %v4265, 5
      %v4384 = vrot.slane %v4383, 4
      %v4385 = vrot.slane %v3631, 5
      %v4386 = vsel %vm1648, %v4384, %v4385
      %v4387 = vrot.slane %v4385, 4
      %v4388 = vrot.slane %v3632, 5
      %v4389 = vsel %vm1648, %v4387, %v4388
      %v4390 = vrot.slane %v4266, 5
      %v4391 = vrot.slane %v4390, 4
      %v4392 = vrot.slane %v3634, 5
      %v4393 = vsel %vm1648, %v4391, %v4392
      %v4394 = vrot.slane %v4392, 4
      %v4395 = vrot.slane %v3635, 5
      %v4396 = vsel %vm1648, %v4394, %v4395
      %v4397 = vrot.slane %v4267, 5
      %v4398 = vrot.slane %v4397, 4
      %v4399 = vrot.slane %v3637, 5
      %v4400 = vsel %vm1648, %v4398, %v4399
      %v4401 = vrot.slane %v4399, 4
      %v4402 = vrot.slane %v3638, 5
      %v4403 = vsel %vm1648, %v4401, %v4402
      %v4404 = vrot.slane %v4268, 5
      %v4405 = vrot.slane %v4404, 4
      %v4406 = vrot.slane %v3640, 5
      %v4407 = vsel %vm1648, %v4405, %v4406
      %v4408 = vrot.slane %v4406, 4
      %v4409 = vrot.slane %v3641, 5
      %v4410 = vsel %vm1648, %v4408, %v4409
      %v4411 = vrot.slane %v4269, 5
      %v4412 = vrot.slane %v4411, 4
      %v4413 = vrot.slane %v3643, 5
      %v4414 = vsel %vm1648, %v4412, %v4413
      %v4415 = vrot.slane %v4413, 4
      %v4416 = vrot.slane %v3644, 5
      %v4417 = vsel %vm1648, %v4415, %v4416
      %v4418 = vrot.slane %v4270, 5
      %v4419 = vrot.slane %v4418, 4
      %v4420 = vrot.slane %v3646, 5
      %v4421 = vsel %vm1648, %v4419, %v4420
      %v4422 = vrot.slane %v4420, 4
      %v4423 = vrot.slane %v3647, 5
      %v4424 = vsel %vm1648, %v4422, %v4423
      %v4425 = vrot.slane %v4271, 5
      %v4426 = vrot.slane %v4425, 4
      %v4427 = vrot.slane %v3649, 5
      %v4428 = vsel %vm1648, %v4426, %v4427
      %v4429 = vrot.slane %v4427, 4
      %v4430 = vrot.slane %v3650, 5
      %v4431 = vsel %vm1648, %v4429, %v4430
      %v4432 = vld [vmem:[%s1 + $0x20] sm:$0xf]
      %v4433 = vunpack.c.l.b16 %v4323
      %v4434 = vunpack.c.l.b16 %v4326
      %v4435 = vunpack.c.l.b16 %v4330
      %v4436 = vunpack.c.l.b16 %v4333
      %v4437 = vunpack.c.l.b16 %v4337
      %v4438 = vunpack.c.l.b16 %v4340
      %v4439 = vunpack.c.l.b16 %v4344
      %v4440 = vunpack.c.l.b16 %v4347
      %v4441 = vunpack.c.l.b16 %v4351
      %v4442 = vunpack.c.l.b16 %v4354
      %v4443 = vunpack.c.l.b16 %v4358
      %v4444 = vunpack.c.l.b16 %v4361
      %v4445 = vunpack.c.l.b16 %v4365
      %v4446 = vunpack.c.l.b16 %v4368
      %v4447 = vunpack.c.l.b16 %v4372
      %v4448 = vunpack.c.l.b16 %v4375
      %v4449 = vunpack.c.l.b16 %v4379
      %v4450 = vunpack.c.l.b16 %v4382
      %v4451 = vunpack.c.l.b16 %v4386
      %v4452 = vunpack.c.l.b16 %v4389
      %v4453 = vunpack.c.l.b16 %v4393
      %v4454 = vunpack.c.l.b16 %v4396
      %v4455 = vunpack.c.l.b16 %v4400
      %v4456 = vunpack.c.l.b16 %v4403
      %v4457 = vunpack.c.l.b16 %v4407
      %v4458 = vunpack.c.l.b16 %v4410
      %v4459 = vunpack.c.l.b16 %v4414
      %v4460 = vunpack.c.l.b16 %v4417
      %v4461 = vunpack.c.l.b16 %v4421
      %v4462 = vunpack.c.l.b16 %v4424
      %v4463 = vunpack.c.l.b16 %v4428
      %v4464 = vunpack.c.l.b16 %v4431
      %v4465 = vpack.c.b16 %v4434, %v4433
      %v4466 = vpack.c.b16 %v4436, %v4435
      %v4467 = vpack.c.b16 %v4438, %v4437
      %v4468 = vpack.c.b16 %v4440, %v4439
      %v4469 = vpack.c.b16 %v4442, %v4441
      %v4470 = vpack.c.b16 %v4444, %v4443
      %v4471 = vpack.c.b16 %v4446, %v4445
      %v4472 = vpack.c.b16 %v4448, %v4447
      %v4473 = vpack.c.b16 %v4450, %v4449
      %v4474 = vpack.c.b16 %v4452, %v4451
      %v4475 = vpack.c.b16 %v4454, %v4453
      %v4476 = vpack.c.b16 %v4456, %v4455
      %v4477 = vpack.c.b16 %v4458, %v4457
      %v4478 = vpack.c.b16 %v4460, %v4459
      %v4479 = vpack.c.b16 %v4462, %v4461
      %v4480 = vpack.c.b16 %v4464, %v4463
      %v4482 = vsel %vm1236, %v4465, 0
      %v4485 = vsel %vm1236, %v4466, 0
      %v4488 = vsel %vm1236, %v4467, 0
      %v4491 = vsel %vm1236, %v4468, 0
      %v4494 = vsel %vm1236, %v4469, 0
      %v4497 = vsel %vm1236, %v4470, 0
      %v4500 = vsel %vm1236, %v4471, 0
      %v4503 = vsel %vm1236, %v4472, 0
      %v4506 = vsel %vm1236, %v4473, 0
      %v4509 = vsel %vm1236, %v4474, 0
      %v4512 = vsel %vm1236, %v4475, 0
      %v4515 = vsel %vm1236, %v4476, 0
      %v4518 = vsel %vm1236, %v4477, 0
      %v4521 = vsel %vm1236, %v4478, 0
      %v4524 = vsel %vm1236, %v4479, 0
      %v4527 = vsel %vm1236, %v4480, 0
      %v4530 = vsel %vm1285, %v4432, 0
      %4532 = vmatpush.bf16.msra.mxu0 0
      %4533 = vmatpush.bf16.msra.mxu0 0
      %4534 = vmatpush.bf16.msra.mxu0 0
      %4535 = vmatpush.bf16.msra.mxu0 0
      %4536 = vmatpush.bf16.msra.mxu0 0
      %4537 = vmatpush.bf16.msra.mxu0 0
      %4538 = vmatpush.bf16.msra.mxu0 0
      %4539 = vmatpush.bf16.msra.mxu0 %v4530
      %4540 = vmatmul.bf16.gmra.mxu0 %v4482
      %v4541 = vpop.f32.mrf.mxu0
      %v4542 = vadd.f32 0.0, %v4541
      %v4543 = vpop.f32.mrf.mxu0
      %v4544 = vadd.f32 0.0, %v4543
      %4545 = vmatmul.bf16.gmra.mxu0 %v4485
      %v4546 = vpop.f32.mrf.mxu0
      %v4547 = vadd.f32 0.0, %v4546
      %v4548 = vpop.f32.mrf.mxu0
      %v4549 = vadd.f32 0.0, %v4548
      %4550 = vmatmul.bf16.gmra.mxu0 %v4488
      %v4551 = vpop.f32.mrf.mxu0
      %v4552 = vadd.f32 0.0, %v4551
      %v4553 = vpop.f32.mrf.mxu0
      %v4554 = vadd.f32 0.0, %v4553
      %4555 = vmatmul.bf16.gmra.mxu0 %v4491
      %v4556 = vpop.f32.mrf.mxu0
      %v4557 = vadd.f32 0.0, %v4556
      %v4558 = vpop.f32.mrf.mxu0
      %v4559 = vadd.f32 0.0, %v4558
      %4560 = vmatmul.bf16.gmra.mxu0 %v4494
      %v4561 = vpop.f32.mrf.mxu0
      %v4562 = vadd.f32 0.0, %v4561
      %v4563 = vpop.f32.mrf.mxu0
      %v4564 = vadd.f32 0.0, %v4563
      %4565 = vmatmul.bf16.gmra.mxu0 %v4497
      %v4566 = vpop.f32.mrf.mxu0
      %v4567 = vadd.f32 0.0, %v4566
      %v4568 = vpop.f32.mrf.mxu0
      %v4569 = vadd.f32 0.0, %v4568
      %4570 = vmatmul.bf16.gmra.mxu0 %v4500
      %v4571 = vpop.f32.mrf.mxu0
      %v4572 = vadd.f32 0.0, %v4571
      %v4573 = vpop.f32.mrf.mxu0
      %v4574 = vadd.f32 0.0, %v4573
      %4575 = vmatmul.bf16.gmra.mxu0 %v4503
      %v4576 = vpop.f32.mrf.mxu0
      %v4577 = vadd.f32 0.0, %v4576
      %v4578 = vpop.f32.mrf.mxu0
      %v4579 = vadd.f32 0.0, %v4578
      %4580 = vmatmul.bf16.gmra.mxu0 %v4506
      %v4581 = vpop.f32.mrf.mxu0
      %v4582 = vadd.f32 0.0, %v4581
      %v4583 = vpop.f32.mrf.mxu0
      %v4584 = vadd.f32 0.0, %v4583
      %4585 = vmatmul.bf16.gmra.mxu0 %v4509
      %v4586 = vpop.f32.mrf.mxu0
      %v4587 = vadd.f32 0.0, %v4586
      %v4588 = vpop.f32.mrf.mxu0
      %v4589 = vadd.f32 0.0, %v4588
      %4590 = vmatmul.bf16.gmra.mxu0 %v4512
      %v4591 = vpop.f32.mrf.mxu0
      %v4592 = vadd.f32 0.0, %v4591
      %v4593 = vpop.f32.mrf.mxu0
      %v4594 = vadd.f32 0.0, %v4593
      %4595 = vmatmul.bf16.gmra.mxu0 %v4515
      %v4596 = vpop.f32.mrf.mxu0
      %v4597 = vadd.f32 0.0, %v4596
      %v4598 = vpop.f32.mrf.mxu0
      %v4599 = vadd.f32 0.0, %v4598
      %4600 = vmatmul.bf16.gmra.mxu0 %v4518
      %v4601 = vpop.f32.mrf.mxu0
      %v4602 = vadd.f32 0.0, %v4601
      %v4603 = vpop.f32.mrf.mxu0
      %v4604 = vadd.f32 0.0, %v4603
      %4605 = vmatmul.bf16.gmra.mxu0 %v4521
      %v4606 = vpop.f32.mrf.mxu0
      %v4607 = vadd.f32 0.0, %v4606
      %v4608 = vpop.f32.mrf.mxu0
      %v4609 = vadd.f32 0.0, %v4608
      %4610 = vmatmul.bf16.gmra.mxu0 %v4524
      %v4611 = vpop.f32.mrf.mxu0
      %v4612 = vadd.f32 0.0, %v4611
      %v4613 = vpop.f32.mrf.mxu0
      %v4614 = vadd.f32 0.0, %v4613
      %4615 = vmatmul.bf16.gmra.mxu0 %v4527
      %v4616 = vpop.f32.mrf.mxu0
      %v4617 = vadd.f32 0.0, %v4616
      %v4618 = vpop.f32.mrf.mxu0
      %v4619 = vadd.f32 0.0, %v4618
      %4620 = vdwg.mxu0
      %v4621 = vadd.f32 %v4224, %v4542
      %v4622 = vadd.f32 %v4225, %v4544
      %v4623 = vadd.f32 %v4226, %v4547
      %v4624 = vadd.f32 %v4227, %v4549
      %v4625 = vadd.f32 %v4228, %v4552
      %v4626 = vadd.f32 %v4229, %v4554
      %v4627 = vadd.f32 %v4230, %v4557
      %v4628 = vadd.f32 %v4231, %v4559
      %v4629 = vadd.f32 %v4232, %v4562
      %v4630 = vadd.f32 %v4233, %v4564
      %v4631 = vadd.f32 %v4234, %v4567
      %v4632 = vadd.f32 %v4235, %v4569
      %v4633 = vadd.f32 %v4236, %v4572
      %v4634 = vadd.f32 %v4237, %v4574
      %v4635 = vadd.f32 %v4238, %v4577
      %v4636 = vadd.f32 %v4239, %v4579
      %v4637 = vadd.f32 %v4240, %v4582
      %v4638 = vadd.f32 %v4241, %v4584
      %v4639 = vadd.f32 %v4242, %v4587
      %v4640 = vadd.f32 %v4243, %v4589
      %v4641 = vadd.f32 %v4244, %v4592
      %v4642 = vadd.f32 %v4245, %v4594
      %v4643 = vadd.f32 %v4246, %v4597
      %v4644 = vadd.f32 %v4247, %v4599
      %v4645 = vadd.f32 %v4248, %v4602
      %v4646 = vadd.f32 %v4249, %v4604
      %v4647 = vadd.f32 %v4250, %v4607
      %v4648 = vadd.f32 %v4251, %v4609
      %v4649 = vadd.f32 %v4252, %v4612
      %v4650 = vadd.f32 %v4253, %v4614
      %v4651 = vadd.f32 %v4254, %v4617
      %v4652 = vadd.f32 %v4255, %v4619
      %v4653 = vld [vmem:[%s2] sm:$0x1]
      %v4655 = vperm.slane %v4653, 0
      %v4657 = vadd.f32 %v4621, %v4655
      %v4658 = vadd.f32 %v4622, %v4655
      %v4659 = vadd.f32 %v4623, %v4655
      %v4660 = vadd.f32 %v4624, %v4655
      %v4661 = vadd.f32 %v4625, %v4655
      %v4662 = vadd.f32 %v4626, %v4655
      %v4663 = vadd.f32 %v4627, %v4655
      %v4664 = vadd.f32 %v4628, %v4655
      %v4665 = vadd.f32 %v4629, %v4655
      %v4666 = vadd.f32 %v4630, %v4655
      %v4667 = vadd.f32 %v4631, %v4655
      %v4668 = vadd.f32 %v4632, %v4655
      %v4669 = vadd.f32 %v4633, %v4655
      %v4670 = vadd.f32 %v4634, %v4655
      %v4671 = vadd.f32 %v4635, %v4655
      %v4672 = vadd.f32 %v4636, %v4655
      %v4673 = vadd.f32 %v4637, %v4655
      %v4674 = vadd.f32 %v4638, %v4655
      %v4675 = vadd.f32 %v4639, %v4655
      %v4676 = vadd.f32 %v4640, %v4655
      %v4677 = vadd.f32 %v4641, %v4655
      %v4678 = vadd.f32 %v4642, %v4655
      %v4679 = vadd.f32 %v4643, %v4655
      %v4680 = vadd.f32 %v4644, %v4655
      %v4681 = vadd.f32 %v4645, %v4655
      %v4682 = vadd.f32 %v4646, %v4655
      %v4683 = vadd.f32 %v4647, %v4655
      %v4684 = vadd.f32 %v4648, %v4655
      %v4685 = vadd.f32 %v4649, %v4655
      %v4686 = vadd.f32 %v4650, %v4655
      %v4687 = vadd.f32 %v4651, %v4655
      %v4688 = vadd.f32 %v4652, %v4655
      %v4689 = vmax.f32 %v4657, 0.0
      %v4690 = vmax.f32 %v4658, 0.0
      %v4691 = vmax.f32 %v4659, 0.0
      %v4692 = vmax.f32 %v4660, 0.0
      %v4693 = vmax.f32 %v4661, 0.0
      %v4694 = vmax.f32 %v4662, 0.0
      %v4695 = vmax.f32 %v4663, 0.0
      %v4696 = vmax.f32 %v4664, 0.0
      %v4697 = vmax.f32 %v4665, 0.0
      %v4698 = vmax.f32 %v4666, 0.0
      %v4699 = vmax.f32 %v4667, 0.0
      %v4700 = vmax.f32 %v4668, 0.0
      %v4701 = vmax.f32 %v4669, 0.0
      %v4702 = vmax.f32 %v4670, 0.0
      %v4703 = vmax.f32 %v4671, 0.0
      %v4704 = vmax.f32 %v4672, 0.0
      %v4705 = vmax.f32 %v4673, 0.0
      %v4706 = vmax.f32 %v4674, 0.0
      %v4707 = vmax.f32 %v4675, 0.0
      %v4708 = vmax.f32 %v4676, 0.0
      %v4709 = vmax.f32 %v4677, 0.0
      %v4710 = vmax.f32 %v4678, 0.0
      %v4711 = vmax.f32 %v4679, 0.0
      %v4712 = vmax.f32 %v4680, 0.0
      %v4713 = vmax.f32 %v4681, 0.0
      %v4714 = vmax.f32 %v4682, 0.0
      %v4715 = vmax.f32 %v4683, 0.0
      %v4716 = vmax.f32 %v4684, 0.0
      %v4717 = vmax.f32 %v4685, 0.0
      %v4718 = vmax.f32 %v4686, 0.0
      %v4719 = vmax.f32 %v4687, 0.0
      %v4720 = vmax.f32 %v4688, 0.0
      %v4721 = vmax.f32 %v4689, %v4691
      %v4722 = vmax.f32 %v4690, %v4692
      %v4723 = vmax.f32 %v4693, %v4695
      %v4724 = vmax.f32 %v4694, %v4696
      %v4725 = vmax.f32 %v4697, %v4699
      %v4726 = vmax.f32 %v4698, %v4700
      %v4727 = vmax.f32 %v4701, %v4703
      %v4728 = vmax.f32 %v4702, %v4704
      %v4729 = vmax.f32 %v4705, %v4707
      %v4730 = vmax.f32 %v4706, %v4708
      %v4731 = vmax.f32 %v4709, %v4711
      %v4732 = vmax.f32 %v4710, %v4712
      %v4733 = vmax.f32 %v4713, %v4715
      %v4734 = vmax.f32 %v4714, %v4716
      %v4735 = vmax.f32 %v4717, %v4719
      %v4736 = vmax.f32 %v4718, %v4720
      %4737 = vst.msk [vmem:[#allocation3] sm:$0xff] %vm1236, %v4721
      %4738 = vst.msk [vmem:[#allocation3 + $0x8] sm:$0xff] %vm1236, %v4722
      %4739 = vst.msk [vmem:[#allocation3 + $0x10] sm:$0xff] %vm1236, %v4723
      %4740 = vst.msk [vmem:[#allocation3 + $0x18] sm:$0xff] %vm1236, %v4724
      %4741 = vst.msk [vmem:[#allocation3 + $0x20] sm:$0xff] %vm1236, %v4725
      %4742 = vst.msk [vmem:[#allocation3 + $0x28] sm:$0xff] %vm1236, %v4726
      %4743 = vst.msk [vmem:[#allocation3 + $0x30] sm:$0xff] %vm1236, %v4727
      %4744 = vst.msk [vmem:[#allocation3 + $0x38] sm:$0xff] %vm1236, %v4728
      %4745 = vst.msk [vmem:[#allocation3 + $0x40] sm:$0xff] %vm1236, %v4729
      %4746 = vst.msk [vmem:[#allocation3 + $0x48] sm:$0xff] %vm1236, %v4730
      %4747 = vst.msk [vmem:[#allocation3 + $0x50] sm:$0xff] %vm1236, %v4731
      %4748 = vst.msk [vmem:[#allocation3 + $0x58] sm:$0xff] %vm1236, %v4732
      %4749 = vst.msk [vmem:[#allocation3 + $0x60] sm:$0xff] %vm1236, %v4733
      %4750 = vst.msk [vmem:[#allocation3 + $0x68] sm:$0xff] %vm1236, %v4734
      %4751 = vst.msk [vmem:[#allocation3 + $0x70] sm:$0xff] %vm1236, %v4735
      %4752 = vst.msk [vmem:[#allocation3 + $0x78] sm:$0xff] %vm1236, %v4736
      %v4753 = vld [vmem:[#allocation3] ss:$2 sm:$0xff]
      %s4754 = scalar_lea.vmem [#allocation3], 16
      %v4755 = vld [vmem:[%s4754] ss:$2 sm:$0xff]
      %s4756 = scalar_lea.vmem [#allocation3], 32
      %v4757 = vld [vmem:[%s4756] ss:$2 sm:$0xff]
      %s4758 = scalar_lea.vmem [#allocation3], 48
      %v4759 = vld [vmem:[%s4758] ss:$2 sm:$0xff]
      %s4760 = scalar_lea.vmem [#allocation3], 64
      %v4761 = vld [vmem:[%s4760] ss:$2 sm:$0xff]
      %s4762 = scalar_lea.vmem [#allocation3], 80
      %v4763 = vld [vmem:[%s4762] ss:$2 sm:$0xff]
      %s4764 = scalar_lea.vmem [#allocation3], 96
      %v4765 = vld [vmem:[%s4764] ss:$2 sm:$0xff]
      %s4766 = scalar_lea.vmem [#allocation3], 112
      %v4767 = vld [vmem:[%s4766] ss:$2 sm:$0xff]
      %s4768 = scalar_lea.vmem [#allocation3], 1
      %v4769 = vld [vmem:[%s4768] ss:$2 sm:$0xff]
      %s4770 = scalar_lea.vmem [#allocation3], 17
      %v4771 = vld [vmem:[%s4770] ss:$2 sm:$0xff]
      %s4772 = scalar_lea.vmem [#allocation3], 33
      %v4773 = vld [vmem:[%s4772] ss:$2 sm:$0xff]
      %s4774 = scalar_lea.vmem [#allocation3], 49
      %v4775 = vld [vmem:[%s4774] ss:$2 sm:$0xff]
      %s4776 = scalar_lea.vmem [#allocation3], 65
      %v4777 = vld [vmem:[%s4776] ss:$2 sm:$0xff]
      %s4778 = scalar_lea.vmem [#allocation3], 81
      %v4779 = vld [vmem:[%s4778] ss:$2 sm:$0xff]
      %s4780 = scalar_lea.vmem [#allocation3], 97
      %v4781 = vld [vmem:[%s4780] ss:$2 sm:$0xff]
      %s4782 = scalar_lea.vmem [#allocation3], 113
      %v4783 = vld [vmem:[%s4782] ss:$2 sm:$0xff]
      %v4784 = vmax.f32 %v4753, %v4769
      %v4785 = vmax.f32 %v4755, %v4771
      %v4786 = vmax.f32 %v4757, %v4773
      %v4787 = vmax.f32 %v4759, %v4775
      %v4788 = vmax.f32 %v4761, %v4777
      %v4789 = vmax.f32 %v4763, %v4779
      %v4790 = vmax.f32 %v4765, %v4781
      %v4791 = vmax.f32 %v4767, %v4783
      %v4792 = vpack.c.bf16 %v4784, %v4784
      %v4793 = vpack.c.bf16 %v4785, %v4785
      %v4794 = vpack.c.bf16 %v4786, %v4786
      %v4795 = vpack.c.bf16 %v4787, %v4787
      %v4796 = vpack.c.bf16 %v4788, %v4788
      %v4797 = vpack.c.bf16 %v4789, %v4789
      %v4798 = vpack.c.bf16 %v4790, %v4790
      %v4799 = vpack.c.bf16 %v4791, %v4791
      %4800 = vst.msk [vmem:[%s170] sm:$0xf] %vm172, %v4792
      %4801 = vst.msk [vmem:[%s170 + $0x4] sm:$0xf] %vm172, %v4793
      %4802 = vst.msk [vmem:[%s170 + $0x8] sm:$0xf] %vm172, %v4794
      %4803 = vst.msk [vmem:[%s170 + $0xc] sm:$0xf] %vm172, %v4795
      %4804 = vst.msk [vmem:[%s170 + $0x10] sm:$0xf] %vm172, %v4796
      %4805 = vst.msk [vmem:[%s170 + $0x14] sm:$0xf] %vm172, %v4797
      %4806 = vst.msk [vmem:[%s170 + $0x18] sm:$0xf] %vm172, %v4798
      %4807 = vst.msk [vmem:[%s170 + $0x1c] sm:$0xf] %vm172, %v4799
      %p4808 = scmp.lt.s32.totalorder %s14, 1
      %s4809 = scalar_select %p4808, %s14, 1
      %s4810 = smul.addr %s4809, 8
      %s4811 = smul.addr %s4810, 4
      %s4812 = scalar_lea.vmem %s3, %s4811
      // Predicated region
      $region33: #{vgg_forward.6} parent=31 // pred_check
        %p4813 = pneg %p100
      $region34: #{vgg_forward.6} parent=31 // pred_check_branch
        %4815 = sbr.rel (%p4813) target = $region36
      $region35: #{vgg_forward.6} parent=31 // pred_region
        _
      $region36: #{vgg_forward.6} parent=31 // pred_fallthru
        _
    $region32: #{vgg_forward.6} parent=5 // pred_fallthru
      _
    %p4816 = scmp.le.s32.totalorder 2, %s9
    // Predicated region
    $region37: #{vgg_forward.6} parent=5 // pred_check
      %p4817 = pneg %p4816
    $region38: #{vgg_forward.6} parent=5 // pred_check_branch
      %4819 = sbr.rel (%p4817) target = $region40
    $region39: #{vgg_forward.6} parent=5 // pred_region
      %s4820 = ssub.s32 %s9, 2
      // Predicated region
      $region41: #{vgg_forward.6} parent=39 // pred_check
        %p4821 = pneg %p106
      $region42: #{vgg_forward.6} parent=39 // pred_check_branch
        %4823 = sbr.rel (%p4821) target = $region44
      $region43: #{vgg_forward.6} parent=39 // pred_region
        %p4824 = scmp.lt.s32.totalorder %s15, 1
        %s4825 = scalar_select %p4824, %s15, 1
        %s4826 = smul.addr %s4825, 8
        %s4827 = smul.addr %s4826, 4
        %s4828 = scalar_lea.vmem %s3, %s4827
      $region44: #{vgg_forward.6} parent=39 // pred_fallthru
        _
    $region40: #{vgg_forward.6} parent=5 // pred_fallthru
      _
  $region6: #{vgg_forward.6} parent=0 // loop_footer
    %s13 = sadd.s32 1, %s9
  $region7: #{vgg_forward.6} parent=0 // loop_footer_branch
    %8 = sbr.rel target = $region3
  $region8: #{vgg_forward.6} parent=0 // loop_exit
    _

// kernel: vgg_forward.5
$region0: #{vgg_forward.5}
  #allocation0 [shape = 'u32[]', space=smem, size = 0x4, offset = 0x4, fixed_abs, tag = 'smem constant byte address 0x4 - core index']
  #allocation1 [shape = 'u32[72,128]{1,0:T(1,128)}', space=vmem, size = 0x9000, scoped, tag = 'internal scratch']
  #allocation2 [shape = 'bf16[18,18,4]{2,1,0:T(8,128)(2,1)}', space=vmem, size = 0x1b000, scoped, tag = 'scratch operand']
  %s0 = inlined_call_operand.vmem [shape: bf16[2,16,16,4], index: 0, kind: input, shape index: {}]
  %s1 = inlined_call_operand.vmem [shape: bf16[36,8], index: 1, kind: input, shape index: {}]
  %s2 = inlined_call_operand.vmem [shape: f32[1,8], index: 2, kind: input, shape index: {}]
  %s3 = inlined_call_operand.vmem [shape: bf16[2,16,16,8], index: 3, kind: output, shape index: {}]
  %s4 = sld [smem:[#allocation0]]
  $region45: #{vgg_forward.5} parent=0
    _
  %s6 = ssub.s32 1, %s4
  %s7 = scalar_select 0, %s6, %s4
  loop: start=0, step=1, limit=4
  $region2: #{vgg_forward.5} parent=0 // loop_pre_header
    _
  $region3: #{vgg_forward.5} parent=0 // loop_header
    %s9 = sphi 0, %s13
    %p10 = scmp.ge.s32.totalorder %s9, 4
    %s19 = sphi 0, %s21
    %s22 = sphi 0, %s19
    %s23 = sphi 0, %s22
    %s39 = sphi 0, %s23
    %s43 = sphi 0, %s43
    %s45 = sphi 0, %s43
    %s46 = sphi 0, %s45
    %s60 = sphi 0, %s46
    %s64 = sphi 0, %s64
    %s66 = sphi 0, %s64
    %s67 = sphi 0, %s66
    %s81 = sphi 0, %s67
    %s87 = sphi 0, %s89
    %s90 = sphi 0, %s87
    %s91 = sphi 0, %s90
    %s107 = sphi 0, %s91
  $region4: #{vgg_forward.5} parent=0 // loop_header_branch
    %12 = sbr.rel (%p10) target = $region8
  $region5: #{vgg_forward.5} parent=0 // loop_body
    %s14 = ssub.s32 %s9, 1
    %s15 = ssub.s32 %s9, 2
    %s16 = sadd.s32 %s9, 1
    %s17 = ssub.s32 %s9, %s16
    %p18 = scmp.eq.s32.totalorder %s17, 0
    %s20 = sadd.s32 %s19, 1
    %s21 = scalar_select %p18, %s19, %s20
    %p24 = pneg %p18
    %p25 = scmp.eq.s32.totalorder %s9, 1
    %p26 = por %p24, %p25
    %p27 = scmp.ne.s32.totalorder %s19, %s22
    %p28 = scmp.eq.s32.totalorder %s9, 0
    %p29 = por %p27, %p28
    %p30 = scmp.ne.s32.totalorder %s19, %s22
    %p31 = scmp.eq.s32.totalorder %s14, 1
    %p32 = por %p30, %p31
    %p33 = scmp.ne.s32.totalorder %s22, %s23
    %p34 = scmp.eq.s32.totalorder %s14, 0
    %p35 = por %p33, %p34
    %p36 = scmp.ne.s32.totalorder %s22, %s23
    %p37 = scmp.eq.s32.totalorder %s15, 1
    %p38 = por %p36, %p37
    %p40 = scmp.ne.s32.totalorder %s23, %s39
    %p41 = scmp.eq.s32.totalorder %s15, 0
    %p42 = por %p40, %p41
    %s44 = sadd.s32 %s43, 1
    %p47 = scmp.eq.s32.totalorder %s9, 1
    %p48 = scmp.ne.s32.totalorder %s43, %s45
    %p49 = scmp.eq.s32.totalorder %s9, 0
    %p50 = por %p48, %p49
    %p51 = scmp.ne.s32.totalorder %s43, %s45
    %p52 = scmp.eq.s32.totalorder %s14, 1
    %p53 = por %p51, %p52
    %p54 = scmp.ne.s32.totalorder %s45, %s46
    %p55 = scmp.eq.s32.totalorder %s14, 0
    %p56 = por %p54, %p55
    %p57 = scmp.ne.s32.totalorder %s45, %s46
    %p58 = scmp.eq.s32.totalorder %s15, 1
    %p59 = por %p57, %p58
    %p61 = scmp.ne.s32.totalorder %s46, %s60
    %p62 = scmp.eq.s32.totalorder %s15, 0
    %p63 = por %p61, %p62
    %s65 = sadd.s32 %s64, 1
    %p68 = scmp.eq.s32.totalorder %s9, 1
    %p69 = scmp.ne.s32.totalorder %s64, %s66
    %p70 = scmp.eq.s32.totalorder %s9, 0
    %p71 = por %p69, %p70
    %p72 = scmp.ne.s32.totalorder %s64, %s66
    %p73 = scmp.eq.s32.totalorder %s14, 1
    %p74 = por %p72, %p73
    %p75 = scmp.ne.s32.totalorder %s66, %s67
    %p76 = scmp.eq.s32.totalorder %s14, 0
    %p77 = por %p75, %p76
    %p78 = scmp.ne.s32.totalorder %s66, %s67
    %p79 = scmp.eq.s32.totalorder %s15, 1
    %p80 = por %p78, %p79
    %p82 = scmp.ne.s32.totalorder %s67, %s81
    %p83 = scmp.eq.s32.totalorder %s15, 0
    %p84 = por %p82, %p83
    %s85 = ssub.s32 %s9, %s16
    %p86 = scmp.eq.s32.totalorder %s85, 0
    %s88 = sadd.s32 %s87, 1
    %s89 = scalar_select %p86, %s87, %s88
    %p92 = pneg %p86
    %p93 = scmp.eq.s32.totalorder %s9, 1
    %p94 = por %p92, %p93
    %p95 = scmp.ne.s32.totalorder %s87, %s90
    %p96 = scmp.eq.s32.totalorder %s9, 0
    %p97 = por %p95, %p96
    %p98 = scmp.ne.s32.totalorder %s87, %s90
    %p99 = scmp.eq.s32.totalorder %s14, 1
    %p100 = por %p98, %p99
    %p101 = scmp.ne.s32.totalorder %s90, %s91
    %p102 = scmp.eq.s32.totalorder %s14, 0
    %p103 = por %p101, %p102
    %p104 = scmp.ne.s32.totalorder %s90, %s91
    %p105 = scmp.eq.s32.totalorder %s15, 1
    %p106 = por %p104, %p105
    %p108 = scmp.ne.s32.totalorder %s91, %s107
    %p109 = scmp.eq.s32.totalorder %s15, 0
    %p110 = por %p108, %p109
    %p111 = scmp.le.s32.totalorder 1, %s9
    %p112 = scmp.lt.s32.totalorder %s9, 3
    %p113 = pnand %p111, %p112
    %p114 = pneg %p113
    // Predicated region
    $region9: #{vgg_forward.5} parent=5 // pred_check
      _
    $region10: #{vgg_forward.5} parent=5 // pred_check_branch
      %116 = sbr.rel (%p113) target = $region12
    $region11: #{vgg_forward.5} parent=5 // pred_region
      %s117 = ssub.s32 %s9, 1
      // Predicated region
      $region13: #{vgg_forward.5} parent=11 // pred_check
        %p118 = pneg %p56
      $region14: #{vgg_forward.5} parent=11 // pred_check_branch
        %120 = sbr.rel (%p118) target = $region16
      $region15: #{vgg_forward.5} parent=11 // pred_region
        _
      $region16: #{vgg_forward.5} parent=11 // pred_fallthru
        _
      // Predicated region
      $region17: #{vgg_forward.5} parent=11 // pred_check
        %p121 = pneg %p77
      $region18: #{vgg_forward.5} parent=11 // pred_check_branch
        %123 = sbr.rel (%p121) target = $region20
      $region19: #{vgg_forward.5} parent=11 // pred_region
        _
      $region20: #{vgg_forward.5} parent=11 // pred_fallthru
        _
    $region12: #{vgg_forward.5} parent=5 // pred_fallthru
      _
    %p124 = scmp.lt.s32.totalorder %s9, 2
    // Predicated region
    $region21: #{vgg_forward.5} parent=5 // pred_check
      %p125 = pneg %p124
    $region22: #{vgg_forward.5} parent=5 // pred_check_branch
      %127 = sbr.rel (%p125) target = $region24
    $region23: #{vgg_forward.5} parent=5 // pred_region
      // Predicated region
      $region25: #{vgg_forward.5} parent=23 // pred_check
        %p128 = pneg %p29
      $region26: #{vgg_forward.5} parent=23 // pred_check_branch
        %130 = sbr.rel (%p128) target = $region28
      $region27: #{vgg_forward.5} parent=23 // pred_region
        %p131 = scmp.lt.s32.totalorder %s9, 1
        %s132 = scalar_select %p131, %s9, 1
        %s133 = smul.addr %s132, 32
        %s134 = smul.addr %s133, 4
        %s135 = scalar_lea.vmem %s0, %s134
      $region28: #{vgg_forward.5} parent=23 // pred_fallthru
        _
    $region24: #{vgg_forward.5} parent=5 // pred_fallthru
      _
    %p136 = scmp.le.s32.totalorder 1, %s9
    %p137 = scmp.lt.s32.totalorder %s9, 3
    %p138 = pnand %p136, %p137
    %p139 = pneg %p138
    // Predicated region
    $region29: #{vgg_forward.5} parent=5 // pred_check
      _
    $region30: #{vgg_forward.5} parent=5 // pred_check_branch
      %141 = sbr.rel (%p138) target = $region32
    $region31: #{vgg_forward.5} parent=5 // pred_region
      %s142 = ssub.s32 %s9, 1
      %p143 = scmp.lt.s32.totalorder %s14, 1
      %s144 = scalar_select %p143, %s14, 1
      %s145 = smul.addr %s144, 32
      %s146 = smul.addr %s145, 4
      %s147 = scalar_lea.vmem %s0, %s146
      %p148 = pneg %p35
      %p149 = pneg %p32
      %p150 = pneg %p56
      %p151 = pneg %p53
      %p152 = pneg %p77
      %p153 = pneg %p74
      %p154 = pneg %p103
      %p155 = pneg %p100
      %p156 = scmp.lt.s32.totalorder %s14, 1
      %s157 = scalar_select %p156, %s14, 1
      %s158 = smul.addr %s157, 32
      %s159 = smul.addr %s158, 4
      %s160 = scalar_lea.vmem %s3, %s159
      %p161 = scmp.lt.s32.totalorder %s14, 1
      %s162 = scalar_select %p161, %s14, 1
      %s163 = smul.addr %s162, 32
      %s164 = smul.addr %s163, 4
      %s165 = scalar_lea.vmem %s0, %s164
      %p166 = scmp.lt.s32.totalorder %s14, 1
      %s167 = scalar_select %p166, %s14, 1
      %s168 = smul.addr %s167, 32
      %s169 = smul.addr %s168, 4
      %s170 = scalar_lea.vmem %s3, %s169
      %vm172 = vcmask 27648
      %173 = vst.msk [vmem:[#allocation2] sm:$0xf] %vm172, 0
      %174 = vst.msk [vmem:[#allocation2 + $0x4] sm:$0xf] %vm172, 0
      %vm175 = vcmask 24576
      %176 = vst.msk [vmem:[#allocation2 + $0x8] sm:$0x1] %vm175, 0
      %s177 = scalar_lea.vmem [#allocation2], 204
      %178 = vst.msk [vmem:[%s177] sm:$0xf] %vm172, 0
      %179 = vst.msk [vmem:[%s177 + $0x4] sm:$0xf] %vm172, 0
      %180 = vst.msk [vmem:[%s177 + $0x8] sm:$0x1] %vm175, 0
      %s181 = scalar_lea.vmem [#allocation2], 12
      %vm182 = vcmask 24576
      %vm183 = vsmask.f32 256
      %vm184 = vmand %vm182, %vm183
      %v185 = vld [vmem:[%s181] sm:$0x1]
      %v186 = vsel %vm184, 0, %v185
      %187 = vst [vmem:[%s181] sm:$0x1] %v186
      %v188 = vld [vmem:[%s181 + $0xc] sm:$0x1]
      %v189 = vsel %vm184, 0, %v188
      %190 = vst [vmem:[%s181 + $0xc] sm:$0x1] %v189
      %v191 = vld [vmem:[%s181 + $0x18] sm:$0x1]
      %v192 = vsel %vm184, 0, %v191
      %193 = vst [vmem:[%s181 + $0x18] sm:$0x1] %v192
      %v194 = vld [vmem:[%s181 + $0x24] sm:$0x1]
      %v195 = vsel %vm184, 0, %v194
      %196 = vst [vmem:[%s181 + $0x24] sm:$0x1] %v195
      %v197 = vld [vmem:[%s181 + $0x30] sm:$0x1]
      %v198 = vsel %vm184, 0, %v197
      %199 = vst [vmem:[%s181 + $0x30] sm:$0x1] %v198
      %v200 = vld [vmem:[%s181 + $0x3c] sm:$0x1]
      %v201 = vsel %vm184, 0, %v200
      %202 = vst [vmem:[%s181 + $0x3c] sm:$0x1] %v201
      %v203 = vld [vmem:[%s181 + $0x48] sm:$0x1]
      %v204 = vsel %vm184, 0, %v203
      %205 = vst [vmem:[%s181 + $0x48] sm:$0x1] %v204
      %v206 = vld [vmem:[%s181 + $0x54] sm:$0x1]
      %v207 = vsel %vm184, 0, %v206
      %208 = vst [vmem:[%s181 + $0x54] sm:$0x1] %v207
      %v209 = vld [vmem:[%s181 + $0x60] sm:$0x1]
      %v210 = vsel %vm184, 0, %v209
      %211 = vst [vmem:[%s181 + $0x60] sm:$0x1] %v210
      %v212 = vld [vmem:[%s181 + $0x6c] sm:$0x1]
      %v213 = vsel %vm184, 0, %v212
      %214 = vst [vmem:[%s181 + $0x6c] sm:$0x1] %v213
      %v215 = vld [vmem:[%s181 + $0x78] sm:$0x1]
      %v216 = vsel %vm184, 0, %v215
      %217 = vst [vmem:[%s181 + $0x78] sm:$0x1] %v216
      %v218 = vld [vmem:[%s181 + $0x84] sm:$0x1]
      %v219 = vsel %vm184, 0, %v218
      %220 = vst [vmem:[%s181 + $0x84] sm:$0x1] %v219
      %v221 = vld [vmem:[%s181 + $0x90] sm:$0x1]
      %v222 = vsel %vm184, 0, %v221
      %223 = vst [vmem:[%s181 + $0x90] sm:$0x1] %v222
      %v224 = vld [vmem:[%s181 + $0x9c] sm:$0x1]
      %v225 = vsel %vm184, 0, %v224
      %226 = vst [vmem:[%s181 + $0x9c] sm:$0x1] %v225
      %v227 = vld [vmem:[%s181 + $0xa8] sm:$0x1]
      %v228 = vsel %vm184, 0, %v227
      %229 = vst [vmem:[%s181 + $0xa8] sm:$0x1] %v228
      %v230 = vld [vmem:[%s181 + $0xb4] sm:$0x1]
      %v231 = vsel %vm184, 0, %v230
      %232 = vst [vmem:[%s181 + $0xb4] sm:$0x1] %v231
      %vm233 = vsmask.f32 7938
      %vm234 = vmand %vm182, %vm233
      %v235 = vld [vmem:[%s181 + $0x8] sm:$0x1]
      %v236 = vsel %vm234, 0, %v235
      %237 = vst [vmem:[%s181 + $0x8] sm:$0x1] %v236
      %v238 = vld [vmem:[%s181 + $0x14] sm:$0x1]
      %v239 = vsel %vm234, 0, %v238
      %240 = vst [vmem:[%s181 + $0x14] sm:$0x1] %v239
      %v241 = vld [vmem:[%s181 + $0x20] sm:$0x1]
      %v242 = vsel %vm234, 0, %v241
      %243 = vst [vmem:[%s181 + $0x20] sm:$0x1] %v242
      %v244 = vld [vmem:[%s181 + $0x2c] sm:$0x1]
      %v245 = vsel %vm234, 0, %v244
      %246 = vst [vmem:[%s181 + $0x2c] sm:$0x1] %v245
      %v247 = vld [vmem:[%s181 + $0x38] sm:$0x1]
      %v248 = vsel %vm234, 0, %v247
      %249 = vst [vmem:[%s181 + $0x38] sm:$0x1] %v248
      %v250 = vld [vmem:[%s181 + $0x44] sm:$0x1]
      %v251 = vsel %vm234, 0, %v250
      %252 = vst [vmem:[%s181 + $0x44] sm:$0x1] %v251
      %v253 = vld [vmem:[%s181 + $0x50] sm:$0x1]
      %v254 = vsel %vm234, 0, %v253
      %255 = vst [vmem:[%s181 + $0x50] sm:$0x1] %v254
      %v256 = vld [vmem:[%s181 + $0x5c] sm:$0x1]
      %v257 = vsel %vm234, 0, %v256
      %258 = vst [vmem:[%s181 + $0x5c] sm:$0x1] %v257
      %v259 = vld [vmem:[%s181 + $0x68] sm:$0x1]
      %v260 = vsel %vm234, 0, %v259
      %261 = vst [vmem:[%s181 + $0x68] sm:$0x1] %v260
      %v262 = vld [vmem:[%s181 + $0x74] sm:$0x1]
      %v263 = vsel %vm234, 0, %v262
      %264 = vst [vmem:[%s181 + $0x74] sm:$0x1] %v263
      %v265 = vld [vmem:[%s181 + $0x80] sm:$0x1]
      %v266 = vsel %vm234, 0, %v265
      %267 = vst [vmem:[%s181 + $0x80] sm:$0x1] %v266
      %v268 = vld [vmem:[%s181 + $0x8c] sm:$0x1]
      %v269 = vsel %vm234, 0, %v268
      %270 = vst [vmem:[%s181 + $0x8c] sm:$0x1] %v269
      %v271 = vld [vmem:[%s181 + $0x98] sm:$0x1]
      %v272 = vsel %vm234, 0, %v271
      %273 = vst [vmem:[%s181 + $0x98] sm:$0x1] %v272
      %v274 = vld [vmem:[%s181 + $0xa4] sm:$0x1]
      %v275 = vsel %vm234, 0, %v274
      %276 = vst [vmem:[%s181 + $0xa4] sm:$0x1] %v275
      %v277 = vld [vmem:[%s181 + $0xb0] sm:$0x1]
      %v278 = vsel %vm234, 0, %v277
      %279 = vst [vmem:[%s181 + $0xb0] sm:$0x1] %v278
      %v280 = vld [vmem:[%s181 + $0xbc] sm:$0x1]
      %v281 = vsel %vm234, 0, %v280
      %282 = vst [vmem:[%s181 + $0xbc] sm:$0x1] %v281
      %v283 = vld [vmem:[%s165] sm:$0xf]
      %v284 = vld [vmem:[%s165 + $0x4] sm:$0xf]
      %v285 = vld [vmem:[%s165 + $0x8] sm:$0xf]
      %v286 = vld [vmem:[%s165 + $0xc] sm:$0xf]
      %v287 = vld [vmem:[%s165 + $0x10] sm:$0xf]
      %v288 = vld [vmem:[%s165 + $0x14] sm:$0xf]
      %v289 = vld [vmem:[%s165 + $0x18] sm:$0xf]
      %v290 = vld [vmem:[%s165 + $0x1c] sm:$0xf]
      %v291 = vld [vmem:[%s165 + $0x20] sm:$0xf]
      %v292 = vld [vmem:[%s165 + $0x24] sm:$0xf]
      %v293 = vld [vmem:[%s165 + $0x28] sm:$0xf]
      %v294 = vld [vmem:[%s165 + $0x2c] sm:$0xf]
      %v295 = vld [vmem:[%s165 + $0x30] sm:$0xf]
      %v296 = vld [vmem:[%s165 + $0x34] sm:$0xf]
      %v297 = vld [vmem:[%s165 + $0x38] sm:$0xf]
      %v298 = vld [vmem:[%s165 + $0x3c] sm:$0xf]
      %v299 = vld [vmem:[%s165 + $0x40] sm:$0xf]
      %v300 = vld [vmem:[%s165 + $0x44] sm:$0xf]
      %v301 = vld [vmem:[%s165 + $0x48] sm:$0xf]
      %v302 = vld [vmem:[%s165 + $0x4c] sm:$0xf]
      %v303 = vld [vmem:[%s165 + $0x50] sm:$0xf]
      %v304 = vld [vmem:[%s165 + $0x54] sm:$0xf]
      %v305 = vld [vmem:[%s165 + $0x58] sm:$0xf]
      %v306 = vld [vmem:[%s165 + $0x5c] sm:$0xf]
      %v307 = vld [vmem:[%s165 + $0x60] sm:$0xf]
      %v308 = vld [vmem:[%s165 + $0x64] sm:$0xf]
      %v309 = vld [vmem:[%s165 + $0x68] sm:$0xf]
      %v310 = vld [vmem:[%s165 + $0x6c] sm:$0xf]
      %v311 = vld [vmem:[%s165 + $0x70] sm:$0xf]
      %v312 = vld [vmem:[%s165 + $0x74] sm:$0xf]
      %v313 = vld [vmem:[%s165 + $0x78] sm:$0xf]
      %v314 = vld [vmem:[%s165 + $0x7c] sm:$0xf]
      %vm315 = vsmask.f32 4368
      %vm316 = vmor %vm183, %vm315
      %v318 = vshrl.u32 %v283, 16
      %v320 = vrot.slane %v318, 7
      %v321 = vshll.u32 %v283, 16
      %v323 = vor.u32 %v320, %v321
      %v324 = vrot.slane %v320, 4
      %v326 = vshrl.u32 %v284, 16
      %v328 = vrot.slane %v326, 7
      %v329 = vshll.u32 %v284, 16
      %v331 = vor.u32 %v328, %v329
      %v332 = vsel %vm316, %v324, %v331
      %v333 = vrot.slane %v328, 4
      %v335 = vshrl.u32 %v285, 16
      %v337 = vrot.slane %v335, 7
      %v338 = vshll.u32 %v285, 16
      %v340 = vor.u32 %v337, %v338
      %v341 = vrot.slane %v337, 4
      %v343 = vshrl.u32 %v286, 16
      %v345 = vrot.slane %v343, 7
      %v346 = vshll.u32 %v286, 16
      %v348 = vor.u32 %v345, %v346
      %v349 = vsel %vm316, %v341, %v348
      %v350 = vrot.slane %v345, 4
      %v352 = vshrl.u32 %v287, 16
      %v354 = vrot.slane %v352, 7
      %v355 = vshll.u32 %v287, 16
      %v357 = vor.u32 %v354, %v355
      %v358 = vrot.slane %v354, 4
      %v360 = vshrl.u32 %v288, 16
      %v362 = vrot.slane %v360, 7
      %v363 = vshll.u32 %v288, 16
      %v365 = vor.u32 %v362, %v363
      %v366 = vsel %vm316, %v358, %v365
      %v367 = vrot.slane %v362, 4
      %v369 = vshrl.u32 %v289, 16
      %v371 = vrot.slane %v369, 7
      %v372 = vshll.u32 %v289, 16
      %v374 = vor.u32 %v371, %v372
      %v375 = vrot.slane %v371, 4
      %v377 = vshrl.u32 %v290, 16
      %v379 = vrot.slane %v377, 7
      %v380 = vshll.u32 %v290, 16
      %v382 = vor.u32 %v379, %v380
      %v383 = vsel %vm316, %v375, %v382
      %v384 = vrot.slane %v379, 4
      %v386 = vshrl.u32 %v291, 16
      %v388 = vrot.slane %v386, 7
      %v389 = vshll.u32 %v291, 16
      %v391 = vor.u32 %v388, %v389
      %v392 = vrot.slane %v388, 4
      %v394 = vshrl.u32 %v292, 16
      %v396 = vrot.slane %v394, 7
      %v397 = vshll.u32 %v292, 16
      %v399 = vor.u32 %v396, %v397
      %v400 = vsel %vm316, %v392, %v399
      %v401 = vrot.slane %v396, 4
      %v403 = vshrl.u32 %v293, 16
      %v405 = vrot.slane %v403, 7
      %v406 = vshll.u32 %v293, 16
      %v408 = vor.u32 %v405, %v406
      %v409 = vrot.slane %v405, 4
      %v411 = vshrl.u32 %v294, 16
      %v413 = vrot.slane %v411, 7
      %v414 = vshll.u32 %v294, 16
      %v416 = vor.u32 %v413, %v414
      %v417 = vsel %vm316, %v409, %v416
      %v418 = vrot.slane %v413, 4
      %v420 = vshrl.u32 %v295, 16
      %v422 = vrot.slane %v420, 7
      %v423 = vshll.u32 %v295, 16
      %v425 = vor.u32 %v422, %v423
      %v426 = vrot.slane %v422, 4
      %v428 = vshrl.u32 %v296, 16
      %v430 = vrot.slane %v428, 7
      %v431 = vshll.u32 %v296, 16
      %v433 = vor.u32 %v430, %v431
      %v434 = vsel %vm316, %v426, %v433
      %v435 = vrot.slane %v430, 4
      %v437 = vshrl.u32 %v297, 16
      %v439 = vrot.slane %v437, 7
      %v440 = vshll.u32 %v297, 16
      %v442 = vor.u32 %v439, %v440
      %v443 = vrot.slane %v439, 4
      %v445 = vshrl.u32 %v298, 16
      %v447 = vrot.slane %v445, 7
      %v448 = vshll.u32 %v298, 16
      %v450 = vor.u32 %v447, %v448
      %v451 = vsel %vm316, %v443, %v450
      %v452 = vrot.slane %v447, 4
      %v454 = vshrl.u32 %v299, 16
      %v456 = vrot.slane %v454, 7
      %v457 = vshll.u32 %v299, 16
      %v459 = vor.u32 %v456, %v457
      %v460 = vrot.slane %v456, 4
      %v462 = vshrl.u32 %v300, 16
      %v464 = vrot.slane %v462, 7
      %v465 = vshll.u32 %v300, 16
      %v467 = vor.u32 %v464, %v465
      %v468 = vsel %vm316, %v460, %v467
      %v469 = vrot.slane %v464, 4
      %v471 = vshrl.u32 %v301, 16
      %v473 = vrot.slane %v471, 7
      %v474 = vshll.u32 %v301, 16
      %v476 = vor.u32 %v473, %v474
      %v477 = vrot.slane %v473, 4
      %v479 = vshrl.u32 %v302, 16
      %v481 = vrot.slane %v479, 7
      %v482 = vshll.u32 %v302, 16
      %v484 = vor.u32 %v481, %v482
      %v485 = vsel %vm316, %v477, %v484
      %v486 = vrot.slane %v481, 4
      %v488 = vshrl.u32 %v303, 16
      %v490 = vrot.slane %v488, 7
      %v491 = vshll.u32 %v303, 16
      %v493 = vor.u32 %v490, %v491
      %v494 = vrot.slane %v490, 4
      %v496 = vshrl.u32 %v304, 16
      %v498 = vrot.slane %v496, 7
      %v499 = vshll.u32 %v304, 16
      %v501 = vor.u32 %v498, %v499
      %v502 = vsel %vm316, %v494, %v501
      %v503 = vrot.slane %v498, 4
      %v505 = vshrl.u32 %v305, 16
      %v507 = vrot.slane %v505, 7
      %v508 = vshll.u32 %v305, 16
      %v510 = vor.u32 %v507, %v508
      %v511 = vrot.slane %v507, 4
      %v513 = vshrl.u32 %v306, 16
      %v515 = vrot.slane %v513, 7
      %v516 = vshll.u32 %v306, 16
      %v518 = vor.u32 %v515, %v516
      %v519 = vsel %vm316, %v511, %v518
      %v520 = vrot.slane %v515, 4
      %v522 = vshrl.u32 %v307, 16
      %v524 = vrot.slane %v522, 7
      %v525 = vshll.u32 %v307, 16
      %v527 = vor.u32 %v524, %v525
      %v528 = vrot.slane %v524, 4
      %v530 = vshrl.u32 %v308, 16
      %v532 = vrot.slane %v530, 7
      %v533 = vshll.u32 %v308, 16
      %v535 = vor.u32 %v532, %v533
      %v536 = vsel %vm316, %v528, %v535
      %v537 = vrot.slane %v532, 4
      %v539 = vshrl.u32 %v309, 16
      %v541 = vrot.slane %v539, 7
      %v542 = vshll.u32 %v309, 16
      %v544 = vor.u32 %v541, %v542
      %v545 = vrot.slane %v541, 4
      %v547 = vshrl.u32 %v310, 16
      %v549 = vrot.slane %v547, 7
      %v550 = vshll.u32 %v310, 16
      %v552 = vor.u32 %v549, %v550
      %v553 = vsel %vm316, %v545, %v552
      %v554 = vrot.slane %v549, 4
      %v556 = vshrl.u32 %v311, 16
      %v558 = vrot.slane %v556, 7
      %v559 = vshll.u32 %v311, 16
      %v561 = vor.u32 %v558, %v559
      %v562 = vrot.slane %v558, 4
      %v564 = vshrl.u32 %v312, 16
      %v566 = vrot.slane %v564, 7
      %v567 = vshll.u32 %v312, 16
      %v569 = vor.u32 %v566, %v567
      %v570 = vsel %vm316, %v562, %v569
      %v571 = vrot.slane %v566, 4
      %v573 = vshrl.u32 %v313, 16
      %v575 = vrot.slane %v573, 7
      %v576 = vshll.u32 %v313, 16
      %v578 = vor.u32 %v575, %v576
      %v579 = vrot.slane %v575, 4
      %v581 = vshrl.u32 %v314, 16
      %v583 = vrot.slane %v581, 7
      %v584 = vshll.u32 %v314, 16
      %v586 = vor.u32 %v583, %v584
      %v587 = vsel %vm316, %v579, %v586
      %v588 = vrot.slane %v583, 4
      %vm637 = vcmask 27648
      %vm638 = vmand %vm637, %vm233
      %v639 = vld [vmem:[%s181] sm:$0xf]
      %v640 = vsel %vm638, %v323, %v639
      %641 = vst [vmem:[%s181] sm:$0xf] %v640
      %642 = vst.msk [vmem:[%s181 + $0x4] sm:$0xf] %vm172, %v332
      %v643 = vld [vmem:[%s181 + $0x8] sm:$0x1]
      %v644 = vsel %vm184, %v333, %v643
      %645 = vst [vmem:[%s181 + $0x8] sm:$0x1] %v644
      %v646 = vld [vmem:[%s181 + $0xc] sm:$0xf]
      %v647 = vsel %vm638, %v340, %v646
      %648 = vst [vmem:[%s181 + $0xc] sm:$0xf] %v647
      %649 = vst.msk [vmem:[%s181 + $0x10] sm:$0xf] %vm172, %v349
      %v650 = vld [vmem:[%s181 + $0x14] sm:$0x1]
      %v651 = vsel %vm184, %v350, %v650
      %652 = vst [vmem:[%s181 + $0x14] sm:$0x1] %v651
      %v653 = vld [vmem:[%s181 + $0x18] sm:$0xf]
      %v654 = vsel %vm638, %v357, %v653
      %655 = vst [vmem:[%s181 + $0x18] sm:$0xf] %v654
      %656 = vst.msk [vmem:[%s181 + $0x1c] sm:$0xf] %vm172, %v366
      %v657 = vld [vmem:[%s181 + $0x20] sm:$0x1]
      %v658 = vsel %vm184, %v367, %v657
      %659 = vst [vmem:[%s181 + $0x20] sm:$0x1] %v658
      %v660 = vld [vmem:[%s181 + $0x24] sm:$0xf]
      %v661 = vsel %vm638, %v374, %v660
      %662 = vst [vmem:[%s181 + $0x24] sm:$0xf] %v661
      %663 = vst.msk [vmem:[%s181 + $0x28] sm:$0xf] %vm172, %v383
      %v664 = vld [vmem:[%s181 + $0x2c] sm:$0x1]
      %v665 = vsel %vm184, %v384, %v664
      %666 = vst [vmem:[%s181 + $0x2c] sm:$0x1] %v665
      %v667 = vld [vmem:[%s181 + $0x30] sm:$0xf]
      %v668 = vsel %vm638, %v391, %v667
      %669 = vst [vmem:[%s181 + $0x30] sm:$0xf] %v668
      %670 = vst.msk [vmem:[%s181 + $0x34] sm:$0xf] %vm172, %v400
      %v671 = vld [vmem:[%s181 + $0x38] sm:$0x1]
      %v672 = vsel %vm184, %v401, %v671
      %673 = vst [vmem:[%s181 + $0x38] sm:$0x1] %v672
      %v674 = vld [vmem:[%s181 + $0x3c] sm:$0xf]
      %v675 = vsel %vm638, %v408, %v674
      %676 = vst [vmem:[%s181 + $0x3c] sm:$0xf] %v675
      %677 = vst.msk [vmem:[%s181 + $0x40] sm:$0xf] %vm172, %v417
      %v678 = vld [vmem:[%s181 + $0x44] sm:$0x1]
      %v679 = vsel %vm184, %v418, %v678
      %680 = vst [vmem:[%s181 + $0x44] sm:$0x1] %v679
      %v681 = vld [vmem:[%s181 + $0x48] sm:$0xf]
      %v682 = vsel %vm638, %v425, %v681
      %683 = vst [vmem:[%s181 + $0x48] sm:$0xf] %v682
      %684 = vst.msk [vmem:[%s181 + $0x4c] sm:$0xf] %vm172, %v434
      %v685 = vld [vmem:[%s181 + $0x50] sm:$0x1]
      %v686 = vsel %vm184, %v435, %v685
      %687 = vst [vmem:[%s181 + $0x50] sm:$0x1] %v686
      %v688 = vld [vmem:[%s181 + $0x54] sm:$0xf]
      %v689 = vsel %vm638, %v442, %v688
      %690 = vst [vmem:[%s181 + $0x54] sm:$0xf] %v689
      %691 = vst.msk [vmem:[%s181 + $0x58] sm:$0xf] %vm172, %v451
      %v692 = vld [vmem:[%s181 + $0x5c] sm:$0x1]
      %v693 = vsel %vm184, %v452, %v692
      %694 = vst [vmem:[%s181 + $0x5c] sm:$0x1] %v693
      %v695 = vld [vmem:[%s181 + $0x60] sm:$0xf]
      %v696 = vsel %vm638, %v459, %v695
      %697 = vst [vmem:[%s181 + $0x60] sm:$0xf] %v696
      %698 = vst.msk [vmem:[%s181 + $0x64] sm:$0xf] %vm172, %v468
      %v699 = vld [vmem:[%s181 + $0x68] sm:$0x1]
      %v700 = vsel %vm184, %v469, %v699
      %701 = vst [vmem:[%s181 + $0x68] sm:$0x1] %v700
      %v702 = vld [vmem:[%s181 + $0x6c] sm:$0xf]
      %v703 = vsel %vm638, %v476, %v702
      %704 = vst [vmem:[%s181 + $0x6c] sm:$0xf] %v703
      %705 = vst.msk [vmem:[%s181 + $0x70] sm:$0xf] %vm172, %v485
      %v706 = vld [vmem:[%s181 + $0x74] sm:$0x1]
      %v707 = vsel %vm184, %v486, %v706
      %708 = vst [vmem:[%s181 + $0x74] sm:$0x1] %v707
      %v709 = vld [vmem:[%s181 + $0x78] sm:$0xf]
      %v710 = vsel %vm638, %v493, %v709
      %711 = vst [vmem:[%s181 + $0x78] sm:$0xf] %v710
      %712 = vst.msk [vmem:[%s181 + $0x7c] sm:$0xf] %vm172, %v502
      %v713 = vld [vmem:[%s181 + $0x80] sm:$0x1]
      %v714 = vsel %vm184, %v503, %v713
      %715 = vst [vmem:[%s181 + $0x80] sm:$0x1] %v714
      %v716 = vld [vmem:[%s181 + $0x84] sm:$0xf]
      %v717 = vsel %vm638, %v510, %v716
      %718 = vst [vmem:[%s181 + $0x84] sm:$0xf] %v717
      %719 = vst.msk [vmem:[%s181 + $0x88] sm:$0xf] %vm172, %v519
      %v720 = vld [vmem:[%s181 + $0x8c] sm:$0x1]
      %v721 = vsel %vm184, %v520, %v720
      %722 = vst [vmem:[%s181 + $0x8c] sm:$0x1] %v721
      %v723 = vld [vmem:[%s181 + $0x90] sm:$0xf]
      %v724 = vsel %vm638, %v527, %v723
      %725 = vst [vmem:[%s181 + $0x90] sm:$0xf] %v724
      %726 = vst.msk [vmem:[%s181 + $0x94] sm:$0xf] %vm172, %v536
      %v727 = vld [vmem:[%s181 + $0x98] sm:$0x1]
      %v728 = vsel %vm184, %v537, %v727
      %729 = vst [vmem:[%s181 + $0x98] sm:$0x1] %v728
      %v730 = vld [vmem:[%s181 + $0x9c] sm:$0xf]
      %v731 = vsel %vm638, %v544, %v730
      %732 = vst [vmem:[%s181 + $0x9c] sm:$0xf] %v731
      %733 = vst.msk [vmem:[%s181 + $0xa0] sm:$0xf] %vm172, %v553
      %v734 = vld [vmem:[%s181 + $0xa4] sm:$0x1]
      %v735 = vsel %vm184, %v554, %v734
      %736 = vst [vmem:[%s181 + $0xa4] sm:$0x1] %v735
      %v737 = vld [vmem:[%s181 + $0xa8] sm:$0xf]
      %v738 = vsel %vm638, %v561, %v737
      %739 = vst [vmem:[%s181 + $0xa8] sm:$0xf] %v738
      %740 = vst.msk [vmem:[%s181 + $0xac] sm:$0xf] %vm172, %v570
      %v741 = vld [vmem:[%s181 + $0xb0] sm:$0x1]
      %v742 = vsel %vm184, %v571, %v741
      %743 = vst [vmem:[%s181 + $0xb0] sm:$0x1] %v742
      %v744 = vld [vmem:[%s181 + $0xb4] sm:$0xf]
      %v745 = vsel %vm638, %v578, %v744
      %746 = vst [vmem:[%s181 + $0xb4] sm:$0xf] %v745
      %747 = vst.msk [vmem:[%s181 + $0xb8] sm:$0xf] %vm172, %v587
      %v748 = vld [vmem:[%s181 + $0xbc] sm:$0x1]
      %v749 = vsel %vm184, %v588, %v748
      %750 = vst [vmem:[%s181 + $0xbc] sm:$0x1] %v749
      %v751 = vld [vmem:[#allocation2] sm:$0xf]
      %v752 = vld [vmem:[#allocation2 + $0x4] sm:$0xf]
      %v753 = vld [vmem:[#allocation2 + $0xc] sm:$0xf]
      %v754 = vld [vmem:[#allocation2 + $0x10] sm:$0xf]
      %v755 = vld [vmem:[#allocation2 + $0x18] sm:$0xf]
      %v756 = vld [vmem:[#allocation2 + $0x1c] sm:$0xf]
      %v757 = vld [vmem:[#allocation2 + $0x24] sm:$0xf]
      %v758 = vld [vmem:[#allocation2 + $0x28] sm:$0xf]
      %v759 = vld [vmem:[#allocation2 + $0x30] sm:$0xf]
      %v760 = vld [vmem:[#allocation2 + $0x34] sm:$0xf]
      %v761 = vld [vmem:[#allocation2 + $0x3c] sm:$0xf]
      %v762 = vld [vmem:[#allocation2 + $0x40] sm:$0xf]
      %v763 = vld [vmem:[#allocation2 + $0x48] sm:$0xf]
      %v764 = vld [vmem:[#allocation2 + $0x4c] sm:$0xf]
      %v765 = vld [vmem:[#allocation2 + $0x54] sm:$0xf]
      %v766 = vld [vmem:[#allocation2 + $0x58] sm:$0xf]
      %v767 = vld [vmem:[#allocation2 + $0x60] sm:$0xf]
      %v768 = vld [vmem:[#allocation2 + $0x64] sm:$0xf]
      %v769 = vld [vmem:[#allocation2 + $0x6c] sm:$0xf]
      %v770 = vld [vmem:[#allocation2 + $0x70] sm:$0xf]
      %v771 = vld [vmem:[#allocation2 + $0x78] sm:$0xf]
      %v772 = vld [vmem:[#allocation2 + $0x7c] sm:$0xf]
      %v773 = vld [vmem:[#allocation2 + $0x84] sm:$0xf]
      %v774 = vld [vmem:[#allocation2 + $0x88] sm:$0xf]
      %v775 = vld [vmem:[#allocation2 + $0x90] sm:$0xf]
      %v776 = vld [vmem:[#allocation2 + $0x94] sm:$0xf]
      %v777 = vld [vmem:[#allocation2 + $0x9c] sm:$0xf]
      %v778 = vld [vmem:[#allocation2 + $0xa0] sm:$0xf]
      %v779 = vld [vmem:[#allocation2 + $0xa8] sm:$0xf]
      %v780 = vld [vmem:[#allocation2 + $0xac] sm:$0xf]
      %v781 = vld [vmem:[#allocation2 + $0xb4] sm:$0xf]
      %v782 = vld [vmem:[#allocation2 + $0xb8] sm:$0xf]
      %v783 = vld [vmem:[%s1] sm:$0x3]
      %v784 = vld [vmem:[#allocation2 + $0x8] sm:$0x1]
      %v785 = vld [vmem:[#allocation2 + $0x14] sm:$0x1]
      %v786 = vld [vmem:[#allocation2 + $0x20] sm:$0x1]
      %v787 = vld [vmem:[#allocation2 + $0x2c] sm:$0x1]
      %v788 = vld [vmem:[#allocation2 + $0x38] sm:$0x1]
      %v789 = vld [vmem:[#allocation2 + $0x44] sm:$0x1]
      %v790 = vld [vmem:[#allocation2 + $0x50] sm:$0x1]
      %v791 = vld [vmem:[#allocation2 + $0x5c] sm:$0x1]
      %v792 = vld [vmem:[#allocation2 + $0x68] sm:$0x1]
      %v793 = vld [vmem:[#allocation2 + $0x74] sm:$0x1]
      %v794 = vld [vmem:[#allocation2 + $0x80] sm:$0x1]
      %v795 = vld [vmem:[#allocation2 + $0x8c] sm:$0x1]
      %v796 = vld [vmem:[#allocation2 + $0x98] sm:$0x1]
      %v797 = vld [vmem:[#allocation2 + $0xa4] sm:$0x1]
      %v798 = vld [vmem:[#allocation2 + $0xb0] sm:$0x1]
      %v799 = vld [vmem:[#allocation2 + $0xbc] sm:$0x1]
      %vm800 = vsmask.f32 3328
      %vm801 = vsmask.f32 7440
      %vm802 = vmor %vm800, %vm801
      %v804 = vshrl.u32 %v751, 16
      %v806 = vrot.slane %v804, 4
      %v807 = vshll.u32 %v751, 16
      %v809 = vrot.slane %v807, 5
      %v810 = vor.u32 %v806, %v809
      %v811 = vrot.slane %v810, 4
      %v813 = vshll.u32 %v752, 16
      %v815 = vrot.slane %v813, 5
      %v816 = vsel %vm802, %v811, %v815
      %v817 = vshrl.u32 %v752, 16
      %v819 = vrot.slane %v817, 4
      %v820 = vor.u32 %v819, %v815
      %v821 = vrot.slane %v820, 4
      %v823 = vshll.u32 %v784, 16
      %v825 = vrot.slane %v823, 5
      %v826 = vsel %vm802, %v821, %v825
      %v828 = vshrl.u32 %v753, 16
      %v830 = vrot.slane %v828, 4
      %v831 = vshll.u32 %v753, 16
      %v833 = vrot.slane %v831, 5
      %v834 = vor.u32 %v830, %v833
      %v835 = vrot.slane %v834, 4
      %v837 = vshll.u32 %v754, 16
      %v839 = vrot.slane %v837, 5
      %v840 = vsel %vm802, %v835, %v839
      %v841 = vshrl.u32 %v754, 16
      %v843 = vrot.slane %v841, 4
      %v844 = vor.u32 %v843, %v839
      %v845 = vrot.slane %v844, 4
      %v847 = vshll.u32 %v785, 16
      %v849 = vrot.slane %v847, 5
      %v850 = vsel %vm802, %v845, %v849
      %v852 = vshrl.u32 %v755, 16
      %v854 = vrot.slane %v852, 4
      %v855 = vshll.u32 %v755, 16
      %v857 = vrot.slane %v855, 5
      %v858 = vor.u32 %v854, %v857
      %v859 = vrot.slane %v858, 4
      %v861 = vshll.u32 %v756, 16
      %v863 = vrot.slane %v861, 5
      %v864 = vsel %vm802, %v859, %v863
      %v865 = vshrl.u32 %v756, 16
      %v867 = vrot.slane %v865, 4
      %v868 = vor.u32 %v867, %v863
      %v869 = vrot.slane %v868, 4
      %v871 = vshll.u32 %v786, 16
      %v873 = vrot.slane %v871, 5
      %v874 = vsel %vm802, %v869, %v873
      %v876 = vshrl.u32 %v757, 16
      %v878 = vrot.slane %v876, 4
      %v879 = vshll.u32 %v757, 16
      %v881 = vrot.slane %v879, 5
      %v882 = vor.u32 %v878, %v881
      %v883 = vrot.slane %v882, 4
      %v885 = vshll.u32 %v758, 16
      %v887 = vrot.slane %v885, 5
      %v888 = vsel %vm802, %v883, %v887
      %v889 = vshrl.u32 %v758, 16
      %v891 = vrot.slane %v889, 4
      %v892 = vor.u32 %v891, %v887
      %v893 = vrot.slane %v892, 4
      %v895 = vshll.u32 %v787, 16
      %v897 = vrot.slane %v895, 5
      %v898 = vsel %vm802, %v893, %v897
      %v900 = vshrl.u32 %v759, 16
      %v902 = vrot.slane %v900, 4
      %v903 = vshll.u32 %v759, 16
      %v905 = vrot.slane %v903, 5
      %v906 = vor.u32 %v902, %v905
      %v907 = vrot.slane %v906, 4
      %v909 = vshll.u32 %v760, 16
      %v911 = vrot.slane %v909, 5
      %v912 = vsel %vm802, %v907, %v911
      %v913 = vshrl.u32 %v760, 16
      %v915 = vrot.slane %v913, 4
      %v916 = vor.u32 %v915, %v911
      %v917 = vrot.slane %v916, 4
      %v919 = vshll.u32 %v788, 16
      %v921 = vrot.slane %v919, 5
      %v922 = vsel %vm802, %v917, %v921
      %v924 = vshrl.u32 %v761, 16
      %v926 = vrot.slane %v924, 4
      %v927 = vshll.u32 %v761, 16
      %v929 = vrot.slane %v927, 5
      %v930 = vor.u32 %v926, %v929
      %v931 = vrot.slane %v930, 4
      %v933 = vshll.u32 %v762, 16
      %v935 = vrot.slane %v933, 5
      %v936 = vsel %vm802, %v931, %v935
      %v937 = vshrl.u32 %v762, 16
      %v939 = vrot.slane %v937, 4
      %v940 = vor.u32 %v939, %v935
      %v941 = vrot.slane %v940, 4
      %v943 = vshll.u32 %v789, 16
      %v945 = vrot.slane %v943, 5
      %v946 = vsel %vm802, %v941, %v945
      %v948 = vshrl.u32 %v763, 16
      %v950 = vrot.slane %v948, 4
      %v951 = vshll.u32 %v763, 16
      %v953 = vrot.slane %v951, 5
      %v954 = vor.u32 %v950, %v953
      %v955 = vrot.slane %v954, 4
      %v957 = vshll.u32 %v764, 16
      %v959 = vrot.slane %v957, 5
      %v960 = vsel %vm802, %v955, %v959
      %v961 = vshrl.u32 %v764, 16
      %v963 = vrot.slane %v961, 4
      %v964 = vor.u32 %v963, %v959
      %v965 = vrot.slane %v964, 4
      %v967 = vshll.u32 %v790, 16
      %v969 = vrot.slane %v967, 5
      %v970 = vsel %vm802, %v965, %v969
      %v972 = vshrl.u32 %v765, 16
      %v974 = vrot.slane %v972, 4
      %v975 = vshll.u32 %v765, 16
      %v977 = vrot.slane %v975, 5
      %v978 = vor.u32 %v974, %v977
      %v979 = vrot.slane %v978, 4
      %v981 = vshll.u32 %v766, 16
      %v983 = vrot.slane %v981, 5
      %v984 = vsel %vm802, %v979, %v983
      %v985 = vshrl.u32 %v766, 16
      %v987 = vrot.slane %v985, 4
      %v988 = vor.u32 %v987, %v983
      %v989 = vrot.slane %v988, 4
      %v991 = vshll.u32 %v791, 16
      %v993 = vrot.slane %v991, 5
      %v994 = vsel %vm802, %v989, %v993
      %v996 = vshrl.u32 %v767, 16
      %v998 = vrot.slane %v996, 4
      %v999 = vshll.u32 %v767, 16
      %v1001 = vrot.slane %v999, 5
      %v1002 = vor.u32 %v998, %v1001
      %v1003 = vrot.slane %v1002, 4
      %v1005 = vshll.u32 %v768, 16
      %v1007 = vrot.slane %v1005, 5
      %v1008 = vsel %vm802, %v1003, %v1007
      %v1009 = vshrl.u32 %v768, 16
      %v1011 = vrot.slane %v1009, 4
      %v1012 = vor.u32 %v1011, %v1007
      %v1013 = vrot.slane %v1012, 4
      %v1015 = vshll.u32 %v792, 16
      %v1017 = vrot.slane %v1015, 5
      %v1018 = vsel %vm802, %v1013, %v1017
      %v1020 = vshrl.u32 %v769, 16
      %v1022 = vrot.slane %v1020, 4
      %v1023 = vshll.u32 %v769, 16
      %v1025 = vrot.slane %v1023, 5
      %v1026 = vor.u32 %v1022, %v1025
      %v1027 = vrot.slane %v1026, 4
      %v1029 = vshll.u32 %v770, 16
      %v1031 = vrot.slane %v1029, 5
      %v1032 = vsel %vm802, %v1027, %v1031
      %v1033 = vshrl.u32 %v770, 16
      %v1035 = vrot.slane %v1033, 4
      %v1036 = vor.u32 %v1035, %v1031
      %v1037 = vrot.slane %v1036, 4
      %v1039 = vshll.u32 %v793, 16
      %v1041 = vrot.slane %v1039, 5
      %v1042 = vsel %vm802, %v1037, %v1041
      %v1044 = vshrl.u32 %v771, 16
      %v1046 = vrot.slane %v1044, 4
      %v1047 = vshll.u32 %v771, 16
      %v1049 = vrot.slane %v1047, 5
      %v1050 = vor.u32 %v1046, %v1049
      %v1051 = vrot.slane %v1050, 4
      %v1053 = vshll.u32 %v772, 16
      %v1055 = vrot.slane %v1053, 5
      %v1056 = vsel %vm802, %v1051, %v1055
      %v1057 = vshrl.u32 %v772, 16
      %v1059 = vrot.slane %v1057, 4
      %v1060 = vor.u32 %v1059, %v1055
      %v1061 = vrot.slane %v1060, 4
      %v1063 = vshll.u32 %v794, 16
      %v1065 = vrot.slane %v1063, 5
      %v1066 = vsel %vm802, %v1061, %v1065
      %v1068 = vshrl.u32 %v773, 16
      %v1070 = vrot.slane %v1068, 4
      %v1071 = vshll.u32 %v773, 16
      %v1073 = vrot.slane %v1071, 5
      %v1074 = vor.u32 %v1070, %v1073
      %v1075 = vrot.slane %v1074, 4
      %v1077 = vshll.u32 %v774, 16
      %v1079 = vrot.slane %v1077, 5
      %v1080 = vsel %vm802, %v1075, %v1079
      %v1081 = vshrl.u32 %v774, 16
      %v1083 = vrot.slane %v1081, 4
      %v1084 = vor.u32 %v1083, %v1079
      %v1085 = vrot.slane %v1084, 4
      %v1087 = vshll.u32 %v795, 16
      %v1089 = vrot.slane %v1087, 5
      %v1090 = vsel %vm802, %v1085, %v1089
      %v1092 = vshrl.u32 %v775, 16
      %v1094 = vrot.slane %v1092, 4
      %v1095 = vshll.u32 %v775, 16
      %v1097 = vrot.slane %v1095, 5
      %v1098 = vor.u32 %v1094, %v1097
      %v1099 = vrot.slane %v1098, 4
      %v1101 = vshll.u32 %v776, 16
      %v1103 = vrot.slane %v1101, 5
      %v1104 = vsel %vm802, %v1099, %v1103
      %v1105 = vshrl.u32 %v776, 16
      %v1107 = vrot.slane %v1105, 4
      %v1108 = vor.u32 %v1107, %v1103
      %v1109 = vrot.slane %v1108, 4
      %v1111 = vshll.u32 %v796, 16
      %v1113 = vrot.slane %v1111, 5
      %v1114 = vsel %vm802, %v1109, %v1113
      %v1116 = vshrl.u32 %v777, 16
      %v1118 = vrot.slane %v1116, 4
      %v1119 = vshll.u32 %v777, 16
      %v1121 = vrot.slane %v1119, 5
      %v1122 = vor.u32 %v1118, %v1121
      %v1123 = vrot.slane %v1122, 4
      %v1125 = vshll.u32 %v778, 16
      %v1127 = vrot.slane %v1125, 5
      %v1128 = vsel %vm802, %v1123, %v1127
      %v1129 = vshrl.u32 %v778, 16
      %v1131 = vrot.slane %v1129, 4
      %v1132 = vor.u32 %v1131, %v1127
      %v1133 = vrot.slane %v1132, 4
      %v1135 = vshll.u32 %v797, 16
      %v1137 = vrot.slane %v1135, 5
      %v1138 = vsel %vm802, %v1133, %v1137
      %v1140 = vshrl.u32 %v779, 16
      %v1142 = vrot.slane %v1140, 4
      %v1143 = vshll.u32 %v779, 16
      %v1145 = vrot.slane %v1143, 5
      %v1146 = vor.u32 %v1142, %v1145
      %v1147 = vrot.slane %v1146, 4
      %v1149 = vshll.u32 %v780, 16
      %v1151 = vrot.slane %v1149, 5
      %v1152 = vsel %vm802, %v1147, %v1151
      %v1153 = vshrl.u32 %v780, 16
      %v1155 = vrot.slane %v1153, 4
      %v1156 = vor.u32 %v1155, %v1151
      %v1157 = vrot.slane %v1156, 4
      %v1159 = vshll.u32 %v798, 16
      %v1161 = vrot.slane %v1159, 5
      %v1162 = vsel %vm802, %v1157, %v1161
      %v1164 = vshrl.u32 %v781, 16
      %v1166 = vrot.slane %v1164, 4
      %v1167 = vshll.u32 %v781, 16
      %v1169 = vrot.slane %v1167, 5
      %v1170 = vor.u32 %v1166, %v1169
      %v1171 = vrot.slane %v1170, 4
      %v1173 = vshll.u32 %v782, 16
      %v1175 = vrot.slane %v1173, 5
      %v1176 = vsel %vm802, %v1171, %v1175
      %v1177 = vshrl.u32 %v782, 16
      %v1179 = vrot.slane %v1177, 4
      %v1180 = vor.u32 %v1179, %v1175
      %v1181 = vrot.slane %v1180, 4
      %v1183 = vshll.u32 %v799, 16
      %v1185 = vrot.slane %v1183, 5
      %v1186 = vsel %vm802, %v1181, %v1185
      %v1187 = vld [vmem:[%s1] sm:$0xc]
      %v1188 = vunpack.c.l.b16 %v816
      %v1189 = vunpack.c.l.b16 %v826
      %v1190 = vunpack.c.l.b16 %v840
      %v1191 = vunpack.c.l.b16 %v850
      %v1192 = vunpack.c.l.b16 %v864
      %v1193 = vunpack.c.l.b16 %v874
      %v1194 = vunpack.c.l.b16 %v888
      %v1195 = vunpack.c.l.b16 %v898
      %v1196 = vunpack.c.l.b16 %v912
      %v1197 = vunpack.c.l.b16 %v922
      %v1198 = vunpack.c.l.b16 %v936
      %v1199 = vunpack.c.l.b16 %v946
      %v1200 = vunpack.c.l.b16 %v960
      %v1201 = vunpack.c.l.b16 %v970
      %v1202 = vunpack.c.l.b16 %v984
      %v1203 = vunpack.c.l.b16 %v994
      %v1204 = vunpack.c.l.b16 %v1008
      %v1205 = vunpack.c.l.b16 %v1018
      %v1206 = vunpack.c.l.b16 %v1032
      %v1207 = vunpack.c.l.b16 %v1042
      %v1208 = vunpack.c.l.b16 %v1056
      %v1209 = vunpack.c.l.b16 %v1066
      %v1210 = vunpack.c.l.b16 %v1080
      %v1211 = vunpack.c.l.b16 %v1090
      %v1212 = vunpack.c.l.b16 %v1104
      %v1213 = vunpack.c.l.b16 %v1114
      %v1214 = vunpack.c.l.b16 %v1128
      %v1215 = vunpack.c.l.b16 %v1138
      %v1216 = vunpack.c.l.b16 %v1152
      %v1217 = vunpack.c.l.b16 %v1162
      %v1218 = vunpack.c.l.b16 %v1176
      %v1219 = vunpack.c.l.b16 %v1186
      %v1220 = vpack.c.b16 %v1189, %v1188
      %v1221 = vpack.c.b16 %v1191, %v1190
      %v1222 = vpack.c.b16 %v1193, %v1192
      %v1223 = vpack.c.b16 %v1195, %v1194
      %v1224 = vpack.c.b16 %v1197, %v1196
      %v1225 = vpack.c.b16 %v1199, %v1198
      %v1226 = vpack.c.b16 %v1201, %v1200
      %v1227 = vpack.c.b16 %v1203, %v1202
      %v1228 = vpack.c.b16 %v1205, %v1204
      %v1229 = vpack.c.b16 %v1207, %v1206
      %v1230 = vpack.c.b16 %v1209, %v1208
      %v1231 = vpack.c.b16 %v1211, %v1210
      %v1232 = vpack.c.b16 %v1213, %v1212
      %v1233 = vpack.c.b16 %v1215, %v1214
      %v1234 = vpack.c.b16 %v1217, %v1216
      %v1235 = vpack.c.b16 %v1219, %v1218
      %v1237 = vunpack.c.l.b16 %v1187
      %v1238 = vpack.c.b16 %v1237, %v1237
      %v1239 = vrot.slane %v1238, 2
      %vm1240 = vcmask 31744
      %v1242 = vsel %vm1240, %v1220, 0
      %v1245 = vsel %vm1240, %v1221, 0
      %v1248 = vsel %vm1240, %v1222, 0
      %v1251 = vsel %vm1240, %v1223, 0
      %v1254 = vsel %vm1240, %v1224, 0
      %v1257 = vsel %vm1240, %v1225, 0
      %v1260 = vsel %vm1240, %v1226, 0
      %v1263 = vsel %vm1240, %v1227, 0
      %v1266 = vsel %vm1240, %v1228, 0
      %v1269 = vsel %vm1240, %v1229, 0
      %v1272 = vsel %vm1240, %v1230, 0
      %v1275 = vsel %vm1240, %v1231, 0
      %v1278 = vsel %vm1240, %v1232, 0
      %v1281 = vsel %vm1240, %v1233, 0
      %v1284 = vsel %vm1240, %v1234, 0
      %v1287 = vsel %vm1240, %v1235, 0
      %vm1289 = vcmask 1041408
      %v1291 = vsel %vm1289, %v1239, 0
      %1293 = vmatpush.bf16.msra.mxu0 0
      %1294 = vmatpush.bf16.msra.mxu0 0
      %1295 = vmatpush.bf16.msra.mxu0 0
      %1296 = vmatpush.bf16.msra.mxu0 0
      %1297 = vmatpush.bf16.msra.mxu0 0
      %1298 = vmatpush.bf16.msra.mxu0 0
      %1299 = vmatpush.bf16.msra.mxu0 0
      %1300 = vmatpush.bf16.msra.mxu0 %v1291
      %1301 = vmatmul.bf16.gmra.mxu0 %v1242
      %v1302 = vpop.f32.mrf.mxu0
      %v1303 = vadd.f32 0.0, %v1302
      %v1304 = vpop.f32.mrf.mxu0
      %v1305 = vadd.f32 0.0, %v1304
      %1306 = vmatmul.bf16.gmra.mxu0 %v1245
      %v1307 = vpop.f32.mrf.mxu0
      %v1308 = vadd.f32 0.0, %v1307
      %v1309 = vpop.f32.mrf.mxu0
      %v1310 = vadd.f32 0.0, %v1309
      %1311 = vmatmul.bf16.gmra.mxu0 %v1248
      %v1312 = vpop.f32.mrf.mxu0
      %v1313 = vadd.f32 0.0, %v1312
      %v1314 = vpop.f32.mrf.mxu0
      %v1315 = vadd.f32 0.0, %v1314
      %1316 = vmatmul.bf16.gmra.mxu0 %v1251
      %v1317 = vpop.f32.mrf.mxu0
      %v1318 = vadd.f32 0.0, %v1317
      %v1319 = vpop.f32.mrf.mxu0
      %v1320 = vadd.f32 0.0, %v1319
      %1321 = vmatmul.bf16.gmra.mxu0 %v1254
      %v1322 = vpop.f32.mrf.mxu0
      %v1323 = vadd.f32 0.0, %v1322
      %v1324 = vpop.f32.mrf.mxu0
      %v1325 = vadd.f32 0.0, %v1324
      %1326 = vmatmul.bf16.gmra.mxu0 %v1257
      %v1327 = vpop.f32.mrf.mxu0
      %v1328 = vadd.f32 0.0, %v1327
      %v1329 = vpop.f32.mrf.mxu0
      %v1330 = vadd.f32 0.0, %v1329
      %1331 = vmatmul.bf16.gmra.mxu0 %v1260
      %v1332 = vpop.f32.mrf.mxu0
      %v1333 = vadd.f32 0.0, %v1332
      %v1334 = vpop.f32.mrf.mxu0
      %v1335 = vadd.f32 0.0, %v1334
      %1336 = vmatmul.bf16.gmra.mxu0 %v1263
      %v1337 = vpop.f32.mrf.mxu0
      %v1338 = vadd.f32 0.0, %v1337
      %v1339 = vpop.f32.mrf.mxu0
      %v1340 = vadd.f32 0.0, %v1339
      %1341 = vmatmul.bf16.gmra.mxu0 %v1266
      %v1342 = vpop.f32.mrf.mxu0
      %v1343 = vadd.f32 0.0, %v1342
      %v1344 = vpop.f32.mrf.mxu0
      %v1345 = vadd.f32 0.0, %v1344
      %1346 = vmatmul.bf16.gmra.mxu0 %v1269
      %v1347 = vpop.f32.mrf.mxu0
      %v1348 = vadd.f32 0.0, %v1347
      %v1349 = vpop.f32.mrf.mxu0
      %v1350 = vadd.f32 0.0, %v1349
      %1351 = vmatmul.bf16.gmra.mxu0 %v1272
      %v1352 = vpop.f32.mrf.mxu0
      %v1353 = vadd.f32 0.0, %v1352
      %v1354 = vpop.f32.mrf.mxu0
      %v1355 = vadd.f32 0.0, %v1354
      %1356 = vmatmul.bf16.gmra.mxu0 %v1275
      %v1357 = vpop.f32.mrf.mxu0
      %v1358 = vadd.f32 0.0, %v1357
      %v1359 = vpop.f32.mrf.mxu0
      %v1360 = vadd.f32 0.0, %v1359
      %1361 = vmatmul.bf16.gmra.mxu0 %v1278
      %v1362 = vpop.f32.mrf.mxu0
      %v1363 = vadd.f32 0.0, %v1362
      %v1364 = vpop.f32.mrf.mxu0
      %v1365 = vadd.f32 0.0, %v1364
      %1366 = vmatmul.bf16.gmra.mxu0 %v1281
      %v1367 = vpop.f32.mrf.mxu0
      %v1368 = vadd.f32 0.0, %v1367
      %v1369 = vpop.f32.mrf.mxu0
      %v1370 = vadd.f32 0.0, %v1369
      %1371 = vmatmul.bf16.gmra.mxu0 %v1284
      %v1372 = vpop.f32.mrf.mxu0
      %v1373 = vadd.f32 0.0, %v1372
      %v1374 = vpop.f32.mrf.mxu0
      %v1375 = vadd.f32 0.0, %v1374
      %1376 = vmatmul.bf16.gmra.mxu0 %v1287
      %v1377 = vpop.f32.mrf.mxu0
      %v1378 = vadd.f32 0.0, %v1377
      %v1379 = vpop.f32.mrf.mxu0
      %v1380 = vadd.f32 0.0, %v1379
      %1381 = vdwg.mxu0
      %v1414 = vunpack.c.l.b16 %v751
      %v1415 = vunpack.c.l.b16 %v752
      %v1416 = vunpack.c.l.b16 %v753
      %v1417 = vunpack.c.l.b16 %v754
      %v1418 = vunpack.c.l.b16 %v755
      %v1419 = vunpack.c.l.b16 %v756
      %v1420 = vunpack.c.l.b16 %v757
      %v1421 = vunpack.c.l.b16 %v758
      %v1422 = vunpack.c.l.b16 %v759
      %v1423 = vunpack.c.l.b16 %v760
      %v1424 = vunpack.c.l.b16 %v761
      %v1425 = vunpack.c.l.b16 %v762
      %v1426 = vunpack.c.l.b16 %v763
      %v1427 = vunpack.c.l.b16 %v764
      %v1428 = vunpack.c.l.b16 %v765
      %v1429 = vunpack.c.l.b16 %v766
      %v1430 = vunpack.c.l.b16 %v767
      %v1431 = vunpack.c.l.b16 %v768
      %v1432 = vunpack.c.l.b16 %v769
      %v1433 = vunpack.c.l.b16 %v770
      %v1434 = vunpack.c.l.b16 %v771
      %v1435 = vunpack.c.l.b16 %v772
      %v1436 = vunpack.c.l.b16 %v773
      %v1437 = vunpack.c.l.b16 %v774
      %v1438 = vunpack.c.l.b16 %v775
      %v1439 = vunpack.c.l.b16 %v776
      %v1440 = vunpack.c.l.b16 %v777
      %v1441 = vunpack.c.l.b16 %v778
      %v1442 = vunpack.c.l.b16 %v779
      %v1443 = vunpack.c.l.b16 %v780
      %v1444 = vunpack.c.l.b16 %v781
      %v1445 = vunpack.c.l.b16 %v782
      %v1446 = vpack.c.b16 %v1415, %v1414
      %v1447 = vpack.c.b16 %v1417, %v1416
      %v1448 = vpack.c.b16 %v1419, %v1418
      %v1449 = vpack.c.b16 %v1421, %v1420
      %v1450 = vpack.c.b16 %v1423, %v1422
      %v1451 = vpack.c.b16 %v1425, %v1424
      %v1452 = vpack.c.b16 %v1427, %v1426
      %v1453 = vpack.c.b16 %v1429, %v1428
      %v1454 = vpack.c.b16 %v1431, %v1430
      %v1455 = vpack.c.b16 %v1433, %v1432
      %v1456 = vpack.c.b16 %v1435, %v1434
      %v1457 = vpack.c.b16 %v1437, %v1436
      %v1458 = vpack.c.b16 %v1439, %v1438
      %v1459 = vpack.c.b16 %v1441, %v1440
      %v1460 = vpack.c.b16 %v1443, %v1442
      %v1461 = vpack.c.b16 %v1445, %v1444
      %v1463 = vsel %vm1240, %v1446, 0
      %v1466 = vsel %vm1240, %v1447, 0
      %v1469 = vsel %vm1240, %v1448, 0
      %v1472 = vsel %vm1240, %v1449, 0
      %v1475 = vsel %vm1240, %v1450, 0
      %v1478 = vsel %vm1240, %v1451, 0
      %v1481 = vsel %vm1240, %v1452, 0
      %v1484 = vsel %vm1240, %v1453, 0
      %v1487 = vsel %vm1240, %v1454, 0
      %v1490 = vsel %vm1240, %v1455, 0
      %v1493 = vsel %vm1240, %v1456, 0
      %v1496 = vsel %vm1240, %v1457, 0
      %v1499 = vsel %vm1240, %v1458, 0
      %v1502 = vsel %vm1240, %v1459, 0
      %v1505 = vsel %vm1240, %v1460, 0
      %v1508 = vsel %vm1240, %v1461, 0
      %v1511 = vsel %vm1289, %v783, 0
      %1513 = vmatpush.bf16.msra.mxu0 0
      %1514 = vmatpush.bf16.msra.mxu0 0
      %1515 = vmatpush.bf16.msra.mxu0 0
      %1516 = vmatpush.bf16.msra.mxu0 0
      %1517 = vmatpush.bf16.msra.mxu0 0
      %1518 = vmatpush.bf16.msra.mxu0 0
      %1519 = vmatpush.bf16.msra.mxu0 0
      %1520 = vmatpush.bf16.msra.mxu0 %v1511
      %1521 = vmatmul.bf16.gmra.mxu0 %v1463
      %v1522 = vpop.f32.mrf.mxu0
      %v1523 = vadd.f32 %v1303, %v1522
      %v1524 = vpop.f32.mrf.mxu0
      %v1525 = vadd.f32 %v1305, %v1524
      %1526 = vmatmul.bf16.gmra.mxu0 %v1466
      %v1527 = vpop.f32.mrf.mxu0
      %v1528 = vadd.f32 %v1308, %v1527
      %v1529 = vpop.f32.mrf.mxu0
      %v1530 = vadd.f32 %v1310, %v1529
      %1531 = vmatmul.bf16.gmra.mxu0 %v1469
      %v1532 = vpop.f32.mrf.mxu0
      %v1533 = vadd.f32 %v1313, %v1532
      %v1534 = vpop.f32.mrf.mxu0
      %v1535 = vadd.f32 %v1315, %v1534
      %1536 = vmatmul.bf16.gmra.mxu0 %v1472
      %v1537 = vpop.f32.mrf.mxu0
      %v1538 = vadd.f32 %v1318, %v1537
      %v1539 = vpop.f32.mrf.mxu0
      %v1540 = vadd.f32 %v1320, %v1539
      %1541 = vmatmul.bf16.gmra.mxu0 %v1475
      %v1542 = vpop.f32.mrf.mxu0
      %v1543 = vadd.f32 %v1323, %v1542
      %v1544 = vpop.f32.mrf.mxu0
      %v1545 = vadd.f32 %v1325, %v1544
      %1546 = vmatmul.bf16.gmra.mxu0 %v1478
      %v1547 = vpop.f32.mrf.mxu0
      %v1548 = vadd.f32 %v1328, %v1547
      %v1549 = vpop.f32.mrf.mxu0
      %v1550 = vadd.f32 %v1330, %v1549
      %1551 = vmatmul.bf16.gmra.mxu0 %v1481
      %v1552 = vpop.f32.mrf.mxu0
      %v1553 = vadd.f32 %v1333, %v1552
      %v1554 = vpop.f32.mrf.mxu0
      %v1555 = vadd.f32 %v1335, %v1554
      %1556 = vmatmul.bf16.gmra.mxu0 %v1484
      %v1557 = vpop.f32.mrf.mxu0
      %v1558 = vadd.f32 %v1338, %v1557
      %v1559 = vpop.f32.mrf.mxu0
      %v1560 = vadd.f32 %v1340, %v1559
      %1561 = vmatmul.bf16.gmra.mxu0 %v1487
      %v1562 = vpop.f32.mrf.mxu0
      %v1563 = vadd.f32 %v1343, %v1562
      %v1564 = vpop.f32.mrf.mxu0
      %v1565 = vadd.f32 %v1345, %v1564
      %1566 = vmatmul.bf16.gmra.mxu0 %v1490
      %v1567 = vpop.f32.mrf.mxu0
      %v1568 = vadd.f32 %v1348, %v1567
      %v1569 = vpop.f32.mrf.mxu0
      %v1570 = vadd.f32 %v1350, %v1569
      %1571 = vmatmul.bf16.gmra.mxu0 %v1493
      %v1572 = vpop.f32.mrf.mxu0
      %v1573 = vadd.f32 %v1353, %v1572
      %v1574 = vpop.f32.mrf.mxu0
      %v1575 = vadd.f32 %v1355, %v1574
      %1576 = vmatmul.bf16.gmra.mxu0 %v1496
      %v1577 = vpop.f32.mrf.mxu0
      %v1578 = vadd.f32 %v1358, %v1577
      %v1579 = vpop.f32.mrf.mxu0
      %v1580 = vadd.f32 %v1360, %v1579
      %1581 = vmatmul.bf16.gmra.mxu0 %v1499
      %v1582 = vpop.f32.mrf.mxu0
      %v1583 = vadd.f32 %v1363, %v1582
      %v1584 = vpop.f32.mrf.mxu0
      %v1585 = vadd.f32 %v1365, %v1584
      %1586 = vmatmul.bf16.gmra.mxu0 %v1502
      %v1587 = vpop.f32.mrf.mxu0
      %v1588 = vadd.f32 %v1368, %v1587
      %v1589 = vpop.f32.mrf.mxu0
      %v1590 = vadd.f32 %v1370, %v1589
      %1591 = vmatmul.bf16.gmra.mxu0 %v1505
      %v1592 = vpop.f32.mrf.mxu0
      %v1593 = vadd.f32 %v1373, %v1592
      %v1594 = vpop.f32.mrf.mxu0
      %v1595 = vadd.f32 %v1375, %v1594
      %1596 = vmatmul.bf16.gmra.mxu0 %v1508
      %v1597 = vpop.f32.mrf.mxu0
      %v1598 = vadd.f32 %v1378, %v1597
      %v1599 = vpop.f32.mrf.mxu0
      %v1600 = vadd.f32 %v1380, %v1599
      %1601 = vdwg.mxu0
      %v1602 = vld [vmem:[#allocation2] sm:$0xe]
      %v1603 = vld [vmem:[#allocation2 + $0xc] sm:$0xe]
      %v1604 = vld [vmem:[#allocation2 + $0x18] sm:$0xe]
      %v1605 = vld [vmem:[#allocation2 + $0x24] sm:$0xe]
      %v1606 = vld [vmem:[#allocation2 + $0x30] sm:$0xe]
      %v1607 = vld [vmem:[#allocation2 + $0x3c] sm:$0xe]
      %v1608 = vld [vmem:[#allocation2 + $0x48] sm:$0xe]
      %v1609 = vld [vmem:[#allocation2 + $0x54] sm:$0xe]
      %v1610 = vld [vmem:[#allocation2 + $0x60] sm:$0xe]
      %v1611 = vld [vmem:[#allocation2 + $0x6c] sm:$0xe]
      %v1612 = vld [vmem:[#allocation2 + $0x78] sm:$0xe]
      %v1613 = vld [vmem:[#allocation2 + $0x84] sm:$0xe]
      %v1614 = vld [vmem:[#allocation2 + $0x90] sm:$0xe]
      %v1615 = vld [vmem:[#allocation2 + $0x9c] sm:$0xe]
      %v1616 = vld [vmem:[#allocation2 + $0xa8] sm:$0xe]
      %v1617 = vld [vmem:[#allocation2 + $0xb4] sm:$0xe]
      %vm1650 = vcmask 1042432
      %vm1651 = vcmask 1046532
      %vm1652 = vmor %vm1650, %vm1651
      %v1653 = vrot.slane %v1602, 5
      %v1654 = vrot.slane %v1653, 4
      %v1655 = vrot.slane %v752, 5
      %v1656 = vsel %vm1652, %v1654, %v1655
      %v1657 = vrot.slane %v1655, 4
      %v1658 = vrot.slane %v784, 5
      %v1659 = vsel %vm1652, %v1657, %v1658
      %v1660 = vrot.slane %v1603, 5
      %v1661 = vrot.slane %v1660, 4
      %v1662 = vrot.slane %v754, 5
      %v1663 = vsel %vm1652, %v1661, %v1662
      %v1664 = vrot.slane %v1662, 4
      %v1665 = vrot.slane %v785, 5
      %v1666 = vsel %vm1652, %v1664, %v1665
      %v1667 = vrot.slane %v1604, 5
      %v1668 = vrot.slane %v1667, 4
      %v1669 = vrot.slane %v756, 5
      %v1670 = vsel %vm1652, %v1668, %v1669
      %v1671 = vrot.slane %v1669, 4
      %v1672 = vrot.slane %v786, 5
      %v1673 = vsel %vm1652, %v1671, %v1672
      %v1674 = vrot.slane %v1605, 5
      %v1675 = vrot.slane %v1674, 4
      %v1676 = vrot.slane %v758, 5
      %v1677 = vsel %vm1652, %v1675, %v1676
      %v1678 = vrot.slane %v1676, 4
      %v1679 = vrot.slane %v787, 5
      %v1680 = vsel %vm1652, %v1678, %v1679
      %v1681 = vrot.slane %v1606, 5
      %v1682 = vrot.slane %v1681, 4
      %v1683 = vrot.slane %v760, 5
      %v1684 = vsel %vm1652, %v1682, %v1683
      %v1685 = vrot.slane %v1683, 4
      %v1686 = vrot.slane %v788, 5
      %v1687 = vsel %vm1652, %v1685, %v1686
      %v1688 = vrot.slane %v1607, 5
      %v1689 = vrot.slane %v1688, 4
      %v1690 = vrot.slane %v762, 5
      %v1691 = vsel %vm1652, %v1689, %v1690
      %v1692 = vrot.slane %v1690, 4
      %v1693 = vrot.slane %v789, 5
      %v1694 = vsel %vm1652, %v1692, %v1693
      %v1695 = vrot.slane %v1608, 5
      %v1696 = vrot.slane %v1695, 4
      %v1697 = vrot.slane %v764, 5
      %v1698 = vsel %vm1652, %v1696, %v1697
      %v1699 = vrot.slane %v1697, 4
      %v1700 = vrot.slane %v790, 5
      %v1701 = vsel %vm1652, %v1699, %v1700
      %v1702 = vrot.slane %v1609, 5
      %v1703 = vrot.slane %v1702, 4
      %v1704 = vrot.slane %v766, 5
      %v1705 = vsel %vm1652, %v1703, %v1704
      %v1706 = vrot.slane %v1704, 4
      %v1707 = vrot.slane %v791, 5
      %v1708 = vsel %vm1652, %v1706, %v1707
      %v1709 = vrot.slane %v1610, 5
      %v1710 = vrot.slane %v1709, 4
      %v1711 = vrot.slane %v768, 5
      %v1712 = vsel %vm1652, %v1710, %v1711
      %v1713 = vrot.slane %v1711, 4
      %v1714 = vrot.slane %v792, 5
      %v1715 = vsel %vm1652, %v1713, %v1714
      %v1716 = vrot.slane %v1611, 5
      %v1717 = vrot.slane %v1716, 4
      %v1718 = vrot.slane %v770, 5
      %v1719 = vsel %vm1652, %v1717, %v1718
      %v1720 = vrot.slane %v1718, 4
      %v1721 = vrot.slane %v793, 5
      %v1722 = vsel %vm1652, %v1720, %v1721
      %v1723 = vrot.slane %v1612, 5
      %v1724 = vrot.slane %v1723, 4
      %v1725 = vrot.slane %v772, 5
      %v1726 = vsel %vm1652, %v1724, %v1725
      %v1727 = vrot.slane %v1725, 4
      %v1728 = vrot.slane %v794, 5
      %v1729 = vsel %vm1652, %v1727, %v1728
      %v1730 = vrot.slane %v1613, 5
      %v1731 = vrot.slane %v1730, 4
      %v1732 = vrot.slane %v774, 5
      %v1733 = vsel %vm1652, %v1731, %v1732
      %v1734 = vrot.slane %v1732, 4
      %v1735 = vrot.slane %v795, 5
      %v1736 = vsel %vm1652, %v1734, %v1735
      %v1737 = vrot.slane %v1614, 5
      %v1738 = vrot.slane %v1737, 4
      %v1739 = vrot.slane %v776, 5
      %v1740 = vsel %vm1652, %v1738, %v1739
      %v1741 = vrot.slane %v1739, 4
      %v1742 = vrot.slane %v796, 5
      %v1743 = vsel %vm1652, %v1741, %v1742
      %v1744 = vrot.slane %v1615, 5
      %v1745 = vrot.slane %v1744, 4
      %v1746 = vrot.slane %v778, 5
      %v1747 = vsel %vm1652, %v1745, %v1746
      %v1748 = vrot.slane %v1746, 4
      %v1749 = vrot.slane %v797, 5
      %v1750 = vsel %vm1652, %v1748, %v1749
      %v1751 = vrot.slane %v1616, 5
      %v1752 = vrot.slane %v1751, 4
      %v1753 = vrot.slane %v780, 5
      %v1754 = vsel %vm1652, %v1752, %v1753
      %v1755 = vrot.slane %v1753, 4
      %v1756 = vrot.slane %v798, 5
      %v1757 = vsel %vm1652, %v1755, %v1756
      %v1758 = vrot.slane %v1617, 5
      %v1759 = vrot.slane %v1758, 4
      %v1760 = vrot.slane %v782, 5
      %v1761 = vsel %vm1652, %v1759, %v1760
      %v1762 = vrot.slane %v1760, 4
      %v1763 = vrot.slane %v799, 5
      %v1764 = vsel %vm1652, %v1762, %v1763
      %v1765 = vld [vmem:[%s1 + $0x4] sm:$0x3]
      %v1766 = vunpack.c.l.b16 %v1656
      %v1767 = vunpack.c.l.b16 %v1659
      %v1768 = vunpack.c.l.b16 %v1663
      %v1769 = vunpack.c.l.b16 %v1666
      %v1770 = vunpack.c.l.b16 %v1670
      %v1771 = vunpack.c.l.b16 %v1673
      %v1772 = vunpack.c.l.b16 %v1677
      %v1773 = vunpack.c.l.b16 %v1680
      %v1774 = vunpack.c.l.b16 %v1684
      %v1775 = vunpack.c.l.b16 %v1687
      %v1776 = vunpack.c.l.b16 %v1691
      %v1777 = vunpack.c.l.b16 %v1694
      %v1778 = vunpack.c.l.b16 %v1698
      %v1779 = vunpack.c.l.b16 %v1701
      %v1780 = vunpack.c.l.b16 %v1705
      %v1781 = vunpack.c.l.b16 %v1708
      %v1782 = vunpack.c.l.b16 %v1712
      %v1783 = vunpack.c.l.b16 %v1715
      %v1784 = vunpack.c.l.b16 %v1719
      %v1785 = vunpack.c.l.b16 %v1722
      %v1786 = vunpack.c.l.b16 %v1726
      %v1787 = vunpack.c.l.b16 %v1729
      %v1788 = vunpack.c.l.b16 %v1733
      %v1789 = vunpack.c.l.b16 %v1736
      %v1790 = vunpack.c.l.b16 %v1740
      %v1791 = vunpack.c.l.b16 %v1743
      %v1792 = vunpack.c.l.b16 %v1747
      %v1793 = vunpack.c.l.b16 %v1750
      %v1794 = vunpack.c.l.b16 %v1754
      %v1795 = vunpack.c.l.b16 %v1757
      %v1796 = vunpack.c.l.b16 %v1761
      %v1797 = vunpack.c.l.b16 %v1764
      %v1798 = vpack.c.b16 %v1767, %v1766
      %v1799 = vpack.c.b16 %v1769, %v1768
      %v1800 = vpack.c.b16 %v1771, %v1770
      %v1801 = vpack.c.b16 %v1773, %v1772
      %v1802 = vpack.c.b16 %v1775, %v1774
      %v1803 = vpack.c.b16 %v1777, %v1776
      %v1804 = vpack.c.b16 %v1779, %v1778
      %v1805 = vpack.c.b16 %v1781, %v1780
      %v1806 = vpack.c.b16 %v1783, %v1782
      %v1807 = vpack.c.b16 %v1785, %v1784
      %v1808 = vpack.c.b16 %v1787, %v1786
      %v1809 = vpack.c.b16 %v1789, %v1788
      %v1810 = vpack.c.b16 %v1791, %v1790
      %v1811 = vpack.c.b16 %v1793, %v1792
      %v1812 = vpack.c.b16 %v1795, %v1794
      %v1813 = vpack.c.b16 %v1797, %v1796
      %v1815 = vsel %vm1240, %v1798, 0
      %v1818 = vsel %vm1240, %v1799, 0
      %v1821 = vsel %vm1240, %v1800, 0
      %v1824 = vsel %vm1240, %v1801, 0
      %v1827 = vsel %vm1240, %v1802, 0
      %v1830 = vsel %vm1240, %v1803, 0
      %v1833 = vsel %vm1240, %v1804, 0
      %v1836 = vsel %vm1240, %v1805, 0
      %v1839 = vsel %vm1240, %v1806, 0
      %v1842 = vsel %vm1240, %v1807, 0
      %v1845 = vsel %vm1240, %v1808, 0
      %v1848 = vsel %vm1240, %v1809, 0
      %v1851 = vsel %vm1240, %v1810, 0
      %v1854 = vsel %vm1240, %v1811, 0
      %v1857 = vsel %vm1240, %v1812, 0
      %v1860 = vsel %vm1240, %v1813, 0
      %v1863 = vsel %vm1289, %v1765, 0
      %1865 = vmatpush.bf16.msra.mxu0 0
      %1866 = vmatpush.bf16.msra.mxu0 0
      %1867 = vmatpush.bf16.msra.mxu0 0
      %1868 = vmatpush.bf16.msra.mxu0 0
      %1869 = vmatpush.bf16.msra.mxu0 0
      %1870 = vmatpush.bf16.msra.mxu0 0
      %1871 = vmatpush.bf16.msra.mxu0 0
      %1872 = vmatpush.bf16.msra.mxu0 %v1863
      %1873 = vmatmul.bf16.gmra.mxu0 %v1815
      %v1874 = vpop.f32.mrf.mxu0
      %v1875 = vadd.f32 0.0, %v1874
      %v1876 = vpop.f32.mrf.mxu0
      %v1877 = vadd.f32 0.0, %v1876
      %1878 = vmatmul.bf16.gmra.mxu0 %v1818
      %v1879 = vpop.f32.mrf.mxu0
      %v1880 = vadd.f32 0.0, %v1879
      %v1881 = vpop.f32.mrf.mxu0
      %v1882 = vadd.f32 0.0, %v1881
      %1883 = vmatmul.bf16.gmra.mxu0 %v1821
      %v1884 = vpop.f32.mrf.mxu0
      %v1885 = vadd.f32 0.0, %v1884
      %v1886 = vpop.f32.mrf.mxu0
      %v1887 = vadd.f32 0.0, %v1886
      %1888 = vmatmul.bf16.gmra.mxu0 %v1824
      %v1889 = vpop.f32.mrf.mxu0
      %v1890 = vadd.f32 0.0, %v1889
      %v1891 = vpop.f32.mrf.mxu0
      %v1892 = vadd.f32 0.0, %v1891
      %1893 = vmatmul.bf16.gmra.mxu0 %v1827
      %v1894 = vpop.f32.mrf.mxu0
      %v1895 = vadd.f32 0.0, %v1894
      %v1896 = vpop.f32.mrf.mxu0
      %v1897 = vadd.f32 0.0, %v1896
      %1898 = vmatmul.bf16.gmra.mxu0 %v1830
      %v1899 = vpop.f32.mrf.mxu0
      %v1900 = vadd.f32 0.0, %v1899
      %v1901 = vpop.f32.mrf.mxu0
      %v1902 = vadd.f32 0.0, %v1901
      %1903 = vmatmul.bf16.gmra.mxu0 %v1833
      %v1904 = vpop.f32.mrf.mxu0
      %v1905 = vadd.f32 0.0, %v1904
      %v1906 = vpop.f32.mrf.mxu0
      %v1907 = vadd.f32 0.0, %v1906
      %1908 = vmatmul.bf16.gmra.mxu0 %v1836
      %v1909 = vpop.f32.mrf.mxu0
      %v1910 = vadd.f32 0.0, %v1909
      %v1911 = vpop.f32.mrf.mxu0
      %v1912 = vadd.f32 0.0, %v1911
      %1913 = vmatmul.bf16.gmra.mxu0 %v1839
      %v1914 = vpop.f32.mrf.mxu0
      %v1915 = vadd.f32 0.0, %v1914
      %v1916 = vpop.f32.mrf.mxu0
      %v1917 = vadd.f32 0.0, %v1916
      %1918 = vmatmul.bf16.gmra.mxu0 %v1842
      %v1919 = vpop.f32.mrf.mxu0
      %v1920 = vadd.f32 0.0, %v1919
      %v1921 = vpop.f32.mrf.mxu0
      %v1922 = vadd.f32 0.0, %v1921
      %1923 = vmatmul.bf16.gmra.mxu0 %v1845
      %v1924 = vpop.f32.mrf.mxu0
      %v1925 = vadd.f32 0.0, %v1924
      %v1926 = vpop.f32.mrf.mxu0
      %v1927 = vadd.f32 0.0, %v1926
      %1928 = vmatmul.bf16.gmra.mxu0 %v1848
      %v1929 = vpop.f32.mrf.mxu0
      %v1930 = vadd.f32 0.0, %v1929
      %v1931 = vpop.f32.mrf.mxu0
      %v1932 = vadd.f32 0.0, %v1931
      %1933 = vmatmul.bf16.gmra.mxu0 %v1851
      %v1934 = vpop.f32.mrf.mxu0
      %v1935 = vadd.f32 0.0, %v1934
      %v1936 = vpop.f32.mrf.mxu0
      %v1937 = vadd.f32 0.0, %v1936
      %1938 = vmatmul.bf16.gmra.mxu0 %v1854
      %v1939 = vpop.f32.mrf.mxu0
      %v1940 = vadd.f32 0.0, %v1939
      %v1941 = vpop.f32.mrf.mxu0
      %v1942 = vadd.f32 0.0, %v1941
      %1943 = vmatmul.bf16.gmra.mxu0 %v1857
      %v1944 = vpop.f32.mrf.mxu0
      %v1945 = vadd.f32 0.0, %v1944
      %v1946 = vpop.f32.mrf.mxu0
      %v1947 = vadd.f32 0.0, %v1946
      %1948 = vmatmul.bf16.gmra.mxu0 %v1860
      %v1949 = vpop.f32.mrf.mxu0
      %v1950 = vadd.f32 0.0, %v1949
      %v1951 = vpop.f32.mrf.mxu0
      %v1952 = vadd.f32 0.0, %v1951
      %1953 = vdwg.mxu0
      %v1954 = vadd.f32 %v1523, %v1875
      %v1955 = vadd.f32 %v1525, %v1877
      %v1956 = vadd.f32 %v1528, %v1880
      %v1957 = vadd.f32 %v1530, %v1882
      %v1958 = vadd.f32 %v1533, %v1885
      %v1959 = vadd.f32 %v1535, %v1887
      %v1960 = vadd.f32 %v1538, %v1890
      %v1961 = vadd.f32 %v1540, %v1892
      %v1962 = vadd.f32 %v1543, %v1895
      %v1963 = vadd.f32 %v1545, %v1897
      %v1964 = vadd.f32 %v1548, %v1900
      %v1965 = vadd.f32 %v1550, %v1902
      %v1966 = vadd.f32 %v1553, %v1905
      %v1967 = vadd.f32 %v1555, %v1907
      %v1968 = vadd.f32 %v1558, %v1910
      %v1969 = vadd.f32 %v1560, %v1912
      %v1970 = vadd.f32 %v1563, %v1915
      %v1971 = vadd.f32 %v1565, %v1917
      %v1972 = vadd.f32 %v1568, %v1920
      %v1973 = vadd.f32 %v1570, %v1922
      %v1974 = vadd.f32 %v1573, %v1925
      %v1975 = vadd.f32 %v1575, %v1927
      %v1976 = vadd.f32 %v1578, %v1930
      %v1977 = vadd.f32 %v1580, %v1932
      %v1978 = vadd.f32 %v1583, %v1935
      %v1979 = vadd.f32 %v1585, %v1937
      %v1980 = vadd.f32 %v1588, %v1940
      %v1981 = vadd.f32 %v1590, %v1942
      %v1982 = vadd.f32 %v1593, %v1945
      %v1983 = vadd.f32 %v1595, %v1947
      %v1984 = vadd.f32 %v1598, %v1950
      %v1985 = vadd.f32 %v1600, %v1952
      %v1986 = vld [vmem:[%s181] sm:$0xf]
      %v1987 = vld [vmem:[%s181 + $0x4] sm:$0xf]
      %v1988 = vld [vmem:[%s181 + $0xc] sm:$0xf]
      %v1989 = vld [vmem:[%s181 + $0x10] sm:$0xf]
      %v1990 = vld [vmem:[%s181 + $0x18] sm:$0xf]
      %v1991 = vld [vmem:[%s181 + $0x1c] sm:$0xf]
      %v1992 = vld [vmem:[%s181 + $0x24] sm:$0xf]
      %v1993 = vld [vmem:[%s181 + $0x28] sm:$0xf]
      %v1994 = vld [vmem:[%s181 + $0x30] sm:$0xf]
      %v1995 = vld [vmem:[%s181 + $0x34] sm:$0xf]
      %v1996 = vld [vmem:[%s181 + $0x3c] sm:$0xf]
      %v1997 = vld [vmem:[%s181 + $0x40] sm:$0xf]
      %v1998 = vld [vmem:[%s181 + $0x48] sm:$0xf]
      %v1999 = vld [vmem:[%s181 + $0x4c] sm:$0xf]
      %v2000 = vld [vmem:[%s181 + $0x54] sm:$0xf]
      %v2001 = vld [vmem:[%s181 + $0x58] sm:$0xf]
      %v2002 = vld [vmem:[%s181 + $0x60] sm:$0xf]
      %v2003 = vld [vmem:[%s181 + $0x64] sm:$0xf]
      %v2004 = vld [vmem:[%s181 + $0x6c] sm:$0xf]
      %v2005 = vld [vmem:[%s181 + $0x70] sm:$0xf]
      %v2006 = vld [vmem:[%s181 + $0x78] sm:$0xf]
      %v2007 = vld [vmem:[%s181 + $0x7c] sm:$0xf]
      %v2008 = vld [vmem:[%s181 + $0x84] sm:$0xf]
      %v2009 = vld [vmem:[%s181 + $0x88] sm:$0xf]
      %v2010 = vld [vmem:[%s181 + $0x90] sm:$0xf]
      %v2011 = vld [vmem:[%s181 + $0x94] sm:$0xf]
      %v2012 = vld [vmem:[%s181 + $0x9c] sm:$0xf]
      %v2013 = vld [vmem:[%s181 + $0xa0] sm:$0xf]
      %v2014 = vld [vmem:[%s181 + $0xa8] sm:$0xf]
      %v2015 = vld [vmem:[%s181 + $0xac] sm:$0xf]
      %v2016 = vld [vmem:[%s181 + $0xb4] sm:$0xf]
      %v2017 = vld [vmem:[%s181 + $0xb8] sm:$0xf]
      %v2018 = vld [vmem:[%s1 + $0x4] sm:$0xc]
      %v2051 = vunpack.c.l.b16 %v1986
      %v2052 = vunpack.c.l.b16 %v1987
      %v2053 = vunpack.c.l.b16 %v1988
      %v2054 = vunpack.c.l.b16 %v1989
      %v2055 = vunpack.c.l.b16 %v1990
      %v2056 = vunpack.c.l.b16 %v1991
      %v2057 = vunpack.c.l.b16 %v1992
      %v2058 = vunpack.c.l.b16 %v1993
      %v2059 = vunpack.c.l.b16 %v1994
      %v2060 = vunpack.c.l.b16 %v1995
      %v2061 = vunpack.c.l.b16 %v1996
      %v2062 = vunpack.c.l.b16 %v1997
      %v2063 = vunpack.c.l.b16 %v1998
      %v2064 = vunpack.c.l.b16 %v1999
      %v2065 = vunpack.c.l.b16 %v2000
      %v2066 = vunpack.c.l.b16 %v2001
      %v2067 = vunpack.c.l.b16 %v2002
      %v2068 = vunpack.c.l.b16 %v2003
      %v2069 = vunpack.c.l.b16 %v2004
      %v2070 = vunpack.c.l.b16 %v2005
      %v2071 = vunpack.c.l.b16 %v2006
      %v2072 = vunpack.c.l.b16 %v2007
      %v2073 = vunpack.c.l.b16 %v2008
      %v2074 = vunpack.c.l.b16 %v2009
      %v2075 = vunpack.c.l.b16 %v2010
      %v2076 = vunpack.c.l.b16 %v2011
      %v2077 = vunpack.c.l.b16 %v2012
      %v2078 = vunpack.c.l.b16 %v2013
      %v2079 = vunpack.c.l.b16 %v2014
      %v2080 = vunpack.c.l.b16 %v2015
      %v2081 = vunpack.c.l.b16 %v2016
      %v2082 = vunpack.c.l.b16 %v2017
      %v2083 = vpack.c.b16 %v2052, %v2051
      %v2084 = vpack.c.b16 %v2054, %v2053
      %v2085 = vpack.c.b16 %v2056, %v2055
      %v2086 = vpack.c.b16 %v2058, %v2057
      %v2087 = vpack.c.b16 %v2060, %v2059
      %v2088 = vpack.c.b16 %v2062, %v2061
      %v2089 = vpack.c.b16 %v2064, %v2063
      %v2090 = vpack.c.b16 %v2066, %v2065
      %v2091 = vpack.c.b16 %v2068, %v2067
      %v2092 = vpack.c.b16 %v2070, %v2069
      %v2093 = vpack.c.b16 %v2072, %v2071
      %v2094 = vpack.c.b16 %v2074, %v2073
      %v2095 = vpack.c.b16 %v2076, %v2075
      %v2096 = vpack.c.b16 %v2078, %v2077
      %v2097 = vpack.c.b16 %v2080, %v2079
      %v2098 = vpack.c.b16 %v2082, %v2081
      %v2100 = vunpack.c.l.b16 %v2018
      %v2101 = vpack.c.b16 %v2100, %v2100
      %v2102 = vrot.slane %v2101, 2
      %v2104 = vsel %vm1240, %v2083, 0
      %v2107 = vsel %vm1240, %v2084, 0
      %v2110 = vsel %vm1240, %v2085, 0
      %v2113 = vsel %vm1240, %v2086, 0
      %v2116 = vsel %vm1240, %v2087, 0
      %v2119 = vsel %vm1240, %v2088, 0
      %v2122 = vsel %vm1240, %v2089, 0
      %v2125 = vsel %vm1240, %v2090, 0
      %v2128 = vsel %vm1240, %v2091, 0
      %v2131 = vsel %vm1240, %v2092, 0
      %v2134 = vsel %vm1240, %v2093, 0
      %v2137 = vsel %vm1240, %v2094, 0
      %v2140 = vsel %vm1240, %v2095, 0
      %v2143 = vsel %vm1240, %v2096, 0
      %v2146 = vsel %vm1240, %v2097, 0
      %v2149 = vsel %vm1240, %v2098, 0
      %v2152 = vsel %vm1289, %v2102, 0
      %2154 = vmatpush.bf16.msra.mxu0 0
      %2155 = vmatpush.bf16.msra.mxu0 0
      %2156 = vmatpush.bf16.msra.mxu0 0
      %2157 = vmatpush.bf16.msra.mxu0 0
      %2158 = vmatpush.bf16.msra.mxu0 0
      %2159 = vmatpush.bf16.msra.mxu0 0
      %2160 = vmatpush.bf16.msra.mxu0 0
      %2161 = vmatpush.bf16.msra.mxu0 %v2152
      %2162 = vmatmul.bf16.gmra.mxu0 %v2104
      %v2163 = vpop.f32.mrf.mxu0
      %v2164 = vadd.f32 0.0, %v2163
      %v2165 = vpop.f32.mrf.mxu0
      %v2166 = vadd.f32 0.0, %v2165
      %2167 = vmatmul.bf16.gmra.mxu0 %v2107
      %v2168 = vpop.f32.mrf.mxu0
      %v2169 = vadd.f32 0.0, %v2168
      %v2170 = vpop.f32.mrf.mxu0
      %v2171 = vadd.f32 0.0, %v2170
      %2172 = vmatmul.bf16.gmra.mxu0 %v2110
      %v2173 = vpop.f32.mrf.mxu0
      %v2174 = vadd.f32 0.0, %v2173
      %v2175 = vpop.f32.mrf.mxu0
      %v2176 = vadd.f32 0.0, %v2175
      %2177 = vmatmul.bf16.gmra.mxu0 %v2113
      %v2178 = vpop.f32.mrf.mxu0
      %v2179 = vadd.f32 0.0, %v2178
      %v2180 = vpop.f32.mrf.mxu0
      %v2181 = vadd.f32 0.0, %v2180
      %2182 = vmatmul.bf16.gmra.mxu0 %v2116
      %v2183 = vpop.f32.mrf.mxu0
      %v2184 = vadd.f32 0.0, %v2183
      %v2185 = vpop.f32.mrf.mxu0
      %v2186 = vadd.f32 0.0, %v2185
      %2187 = vmatmul.bf16.gmra.mxu0 %v2119
      %v2188 = vpop.f32.mrf.mxu0
      %v2189 = vadd.f32 0.0, %v2188
      %v2190 = vpop.f32.mrf.mxu0
      %v2191 = vadd.f32 0.0, %v2190
      %2192 = vmatmul.bf16.gmra.mxu0 %v2122
      %v2193 = vpop.f32.mrf.mxu0
      %v2194 = vadd.f32 0.0, %v2193
      %v2195 = vpop.f32.mrf.mxu0
      %v2196 = vadd.f32 0.0, %v2195
      %2197 = vmatmul.bf16.gmra.mxu0 %v2125
      %v2198 = vpop.f32.mrf.mxu0
      %v2199 = vadd.f32 0.0, %v2198
      %v2200 = vpop.f32.mrf.mxu0
      %v2201 = vadd.f32 0.0, %v2200
      %2202 = vmatmul.bf16.gmra.mxu0 %v2128
      %v2203 = vpop.f32.mrf.mxu0
      %v2204 = vadd.f32 0.0, %v2203
      %v2205 = vpop.f32.mrf.mxu0
      %v2206 = vadd.f32 0.0, %v2205
      %2207 = vmatmul.bf16.gmra.mxu0 %v2131
      %v2208 = vpop.f32.mrf.mxu0
      %v2209 = vadd.f32 0.0, %v2208
      %v2210 = vpop.f32.mrf.mxu0
      %v2211 = vadd.f32 0.0, %v2210
      %2212 = vmatmul.bf16.gmra.mxu0 %v2134
      %v2213 = vpop.f32.mrf.mxu0
      %v2214 = vadd.f32 0.0, %v2213
      %v2215 = vpop.f32.mrf.mxu0
      %v2216 = vadd.f32 0.0, %v2215
      %2217 = vmatmul.bf16.gmra.mxu0 %v2137
      %v2218 = vpop.f32.mrf.mxu0
      %v2219 = vadd.f32 0.0, %v2218
      %v2220 = vpop.f32.mrf.mxu0
      %v2221 = vadd.f32 0.0, %v2220
      %2222 = vmatmul.bf16.gmra.mxu0 %v2140
      %v2223 = vpop.f32.mrf.mxu0
      %v2224 = vadd.f32 0.0, %v2223
      %v2225 = vpop.f32.mrf.mxu0
      %v2226 = vadd.f32 0.0, %v2225
      %2227 = vmatmul.bf16.gmra.mxu0 %v2143
      %v2228 = vpop.f32.mrf.mxu0
      %v2229 = vadd.f32 0.0, %v2228
      %v2230 = vpop.f32.mrf.mxu0
      %v2231 = vadd.f32 0.0, %v2230
      %2232 = vmatmul.bf16.gmra.mxu0 %v2146
      %v2233 = vpop.f32.mrf.mxu0
      %v2234 = vadd.f32 0.0, %v2233
      %v2235 = vpop.f32.mrf.mxu0
      %v2236 = vadd.f32 0.0, %v2235
      %2237 = vmatmul.bf16.gmra.mxu0 %v2149
      %v2238 = vpop.f32.mrf.mxu0
      %v2239 = vadd.f32 0.0, %v2238
      %v2240 = vpop.f32.mrf.mxu0
      %v2241 = vadd.f32 0.0, %v2240
      %2242 = vdwg.mxu0
      %v2243 = vadd.f32 %v1954, %v2164
      %v2244 = vadd.f32 %v1955, %v2166
      %v2245 = vadd.f32 %v1956, %v2169
      %v2246 = vadd.f32 %v1957, %v2171
      %v2247 = vadd.f32 %v1958, %v2174
      %v2248 = vadd.f32 %v1959, %v2176
      %v2249 = vadd.f32 %v1960, %v2179
      %v2250 = vadd.f32 %v1961, %v2181
      %v2251 = vadd.f32 %v1962, %v2184
      %v2252 = vadd.f32 %v1963, %v2186
      %v2253 = vadd.f32 %v1964, %v2189
      %v2254 = vadd.f32 %v1965, %v2191
      %v2255 = vadd.f32 %v1966, %v2194
      %v2256 = vadd.f32 %v1967, %v2196
      %v2257 = vadd.f32 %v1968, %v2199
      %v2258 = vadd.f32 %v1969, %v2201
      %v2259 = vadd.f32 %v1970, %v2204
      %v2260 = vadd.f32 %v1971, %v2206
      %v2261 = vadd.f32 %v1972, %v2209
      %v2262 = vadd.f32 %v1973, %v2211
      %v2263 = vadd.f32 %v1974, %v2214
      %v2264 = vadd.f32 %v1975, %v2216
      %v2265 = vadd.f32 %v1976, %v2219
      %v2266 = vadd.f32 %v1977, %v2221
      %v2267 = vadd.f32 %v1978, %v2224
      %v2268 = vadd.f32 %v1979, %v2226
      %v2269 = vadd.f32 %v1980, %v2229
      %v2270 = vadd.f32 %v1981, %v2231
      %v2271 = vadd.f32 %v1982, %v2234
      %v2272 = vadd.f32 %v1983, %v2236
      %v2273 = vadd.f32 %v1984, %v2239
      %v2274 = vadd.f32 %v1985, %v2241
      %v2275 = vld [vmem:[%s181] sm:$0xf]
      %v2276 = vld [vmem:[%s181 + $0x4] sm:$0xf]
      %v2277 = vld [vmem:[%s181 + $0x8] sm:$0x1]
      %v2278 = vld [vmem:[%s181 + $0xc] sm:$0xf]
      %v2279 = vld [vmem:[%s181 + $0x10] sm:$0xf]
      %v2280 = vld [vmem:[%s181 + $0x14] sm:$0x1]
      %v2281 = vld [vmem:[%s181 + $0x18] sm:$0xf]
      %v2282 = vld [vmem:[%s181 + $0x1c] sm:$0xf]
      %v2283 = vld [vmem:[%s181 + $0x20] sm:$0x1]
      %v2284 = vld [vmem:[%s181 + $0x24] sm:$0xf]
      %v2285 = vld [vmem:[%s181 + $0x28] sm:$0xf]
      %v2286 = vld [vmem:[%s181 + $0x2c] sm:$0x1]
      %v2287 = vld [vmem:[%s181 + $0x30] sm:$0xf]
      %v2288 = vld [vmem:[%s181 + $0x34] sm:$0xf]
      %v2289 = vld [vmem:[%s181 + $0x38] sm:$0x1]
      %v2290 = vld [vmem:[%s181 + $0x3c] sm:$0xf]
      %v2291 = vld [vmem:[%s181 + $0x40] sm:$0xf]
      %v2292 = vld [vmem:[%s181 + $0x44] sm:$0x1]
      %v2293 = vld [vmem:[%s181 + $0x48] sm:$0xf]
      %v2294 = vld [vmem:[%s181 + $0x4c] sm:$0xf]
      %v2295 = vld [vmem:[%s181 + $0x50] sm:$0x1]
      %v2296 = vld [vmem:[%s181 + $0x54] sm:$0xf]
      %v2297 = vld [vmem:[%s181 + $0x58] sm:$0xf]
      %v2298 = vld [vmem:[%s181 + $0x5c] sm:$0x1]
      %v2299 = vld [vmem:[%s181 + $0x60] sm:$0xf]
      %v2300 = vld [vmem:[%s181 + $0x64] sm:$0xf]
      %v2301 = vld [vmem:[%s181 + $0x68] sm:$0x1]
      %v2302 = vld [vmem:[%s181 + $0x6c] sm:$0xf]
      %v2303 = vld [vmem:[%s181 + $0x70] sm:$0xf]
      %v2304 = vld [vmem:[%s181 + $0x74] sm:$0x1]
      %v2305 = vld [vmem:[%s181 + $0x78] sm:$0xf]
      %v2306 = vld [vmem:[%s181 + $0x7c] sm:$0xf]
      %v2307 = vld [vmem:[%s181 + $0x80] sm:$0x1]
      %v2308 = vld [vmem:[%s181 + $0x84] sm:$0xf]
      %v2309 = vld [vmem:[%s181 + $0x88] sm:$0xf]
      %v2310 = vld [vmem:[%s181 + $0x8c] sm:$0x1]
      %v2311 = vld [vmem:[%s181 + $0x90] sm:$0xf]
      %v2312 = vld [vmem:[%s181 + $0x94] sm:$0xf]
      %v2313 = vld [vmem:[%s181 + $0x98] sm:$0x1]
      %v2314 = vld [vmem:[%s181 + $0x9c] sm:$0xf]
      %v2315 = vld [vmem:[%s181 + $0xa0] sm:$0xf]
      %v2316 = vld [vmem:[%s181 + $0xa4] sm:$0x1]
      %v2317 = vld [vmem:[%s181 + $0xa8] sm:$0xf]
      %v2318 = vld [vmem:[%s181 + $0xac] sm:$0xf]
      %v2319 = vld [vmem:[%s181 + $0xb0] sm:$0x1]
      %v2320 = vld [vmem:[%s181 + $0xb4] sm:$0xf]
      %v2321 = vld [vmem:[%s181 + $0xb8] sm:$0xf]
      %v2322 = vld [vmem:[%s181 + $0xbc] sm:$0x1]
      %v2324 = vshrl.u32 %v2275, 16
      %v2326 = vrot.slane %v2324, 4
      %v2327 = vshll.u32 %v2275, 16
      %v2329 = vrot.slane %v2327, 5
      %v2330 = vor.u32 %v2326, %v2329
      %v2331 = vrot.slane %v2330, 4
      %v2333 = vshll.u32 %v2276, 16
      %v2335 = vrot.slane %v2333, 5
      %v2336 = vsel %vm802, %v2331, %v2335
      %v2337 = vshrl.u32 %v2276, 16
      %v2339 = vrot.slane %v2337, 4
      %v2340 = vor.u32 %v2339, %v2335
      %v2341 = vrot.slane %v2340, 4
      %v2343 = vshll.u32 %v2277, 16
      %v2345 = vrot.slane %v2343, 5
      %v2346 = vsel %vm802, %v2341, %v2345
      %v2348 = vshrl.u32 %v2278, 16
      %v2350 = vrot.slane %v2348, 4
      %v2351 = vshll.u32 %v2278, 16
      %v2353 = vrot.slane %v2351, 5
      %v2354 = vor.u32 %v2350, %v2353
      %v2355 = vrot.slane %v2354, 4
      %v2357 = vshll.u32 %v2279, 16
      %v2359 = vrot.slane %v2357, 5
      %v2360 = vsel %vm802, %v2355, %v2359
      %v2361 = vshrl.u32 %v2279, 16
      %v2363 = vrot.slane %v2361, 4
      %v2364 = vor.u32 %v2363, %v2359
      %v2365 = vrot.slane %v2364, 4
      %v2367 = vshll.u32 %v2280, 16
      %v2369 = vrot.slane %v2367, 5
      %v2370 = vsel %vm802, %v2365, %v2369
      %v2372 = vshrl.u32 %v2281, 16
      %v2374 = vrot.slane %v2372, 4
      %v2375 = vshll.u32 %v2281, 16
      %v2377 = vrot.slane %v2375, 5
      %v2378 = vor.u32 %v2374, %v2377
      %v2379 = vrot.slane %v2378, 4
      %v2381 = vshll.u32 %v2282, 16
      %v2383 = vrot.slane %v2381, 5
      %v2384 = vsel %vm802, %v2379, %v2383
      %v2385 = vshrl.u32 %v2282, 16
      %v2387 = vrot.slane %v2385, 4
      %v2388 = vor.u32 %v2387, %v2383
      %v2389 = vrot.slane %v2388, 4
      %v2391 = vshll.u32 %v2283, 16
      %v2393 = vrot.slane %v2391, 5
      %v2394 = vsel %vm802, %v2389, %v2393
      %v2396 = vshrl.u32 %v2284, 16
      %v2398 = vrot.slane %v2396, 4
      %v2399 = vshll.u32 %v2284, 16
      %v2401 = vrot.slane %v2399, 5
      %v2402 = vor.u32 %v2398, %v2401
      %v2403 = vrot.slane %v2402, 4
      %v2405 = vshll.u32 %v2285, 16
      %v2407 = vrot.slane %v2405, 5
      %v2408 = vsel %vm802, %v2403, %v2407
      %v2409 = vshrl.u32 %v2285, 16
      %v2411 = vrot.slane %v2409, 4
      %v2412 = vor.u32 %v2411, %v2407
      %v2413 = vrot.slane %v2412, 4
      %v2415 = vshll.u32 %v2286, 16
      %v2417 = vrot.slane %v2415, 5
      %v2418 = vsel %vm802, %v2413, %v2417
      %v2420 = vshrl.u32 %v2287, 16
      %v2422 = vrot.slane %v2420, 4
      %v2423 = vshll.u32 %v2287, 16
      %v2425 = vrot.slane %v2423, 5
      %v2426 = vor.u32 %v2422, %v2425
      %v2427 = vrot.slane %v2426, 4
      %v2429 = vshll.u32 %v2288, 16
      %v2431 = vrot.slane %v2429, 5
      %v2432 = vsel %vm802, %v2427, %v2431
      %v2433 = vshrl.u32 %v2288, 16
      %v2435 = vrot.slane %v2433, 4
      %v2436 = vor.u32 %v2435, %v2431
      %v2437 = vrot.slane %v2436, 4
      %v2439 = vshll.u32 %v2289, 16
      %v2441 = vrot.slane %v2439, 5
      %v2442 = vsel %vm802, %v2437, %v2441
      %v2444 = vshrl.u32 %v2290, 16
      %v2446 = vrot.slane %v2444, 4
      %v2447 = vshll.u32 %v2290, 16
      %v2449 = vrot.slane %v2447, 5
      %v2450 = vor.u32 %v2446, %v2449
      %v2451 = vrot.slane %v2450, 4
      %v2453 = vshll.u32 %v2291, 16
      %v2455 = vrot.slane %v2453, 5
      %v2456 = vsel %vm802, %v2451, %v2455
      %v2457 = vshrl.u32 %v2291, 16
      %v2459 = vrot.slane %v2457, 4
      %v2460 = vor.u32 %v2459, %v2455
      %v2461 = vrot.slane %v2460, 4
      %v2463 = vshll.u32 %v2292, 16
      %v2465 = vrot.slane %v2463, 5
      %v2466 = vsel %vm802, %v2461, %v2465
      %v2468 = vshrl.u32 %v2293, 16
      %v2470 = vrot.slane %v2468, 4
      %v2471 = vshll.u32 %v2293, 16
      %v2473 = vrot.slane %v2471, 5
      %v2474 = vor.u32 %v2470, %v2473
      %v2475 = vrot.slane %v2474, 4
      %v2477 = vshll.u32 %v2294, 16
      %v2479 = vrot.slane %v2477, 5
      %v2480 = vsel %vm802, %v2475, %v2479
      %v2481 = vshrl.u32 %v2294, 16
      %v2483 = vrot.slane %v2481, 4
      %v2484 = vor.u32 %v2483, %v2479
      %v2485 = vrot.slane %v2484, 4
      %v2487 = vshll.u32 %v2295, 16
      %v2489 = vrot.slane %v2487, 5
      %v2490 = vsel %vm802, %v2485, %v2489
      %v2492 = vshrl.u32 %v2296, 16
      %v2494 = vrot.slane %v2492, 4
      %v2495 = vshll.u32 %v2296, 16
      %v2497 = vrot.slane %v2495, 5
      %v2498 = vor.u32 %v2494, %v2497
      %v2499 = vrot.slane %v2498, 4
      %v2501 = vshll.u32 %v2297, 16
      %v2503 = vrot.slane %v2501, 5
      %v2504 = vsel %vm802, %v2499, %v2503
      %v2505 = vshrl.u32 %v2297, 16
      %v2507 = vrot.slane %v2505, 4
      %v2508 = vor.u32 %v2507, %v2503
      %v2509 = vrot.slane %v2508, 4
      %v2511 = vshll.u32 %v2298, 16
      %v2513 = vrot.slane %v2511, 5
      %v2514 = vsel %vm802, %v2509, %v2513
      %v2516 = vshrl.u32 %v2299, 16
      %v2518 = vrot.slane %v2516, 4
      %v2519 = vshll.u32 %v2299, 16
      %v2521 = vrot.slane %v2519, 5
      %v2522 = vor.u32 %v2518, %v2521
      %v2523 = vrot.slane %v2522, 4
      %v2525 = vshll.u32 %v2300, 16
      %v2527 = vrot.slane %v2525, 5
      %v2528 = vsel %vm802, %v2523, %v2527
      %v2529 = vshrl.u32 %v2300, 16
      %v2531 = vrot.slane %v2529, 4
      %v2532 = vor.u32 %v2531, %v2527
      %v2533 = vrot.slane %v2532, 4
      %v2535 = vshll.u32 %v2301, 16
      %v2537 = vrot.slane %v2535, 5
      %v2538 = vsel %vm802, %v2533, %v2537
      %v2540 = vshrl.u32 %v2302, 16
      %v2542 = vrot.slane %v2540, 4
      %v2543 = vshll.u32 %v2302, 16
      %v2545 = vrot.slane %v2543, 5
      %v2546 = vor.u32 %v2542, %v2545
      %v2547 = vrot.slane %v2546, 4
      %v2549 = vshll.u32 %v2303, 16
      %v2551 = vrot.slane %v2549, 5
      %v2552 = vsel %vm802, %v2547, %v2551
      %v2553 = vshrl.u32 %v2303, 16
      %v2555 = vrot.slane %v2553, 4
      %v2556 = vor.u32 %v2555, %v2551
      %v2557 = vrot.slane %v2556, 4
      %v2559 = vshll.u32 %v2304, 16
      %v2561 = vrot.slane %v2559, 5
      %v2562 = vsel %vm802, %v2557, %v2561
      %v2564 = vshrl.u32 %v2305, 16
      %v2566 = vrot.slane %v2564, 4
      %v2567 = vshll.u32 %v2305, 16
      %v2569 = vrot.slane %v2567, 5
      %v2570 = vor.u32 %v2566, %v2569
      %v2571 = vrot.slane %v2570, 4
      %v2573 = vshll.u32 %v2306, 16
      %v2575 = vrot.slane %v2573, 5
      %v2576 = vsel %vm802, %v2571, %v2575
      %v2577 = vshrl.u32 %v2306, 16
      %v2579 = vrot.slane %v2577, 4
      %v2580 = vor.u32 %v2579, %v2575
      %v2581 = vrot.slane %v2580, 4
      %v2583 = vshll.u32 %v2307, 16
      %v2585 = vrot.slane %v2583, 5
      %v2586 = vsel %vm802, %v2581, %v2585
      %v2588 = vshrl.u32 %v2308, 16
      %v2590 = vrot.slane %v2588, 4
      %v2591 = vshll.u32 %v2308, 16
      %v2593 = vrot.slane %v2591, 5
      %v2594 = vor.u32 %v2590, %v2593
      %v2595 = vrot.slane %v2594, 4
      %v2597 = vshll.u32 %v2309, 16
      %v2599 = vrot.slane %v2597, 5
      %v2600 = vsel %vm802, %v2595, %v2599
      %v2601 = vshrl.u32 %v2309, 16
      %v2603 = vrot.slane %v2601, 4
      %v2604 = vor.u32 %v2603, %v2599
      %v2605 = vrot.slane %v2604, 4
      %v2607 = vshll.u32 %v2310, 16
      %v2609 = vrot.slane %v2607, 5
      %v2610 = vsel %vm802, %v2605, %v2609
      %v2612 = vshrl.u32 %v2311, 16
      %v2614 = vrot.slane %v2612, 4
      %v2615 = vshll.u32 %v2311, 16
      %v2617 = vrot.slane %v2615, 5
      %v2618 = vor.u32 %v2614, %v2617
      %v2619 = vrot.slane %v2618, 4
      %v2621 = vshll.u32 %v2312, 16
      %v2623 = vrot.slane %v2621, 5
      %v2624 = vsel %vm802, %v2619, %v2623
      %v2625 = vshrl.u32 %v2312, 16
      %v2627 = vrot.slane %v2625, 4
      %v2628 = vor.u32 %v2627, %v2623
      %v2629 = vrot.slane %v2628, 4
      %v2631 = vshll.u32 %v2313, 16
      %v2633 = vrot.slane %v2631, 5
      %v2634 = vsel %vm802, %v2629, %v2633
      %v2636 = vshrl.u32 %v2314, 16
      %v2638 = vrot.slane %v2636, 4
      %v2639 = vshll.u32 %v2314, 16
      %v2641 = vrot.slane %v2639, 5
      %v2642 = vor.u32 %v2638, %v2641
      %v2643 = vrot.slane %v2642, 4
      %v2645 = vshll.u32 %v2315, 16
      %v2647 = vrot.slane %v2645, 5
      %v2648 = vsel %vm802, %v2643, %v2647
      %v2649 = vshrl.u32 %v2315, 16
      %v2651 = vrot.slane %v2649, 4
      %v2652 = vor.u32 %v2651, %v2647
      %v2653 = vrot.slane %v2652, 4
      %v2655 = vshll.u32 %v2316, 16
      %v2657 = vrot.slane %v2655, 5
      %v2658 = vsel %vm802, %v2653, %v2657
      %v2660 = vshrl.u32 %v2317, 16
      %v2662 = vrot.slane %v2660, 4
      %v2663 = vshll.u32 %v2317, 16
      %v2665 = vrot.slane %v2663, 5
      %v2666 = vor.u32 %v2662, %v2665
      %v2667 = vrot.slane %v2666, 4
      %v2669 = vshll.u32 %v2318, 16
      %v2671 = vrot.slane %v2669, 5
      %v2672 = vsel %vm802, %v2667, %v2671
      %v2673 = vshrl.u32 %v2318, 16
      %v2675 = vrot.slane %v2673, 4
      %v2676 = vor.u32 %v2675, %v2671
      %v2677 = vrot.slane %v2676, 4
      %v2679 = vshll.u32 %v2319, 16
      %v2681 = vrot.slane %v2679, 5
      %v2682 = vsel %vm802, %v2677, %v2681
      %v2684 = vshrl.u32 %v2320, 16
      %v2686 = vrot.slane %v2684, 4
      %v2687 = vshll.u32 %v2320, 16
      %v2689 = vrot.slane %v2687, 5
      %v2690 = vor.u32 %v2686, %v2689
      %v2691 = vrot.slane %v2690, 4
      %v2693 = vshll.u32 %v2321, 16
      %v2695 = vrot.slane %v2693, 5
      %v2696 = vsel %vm802, %v2691, %v2695
      %v2697 = vshrl.u32 %v2321, 16
      %v2699 = vrot.slane %v2697, 4
      %v2700 = vor.u32 %v2699, %v2695
      %v2701 = vrot.slane %v2700, 4
      %v2703 = vshll.u32 %v2322, 16
      %v2705 = vrot.slane %v2703, 5
      %v2706 = vsel %vm802, %v2701, %v2705
      %v2707 = vld [vmem:[%s1 + $0x8] sm:$0x3]
      %v2708 = vunpack.c.l.b16 %v2336
      %v2709 = vunpack.c.l.b16 %v2346
      %v2710 = vunpack.c.l.b16 %v2360
      %v2711 = vunpack.c.l.b16 %v2370
      %v2712 = vunpack.c.l.b16 %v2384
      %v2713 = vunpack.c.l.b16 %v2394
      %v2714 = vunpack.c.l.b16 %v2408
      %v2715 = vunpack.c.l.b16 %v2418
      %v2716 = vunpack.c.l.b16 %v2432
      %v2717 = vunpack.c.l.b16 %v2442
      %v2718 = vunpack.c.l.b16 %v2456
      %v2719 = vunpack.c.l.b16 %v2466
      %v2720 = vunpack.c.l.b16 %v2480
      %v2721 = vunpack.c.l.b16 %v2490
      %v2722 = vunpack.c.l.b16 %v2504
      %v2723 = vunpack.c.l.b16 %v2514
      %v2724 = vunpack.c.l.b16 %v2528
      %v2725 = vunpack.c.l.b16 %v2538
      %v2726 = vunpack.c.l.b16 %v2552
      %v2727 = vunpack.c.l.b16 %v2562
      %v2728 = vunpack.c.l.b16 %v2576
      %v2729 = vunpack.c.l.b16 %v2586
      %v2730 = vunpack.c.l.b16 %v2600
      %v2731 = vunpack.c.l.b16 %v2610
      %v2732 = vunpack.c.l.b16 %v2624
      %v2733 = vunpack.c.l.b16 %v2634
      %v2734 = vunpack.c.l.b16 %v2648
      %v2735 = vunpack.c.l.b16 %v2658
      %v2736 = vunpack.c.l.b16 %v2672
      %v2737 = vunpack.c.l.b16 %v2682
      %v2738 = vunpack.c.l.b16 %v2696
      %v2739 = vunpack.c.l.b16 %v2706
      %v2740 = vpack.c.b16 %v2709, %v2708
      %v2741 = vpack.c.b16 %v2711, %v2710
      %v2742 = vpack.c.b16 %v2713, %v2712
      %v2743 = vpack.c.b16 %v2715, %v2714
      %v2744 = vpack.c.b16 %v2717, %v2716
      %v2745 = vpack.c.b16 %v2719, %v2718
      %v2746 = vpack.c.b16 %v2721, %v2720
      %v2747 = vpack.c.b16 %v2723, %v2722
      %v2748 = vpack.c.b16 %v2725, %v2724
      %v2749 = vpack.c.b16 %v2727, %v2726
      %v2750 = vpack.c.b16 %v2729, %v2728
      %v2751 = vpack.c.b16 %v2731, %v2730
      %v2752 = vpack.c.b16 %v2733, %v2732
      %v2753 = vpack.c.b16 %v2735, %v2734
      %v2754 = vpack.c.b16 %v2737, %v2736
      %v2755 = vpack.c.b16 %v2739, %v2738
      %v2757 = vsel %vm1240, %v2740, 0
      %v2760 = vsel %vm1240, %v2741, 0
      %v2763 = vsel %vm1240, %v2742, 0
      %v2766 = vsel %vm1240, %v2743, 0
      %v2769 = vsel %vm1240, %v2744, 0
      %v2772 = vsel %vm1240, %v2745, 0
      %v2775 = vsel %vm1240, %v2746, 0
      %v2778 = vsel %vm1240, %v2747, 0
      %v2781 = vsel %vm1240, %v2748, 0
      %v2784 = vsel %vm1240, %v2749, 0
      %v2787 = vsel %vm1240, %v2750, 0
      %v2790 = vsel %vm1240, %v2751, 0
      %v2793 = vsel %vm1240, %v2752, 0
      %v2796 = vsel %vm1240, %v2753, 0
      %v2799 = vsel %vm1240, %v2754, 0
      %v2802 = vsel %vm1240, %v2755, 0
      %v2805 = vsel %vm1289, %v2707, 0
      %2807 = vmatpush.bf16.msra.mxu0 0
      %2808 = vmatpush.bf16.msra.mxu0 0
      %2809 = vmatpush.bf16.msra.mxu0 0
      %2810 = vmatpush.bf16.msra.mxu0 0
      %2811 = vmatpush.bf16.msra.mxu0 0
      %2812 = vmatpush.bf16.msra.mxu0 0
      %2813 = vmatpush.bf16.msra.mxu0 0
      %2814 = vmatpush.bf16.msra.mxu0 %v2805
      %2815 = vmatmul.bf16.gmra.mxu0 %v2757
      %v2816 = vpop.f32.mrf.mxu0
      %v2817 = vadd.f32 0.0, %v2816
      %v2818 = vpop.f32.mrf.mxu0
      %v2819 = vadd.f32 0.0, %v2818
      %2820 = vmatmul.bf16.gmra.mxu0 %v2760
      %v2821 = vpop.f32.mrf.mxu0
      %v2822 = vadd.f32 0.0, %v2821
      %v2823 = vpop.f32.mrf.mxu0
      %v2824 = vadd.f32 0.0, %v2823
      %2825 = vmatmul.bf16.gmra.mxu0 %v2763
      %v2826 = vpop.f32.mrf.mxu0
      %v2827 = vadd.f32 0.0, %v2826
      %v2828 = vpop.f32.mrf.mxu0
      %v2829 = vadd.f32 0.0, %v2828
      %2830 = vmatmul.bf16.gmra.mxu0 %v2766
      %v2831 = vpop.f32.mrf.mxu0
      %v2832 = vadd.f32 0.0, %v2831
      %v2833 = vpop.f32.mrf.mxu0
      %v2834 = vadd.f32 0.0, %v2833
      %2835 = vmatmul.bf16.gmra.mxu0 %v2769
      %v2836 = vpop.f32.mrf.mxu0
      %v2837 = vadd.f32 0.0, %v2836
      %v2838 = vpop.f32.mrf.mxu0
      %v2839 = vadd.f32 0.0, %v2838
      %2840 = vmatmul.bf16.gmra.mxu0 %v2772
      %v2841 = vpop.f32.mrf.mxu0
      %v2842 = vadd.f32 0.0, %v2841
      %v2843 = vpop.f32.mrf.mxu0
      %v2844 = vadd.f32 0.0, %v2843
      %2845 = vmatmul.bf16.gmra.mxu0 %v2775
      %v2846 = vpop.f32.mrf.mxu0
      %v2847 = vadd.f32 0.0, %v2846
      %v2848 = vpop.f32.mrf.mxu0
      %v2849 = vadd.f32 0.0, %v2848
      %2850 = vmatmul.bf16.gmra.mxu0 %v2778
      %v2851 = vpop.f32.mrf.mxu0
      %v2852 = vadd.f32 0.0, %v2851
      %v2853 = vpop.f32.mrf.mxu0
      %v2854 = vadd.f32 0.0, %v2853
      %2855 = vmatmul.bf16.gmra.mxu0 %v2781
      %v2856 = vpop.f32.mrf.mxu0
      %v2857 = vadd.f32 0.0, %v2856
      %v2858 = vpop.f32.mrf.mxu0
      %v2859 = vadd.f32 0.0, %v2858
      %2860 = vmatmul.bf16.gmra.mxu0 %v2784
      %v2861 = vpop.f32.mrf.mxu0
      %v2862 = vadd.f32 0.0, %v2861
      %v2863 = vpop.f32.mrf.mxu0
      %v2864 = vadd.f32 0.0, %v2863
      %2865 = vmatmul.bf16.gmra.mxu0 %v2787
      %v2866 = vpop.f32.mrf.mxu0
      %v2867 = vadd.f32 0.0, %v2866
      %v2868 = vpop.f32.mrf.mxu0
      %v2869 = vadd.f32 0.0, %v2868
      %2870 = vmatmul.bf16.gmra.mxu0 %v2790
      %v2871 = vpop.f32.mrf.mxu0
      %v2872 = vadd.f32 0.0, %v2871
      %v2873 = vpop.f32.mrf.mxu0
      %v2874 = vadd.f32 0.0, %v2873
      %2875 = vmatmul.bf16.gmra.mxu0 %v2793
      %v2876 = vpop.f32.mrf.mxu0
      %v2877 = vadd.f32 0.0, %v2876
      %v2878 = vpop.f32.mrf.mxu0
      %v2879 = vadd.f32 0.0, %v2878
      %2880 = vmatmul.bf16.gmra.mxu0 %v2796
      %v2881 = vpop.f32.mrf.mxu0
      %v2882 = vadd.f32 0.0, %v2881
      %v2883 = vpop.f32.mrf.mxu0
      %v2884 = vadd.f32 0.0, %v2883
      %2885 = vmatmul.bf16.gmra.mxu0 %v2799
      %v2886 = vpop.f32.mrf.mxu0
      %v2887 = vadd.f32 0.0, %v2886
      %v2888 = vpop.f32.mrf.mxu0
      %v2889 = vadd.f32 0.0, %v2888
      %2890 = vmatmul.bf16.gmra.mxu0 %v2802
      %v2891 = vpop.f32.mrf.mxu0
      %v2892 = vadd.f32 0.0, %v2891
      %v2893 = vpop.f32.mrf.mxu0
      %v2894 = vadd.f32 0.0, %v2893
      %2895 = vdwg.mxu0
      %v2896 = vadd.f32 %v2243, %v2817
      %v2897 = vadd.f32 %v2244, %v2819
      %v2898 = vadd.f32 %v2245, %v2822
      %v2899 = vadd.f32 %v2246, %v2824
      %v2900 = vadd.f32 %v2247, %v2827
      %v2901 = vadd.f32 %v2248, %v2829
      %v2902 = vadd.f32 %v2249, %v2832
      %v2903 = vadd.f32 %v2250, %v2834
      %v2904 = vadd.f32 %v2251, %v2837
      %v2905 = vadd.f32 %v2252, %v2839
      %v2906 = vadd.f32 %v2253, %v2842
      %v2907 = vadd.f32 %v2254, %v2844
      %v2908 = vadd.f32 %v2255, %v2847
      %v2909 = vadd.f32 %v2256, %v2849
      %v2910 = vadd.f32 %v2257, %v2852
      %v2911 = vadd.f32 %v2258, %v2854
      %v2912 = vadd.f32 %v2259, %v2857
      %v2913 = vadd.f32 %v2260, %v2859
      %v2914 = vadd.f32 %v2261, %v2862
      %v2915 = vadd.f32 %v2262, %v2864
      %v2916 = vadd.f32 %v2263, %v2867
      %v2917 = vadd.f32 %v2264, %v2869
      %v2918 = vadd.f32 %v2265, %v2872
      %v2919 = vadd.f32 %v2266, %v2874
      %v2920 = vadd.f32 %v2267, %v2877
      %v2921 = vadd.f32 %v2268, %v2879
      %v2922 = vadd.f32 %v2269, %v2882
      %v2923 = vadd.f32 %v2270, %v2884
      %v2924 = vadd.f32 %v2271, %v2887
      %v2925 = vadd.f32 %v2272, %v2889
      %v2926 = vadd.f32 %v2273, %v2892
      %v2927 = vadd.f32 %v2274, %v2894
      %v2928 = vld [vmem:[%s181] sm:$0xe]
      %v2929 = vld [vmem:[%s181 + $0xc] sm:$0xe]
      %v2930 = vld [vmem:[%s181 + $0x18] sm:$0xe]
      %v2931 = vld [vmem:[%s181 + $0x24] sm:$0xe]
      %v2932 = vld [vmem:[%s181 + $0x30] sm:$0xe]
      %v2933 = vld [vmem:[%s181 + $0x3c] sm:$0xe]
      %v2934 = vld [vmem:[%s181 + $0x48] sm:$0xe]
      %v2935 = vld [vmem:[%s181 + $0x54] sm:$0xe]
      %v2936 = vld [vmem:[%s181 + $0x60] sm:$0xe]
      %v2937 = vld [vmem:[%s181 + $0x6c] sm:$0xe]
      %v2938 = vld [vmem:[%s181 + $0x78] sm:$0xe]
      %v2939 = vld [vmem:[%s181 + $0x84] sm:$0xe]
      %v2940 = vld [vmem:[%s181 + $0x90] sm:$0xe]
      %v2941 = vld [vmem:[%s181 + $0x9c] sm:$0xe]
      %v2942 = vld [vmem:[%s181 + $0xa8] sm:$0xe]
      %v2943 = vld [vmem:[%s181 + $0xb4] sm:$0xe]
      %v2992 = vrot.slane %v2928, 5
      %v2993 = vrot.slane %v2992, 4
      %v2994 = vrot.slane %v2276, 5
      %v2995 = vsel %vm1652, %v2993, %v2994
      %v2996 = vrot.slane %v2994, 4
      %v2997 = vrot.slane %v2277, 5
      %v2998 = vsel %vm1652, %v2996, %v2997
      %v2999 = vrot.slane %v2929, 5
      %v3000 = vrot.slane %v2999, 4
      %v3001 = vrot.slane %v2279, 5
      %v3002 = vsel %vm1652, %v3000, %v3001
      %v3003 = vrot.slane %v3001, 4
      %v3004 = vrot.slane %v2280, 5
      %v3005 = vsel %vm1652, %v3003, %v3004
      %v3006 = vrot.slane %v2930, 5
      %v3007 = vrot.slane %v3006, 4
      %v3008 = vrot.slane %v2282, 5
      %v3009 = vsel %vm1652, %v3007, %v3008
      %v3010 = vrot.slane %v3008, 4
      %v3011 = vrot.slane %v2283, 5
      %v3012 = vsel %vm1652, %v3010, %v3011
      %v3013 = vrot.slane %v2931, 5
      %v3014 = vrot.slane %v3013, 4
      %v3015 = vrot.slane %v2285, 5
      %v3016 = vsel %vm1652, %v3014, %v3015
      %v3017 = vrot.slane %v3015, 4
      %v3018 = vrot.slane %v2286, 5
      %v3019 = vsel %vm1652, %v3017, %v3018
      %v3020 = vrot.slane %v2932, 5
      %v3021 = vrot.slane %v3020, 4
      %v3022 = vrot.slane %v2288, 5
      %v3023 = vsel %vm1652, %v3021, %v3022
      %v3024 = vrot.slane %v3022, 4
      %v3025 = vrot.slane %v2289, 5
      %v3026 = vsel %vm1652, %v3024, %v3025
      %v3027 = vrot.slane %v2933, 5
      %v3028 = vrot.slane %v3027, 4
      %v3029 = vrot.slane %v2291, 5
      %v3030 = vsel %vm1652, %v3028, %v3029
      %v3031 = vrot.slane %v3029, 4
      %v3032 = vrot.slane %v2292, 5
      %v3033 = vsel %vm1652, %v3031, %v3032
      %v3034 = vrot.slane %v2934, 5
      %v3035 = vrot.slane %v3034, 4
      %v3036 = vrot.slane %v2294, 5
      %v3037 = vsel %vm1652, %v3035, %v3036
      %v3038 = vrot.slane %v3036, 4
      %v3039 = vrot.slane %v2295, 5
      %v3040 = vsel %vm1652, %v3038, %v3039
      %v3041 = vrot.slane %v2935, 5
      %v3042 = vrot.slane %v3041, 4
      %v3043 = vrot.slane %v2297, 5
      %v3044 = vsel %vm1652, %v3042, %v3043
      %v3045 = vrot.slane %v3043, 4
      %v3046 = vrot.slane %v2298, 5
      %v3047 = vsel %vm1652, %v3045, %v3046
      %v3048 = vrot.slane %v2936, 5
      %v3049 = vrot.slane %v3048, 4
      %v3050 = vrot.slane %v2300, 5
      %v3051 = vsel %vm1652, %v3049, %v3050
      %v3052 = vrot.slane %v3050, 4
      %v3053 = vrot.slane %v2301, 5
      %v3054 = vsel %vm1652, %v3052, %v3053
      %v3055 = vrot.slane %v2937, 5
      %v3056 = vrot.slane %v3055, 4
      %v3057 = vrot.slane %v2303, 5
      %v3058 = vsel %vm1652, %v3056, %v3057
      %v3059 = vrot.slane %v3057, 4
      %v3060 = vrot.slane %v2304, 5
      %v3061 = vsel %vm1652, %v3059, %v3060
      %v3062 = vrot.slane %v2938, 5
      %v3063 = vrot.slane %v3062, 4
      %v3064 = vrot.slane %v2306, 5
      %v3065 = vsel %vm1652, %v3063, %v3064
      %v3066 = vrot.slane %v3064, 4
      %v3067 = vrot.slane %v2307, 5
      %v3068 = vsel %vm1652, %v3066, %v3067
      %v3069 = vrot.slane %v2939, 5
      %v3070 = vrot.slane %v3069, 4
      %v3071 = vrot.slane %v2309, 5
      %v3072 = vsel %vm1652, %v3070, %v3071
      %v3073 = vrot.slane %v3071, 4
      %v3074 = vrot.slane %v2310, 5
      %v3075 = vsel %vm1652, %v3073, %v3074
      %v3076 = vrot.slane %v2940, 5
      %v3077 = vrot.slane %v3076, 4
      %v3078 = vrot.slane %v2312, 5
      %v3079 = vsel %vm1652, %v3077, %v3078
      %v3080 = vrot.slane %v3078, 4
      %v3081 = vrot.slane %v2313, 5
      %v3082 = vsel %vm1652, %v3080, %v3081
      %v3083 = vrot.slane %v2941, 5
      %v3084 = vrot.slane %v3083, 4
      %v3085 = vrot.slane %v2315, 5
      %v3086 = vsel %vm1652, %v3084, %v3085
      %v3087 = vrot.slane %v3085, 4
      %v3088 = vrot.slane %v2316, 5
      %v3089 = vsel %vm1652, %v3087, %v3088
      %v3090 = vrot.slane %v2942, 5
      %v3091 = vrot.slane %v3090, 4
      %v3092 = vrot.slane %v2318, 5
      %v3093 = vsel %vm1652, %v3091, %v3092
      %v3094 = vrot.slane %v3092, 4
      %v3095 = vrot.slane %v2319, 5
      %v3096 = vsel %vm1652, %v3094, %v3095
      %v3097 = vrot.slane %v2943, 5
      %v3098 = vrot.slane %v3097, 4
      %v3099 = vrot.slane %v2321, 5
      %v3100 = vsel %vm1652, %v3098, %v3099
      %v3101 = vrot.slane %v3099, 4
      %v3102 = vrot.slane %v2322, 5
      %v3103 = vsel %vm1652, %v3101, %v3102
      %v3104 = vld [vmem:[%s1 + $0x8] sm:$0xc]
      %v3105 = vunpack.c.l.b16 %v2995
      %v3106 = vunpack.c.l.b16 %v2998
      %v3107 = vunpack.c.l.b16 %v3002
      %v3108 = vunpack.c.l.b16 %v3005
      %v3109 = vunpack.c.l.b16 %v3009
      %v3110 = vunpack.c.l.b16 %v3012
      %v3111 = vunpack.c.l.b16 %v3016
      %v3112 = vunpack.c.l.b16 %v3019
      %v3113 = vunpack.c.l.b16 %v3023
      %v3114 = vunpack.c.l.b16 %v3026
      %v3115 = vunpack.c.l.b16 %v3030
      %v3116 = vunpack.c.l.b16 %v3033
      %v3117 = vunpack.c.l.b16 %v3037
      %v3118 = vunpack.c.l.b16 %v3040
      %v3119 = vunpack.c.l.b16 %v3044
      %v3120 = vunpack.c.l.b16 %v3047
      %v3121 = vunpack.c.l.b16 %v3051
      %v3122 = vunpack.c.l.b16 %v3054
      %v3123 = vunpack.c.l.b16 %v3058
      %v3124 = vunpack.c.l.b16 %v3061
      %v3125 = vunpack.c.l.b16 %v3065
      %v3126 = vunpack.c.l.b16 %v3068
      %v3127 = vunpack.c.l.b16 %v3072
      %v3128 = vunpack.c.l.b16 %v3075
      %v3129 = vunpack.c.l.b16 %v3079
      %v3130 = vunpack.c.l.b16 %v3082
      %v3131 = vunpack.c.l.b16 %v3086
      %v3132 = vunpack.c.l.b16 %v3089
      %v3133 = vunpack.c.l.b16 %v3093
      %v3134 = vunpack.c.l.b16 %v3096
      %v3135 = vunpack.c.l.b16 %v3100
      %v3136 = vunpack.c.l.b16 %v3103
      %v3137 = vpack.c.b16 %v3106, %v3105
      %v3138 = vpack.c.b16 %v3108, %v3107
      %v3139 = vpack.c.b16 %v3110, %v3109
      %v3140 = vpack.c.b16 %v3112, %v3111
      %v3141 = vpack.c.b16 %v3114, %v3113
      %v3142 = vpack.c.b16 %v3116, %v3115
      %v3143 = vpack.c.b16 %v3118, %v3117
      %v3144 = vpack.c.b16 %v3120, %v3119
      %v3145 = vpack.c.b16 %v3122, %v3121
      %v3146 = vpack.c.b16 %v3124, %v3123
      %v3147 = vpack.c.b16 %v3126, %v3125
      %v3148 = vpack.c.b16 %v3128, %v3127
      %v3149 = vpack.c.b16 %v3130, %v3129
      %v3150 = vpack.c.b16 %v3132, %v3131
      %v3151 = vpack.c.b16 %v3134, %v3133
      %v3152 = vpack.c.b16 %v3136, %v3135
      %v3154 = vunpack.c.l.b16 %v3104
      %v3155 = vpack.c.b16 %v3154, %v3154
      %v3156 = vrot.slane %v3155, 2
      %v3158 = vsel %vm1240, %v3137, 0
      %v3161 = vsel %vm1240, %v3138, 0
      %v3164 = vsel %vm1240, %v3139, 0
      %v3167 = vsel %vm1240, %v3140, 0
      %v3170 = vsel %vm1240, %v3141, 0
      %v3173 = vsel %vm1240, %v3142, 0
      %v3176 = vsel %vm1240, %v3143, 0
      %v3179 = vsel %vm1240, %v3144, 0
      %v3182 = vsel %vm1240, %v3145, 0
      %v3185 = vsel %vm1240, %v3146, 0
      %v3188 = vsel %vm1240, %v3147, 0
      %v3191 = vsel %vm1240, %v3148, 0
      %v3194 = vsel %vm1240, %v3149, 0
      %v3197 = vsel %vm1240, %v3150, 0
      %v3200 = vsel %vm1240, %v3151, 0
      %v3203 = vsel %vm1240, %v3152, 0
      %v3206 = vsel %vm1289, %v3156, 0
      %3208 = vmatpush.bf16.msra.mxu0 0
      %3209 = vmatpush.bf16.msra.mxu0 0
      %3210 = vmatpush.bf16.msra.mxu0 0
      %3211 = vmatpush.bf16.msra.mxu0 0
      %3212 = vmatpush.bf16.msra.mxu0 0
      %3213 = vmatpush.bf16.msra.mxu0 0
      %3214 = vmatpush.bf16.msra.mxu0 0
      %3215 = vmatpush.bf16.msra.mxu0 %v3206
      %3216 = vmatmul.bf16.gmra.mxu0 %v3158
      %v3217 = vpop.f32.mrf.mxu0
      %v3218 = vadd.f32 0.0, %v3217
      %v3219 = vpop.f32.mrf.mxu0
      %v3220 = vadd.f32 0.0, %v3219
      %3221 = vmatmul.bf16.gmra.mxu0 %v3161
      %v3222 = vpop.f32.mrf.mxu0
      %v3223 = vadd.f32 0.0, %v3222
      %v3224 = vpop.f32.mrf.mxu0
      %v3225 = vadd.f32 0.0, %v3224
      %3226 = vmatmul.bf16.gmra.mxu0 %v3164
      %v3227 = vpop.f32.mrf.mxu0
      %v3228 = vadd.f32 0.0, %v3227
      %v3229 = vpop.f32.mrf.mxu0
      %v3230 = vadd.f32 0.0, %v3229
      %3231 = vmatmul.bf16.gmra.mxu0 %v3167
      %v3232 = vpop.f32.mrf.mxu0
      %v3233 = vadd.f32 0.0, %v3232
      %v3234 = vpop.f32.mrf.mxu0
      %v3235 = vadd.f32 0.0, %v3234
      %3236 = vmatmul.bf16.gmra.mxu0 %v3170
      %v3237 = vpop.f32.mrf.mxu0
      %v3238 = vadd.f32 0.0, %v3237
      %v3239 = vpop.f32.mrf.mxu0
      %v3240 = vadd.f32 0.0, %v3239
      %3241 = vmatmul.bf16.gmra.mxu0 %v3173
      %v3242 = vpop.f32.mrf.mxu0
      %v3243 = vadd.f32 0.0, %v3242
      %v3244 = vpop.f32.mrf.mxu0
      %v3245 = vadd.f32 0.0, %v3244
      %3246 = vmatmul.bf16.gmra.mxu0 %v3176
      %v3247 = vpop.f32.mrf.mxu0
      %v3248 = vadd.f32 0.0, %v3247
      %v3249 = vpop.f32.mrf.mxu0
      %v3250 = vadd.f32 0.0, %v3249
      %3251 = vmatmul.bf16.gmra.mxu0 %v3179
      %v3252 = vpop.f32.mrf.mxu0
      %v3253 = vadd.f32 0.0, %v3252
      %v3254 = vpop.f32.mrf.mxu0
      %v3255 = vadd.f32 0.0, %v3254
      %3256 = vmatmul.bf16.gmra.mxu0 %v3182
      %v3257 = vpop.f32.mrf.mxu0
      %v3258 = vadd.f32 0.0, %v3257
      %v3259 = vpop.f32.mrf.mxu0
      %v3260 = vadd.f32 0.0, %v3259
      %3261 = vmatmul.bf16.gmra.mxu0 %v3185
      %v3262 = vpop.f32.mrf.mxu0
      %v3263 = vadd.f32 0.0, %v3262
      %v3264 = vpop.f32.mrf.mxu0
      %v3265 = vadd.f32 0.0, %v3264
      %3266 = vmatmul.bf16.gmra.mxu0 %v3188
      %v3267 = vpop.f32.mrf.mxu0
      %v3268 = vadd.f32 0.0, %v3267
      %v3269 = vpop.f32.mrf.mxu0
      %v3270 = vadd.f32 0.0, %v3269
      %3271 = vmatmul.bf16.gmra.mxu0 %v3191
      %v3272 = vpop.f32.mrf.mxu0
      %v3273 = vadd.f32 0.0, %v3272
      %v3274 = vpop.f32.mrf.mxu0
      %v3275 = vadd.f32 0.0, %v3274
      %3276 = vmatmul.bf16.gmra.mxu0 %v3194
      %v3277 = vpop.f32.mrf.mxu0
      %v3278 = vadd.f32 0.0, %v3277
      %v3279 = vpop.f32.mrf.mxu0
      %v3280 = vadd.f32 0.0, %v3279
      %3281 = vmatmul.bf16.gmra.mxu0 %v3197
      %v3282 = vpop.f32.mrf.mxu0
      %v3283 = vadd.f32 0.0, %v3282
      %v3284 = vpop.f32.mrf.mxu0
      %v3285 = vadd.f32 0.0, %v3284
      %3286 = vmatmul.bf16.gmra.mxu0 %v3200
      %v3287 = vpop.f32.mrf.mxu0
      %v3288 = vadd.f32 0.0, %v3287
      %v3289 = vpop.f32.mrf.mxu0
      %v3290 = vadd.f32 0.0, %v3289
      %3291 = vmatmul.bf16.gmra.mxu0 %v3203
      %v3292 = vpop.f32.mrf.mxu0
      %v3293 = vadd.f32 0.0, %v3292
      %v3294 = vpop.f32.mrf.mxu0
      %v3295 = vadd.f32 0.0, %v3294
      %3296 = vdwg.mxu0
      %v3297 = vadd.f32 %v2896, %v3218
      %v3298 = vadd.f32 %v2897, %v3220
      %v3299 = vadd.f32 %v2898, %v3223
      %v3300 = vadd.f32 %v2899, %v3225
      %v3301 = vadd.f32 %v2900, %v3228
      %v3302 = vadd.f32 %v2901, %v3230
      %v3303 = vadd.f32 %v2902, %v3233
      %v3304 = vadd.f32 %v2903, %v3235
      %v3305 = vadd.f32 %v2904, %v3238
      %v3306 = vadd.f32 %v2905, %v3240
      %v3307 = vadd.f32 %v2906, %v3243
      %v3308 = vadd.f32 %v2907, %v3245
      %v3309 = vadd.f32 %v2908, %v3248
      %v3310 = vadd.f32 %v2909, %v3250
      %v3311 = vadd.f32 %v2910, %v3253
      %v3312 = vadd.f32 %v2911, %v3255
      %v3313 = vadd.f32 %v2912, %v3258
      %v3314 = vadd.f32 %v2913, %v3260
      %v3315 = vadd.f32 %v2914, %v3263
      %v3316 = vadd.f32 %v2915, %v3265
      %v3317 = vadd.f32 %v2916, %v3268
      %v3318 = vadd.f32 %v2917, %v3270
      %v3319 = vadd.f32 %v2918, %v3273
      %v3320 = vadd.f32 %v2919, %v3275
      %v3321 = vadd.f32 %v2920, %v3278
      %v3322 = vadd.f32 %v2921, %v3280
      %v3323 = vadd.f32 %v2922, %v3283
      %v3324 = vadd.f32 %v2923, %v3285
      %v3325 = vadd.f32 %v2924, %v3288
      %v3326 = vadd.f32 %v2925, %v3290
      %v3327 = vadd.f32 %v2926, %v3293
      %v3328 = vadd.f32 %v2927, %v3295
      %s3329 = scalar_lea.vmem [#allocation2], 24
      %v3330 = vld [vmem:[%s3329] sm:$0xf]
      %v3331 = vld [vmem:[%s3329 + $0x4] sm:$0xf]
      %v3332 = vld [vmem:[%s3329 + $0xc] sm:$0xf]
      %v3333 = vld [vmem:[%s3329 + $0x10] sm:$0xf]
      %v3334 = vld [vmem:[%s3329 + $0x18] sm:$0xf]
      %v3335 = vld [vmem:[%s3329 + $0x1c] sm:$0xf]
      %v3336 = vld [vmem:[%s3329 + $0x24] sm:$0xf]
      %v3337 = vld [vmem:[%s3329 + $0x28] sm:$0xf]
      %v3338 = vld [vmem:[%s3329 + $0x30] sm:$0xf]
      %v3339 = vld [vmem:[%s3329 + $0x34] sm:$0xf]
      %v3340 = vld [vmem:[%s3329 + $0x3c] sm:$0xf]
      %v3341 = vld [vmem:[%s3329 + $0x40] sm:$0xf]
      %v3342 = vld [vmem:[%s3329 + $0x48] sm:$0xf]
      %v3343 = vld [vmem:[%s3329 + $0x4c] sm:$0xf]
      %v3344 = vld [vmem:[%s3329 + $0x54] sm:$0xf]
      %v3345 = vld [vmem:[%s3329 + $0x58] sm:$0xf]
      %v3346 = vld [vmem:[%s3329 + $0x60] sm:$0xf]
      %v3347 = vld [vmem:[%s3329 + $0x64] sm:$0xf]
      %v3348 = vld [vmem:[%s3329 + $0x6c] sm:$0xf]
      %v3349 = vld [vmem:[%s3329 + $0x70] sm:$0xf]
      %v3350 = vld [vmem:[%s3329 + $0x78] sm:$0xf]
      %v3351 = vld [vmem:[%s3329 + $0x7c] sm:$0xf]
      %v3352 = vld [vmem:[%s3329 + $0x84] sm:$0xf]
      %v3353 = vld [vmem:[%s3329 + $0x88] sm:$0xf]
      %v3354 = vld [vmem:[%s3329 + $0x90] sm:$0xf]
      %v3355 = vld [vmem:[%s3329 + $0x94] sm:$0xf]
      %v3356 = vld [vmem:[%s3329 + $0x9c] sm:$0xf]
      %v3357 = vld [vmem:[%s3329 + $0xa0] sm:$0xf]
      %v3358 = vld [vmem:[%s3329 + $0xa8] sm:$0xf]
      %v3359 = vld [vmem:[%s3329 + $0xac] sm:$0xf]
      %v3360 = vld [vmem:[%s3329 + $0xb4] sm:$0xf]
      %v3361 = vld [vmem:[%s3329 + $0xb8] sm:$0xf]
      %v3362 = vld [vmem:[%s1 + $0xc] sm:$0x3]
      %v3395 = vunpack.c.l.b16 %v3330
      %v3396 = vunpack.c.l.b16 %v3331
      %v3397 = vunpack.c.l.b16 %v3332
      %v3398 = vunpack.c.l.b16 %v3333
      %v3399 = vunpack.c.l.b16 %v3334
      %v3400 = vunpack.c.l.b16 %v3335
      %v3401 = vunpack.c.l.b16 %v3336
      %v3402 = vunpack.c.l.b16 %v3337
      %v3403 = vunpack.c.l.b16 %v3338
      %v3404 = vunpack.c.l.b16 %v3339
      %v3405 = vunpack.c.l.b16 %v3340
      %v3406 = vunpack.c.l.b16 %v3341
      %v3407 = vunpack.c.l.b16 %v3342
      %v3408 = vunpack.c.l.b16 %v3343
      %v3409 = vunpack.c.l.b16 %v3344
      %v3410 = vunpack.c.l.b16 %v3345
      %v3411 = vunpack.c.l.b16 %v3346
      %v3412 = vunpack.c.l.b16 %v3347
      %v3413 = vunpack.c.l.b16 %v3348
      %v3414 = vunpack.c.l.b16 %v3349
      %v3415 = vunpack.c.l.b16 %v3350
      %v3416 = vunpack.c.l.b16 %v3351
      %v3417 = vunpack.c.l.b16 %v3352
      %v3418 = vunpack.c.l.b16 %v3353
      %v3419 = vunpack.c.l.b16 %v3354
      %v3420 = vunpack.c.l.b16 %v3355
      %v3421 = vunpack.c.l.b16 %v3356
      %v3422 = vunpack.c.l.b16 %v3357
      %v3423 = vunpack.c.l.b16 %v3358
      %v3424 = vunpack.c.l.b16 %v3359
      %v3425 = vunpack.c.l.b16 %v3360
      %v3426 = vunpack.c.l.b16 %v3361
      %v3427 = vpack.c.b16 %v3396, %v3395
      %v3428 = vpack.c.b16 %v3398, %v3397
      %v3429 = vpack.c.b16 %v3400, %v3399
      %v3430 = vpack.c.b16 %v3402, %v3401
      %v3431 = vpack.c.b16 %v3404, %v3403
      %v3432 = vpack.c.b16 %v3406, %v3405
      %v3433 = vpack.c.b16 %v3408, %v3407
      %v3434 = vpack.c.b16 %v3410, %v3409
      %v3435 = vpack.c.b16 %v3412, %v3411
      %v3436 = vpack.c.b16 %v3414, %v3413
      %v3437 = vpack.c.b16 %v3416, %v3415
      %v3438 = vpack.c.b16 %v3418, %v3417
      %v3439 = vpack.c.b16 %v3420, %v3419
      %v3440 = vpack.c.b16 %v3422, %v3421
      %v3441 = vpack.c.b16 %v3424, %v3423
      %v3442 = vpack.c.b16 %v3426, %v3425
      %v3444 = vsel %vm1240, %v3427, 0
      %v3447 = vsel %vm1240, %v3428, 0
      %v3450 = vsel %vm1240, %v3429, 0
      %v3453 = vsel %vm1240, %v3430, 0
      %v3456 = vsel %vm1240, %v3431, 0
      %v3459 = vsel %vm1240, %v3432, 0
      %v3462 = vsel %vm1240, %v3433, 0
      %v3465 = vsel %vm1240, %v3434, 0
      %v3468 = vsel %vm1240, %v3435, 0
      %v3471 = vsel %vm1240, %v3436, 0
      %v3474 = vsel %vm1240, %v3437, 0
      %v3477 = vsel %vm1240, %v3438, 0
      %v3480 = vsel %vm1240, %v3439, 0
      %v3483 = vsel %vm1240, %v3440, 0
      %v3486 = vsel %vm1240, %v3441, 0
      %v3489 = vsel %vm1240, %v3442, 0
      %v3492 = vsel %vm1289, %v3362, 0
      %3494 = vmatpush.bf16.msra.mxu0 0
      %3495 = vmatpush.bf16.msra.mxu0 0
      %3496 = vmatpush.bf16.msra.mxu0 0
      %3497 = vmatpush.bf16.msra.mxu0 0
      %3498 = vmatpush.bf16.msra.mxu0 0
      %3499 = vmatpush.bf16.msra.mxu0 0
      %3500 = vmatpush.bf16.msra.mxu0 0
      %3501 = vmatpush.bf16.msra.mxu0 %v3492
      %3502 = vmatmul.bf16.gmra.mxu0 %v3444
      %v3503 = vpop.f32.mrf.mxu0
      %v3504 = vadd.f32 0.0, %v3503
      %v3505 = vpop.f32.mrf.mxu0
      %v3506 = vadd.f32 0.0, %v3505
      %3507 = vmatmul.bf16.gmra.mxu0 %v3447
      %v3508 = vpop.f32.mrf.mxu0
      %v3509 = vadd.f32 0.0, %v3508
      %v3510 = vpop.f32.mrf.mxu0
      %v3511 = vadd.f32 0.0, %v3510
      %3512 = vmatmul.bf16.gmra.mxu0 %v3450
      %v3513 = vpop.f32.mrf.mxu0
      %v3514 = vadd.f32 0.0, %v3513
      %v3515 = vpop.f32.mrf.mxu0
      %v3516 = vadd.f32 0.0, %v3515
      %3517 = vmatmul.bf16.gmra.mxu0 %v3453
      %v3518 = vpop.f32.mrf.mxu0
      %v3519 = vadd.f32 0.0, %v3518
      %v3520 = vpop.f32.mrf.mxu0
      %v3521 = vadd.f32 0.0, %v3520
      %3522 = vmatmul.bf16.gmra.mxu0 %v3456
      %v3523 = vpop.f32.mrf.mxu0
      %v3524 = vadd.f32 0.0, %v3523
      %v3525 = vpop.f32.mrf.mxu0
      %v3526 = vadd.f32 0.0, %v3525
      %3527 = vmatmul.bf16.gmra.mxu0 %v3459
      %v3528 = vpop.f32.mrf.mxu0
      %v3529 = vadd.f32 0.0, %v3528
      %v3530 = vpop.f32.mrf.mxu0
      %v3531 = vadd.f32 0.0, %v3530
      %3532 = vmatmul.bf16.gmra.mxu0 %v3462
      %v3533 = vpop.f32.mrf.mxu0
      %v3534 = vadd.f32 0.0, %v3533
      %v3535 = vpop.f32.mrf.mxu0
      %v3536 = vadd.f32 0.0, %v3535
      %3537 = vmatmul.bf16.gmra.mxu0 %v3465
      %v3538 = vpop.f32.mrf.mxu0
      %v3539 = vadd.f32 0.0, %v3538
      %v3540 = vpop.f32.mrf.mxu0
      %v3541 = vadd.f32 0.0, %v3540
      %3542 = vmatmul.bf16.gmra.mxu0 %v3468
      %v3543 = vpop.f32.mrf.mxu0
      %v3544 = vadd.f32 0.0, %v3543
      %v3545 = vpop.f32.mrf.mxu0
      %v3546 = vadd.f32 0.0, %v3545
      %3547 = vmatmul.bf16.gmra.mxu0 %v3471
      %v3548 = vpop.f32.mrf.mxu0
      %v3549 = vadd.f32 0.0, %v3548
      %v3550 = vpop.f32.mrf.mxu0
      %v3551 = vadd.f32 0.0, %v3550
      %3552 = vmatmul.bf16.gmra.mxu0 %v3474
      %v3553 = vpop.f32.mrf.mxu0
      %v3554 = vadd.f32 0.0, %v3553
      %v3555 = vpop.f32.mrf.mxu0
      %v3556 = vadd.f32 0.0, %v3555
      %3557 = vmatmul.bf16.gmra.mxu0 %v3477
      %v3558 = vpop.f32.mrf.mxu0
      %v3559 = vadd.f32 0.0, %v3558
      %v3560 = vpop.f32.mrf.mxu0
      %v3561 = vadd.f32 0.0, %v3560
      %3562 = vmatmul.bf16.gmra.mxu0 %v3480
      %v3563 = vpop.f32.mrf.mxu0
      %v3564 = vadd.f32 0.0, %v3563
      %v3565 = vpop.f32.mrf.mxu0
      %v3566 = vadd.f32 0.0, %v3565
      %3567 = vmatmul.bf16.gmra.mxu0 %v3483
      %v3568 = vpop.f32.mrf.mxu0
      %v3569 = vadd.f32 0.0, %v3568
      %v3570 = vpop.f32.mrf.mxu0
      %v3571 = vadd.f32 0.0, %v3570
      %3572 = vmatmul.bf16.gmra.mxu0 %v3486
      %v3573 = vpop.f32.mrf.mxu0
      %v3574 = vadd.f32 0.0, %v3573
      %v3575 = vpop.f32.mrf.mxu0
      %v3576 = vadd.f32 0.0, %v3575
      %3577 = vmatmul.bf16.gmra.mxu0 %v3489
      %v3578 = vpop.f32.mrf.mxu0
      %v3579 = vadd.f32 0.0, %v3578
      %v3580 = vpop.f32.mrf.mxu0
      %v3581 = vadd.f32 0.0, %v3580
      %3582 = vdwg.mxu0
      %v3583 = vadd.f32 %v3297, %v3504
      %v3584 = vadd.f32 %v3298, %v3506
      %v3585 = vadd.f32 %v3299, %v3509
      %v3586 = vadd.f32 %v3300, %v3511
      %v3587 = vadd.f32 %v3301, %v3514
      %v3588 = vadd.f32 %v3302, %v3516
      %v3589 = vadd.f32 %v3303, %v3519
      %v3590 = vadd.f32 %v3304, %v3521
      %v3591 = vadd.f32 %v3305, %v3524
      %v3592 = vadd.f32 %v3306, %v3526
      %v3593 = vadd.f32 %v3307, %v3529
      %v3594 = vadd.f32 %v3308, %v3531
      %v3595 = vadd.f32 %v3309, %v3534
      %v3596 = vadd.f32 %v3310, %v3536
      %v3597 = vadd.f32 %v3311, %v3539
      %v3598 = vadd.f32 %v3312, %v3541
      %v3599 = vadd.f32 %v3313, %v3544
      %v3600 = vadd.f32 %v3314, %v3546
      %v3601 = vadd.f32 %v3315, %v3549
      %v3602 = vadd.f32 %v3316, %v3551
      %v3603 = vadd.f32 %v3317, %v3554
      %v3604 = vadd.f32 %v3318, %v3556
      %v3605 = vadd.f32 %v3319, %v3559
      %v3606 = vadd.f32 %v3320, %v3561
      %v3607 = vadd.f32 %v3321, %v3564
      %v3608 = vadd.f32 %v3322, %v3566
      %v3609 = vadd.f32 %v3323, %v3569
      %v3610 = vadd.f32 %v3324, %v3571
      %v3611 = vadd.f32 %v3325, %v3574
      %v3612 = vadd.f32 %v3326, %v3576
      %v3613 = vadd.f32 %v3327, %v3579
      %v3614 = vadd.f32 %v3328, %v3581
      %v3615 = vld [vmem:[%s3329] sm:$0xf]
      %v3616 = vld [vmem:[%s3329 + $0x4] sm:$0xf]
      %v3617 = vld [vmem:[%s3329 + $0x8] sm:$0x1]
      %v3618 = vld [vmem:[%s3329 + $0xc] sm:$0xf]
      %v3619 = vld [vmem:[%s3329 + $0x10] sm:$0xf]
      %v3620 = vld [vmem:[%s3329 + $0x14] sm:$0x1]
      %v3621 = vld [vmem:[%s3329 + $0x18] sm:$0xf]
      %v3622 = vld [vmem:[%s3329 + $0x1c] sm:$0xf]
      %v3623 = vld [vmem:[%s3329 + $0x20] sm:$0x1]
      %v3624 = vld [vmem:[%s3329 + $0x24] sm:$0xf]
      %v3625 = vld [vmem:[%s3329 + $0x28] sm:$0xf]
      %v3626 = vld [vmem:[%s3329 + $0x2c] sm:$0x1]
      %v3627 = vld [vmem:[%s3329 + $0x30] sm:$0xf]
      %v3628 = vld [vmem:[%s3329 + $0x34] sm:$0xf]
      %v3629 = vld [vmem:[%s3329 + $0x38] sm:$0x1]
      %v3630 = vld [vmem:[%s3329 + $0x3c] sm:$0xf]
      %v3631 = vld [vmem:[%s3329 + $0x40] sm:$0xf]
      %v3632 = vld [vmem:[%s3329 + $0x44] sm:$0x1]
      %v3633 = vld [vmem:[%s3329 + $0x48] sm:$0xf]
      %v3634 = vld [vmem:[%s3329 + $0x4c] sm:$0xf]
      %v3635 = vld [vmem:[%s3329 + $0x50] sm:$0x1]
      %v3636 = vld [vmem:[%s3329 + $0x54] sm:$0xf]
      %v3637 = vld [vmem:[%s3329 + $0x58] sm:$0xf]
      %v3638 = vld [vmem:[%s3329 + $0x5c] sm:$0x1]
      %v3639 = vld [vmem:[%s3329 + $0x60] sm:$0xf]
      %v3640 = vld [vmem:[%s3329 + $0x64] sm:$0xf]
      %v3641 = vld [vmem:[%s3329 + $0x68] sm:$0x1]
      %v3642 = vld [vmem:[%s3329 + $0x6c] sm:$0xf]
      %v3643 = vld [vmem:[%s3329 + $0x70] sm:$0xf]
      %v3644 = vld [vmem:[%s3329 + $0x74] sm:$0x1]
      %v3645 = vld [vmem:[%s3329 + $0x78] sm:$0xf]
      %v3646 = vld [vmem:[%s3329 + $0x7c] sm:$0xf]
      %v3647 = vld [vmem:[%s3329 + $0x80] sm:$0x1]
      %v3648 = vld [vmem:[%s3329 + $0x84] sm:$0xf]
      %v3649 = vld [vmem:[%s3329 + $0x88] sm:$0xf]
      %v3650 = vld [vmem:[%s3329 + $0x8c] sm:$0x1]
      %v3651 = vld [vmem:[%s3329 + $0x90] sm:$0xf]
      %v3652 = vld [vmem:[%s3329 + $0x94] sm:$0xf]
      %v3653 = vld [vmem:[%s3329 + $0x98] sm:$0x1]
      %v3654 = vld [vmem:[%s3329 + $0x9c] sm:$0xf]
      %v3655 = vld [vmem:[%s3329 + $0xa0] sm:$0xf]
      %v3656 = vld [vmem:[%s3329 + $0xa4] sm:$0x1]
      %v3657 = vld [vmem:[%s3329 + $0xa8] sm:$0xf]
      %v3658 = vld [vmem:[%s3329 + $0xac] sm:$0xf]
      %v3659 = vld [vmem:[%s3329 + $0xb0] sm:$0x1]
      %v3660 = vld [vmem:[%s3329 + $0xb4] sm:$0xf]
      %v3661 = vld [vmem:[%s3329 + $0xb8] sm:$0xf]
      %v3662 = vld [vmem:[%s3329 + $0xbc] sm:$0x1]
      %v3664 = vshrl.u32 %v3615, 16
      %v3666 = vrot.slane %v3664, 4
      %v3667 = vshll.u32 %v3615, 16
      %v3669 = vrot.slane %v3667, 5
      %v3670 = vor.u32 %v3666, %v3669
      %v3671 = vrot.slane %v3670, 4
      %v3673 = vshll.u32 %v3616, 16
      %v3675 = vrot.slane %v3673, 5
      %v3676 = vsel %vm802, %v3671, %v3675
      %v3677 = vshrl.u32 %v3616, 16
      %v3679 = vrot.slane %v3677, 4
      %v3680 = vor.u32 %v3679, %v3675
      %v3681 = vrot.slane %v3680, 4
      %v3683 = vshll.u32 %v3617, 16
      %v3685 = vrot.slane %v3683, 5
      %v3686 = vsel %vm802, %v3681, %v3685
      %v3688 = vshrl.u32 %v3618, 16
      %v3690 = vrot.slane %v3688, 4
      %v3691 = vshll.u32 %v3618, 16
      %v3693 = vrot.slane %v3691, 5
      %v3694 = vor.u32 %v3690, %v3693
      %v3695 = vrot.slane %v3694, 4
      %v3697 = vshll.u32 %v3619, 16
      %v3699 = vrot.slane %v3697, 5
      %v3700 = vsel %vm802, %v3695, %v3699
      %v3701 = vshrl.u32 %v3619, 16
      %v3703 = vrot.slane %v3701, 4
      %v3704 = vor.u32 %v3703, %v3699
      %v3705 = vrot.slane %v3704, 4
      %v3707 = vshll.u32 %v3620, 16
      %v3709 = vrot.slane %v3707, 5
      %v3710 = vsel %vm802, %v3705, %v3709
      %v3712 = vshrl.u32 %v3621, 16
      %v3714 = vrot.slane %v3712, 4
      %v3715 = vshll.u32 %v3621, 16
      %v3717 = vrot.slane %v3715, 5
      %v3718 = vor.u32 %v3714, %v3717
      %v3719 = vrot.slane %v3718, 4
      %v3721 = vshll.u32 %v3622, 16
      %v3723 = vrot.slane %v3721, 5
      %v3724 = vsel %vm802, %v3719, %v3723
      %v3725 = vshrl.u32 %v3622, 16
      %v3727 = vrot.slane %v3725, 4
      %v3728 = vor.u32 %v3727, %v3723
      %v3729 = vrot.slane %v3728, 4
      %v3731 = vshll.u32 %v3623, 16
      %v3733 = vrot.slane %v3731, 5
      %v3734 = vsel %vm802, %v3729, %v3733
      %v3736 = vshrl.u32 %v3624, 16
      %v3738 = vrot.slane %v3736, 4
      %v3739 = vshll.u32 %v3624, 16
      %v3741 = vrot.slane %v3739, 5
      %v3742 = vor.u32 %v3738, %v3741
      %v3743 = vrot.slane %v3742, 4
      %v3745 = vshll.u32 %v3625, 16
      %v3747 = vrot.slane %v3745, 5
      %v3748 = vsel %vm802, %v3743, %v3747
      %v3749 = vshrl.u32 %v3625, 16
      %v3751 = vrot.slane %v3749, 4
      %v3752 = vor.u32 %v3751, %v3747
      %v3753 = vrot.slane %v3752, 4
      %v3755 = vshll.u32 %v3626, 16
      %v3757 = vrot.slane %v3755, 5
      %v3758 = vsel %vm802, %v3753, %v3757
      %v3760 = vshrl.u32 %v3627, 16
      %v3762 = vrot.slane %v3760, 4
      %v3763 = vshll.u32 %v3627, 16
      %v3765 = vrot.slane %v3763, 5
      %v3766 = vor.u32 %v3762, %v3765
      %v3767 = vrot.slane %v3766, 4
      %v3769 = vshll.u32 %v3628, 16
      %v3771 = vrot.slane %v3769, 5
      %v3772 = vsel %vm802, %v3767, %v3771
      %v3773 = vshrl.u32 %v3628, 16
      %v3775 = vrot.slane %v3773, 4
      %v3776 = vor.u32 %v3775, %v3771
      %v3777 = vrot.slane %v3776, 4
      %v3779 = vshll.u32 %v3629, 16
      %v3781 = vrot.slane %v3779, 5
      %v3782 = vsel %vm802, %v3777, %v3781
      %v3784 = vshrl.u32 %v3630, 16
      %v3786 = vrot.slane %v3784, 4
      %v3787 = vshll.u32 %v3630, 16
      %v3789 = vrot.slane %v3787, 5
      %v3790 = vor.u32 %v3786, %v3789
      %v3791 = vrot.slane %v3790, 4
      %v3793 = vshll.u32 %v3631, 16
      %v3795 = vrot.slane %v3793, 5
      %v3796 = vsel %vm802, %v3791, %v3795
      %v3797 = vshrl.u32 %v3631, 16
      %v3799 = vrot.slane %v3797, 4
      %v3800 = vor.u32 %v3799, %v3795
      %v3801 = vrot.slane %v3800, 4
      %v3803 = vshll.u32 %v3632, 16
      %v3805 = vrot.slane %v3803, 5
      %v3806 = vsel %vm802, %v3801, %v3805
      %v3808 = vshrl.u32 %v3633, 16
      %v3810 = vrot.slane %v3808, 4
      %v3811 = vshll.u32 %v3633, 16
      %v3813 = vrot.slane %v3811, 5
      %v3814 = vor.u32 %v3810, %v3813
      %v3815 = vrot.slane %v3814, 4
      %v3817 = vshll.u32 %v3634, 16
      %v3819 = vrot.slane %v3817, 5
      %v3820 = vsel %vm802, %v3815, %v3819
      %v3821 = vshrl.u32 %v3634, 16
      %v3823 = vrot.slane %v3821, 4
      %v3824 = vor.u32 %v3823, %v3819
      %v3825 = vrot.slane %v3824, 4
      %v3827 = vshll.u32 %v3635, 16
      %v3829 = vrot.slane %v3827, 5
      %v3830 = vsel %vm802, %v3825, %v3829
      %v3832 = vshrl.u32 %v3636, 16
      %v3834 = vrot.slane %v3832, 4
      %v3835 = vshll.u32 %v3636, 16
      %v3837 = vrot.slane %v3835, 5
      %v3838 = vor.u32 %v3834, %v3837
      %v3839 = vrot.slane %v3838, 4
      %v3841 = vshll.u32 %v3637, 16
      %v3843 = vrot.slane %v3841, 5
      %v3844 = vsel %vm802, %v3839, %v3843
      %v3845 = vshrl.u32 %v3637, 16
      %v3847 = vrot.slane %v3845, 4
      %v3848 = vor.u32 %v3847, %v3843
      %v3849 = vrot.slane %v3848, 4
      %v3851 = vshll.u32 %v3638, 16
      %v3853 = vrot.slane %v3851, 5
      %v3854 = vsel %vm802, %v3849, %v3853
      %v3856 = vshrl.u32 %v3639, 16
      %v3858 = vrot.slane %v3856, 4
      %v3859 = vshll.u32 %v3639, 16
      %v3861 = vrot.slane %v3859, 5
      %v3862 = vor.u32 %v3858, %v3861
      %v3863 = vrot.slane %v3862, 4
      %v3865 = vshll.u32 %v3640, 16
      %v3867 = vrot.slane %v3865, 5
      %v3868 = vsel %vm802, %v3863, %v3867
      %v3869 = vshrl.u32 %v3640, 16
      %v3871 = vrot.slane %v3869, 4
      %v3872 = vor.u32 %v3871, %v3867
      %v3873 = vrot.slane %v3872, 4
      %v3875 = vshll.u32 %v3641, 16
      %v3877 = vrot.slane %v3875, 5
      %v3878 = vsel %vm802, %v3873, %v3877
      %v3880 = vshrl.u32 %v3642, 16
      %v3882 = vrot.slane %v3880, 4
      %v3883 = vshll.u32 %v3642, 16
      %v3885 = vrot.slane %v3883, 5
      %v3886 = vor.u32 %v3882, %v3885
      %v3887 = vrot.slane %v3886, 4
      %v3889 = vshll.u32 %v3643, 16
      %v3891 = vrot.slane %v3889, 5
      %v3892 = vsel %vm802, %v3887, %v3891
      %v3893 = vshrl.u32 %v3643, 16
      %v3895 = vrot.slane %v3893, 4
      %v3896 = vor.u32 %v3895, %v3891
      %v3897 = vrot.slane %v3896, 4
      %v3899 = vshll.u32 %v3644, 16
      %v3901 = vrot.slane %v3899, 5
      %v3902 = vsel %vm802, %v3897, %v3901
      %v3904 = vshrl.u32 %v3645, 16
      %v3906 = vrot.slane %v3904, 4
      %v3907 = vshll.u32 %v3645, 16
      %v3909 = vrot.slane %v3907, 5
      %v3910 = vor.u32 %v3906, %v3909
      %v3911 = vrot.slane %v3910, 4
      %v3913 = vshll.u32 %v3646, 16
      %v3915 = vrot.slane %v3913, 5
      %v3916 = vsel %vm802, %v3911, %v3915
      %v3917 = vshrl.u32 %v3646, 16
      %v3919 = vrot.slane %v3917, 4
      %v3920 = vor.u32 %v3919, %v3915
      %v3921 = vrot.slane %v3920, 4
      %v3923 = vshll.u32 %v3647, 16
      %v3925 = vrot.slane %v3923, 5
      %v3926 = vsel %vm802, %v3921, %v3925
      %v3928 = vshrl.u32 %v3648, 16
      %v3930 = vrot.slane %v3928, 4
      %v3931 = vshll.u32 %v3648, 16
      %v3933 = vrot.slane %v3931, 5
      %v3934 = vor.u32 %v3930, %v3933
      %v3935 = vrot.slane %v3934, 4
      %v3937 = vshll.u32 %v3649, 16
      %v3939 = vrot.slane %v3937, 5
      %v3940 = vsel %vm802, %v3935, %v3939
      %v3941 = vshrl.u32 %v3649, 16
      %v3943 = vrot.slane %v3941, 4
      %v3944 = vor.u32 %v3943, %v3939
      %v3945 = vrot.slane %v3944, 4
      %v3947 = vshll.u32 %v3650, 16
      %v3949 = vrot.slane %v3947, 5
      %v3950 = vsel %vm802, %v3945, %v3949
      %v3952 = vshrl.u32 %v3651, 16
      %v3954 = vrot.slane %v3952, 4
      %v3955 = vshll.u32 %v3651, 16
      %v3957 = vrot.slane %v3955, 5
      %v3958 = vor.u32 %v3954, %v3957
      %v3959 = vrot.slane %v3958, 4
      %v3961 = vshll.u32 %v3652, 16
      %v3963 = vrot.slane %v3961, 5
      %v3964 = vsel %vm802, %v3959, %v3963
      %v3965 = vshrl.u32 %v3652, 16
      %v3967 = vrot.slane %v3965, 4
      %v3968 = vor.u32 %v3967, %v3963
      %v3969 = vrot.slane %v3968, 4
      %v3971 = vshll.u32 %v3653, 16
      %v3973 = vrot.slane %v3971, 5
      %v3974 = vsel %vm802, %v3969, %v3973
      %v3976 = vshrl.u32 %v3654, 16
      %v3978 = vrot.slane %v3976, 4
      %v3979 = vshll.u32 %v3654, 16
      %v3981 = vrot.slane %v3979, 5
      %v3982 = vor.u32 %v3978, %v3981
      %v3983 = vrot.slane %v3982, 4
      %v3985 = vshll.u32 %v3655, 16
      %v3987 = vrot.slane %v3985, 5
      %v3988 = vsel %vm802, %v3983, %v3987
      %v3989 = vshrl.u32 %v3655, 16
      %v3991 = vrot.slane %v3989, 4
      %v3992 = vor.u32 %v3991, %v3987
      %v3993 = vrot.slane %v3992, 4
      %v3995 = vshll.u32 %v3656, 16
      %v3997 = vrot.slane %v3995, 5
      %v3998 = vsel %vm802, %v3993, %v3997
      %v4000 = vshrl.u32 %v3657, 16
      %v4002 = vrot.slane %v4000, 4
      %v4003 = vshll.u32 %v3657, 16
      %v4005 = vrot.slane %v4003, 5
      %v4006 = vor.u32 %v4002, %v4005
      %v4007 = vrot.slane %v4006, 4
      %v4009 = vshll.u32 %v3658, 16
      %v4011 = vrot.slane %v4009, 5
      %v4012 = vsel %vm802, %v4007, %v4011
      %v4013 = vshrl.u32 %v3658, 16
      %v4015 = vrot.slane %v4013, 4
      %v4016 = vor.u32 %v4015, %v4011
      %v4017 = vrot.slane %v4016, 4
      %v4019 = vshll.u32 %v3659, 16
      %v4021 = vrot.slane %v4019, 5
      %v4022 = vsel %vm802, %v4017, %v4021
      %v4024 = vshrl.u32 %v3660, 16
      %v4026 = vrot.slane %v4024, 4
      %v4027 = vshll.u32 %v3660, 16
      %v4029 = vrot.slane %v4027, 5
      %v4030 = vor.u32 %v4026, %v4029
      %v4031 = vrot.slane %v4030, 4
      %v4033 = vshll.u32 %v3661, 16
      %v4035 = vrot.slane %v4033, 5
      %v4036 = vsel %vm802, %v4031, %v4035
      %v4037 = vshrl.u32 %v3661, 16
      %v4039 = vrot.slane %v4037, 4
      %v4040 = vor.u32 %v4039, %v4035
      %v4041 = vrot.slane %v4040, 4
      %v4043 = vshll.u32 %v3662, 16
      %v4045 = vrot.slane %v4043, 5
      %v4046 = vsel %vm802, %v4041, %v4045
      %v4047 = vld [vmem:[%s1 + $0xc] sm:$0xc]
      %v4048 = vunpack.c.l.b16 %v3676
      %v4049 = vunpack.c.l.b16 %v3686
      %v4050 = vunpack.c.l.b16 %v3700
      %v4051 = vunpack.c.l.b16 %v3710
      %v4052 = vunpack.c.l.b16 %v3724
      %v4053 = vunpack.c.l.b16 %v3734
      %v4054 = vunpack.c.l.b16 %v3748
      %v4055 = vunpack.c.l.b16 %v3758
      %v4056 = vunpack.c.l.b16 %v3772
      %v4057 = vunpack.c.l.b16 %v3782
      %v4058 = vunpack.c.l.b16 %v3796
      %v4059 = vunpack.c.l.b16 %v3806
      %v4060 = vunpack.c.l.b16 %v3820
      %v4061 = vunpack.c.l.b16 %v3830
      %v4062 = vunpack.c.l.b16 %v3844
      %v4063 = vunpack.c.l.b16 %v3854
      %v4064 = vunpack.c.l.b16 %v3868
      %v4065 = vunpack.c.l.b16 %v3878
      %v4066 = vunpack.c.l.b16 %v3892
      %v4067 = vunpack.c.l.b16 %v3902
      %v4068 = vunpack.c.l.b16 %v3916
      %v4069 = vunpack.c.l.b16 %v3926
      %v4070 = vunpack.c.l.b16 %v3940
      %v4071 = vunpack.c.l.b16 %v3950
      %v4072 = vunpack.c.l.b16 %v3964
      %v4073 = vunpack.c.l.b16 %v3974
      %v4074 = vunpack.c.l.b16 %v3988
      %v4075 = vunpack.c.l.b16 %v3998
      %v4076 = vunpack.c.l.b16 %v4012
      %v4077 = vunpack.c.l.b16 %v4022
      %v4078 = vunpack.c.l.b16 %v4036
      %v4079 = vunpack.c.l.b16 %v4046
      %v4080 = vpack.c.b16 %v4049, %v4048
      %v4081 = vpack.c.b16 %v4051, %v4050
      %v4082 = vpack.c.b16 %v4053, %v4052
      %v4083 = vpack.c.b16 %v4055, %v4054
      %v4084 = vpack.c.b16 %v4057, %v4056
      %v4085 = vpack.c.b16 %v4059, %v4058
      %v4086 = vpack.c.b16 %v4061, %v4060
      %v4087 = vpack.c.b16 %v4063, %v4062
      %v4088 = vpack.c.b16 %v4065, %v4064
      %v4089 = vpack.c.b16 %v4067, %v4066
      %v4090 = vpack.c.b16 %v4069, %v4068
      %v4091 = vpack.c.b16 %v4071, %v4070
      %v4092 = vpack.c.b16 %v4073, %v4072
      %v4093 = vpack.c.b16 %v4075, %v4074
      %v4094 = vpack.c.b16 %v4077, %v4076
      %v4095 = vpack.c.b16 %v4079, %v4078
      %v4097 = vunpack.c.l.b16 %v4047
      %v4098 = vpack.c.b16 %v4097, %v4097
      %v4099 = vrot.slane %v4098, 2
      %v4101 = vsel %vm1240, %v4080, 0
      %v4104 = vsel %vm1240, %v4081, 0
      %v4107 = vsel %vm1240, %v4082, 0
      %v4110 = vsel %vm1240, %v4083, 0
      %v4113 = vsel %vm1240, %v4084, 0
      %v4116 = vsel %vm1240, %v4085, 0
      %v4119 = vsel %vm1240, %v4086, 0
      %v4122 = vsel %vm1240, %v4087, 0
      %v4125 = vsel %vm1240, %v4088, 0
      %v4128 = vsel %vm1240, %v4089, 0
      %v4131 = vsel %vm1240, %v4090, 0
      %v4134 = vsel %vm1240, %v4091, 0
      %v4137 = vsel %vm1240, %v4092, 0
      %v4140 = vsel %vm1240, %v4093, 0
      %v4143 = vsel %vm1240, %v4094, 0
      %v4146 = vsel %vm1240, %v4095, 0
      %v4149 = vsel %vm1289, %v4099, 0
      %4151 = vmatpush.bf16.msra.mxu0 0
      %4152 = vmatpush.bf16.msra.mxu0 0
      %4153 = vmatpush.bf16.msra.mxu0 0
      %4154 = vmatpush.bf16.msra.mxu0 0
      %4155 = vmatpush.bf16.msra.mxu0 0
      %4156 = vmatpush.bf16.msra.mxu0 0
      %4157 = vmatpush.bf16.msra.mxu0 0
      %4158 = vmatpush.bf16.msra.mxu0 %v4149
      %4159 = vmatmul.bf16.gmra.mxu0 %v4101
      %v4160 = vpop.f32.mrf.mxu0
      %v4161 = vadd.f32 0.0, %v4160
      %v4162 = vpop.f32.mrf.mxu0
      %v4163 = vadd.f32 0.0, %v4162
      %4164 = vmatmul.bf16.gmra.mxu0 %v4104
      %v4165 = vpop.f32.mrf.mxu0
      %v4166 = vadd.f32 0.0, %v4165
      %v4167 = vpop.f32.mrf.mxu0
      %v4168 = vadd.f32 0.0, %v4167
      %4169 = vmatmul.bf16.gmra.mxu0 %v4107
      %v4170 = vpop.f32.mrf.mxu0
      %v4171 = vadd.f32 0.0, %v4170
      %v4172 = vpop.f32.mrf.mxu0
      %v4173 = vadd.f32 0.0, %v4172
      %4174 = vmatmul.bf16.gmra.mxu0 %v4110
      %v4175 = vpop.f32.mrf.mxu0
      %v4176 = vadd.f32 0.0, %v4175
      %v4177 = vpop.f32.mrf.mxu0
      %v4178 = vadd.f32 0.0, %v4177
      %4179 = vmatmul.bf16.gmra.mxu0 %v4113
      %v4180 = vpop.f32.mrf.mxu0
      %v4181 = vadd.f32 0.0, %v4180
      %v4182 = vpop.f32.mrf.mxu0
      %v4183 = vadd.f32 0.0, %v4182
      %4184 = vmatmul.bf16.gmra.mxu0 %v4116
      %v4185 = vpop.f32.mrf.mxu0
      %v4186 = vadd.f32 0.0, %v4185
      %v4187 = vpop.f32.mrf.mxu0
      %v4188 = vadd.f32 0.0, %v4187
      %4189 = vmatmul.bf16.gmra.mxu0 %v4119
      %v4190 = vpop.f32.mrf.mxu0
      %v4191 = vadd.f32 0.0, %v4190
      %v4192 = vpop.f32.mrf.mxu0
      %v4193 = vadd.f32 0.0, %v4192
      %4194 = vmatmul.bf16.gmra.mxu0 %v4122
      %v4195 = vpop.f32.mrf.mxu0
      %v4196 = vadd.f32 0.0, %v4195
      %v4197 = vpop.f32.mrf.mxu0
      %v4198 = vadd.f32 0.0, %v4197
      %4199 = vmatmul.bf16.gmra.mxu0 %v4125
      %v4200 = vpop.f32.mrf.mxu0
      %v4201 = vadd.f32 0.0, %v4200
      %v4202 = vpop.f32.mrf.mxu0
      %v4203 = vadd.f32 0.0, %v4202
      %4204 = vmatmul.bf16.gmra.mxu0 %v4128
      %v4205 = vpop.f32.mrf.mxu0
      %v4206 = vadd.f32 0.0, %v4205
      %v4207 = vpop.f32.mrf.mxu0
      %v4208 = vadd.f32 0.0, %v4207
      %4209 = vmatmul.bf16.gmra.mxu0 %v4131
      %v4210 = vpop.f32.mrf.mxu0
      %v4211 = vadd.f32 0.0, %v4210
      %v4212 = vpop.f32.mrf.mxu0
      %v4213 = vadd.f32 0.0, %v4212
      %4214 = vmatmul.bf16.gmra.mxu0 %v4134
      %v4215 = vpop.f32.mrf.mxu0
      %v4216 = vadd.f32 0.0, %v4215
      %v4217 = vpop.f32.mrf.mxu0
      %v4218 = vadd.f32 0.0, %v4217
      %4219 = vmatmul.bf16.gmra.mxu0 %v4137
      %v4220 = vpop.f32.mrf.mxu0
      %v4221 = vadd.f32 0.0, %v4220
      %v4222 = vpop.f32.mrf.mxu0
      %v4223 = vadd.f32 0.0, %v4222
      %4224 = vmatmul.bf16.gmra.mxu0 %v4140
      %v4225 = vpop.f32.mrf.mxu0
      %v4226 = vadd.f32 0.0, %v4225
      %v4227 = vpop.f32.mrf.mxu0
      %v4228 = vadd.f32 0.0, %v4227
      %4229 = vmatmul.bf16.gmra.mxu0 %v4143
      %v4230 = vpop.f32.mrf.mxu0
      %v4231 = vadd.f32 0.0, %v4230
      %v4232 = vpop.f32.mrf.mxu0
      %v4233 = vadd.f32 0.0, %v4232
      %4234 = vmatmul.bf16.gmra.mxu0 %v4146
      %v4235 = vpop.f32.mrf.mxu0
      %v4236 = vadd.f32 0.0, %v4235
      %v4237 = vpop.f32.mrf.mxu0
      %v4238 = vadd.f32 0.0, %v4237
      %4239 = vdwg.mxu0
      %v4240 = vadd.f32 %v3583, %v4161
      %v4241 = vadd.f32 %v3584, %v4163
      %v4242 = vadd.f32 %v3585, %v4166
      %v4243 = vadd.f32 %v3586, %v4168
      %v4244 = vadd.f32 %v3587, %v4171
      %v4245 = vadd.f32 %v3588, %v4173
      %v4246 = vadd.f32 %v3589, %v4176
      %v4247 = vadd.f32 %v3590, %v4178
      %v4248 = vadd.f32 %v3591, %v4181
      %v4249 = vadd.f32 %v3592, %v4183
      %v4250 = vadd.f32 %v3593, %v4186
      %v4251 = vadd.f32 %v3594, %v4188
      %v4252 = vadd.f32 %v3595, %v4191
      %v4253 = vadd.f32 %v3596, %v4193
      %v4254 = vadd.f32 %v3597, %v4196
      %v4255 = vadd.f32 %v3598, %v4198
      %v4256 = vadd.f32 %v3599, %v4201
      %v4257 = vadd.f32 %v3600, %v4203
      %v4258 = vadd.f32 %v3601, %v4206
      %v4259 = vadd.f32 %v3602, %v4208
      %v4260 = vadd.f32 %v3603, %v4211
      %v4261 = vadd.f32 %v3604, %v4213
      %v4262 = vadd.f32 %v3605, %v4216
      %v4263 = vadd.f32 %v3606, %v4218
      %v4264 = vadd.f32 %v3607, %v4221
      %v4265 = vadd.f32 %v3608, %v4223
      %v4266 = vadd.f32 %v3609, %v4226
      %v4267 = vadd.f32 %v3610, %v4228
      %v4268 = vadd.f32 %v3611, %v4231
      %v4269 = vadd.f32 %v3612, %v4233
      %v4270 = vadd.f32 %v3613, %v4236
      %v4271 = vadd.f32 %v3614, %v4238
      %v4272 = vld [vmem:[%s3329] sm:$0xe]
      %v4273 = vld [vmem:[%s3329 + $0xc] sm:$0xe]
      %v4274 = vld [vmem:[%s3329 + $0x18] sm:$0xe]
      %v4275 = vld [vmem:[%s3329 + $0x24] sm:$0xe]
      %v4276 = vld [vmem:[%s3329 + $0x30] sm:$0xe]
      %v4277 = vld [vmem:[%s3329 + $0x3c] sm:$0xe]
      %v4278 = vld [vmem:[%s3329 + $0x48] sm:$0xe]
      %v4279 = vld [vmem:[%s3329 + $0x54] sm:$0xe]
      %v4280 = vld [vmem:[%s3329 + $0x60] sm:$0xe]
      %v4281 = vld [vmem:[%s3329 + $0x6c] sm:$0xe]
      %v4282 = vld [vmem:[%s3329 + $0x78] sm:$0xe]
      %v4283 = vld [vmem:[%s3329 + $0x84] sm:$0xe]
      %v4284 = vld [vmem:[%s3329 + $0x90] sm:$0xe]
      %v4285 = vld [vmem:[%s3329 + $0x9c] sm:$0xe]
      %v4286 = vld [vmem:[%s3329 + $0xa8] sm:$0xe]
      %v4287 = vld [vmem:[%s3329 + $0xb4] sm:$0xe]
      %v4336 = vrot.slane %v4272, 5
      %v4337 = vrot.slane %v4336, 4
      %v4338 = vrot.slane %v3616, 5
      %v4339 = vsel %vm1652, %v4337, %v4338
      %v4340 = vrot.slane %v4338, 4
      %v4341 = vrot.slane %v3617, 5
      %v4342 = vsel %vm1652, %v4340, %v4341
      %v4343 = vrot.slane %v4273, 5
      %v4344 = vrot.slane %v4343, 4
      %v4345 = vrot.slane %v3619, 5
      %v4346 = vsel %vm1652, %v4344, %v4345
      %v4347 = vrot.slane %v4345, 4
      %v4348 = vrot.slane %v3620, 5
      %v4349 = vsel %vm1652, %v4347, %v4348
      %v4350 = vrot.slane %v4274, 5
      %v4351 = vrot.slane %v4350, 4
      %v4352 = vrot.slane %v3622, 5
      %v4353 = vsel %vm1652, %v4351, %v4352
      %v4354 = vrot.slane %v4352, 4
      %v4355 = vrot.slane %v3623, 5
      %v4356 = vsel %vm1652, %v4354, %v4355
      %v4357 = vrot.slane %v4275, 5
      %v4358 = vrot.slane %v4357, 4
      %v4359 = vrot.slane %v3625, 5
      %v4360 = vsel %vm1652, %v4358, %v4359
      %v4361 = vrot.slane %v4359, 4
      %v4362 = vrot.slane %v3626, 5
      %v4363 = vsel %vm1652, %v4361, %v4362
      %v4364 = vrot.slane %v4276, 5
      %v4365 = vrot.slane %v4364, 4
      %v4366 = vrot.slane %v3628, 5
      %v4367 = vsel %vm1652, %v4365, %v4366
      %v4368 = vrot.slane %v4366, 4
      %v4369 = vrot.slane %v3629, 5
      %v4370 = vsel %vm1652, %v4368, %v4369
      %v4371 = vrot.slane %v4277, 5
      %v4372 = vrot.slane %v4371, 4
      %v4373 = vrot.slane %v3631, 5
      %v4374 = vsel %vm1652, %v4372, %v4373
      %v4375 = vrot.slane %v4373, 4
      %v4376 = vrot.slane %v3632, 5
      %v4377 = vsel %vm1652, %v4375, %v4376
      %v4378 = vrot.slane %v4278, 5
      %v4379 = vrot.slane %v4378, 4
      %v4380 = vrot.slane %v3634, 5
      %v4381 = vsel %vm1652, %v4379, %v4380
      %v4382 = vrot.slane %v4380, 4
      %v4383 = vrot.slane %v3635, 5
      %v4384 = vsel %vm1652, %v4382, %v4383
      %v4385 = vrot.slane %v4279, 5
      %v4386 = vrot.slane %v4385, 4
      %v4387 = vrot.slane %v3637, 5
      %v4388 = vsel %vm1652, %v4386, %v4387
      %v4389 = vrot.slane %v4387, 4
      %v4390 = vrot.slane %v3638, 5
      %v4391 = vsel %vm1652, %v4389, %v4390
      %v4392 = vrot.slane %v4280, 5
      %v4393 = vrot.slane %v4392, 4
      %v4394 = vrot.slane %v3640, 5
      %v4395 = vsel %vm1652, %v4393, %v4394
      %v4396 = vrot.slane %v4394, 4
      %v4397 = vrot.slane %v3641, 5
      %v4398 = vsel %vm1652, %v4396, %v4397
      %v4399 = vrot.slane %v4281, 5
      %v4400 = vrot.slane %v4399, 4
      %v4401 = vrot.slane %v3643, 5
      %v4402 = vsel %vm1652, %v4400, %v4401
      %v4403 = vrot.slane %v4401, 4
      %v4404 = vrot.slane %v3644, 5
      %v4405 = vsel %vm1652, %v4403, %v4404
      %v4406 = vrot.slane %v4282, 5
      %v4407 = vrot.slane %v4406, 4
      %v4408 = vrot.slane %v3646, 5
      %v4409 = vsel %vm1652, %v4407, %v4408
      %v4410 = vrot.slane %v4408, 4
      %v4411 = vrot.slane %v3647, 5
      %v4412 = vsel %vm1652, %v4410, %v4411
      %v4413 = vrot.slane %v4283, 5
      %v4414 = vrot.slane %v4413, 4
      %v4415 = vrot.slane %v3649, 5
      %v4416 = vsel %vm1652, %v4414, %v4415
      %v4417 = vrot.slane %v4415, 4
      %v4418 = vrot.slane %v3650, 5
      %v4419 = vsel %vm1652, %v4417, %v4418
      %v4420 = vrot.slane %v4284, 5
      %v4421 = vrot.slane %v4420, 4
      %v4422 = vrot.slane %v3652, 5
      %v4423 = vsel %vm1652, %v4421, %v4422
      %v4424 = vrot.slane %v4422, 4
      %v4425 = vrot.slane %v3653, 5
      %v4426 = vsel %vm1652, %v4424, %v4425
      %v4427 = vrot.slane %v4285, 5
      %v4428 = vrot.slane %v4427, 4
      %v4429 = vrot.slane %v3655, 5
      %v4430 = vsel %vm1652, %v4428, %v4429
      %v4431 = vrot.slane %v4429, 4
      %v4432 = vrot.slane %v3656, 5
      %v4433 = vsel %vm1652, %v4431, %v4432
      %v4434 = vrot.slane %v4286, 5
      %v4435 = vrot.slane %v4434, 4
      %v4436 = vrot.slane %v3658, 5
      %v4437 = vsel %vm1652, %v4435, %v4436
      %v4438 = vrot.slane %v4436, 4
      %v4439 = vrot.slane %v3659, 5
      %v4440 = vsel %vm1652, %v4438, %v4439
      %v4441 = vrot.slane %v4287, 5
      %v4442 = vrot.slane %v4441, 4
      %v4443 = vrot.slane %v3661, 5
      %v4444 = vsel %vm1652, %v4442, %v4443
      %v4445 = vrot.slane %v4443, 4
      %v4446 = vrot.slane %v3662, 5
      %v4447 = vsel %vm1652, %v4445, %v4446
      %v4448 = vld [vmem:[%s1 + $0x10] sm:$0x3]
      %v4449 = vunpack.c.l.b16 %v4339
      %v4450 = vunpack.c.l.b16 %v4342
      %v4451 = vunpack.c.l.b16 %v4346
      %v4452 = vunpack.c.l.b16 %v4349
      %v4453 = vunpack.c.l.b16 %v4353
      %v4454 = vunpack.c.l.b16 %v4356
      %v4455 = vunpack.c.l.b16 %v4360
      %v4456 = vunpack.c.l.b16 %v4363
      %v4457 = vunpack.c.l.b16 %v4367
      %v4458 = vunpack.c.l.b16 %v4370
      %v4459 = vunpack.c.l.b16 %v4374
      %v4460 = vunpack.c.l.b16 %v4377
      %v4461 = vunpack.c.l.b16 %v4381
      %v4462 = vunpack.c.l.b16 %v4384
      %v4463 = vunpack.c.l.b16 %v4388
      %v4464 = vunpack.c.l.b16 %v4391
      %v4465 = vunpack.c.l.b16 %v4395
      %v4466 = vunpack.c.l.b16 %v4398
      %v4467 = vunpack.c.l.b16 %v4402
      %v4468 = vunpack.c.l.b16 %v4405
      %v4469 = vunpack.c.l.b16 %v4409
      %v4470 = vunpack.c.l.b16 %v4412
      %v4471 = vunpack.c.l.b16 %v4416
      %v4472 = vunpack.c.l.b16 %v4419
      %v4473 = vunpack.c.l.b16 %v4423
      %v4474 = vunpack.c.l.b16 %v4426
      %v4475 = vunpack.c.l.b16 %v4430
      %v4476 = vunpack.c.l.b16 %v4433
      %v4477 = vunpack.c.l.b16 %v4437
      %v4478 = vunpack.c.l.b16 %v4440
      %v4479 = vunpack.c.l.b16 %v4444
      %v4480 = vunpack.c.l.b16 %v4447
      %v4481 = vpack.c.b16 %v4450, %v4449
      %v4482 = vpack.c.b16 %v4452, %v4451
      %v4483 = vpack.c.b16 %v4454, %v4453
      %v4484 = vpack.c.b16 %v4456, %v4455
      %v4485 = vpack.c.b16 %v4458, %v4457
      %v4486 = vpack.c.b16 %v4460, %v4459
      %v4487 = vpack.c.b16 %v4462, %v4461
      %v4488 = vpack.c.b16 %v4464, %v4463
      %v4489 = vpack.c.b16 %v4466, %v4465
      %v4490 = vpack.c.b16 %v4468, %v4467
      %v4491 = vpack.c.b16 %v4470, %v4469
      %v4492 = vpack.c.b16 %v4472, %v4471
      %v4493 = vpack.c.b16 %v4474, %v4473
      %v4494 = vpack.c.b16 %v4476, %v4475
      %v4495 = vpack.c.b16 %v4478, %v4477
      %v4496 = vpack.c.b16 %v4480, %v4479
      %v4498 = vsel %vm1240, %v4481, 0
      %v4501 = vsel %vm1240, %v4482, 0
      %v4504 = vsel %vm1240, %v4483, 0
      %v4507 = vsel %vm1240, %v4484, 0
      %v4510 = vsel %vm1240, %v4485, 0
      %v4513 = vsel %vm1240, %v4486, 0
      %v4516 = vsel %vm1240, %v4487, 0
      %v4519 = vsel %vm1240, %v4488, 0
      %v4522 = vsel %vm1240, %v4489, 0
      %v4525 = vsel %vm1240, %v4490, 0
      %v4528 = vsel %vm1240, %v4491, 0
      %v4531 = vsel %vm1240, %v4492, 0
      %v4534 = vsel %vm1240, %v4493, 0
      %v4537 = vsel %vm1240, %v4494, 0
      %v4540 = vsel %vm1240, %v4495, 0
      %v4543 = vsel %vm1240, %v4496, 0
      %v4546 = vsel %vm1289, %v4448, 0
      %4548 = vmatpush.bf16.msra.mxu0 0
      %4549 = vmatpush.bf16.msra.mxu0 0
      %4550 = vmatpush.bf16.msra.mxu0 0
      %4551 = vmatpush.bf16.msra.mxu0 0
      %4552 = vmatpush.bf16.msra.mxu0 0
      %4553 = vmatpush.bf16.msra.mxu0 0
      %4554 = vmatpush.bf16.msra.mxu0 0
      %4555 = vmatpush.bf16.msra.mxu0 %v4546
      %4556 = vmatmul.bf16.gmra.mxu0 %v4498
      %v4557 = vpop.f32.mrf.mxu0
      %v4558 = vadd.f32 0.0, %v4557
      %v4559 = vpop.f32.mrf.mxu0
      %v4560 = vadd.f32 0.0, %v4559
      %4561 = vmatmul.bf16.gmra.mxu0 %v4501
      %v4562 = vpop.f32.mrf.mxu0
      %v4563 = vadd.f32 0.0, %v4562
      %v4564 = vpop.f32.mrf.mxu0
      %v4565 = vadd.f32 0.0, %v4564
      %4566 = vmatmul.bf16.gmra.mxu0 %v4504
      %v4567 = vpop.f32.mrf.mxu0
      %v4568 = vadd.f32 0.0, %v4567
      %v4569 = vpop.f32.mrf.mxu0
      %v4570 = vadd.f32 0.0, %v4569
      %4571 = vmatmul.bf16.gmra.mxu0 %v4507
      %v4572 = vpop.f32.mrf.mxu0
      %v4573 = vadd.f32 0.0, %v4572
      %v4574 = vpop.f32.mrf.mxu0
      %v4575 = vadd.f32 0.0, %v4574
      %4576 = vmatmul.bf16.gmra.mxu0 %v4510
      %v4577 = vpop.f32.mrf.mxu0
      %v4578 = vadd.f32 0.0, %v4577
      %v4579 = vpop.f32.mrf.mxu0
      %v4580 = vadd.f32 0.0, %v4579
      %4581 = vmatmul.bf16.gmra.mxu0 %v4513
      %v4582 = vpop.f32.mrf.mxu0
      %v4583 = vadd.f32 0.0, %v4582
      %v4584 = vpop.f32.mrf.mxu0
      %v4585 = vadd.f32 0.0, %v4584
      %4586 = vmatmul.bf16.gmra.mxu0 %v4516
      %v4587 = vpop.f32.mrf.mxu0
      %v4588 = vadd.f32 0.0, %v4587
      %v4589 = vpop.f32.mrf.mxu0
      %v4590 = vadd.f32 0.0, %v4589
      %4591 = vmatmul.bf16.gmra.mxu0 %v4519
      %v4592 = vpop.f32.mrf.mxu0
      %v4593 = vadd.f32 0.0, %v4592
      %v4594 = vpop.f32.mrf.mxu0
      %v4595 = vadd.f32 0.0, %v4594
      %4596 = vmatmul.bf16.gmra.mxu0 %v4522
      %v4597 = vpop.f32.mrf.mxu0
      %v4598 = vadd.f32 0.0, %v4597
      %v4599 = vpop.f32.mrf.mxu0
      %v4600 = vadd.f32 0.0, %v4599
      %4601 = vmatmul.bf16.gmra.mxu0 %v4525
      %v4602 = vpop.f32.mrf.mxu0
      %v4603 = vadd.f32 0.0, %v4602
      %v4604 = vpop.f32.mrf.mxu0
      %v4605 = vadd.f32 0.0, %v4604
      %4606 = vmatmul.bf16.gmra.mxu0 %v4528
      %v4607 = vpop.f32.mrf.mxu0
      %v4608 = vadd.f32 0.0, %v4607
      %v4609 = vpop.f32.mrf.mxu0
      %v4610 = vadd.f32 0.0, %v4609
      %4611 = vmatmul.bf16.gmra.mxu0 %v4531
      %v4612 = vpop.f32.mrf.mxu0
      %v4613 = vadd.f32 0.0, %v4612
      %v4614 = vpop.f32.mrf.mxu0
      %v4615 = vadd.f32 0.0, %v4614
      %4616 = vmatmul.bf16.gmra.mxu0 %v4534
      %v4617 = vpop.f32.mrf.mxu0
      %v4618 = vadd.f32 0.0, %v4617
      %v4619 = vpop.f32.mrf.mxu0
      %v4620 = vadd.f32 0.0, %v4619
      %4621 = vmatmul.bf16.gmra.mxu0 %v4537
      %v4622 = vpop.f32.mrf.mxu0
      %v4623 = vadd.f32 0.0, %v4622
      %v4624 = vpop.f32.mrf.mxu0
      %v4625 = vadd.f32 0.0, %v4624
      %4626 = vmatmul.bf16.gmra.mxu0 %v4540
      %v4627 = vpop.f32.mrf.mxu0
      %v4628 = vadd.f32 0.0, %v4627
      %v4629 = vpop.f32.mrf.mxu0
      %v4630 = vadd.f32 0.0, %v4629
      %4631 = vmatmul.bf16.gmra.mxu0 %v4543
      %v4632 = vpop.f32.mrf.mxu0
      %v4633 = vadd.f32 0.0, %v4632
      %v4634 = vpop.f32.mrf.mxu0
      %v4635 = vadd.f32 0.0, %v4634
      %4636 = vdwg.mxu0
      %v4637 = vadd.f32 %v4240, %v4558
      %v4638 = vadd.f32 %v4241, %v4560
      %v4639 = vadd.f32 %v4242, %v4563
      %v4640 = vadd.f32 %v4243, %v4565
      %v4641 = vadd.f32 %v4244, %v4568
      %v4642 = vadd.f32 %v4245, %v4570
      %v4643 = vadd.f32 %v4246, %v4573
      %v4644 = vadd.f32 %v4247, %v4575
      %v4645 = vadd.f32 %v4248, %v4578
      %v4646 = vadd.f32 %v4249, %v4580
      %v4647 = vadd.f32 %v4250, %v4583
      %v4648 = vadd.f32 %v4251, %v4585
      %v4649 = vadd.f32 %v4252, %v4588
      %v4650 = vadd.f32 %v4253, %v4590
      %v4651 = vadd.f32 %v4254, %v4593
      %v4652 = vadd.f32 %v4255, %v4595
      %v4653 = vadd.f32 %v4256, %v4598
      %v4654 = vadd.f32 %v4257, %v4600
      %v4655 = vadd.f32 %v4258, %v4603
      %v4656 = vadd.f32 %v4259, %v4605
      %v4657 = vadd.f32 %v4260, %v4608
      %v4658 = vadd.f32 %v4261, %v4610
      %v4659 = vadd.f32 %v4262, %v4613
      %v4660 = vadd.f32 %v4263, %v4615
      %v4661 = vadd.f32 %v4264, %v4618
      %v4662 = vadd.f32 %v4265, %v4620
      %v4663 = vadd.f32 %v4266, %v4623
      %v4664 = vadd.f32 %v4267, %v4625
      %v4665 = vadd.f32 %v4268, %v4628
      %v4666 = vadd.f32 %v4269, %v4630
      %v4667 = vadd.f32 %v4270, %v4633
      %v4668 = vadd.f32 %v4271, %v4635
      %v4669 = vld [vmem:[%s2] sm:$0x1]
      %v4671 = vperm.slane %v4669, 0
      %v4673 = vadd.f32 %v4637, %v4671
      %v4674 = vadd.f32 %v4638, %v4671
      %v4675 = vadd.f32 %v4639, %v4671
      %v4676 = vadd.f32 %v4640, %v4671
      %v4677 = vadd.f32 %v4641, %v4671
      %v4678 = vadd.f32 %v4642, %v4671
      %v4679 = vadd.f32 %v4643, %v4671
      %v4680 = vadd.f32 %v4644, %v4671
      %v4681 = vadd.f32 %v4645, %v4671
      %v4682 = vadd.f32 %v4646, %v4671
      %v4683 = vadd.f32 %v4647, %v4671
      %v4684 = vadd.f32 %v4648, %v4671
      %v4685 = vadd.f32 %v4649, %v4671
      %v4686 = vadd.f32 %v4650, %v4671
      %v4687 = vadd.f32 %v4651, %v4671
      %v4688 = vadd.f32 %v4652, %v4671
      %v4689 = vadd.f32 %v4653, %v4671
      %v4690 = vadd.f32 %v4654, %v4671
      %v4691 = vadd.f32 %v4655, %v4671
      %v4692 = vadd.f32 %v4656, %v4671
      %v4693 = vadd.f32 %v4657, %v4671
      %v4694 = vadd.f32 %v4658, %v4671
      %v4695 = vadd.f32 %v4659, %v4671
      %v4696 = vadd.f32 %v4660, %v4671
      %v4697 = vadd.f32 %v4661, %v4671
      %v4698 = vadd.f32 %v4662, %v4671
      %v4699 = vadd.f32 %v4663, %v4671
      %v4700 = vadd.f32 %v4664, %v4671
      %v4701 = vadd.f32 %v4665, %v4671
      %v4702 = vadd.f32 %v4666, %v4671
      %v4703 = vadd.f32 %v4667, %v4671
      %v4704 = vadd.f32 %v4668, %v4671
      %v4705 = vmax.f32 %v4673, 0.0
      %v4706 = vmax.f32 %v4674, 0.0
      %v4707 = vmax.f32 %v4675, 0.0
      %v4708 = vmax.f32 %v4676, 0.0
      %v4709 = vmax.f32 %v4677, 0.0
      %v4710 = vmax.f32 %v4678, 0.0
      %v4711 = vmax.f32 %v4679, 0.0
      %v4712 = vmax.f32 %v4680, 0.0
      %v4713 = vmax.f32 %v4681, 0.0
      %v4714 = vmax.f32 %v4682, 0.0
      %v4715 = vmax.f32 %v4683, 0.0
      %v4716 = vmax.f32 %v4684, 0.0
      %v4717 = vmax.f32 %v4685, 0.0
      %v4718 = vmax.f32 %v4686, 0.0
      %v4719 = vmax.f32 %v4687, 0.0
      %v4720 = vmax.f32 %v4688, 0.0
      %v4721 = vmax.f32 %v4689, 0.0
      %v4722 = vmax.f32 %v4690, 0.0
      %v4723 = vmax.f32 %v4691, 0.0
      %v4724 = vmax.f32 %v4692, 0.0
      %v4725 = vmax.f32 %v4693, 0.0
      %v4726 = vmax.f32 %v4694, 0.0
      %v4727 = vmax.f32 %v4695, 0.0
      %v4728 = vmax.f32 %v4696, 0.0
      %v4729 = vmax.f32 %v4697, 0.0
      %v4730 = vmax.f32 %v4698, 0.0
      %v4731 = vmax.f32 %v4699, 0.0
      %v4732 = vmax.f32 %v4700, 0.0
      %v4733 = vmax.f32 %v4701, 0.0
      %v4734 = vmax.f32 %v4702, 0.0
      %v4735 = vmax.f32 %v4703, 0.0
      %v4736 = vmax.f32 %v4704, 0.0
      %v4737 = vpack.c.bf16 %v4705, %v4705
      %v4738 = vpack.c.bf16 %v4706, %v4706
      %v4739 = vpack.c.bf16 %v4707, %v4707
      %v4740 = vpack.c.bf16 %v4708, %v4708
      %v4741 = vpack.c.bf16 %v4709, %v4709
      %v4742 = vpack.c.bf16 %v4710, %v4710
      %v4743 = vpack.c.bf16 %v4711, %v4711
      %v4744 = vpack.c.bf16 %v4712, %v4712
      %v4745 = vpack.c.bf16 %v4713, %v4713
      %v4746 = vpack.c.bf16 %v4714, %v4714
      %v4747 = vpack.c.bf16 %v4715, %v4715
      %v4748 = vpack.c.bf16 %v4716, %v4716
      %v4749 = vpack.c.bf16 %v4717, %v4717
      %v4750 = vpack.c.bf16 %v4718, %v4718
      %v4751 = vpack.c.bf16 %v4719, %v4719
      %v4752 = vpack.c.bf16 %v4720, %v4720
      %v4753 = vpack.c.bf16 %v4721, %v4721
      %v4754 = vpack.c.bf16 %v4722, %v4722
      %v4755 = vpack.c.bf16 %v4723, %v4723
      %v4756 = vpack.c.bf16 %v4724, %v4724
      %v4757 = vpack.c.bf16 %v4725, %v4725
      %v4758 = vpack.c.bf16 %v4726, %v4726
      %v4759 = vpack.c.bf16 %v4727, %v4727
      %v4760 = vpack.c.bf16 %v4728, %v4728
      %v4761 = vpack.c.bf16 %v4729, %v4729
      %v4762 = vpack.c.bf16 %v4730, %v4730
      %v4763 = vpack.c.bf16 %v4731, %v4731
      %v4764 = vpack.c.bf16 %v4732, %v4732
      %v4765 = vpack.c.bf16 %v4733, %v4733
      %v4766 = vpack.c.bf16 %v4734, %v4734
      %v4767 = vpack.c.bf16 %v4735, %v4735
      %v4768 = vpack.c.bf16 %v4736, %v4736
      %vm4769 = vcmask 60416
      %4770 = vst.msk [vmem:[%s170] sm:$0xf] %vm4769, %v4737
      %4771 = vst.msk [vmem:[%s170 + $0x4] sm:$0xf] %vm4769, %v4738
      %4772 = vst.msk [vmem:[%s170 + $0x8] sm:$0xf] %vm4769, %v4739
      %4773 = vst.msk [vmem:[%s170 + $0xc] sm:$0xf] %vm4769, %v4740
      %4774 = vst.msk [vmem:[%s170 + $0x10] sm:$0xf] %vm4769, %v4741
      %4775 = vst.msk [vmem:[%s170 + $0x14] sm:$0xf] %vm4769, %v4742
      %4776 = vst.msk [vmem:[%s170 + $0x18] sm:$0xf] %vm4769, %v4743
      %4777 = vst.msk [vmem:[%s170 + $0x1c] sm:$0xf] %vm4769, %v4744
      %4778 = vst.msk [vmem:[%s170 + $0x20] sm:$0xf] %vm4769, %v4745
      %4779 = vst.msk [vmem:[%s170 + $0x24] sm:$0xf] %vm4769, %v4746
      %4780 = vst.msk [vmem:[%s170 + $0x28] sm:$0xf] %vm4769, %v4747
      %4781 = vst.msk [vmem:[%s170 + $0x2c] sm:$0xf] %vm4769, %v4748
      %4782 = vst.msk [vmem:[%s170 + $0x30] sm:$0xf] %vm4769, %v4749
      %4783 = vst.msk [vmem:[%s170 + $0x34] sm:$0xf] %vm4769, %v4750
      %4784 = vst.msk [vmem:[%s170 + $0x38] sm:$0xf] %vm4769, %v4751
      %4785 = vst.msk [vmem:[%s170 + $0x3c] sm:$0xf] %vm4769, %v4752
      %4786 = vst.msk [vmem:[%s170 + $0x40] sm:$0xf] %vm4769, %v4753
      %4787 = vst.msk [vmem:[%s170 + $0x44] sm:$0xf] %vm4769, %v4754
      %4788 = vst.msk [vmem:[%s170 + $0x48] sm:$0xf] %vm4769, %v4755
      %4789 = vst.msk [vmem:[%s170 + $0x4c] sm:$0xf] %vm4769, %v4756
      %4790 = vst.msk [vmem:[%s170 + $0x50] sm:$0xf] %vm4769, %v4757
      %4791 = vst.msk [vmem:[%s170 + $0x54] sm:$0xf] %vm4769, %v4758
      %4792 = vst.msk [vmem:[%s170 + $0x58] sm:$0xf] %vm4769, %v4759
      %4793 = vst.msk [vmem:[%s170 + $0x5c] sm:$0xf] %vm4769, %v4760
      %4794 = vst.msk [vmem:[%s170 + $0x60] sm:$0xf] %vm4769, %v4761
      %4795 = vst.msk [vmem:[%s170 + $0x64] sm:$0xf] %vm4769, %v4762
      %4796 = vst.msk [vmem:[%s170 + $0x68] sm:$0xf] %vm4769, %v4763
      %4797 = vst.msk [vmem:[%s170 + $0x6c] sm:$0xf] %vm4769, %v4764
      %4798 = vst.msk [vmem:[%s170 + $0x70] sm:$0xf] %vm4769, %v4765
      %4799 = vst.msk [vmem:[%s170 + $0x74] sm:$0xf] %vm4769, %v4766
      %4800 = vst.msk [vmem:[%s170 + $0x78] sm:$0xf] %vm4769, %v4767
      %4801 = vst.msk [vmem:[%s170 + $0x7c] sm:$0xf] %vm4769, %v4768
      %p4802 = scmp.lt.s32.totalorder %s14, 1
      %s4803 = scalar_select %p4802, %s14, 1
      %s4804 = smul.addr %s4803, 32
      %s4805 = smul.addr %s4804, 4
      %s4806 = scalar_lea.vmem %s3, %s4805
      // Predicated region
      $region33: #{vgg_forward.5} parent=31 // pred_check
        %p4807 = pneg %p100
      $region34: #{vgg_forward.5} parent=31 // pred_check_branch
        %4809 = sbr.rel (%p4807) target = $region36
      $region35: #{vgg_forward.5} parent=31 // pred_region
        _
      $region36: #{vgg_forward.5} parent=31 // pred_fallthru
        _
    $region32: #{vgg_forward.5} parent=5 // pred_fallthru
      _
    %p4810 = scmp.le.s32.totalorder 2, %s9
    // Predicated region
    $region37: #{vgg_forward.5} parent=5 // pred_check
      %p4811 = pneg %p4810
    $region38: #{vgg_forward.5} parent=5 // pred_check_branch
      %4813 = sbr.rel (%p4811) target = $region40
    $region39: #{vgg_forward.5} parent=5 // pred_region
      %s4814 = ssub.s32 %s9, 2
      // Predicated region
      $region41: #{vgg_forward.5} parent=39 // pred_check
        %p4815 = pneg %p106
      $region42: #{vgg_forward.5} parent=39 // pred_check_branch
        %4817 = sbr.rel (%p4815) target = $region44
      $region43: #{vgg_forward.5} parent=39 // pred_region
        %p4818 = scmp.lt.s32.totalorder %s15, 1
        %s4819 = scalar_select %p4818, %s15, 1
        %s4820 = smul.addr %s4819, 32
        %s4821 = smul.addr %s4820, 4
        %s4822 = scalar_lea.vmem %s3, %s4821
      $region44: #{vgg_forward.5} parent=39 // pred_fallthru
        _
    $region40: #{vgg_forward.5} parent=5 // pred_fallthru
      _
  $region6: #{vgg_forward.5} parent=0 // loop_footer
    %s13 = sadd.s32 1, %s9
  $region7: #{vgg_forward.5} parent=0 // loop_footer_branch
    %8 = sbr.rel target = $region3
  $region8: #{vgg_forward.5} parent=0 // loop_exit
    _

</llo_original>
